<compile_context>
chip_gen: v6e
topology: v6e:2x2x1
jax: 0.10.0
libtpu: 0.0.40
codegen_flags: <defaults>
</compile_context>

<pallas_src>
import functools

import jax
import jax.numpy as jnp
from jax import lax
from jax.experimental import pallas as pl
from jax.experimental.pallas import tpu as pltpu


GATE_SLOT = 128   # each LSTM gate (i, f, g, o) occupies its own 128-lane slot
HP = GATE_SLOT    # padded hidden width (all layers, H <= 128)


# ----------------------------------------------------------------------------
# Fused decoder kernel: 3 LSTM layers + tanh + time-distributed projection
# ----------------------------------------------------------------------------
def decoder_kernel(x_ref, w0_ref, u0_ref, b0_ref,
                   w1_ref, u1_ref, b1_ref,
                   w2_ref, u2_ref, b2_ref,
                   wblk_ref, out_ref,
                   act1_scr, act2_scr, act3_scr, *, T):
    """
    x_ref    : (B, D0)              decoder input (identical for every timestep)
    w*_ref   : (Din_pad, 4*128)     fused input->gate weights (slots i, f, g, o)
    u*_ref   : (128, 4*128)         fused hidden->gate weights (rows padded to 128)
    b*_ref   : (1, 4*128)           fused combined bias (b_ih + b_hh)
    wblk_ref : (T*128, T)           block-diagonal projection weight (tdm per block)
    out_ref  : (B, T)               projected outputs (lane-dense)
    act1/2   : (T*B, 128)           per-layer tanh(h_t) activations (VMEM scratch)
    act3     : (B, T*128)           layer-2 tanh(h_t), lane-aligned per timestep
    """
    B = x_ref.shape[0]
    f32 = jnp.float32

    def lstm_step(xg_t, h, c, U):
        # gates: (B, 4*128); pad lanes of xg/U/b are zero -> pad h/c stay 0.
        gates = xg_t + jnp.dot(h, U, preferred_element_type=f32)
        i = jax.nn.sigmoid(gates[:, 0 * HP:1 * HP])
        f = jax.nn.sigmoid(gates[:, 1 * HP:2 * HP])
        g = jnp.tanh(gates[:, 2 * HP:3 * HP])
        o = jax.nn.sigmoid(gates[:, 3 * HP:4 * HP])
        c_new = f * c + i * g
        h_new = o * jnp.tanh(c_new)
        return h_new, c_new

    # Hoisted weight loads: one vector-load per layer, reused for all T steps.
    U0 = u0_ref[...]
    U1 = u1_ref[...]
    U2 = u2_ref[...]

    # ---------------- layer 0 -----------------------------------------------
    # Every timestep sees the same (B, D0) input row, so x @ W0 (+ bias) is
    # computed exactly once and reused for all T steps.
    xg0 = jnp.dot(x_ref[...], w0_ref[...], preferred_element_type=f32) + b0_ref[...]
    h = jnp.zeros((B, HP), f32)
    c = jnp.zeros((B, HP), f32)
    for t in range(T):                                  # static T -> fully unrolled
        h, c = lstm_step(xg0, h, c, U0)
        act1_scr[pl.ds(t * B, B), :] = jnp.tanh(h)      # dropout(eval)=id, then tanh

    # ---------------- layer 1 -----------------------------------------------
    # Hoist the input->gate matmul for all timesteps; keep the result in vregs
    # and use static slices inside the unrolled recurrence.
    xg1 = (jnp.dot(act1_scr[...], w1_ref[...], preferred_element_type=f32)
           + b1_ref[...])
    h = jnp.zeros((B, HP), f32)
    c = jnp.zeros((B, HP), f32)
    for t in range(T):
        h, c = lstm_step(xg1[t * B:(t + 1) * B, :], h, c, U1)
        act2_scr[pl.ds(t * B, B), :] = jnp.tanh(h)

    # ---------------- layer 2 -----------------------------------------------
    xg2 = (jnp.dot(act2_scr[...], w2_ref[...], preferred_element_type=f32)
           + b2_ref[...])
    h = jnp.zeros((B, HP), f32)
    c = jnp.zeros((B, HP), f32)
    for t in range(T):
        h, c = lstm_step(xg2[t * B:(t + 1) * B, :], h, c, U2)
        act3_scr[:, t * HP:(t + 1) * HP] = jnp.tanh(h)  # lane-aligned store

    # ------- time-distributed projection: ONE matmul, off the serial chain --
    out_ref[...] = jnp.dot(act3_scr[...], wblk_ref[...],
                           preferred_element_type=f32)


# ----------------------------------------------------------------------------
# Weight fusing helpers (run once at init, in plain XLA)
# ----------------------------------------------------------------------------
def _fuse_w(w4, h_out, rows_pad=None):
    """(4, Din, H) -> (rows, 4*128); gate k occupies lanes [k*128, k*128+H).
    Pad rows / pad lanes are exactly zero (required by the full-slot gate math)."""
    din = w4.shape[1]
    rows = din if rows_pad is None else rows_pad
    out = jnp.zeros((rows, 4 * GATE_SLOT), jnp.float32)
    for k in range(4):
        out = out.at[:din, k * GATE_SLOT:k * GATE_SLOT + h_out].set(w4[k])
    return out


def _fuse_b(b4, h_out):
    """(4, 1, H) -> (1, 4*128), zero-padded."""
    out = jnp.zeros((1, 4 * GATE_SLOT), jnp.float32)
    for k in range(4):
        out = out.at[:, k * GATE_SLOT:k * GATE_SLOT + h_out].set(b4[k])
    return out


# ----------------------------------------------------------------------------
# Decoder module (parameter setup in plain JAX, hot path = ONE Pallas kernel)
# ----------------------------------------------------------------------------
class PallasDecoder:
    def __init__(self, num_layers=4, output_dim=1, hidden_dims=(8, 16, 32, 64),
                 key=jax.random.PRNGKey(0)):
        assert num_layers == len(hidden_dims)
        assert num_layers == 4, "fused kernel is specialized for the default 3-LSTM stack"
        assert output_dim == 1, "fused projection assumes output_dim == 1 (module default)"
        assert max(hidden_dims) <= GATE_SLOT
        self.hidden_dims = list(hidden_dims)
        self.output_dim = output_dim
        self.lstm_params = []     # unfused (for the pure-JAX reference)
        self.fused_params = []    # fused + padded (for the Pallas kernel)
        for idx in range(num_layers - 1):
            din, h = hidden_dims[idx], hidden_dims[idx + 1]
            key, k1, k2, k3 = jax.random.split(key, 4)
            s = float(1.0 / (h ** 0.5))
            wih = jax.random.uniform(k1, (4, din, h), jnp.float32, -s, s)
            whh = jax.random.uniform(k2, (4, h, h), jnp.float32, -s, s)
            b = jax.random.uniform(k3, (4, 1, h), jnp.float32, -s, s)   # b_ih + b_hh
            self.lstm_params.append((wih, whh, b))
            # layer 0's input is the raw (B, D0) x -> keep D0 rows; layers 1/2
            # consume 128-lane-padded activations -> pad Wih rows to 128.
            w_rows = None if idx == 0 else GATE_SLOT
            self.fused_params.append((_fuse_w(wih, h, rows_pad=w_rows),
                                      _fuse_w(whh, h, rows_pad=GATE_SLOT),
                                      _fuse_b(b, h)))
        key, ktdm = jax.random.split(key)
        # matches torch.randn((hidden_dims[-1], output_dim))
        self.tdm = jax.random.normal(ktdm, (hidden_dims[-1], output_dim), jnp.float32)

    def _make_wblk(self, T):
        """Block-diagonal projection weight (T*128, T): block t holds tdm."""
        H_last = self.hidden_dims[-1]
        wblk = jnp.zeros((T * GATE_SLOT, T), jnp.float32)
        col = self.tdm[:, 0]
        for t in range(T):
            wblk = wblk.at[t * GATE_SLOT:t * GATE_SLOT + H_last, t].set(col)
        return wblk

    def __call__(self, x, seq_len):
        # x: (B, 1, D0).  The torch `.expand(B, seq_len, D0)` is NOT materialized:
        # the kernel reuses a single x @ W0 for every timestep of layer 0.
        B = x.shape[0]
        T = int(seq_len)
        D0 = self.hidden_dims[0]
        G = 4 * GATE_SLOT
        x2d = x[:, 0, :]                                           # (B, D0)
        (w0, u0, b0), (w1, u1, b1), (w2, u2, b2) = self.fused_params
        wblk = self._make_wblk(T)

        out2d = pl.pallas_call(
            functools.partial(decoder_kernel, T=T),
            grid=(1,),
            out_shape=jax.ShapeDtypeStruct((B, T), jnp.float32),
            in_specs=[
                pl.BlockSpec((B, D0), lambda i: (0, 0)),
                pl.BlockSpec((D0, G), lambda i: (0, 0)),
                pl.BlockSpec((HP, G), lambda i: (0, 0)),
                pl.BlockSpec((1, G), lambda i: (0, 0)),
                pl.BlockSpec((HP, G), lambda i: (0, 0)),
                pl.BlockSpec((HP, G), lambda i: (0, 0)),
                pl.BlockSpec((1, G), lambda i: (0, 0)),
                pl.BlockSpec((HP, G), lambda i: (0, 0)),
                pl.BlockSpec((HP, G), lambda i: (0, 0)),
                pl.BlockSpec((1, G), lambda i: (0, 0)),
                pl.BlockSpec((T * GATE_SLOT, T), lambda i: (0, 0)),
            ],
            out_specs=pl.BlockSpec((B, T), lambda i: (0, 0)),
            scratch_shapes=[
                pltpu.VMEM((T * B, HP), jnp.float32),   # layer-0 activations
                pltpu.VMEM((T * B, HP), jnp.float32),   # layer-1 activations
                pltpu.VMEM((B, T * HP), jnp.float32),   # layer-2 activations (lane-aligned)
            ],
            compiler_params=pltpu.CompilerParams(
                dimension_semantics=("arbitrary",)),
        )(x2d, w0, u0, b0, w1, u1, b1, w2, u2, b2, wblk)

        return out2d[:, :, None]                                   # (B, T, 1)

    # Pure-JAX reference (for correctness check only)
    def reference(self, x, seq_len):
        B = x.shape[0]
        x = jnp.broadcast_to(x, (B, seq_len, x.shape[2]))
        for (wih, whh, b) in self.lstm_params:
            H = whh.shape[-1]

            def step(carry, x_t, wih=wih, whh=whh, b=b):
                h, c = carry
                i = jax.nn.sigmoid(x_t @ wih[0] + h @ whh[0] + b[0])
                f = jax.nn.sigmoid(x_t @ wih[1] + h @ whh[1] + b[1])
                g = jnp.tanh(x_t @ wih[2] + h @ whh[2] + b[2])
                o = jax.nn.sigmoid(x_t @ wih[3] + h @ whh[3] + b[3])
                c = f * c + i * g
                h = o * jnp.tanh(c)
                return (h, c), h

            x_tm = jnp.transpose(x, (1, 0, 2))
            (_, _), hs = lax.scan(step, (jnp.zeros((B, H)), jnp.zeros((B, H))), x_tm)
            x = jnp.tanh(jnp.transpose(hs, (1, 0, 2)))   # dropout(identity) + tanh
        return x @ self.tdm


# ----------------------------------------------------------------------------
if __name__ == "__main__":
    key = jax.random.PRNGKey(0)
    B, seq_len = 2, 8
    hidden_dims = [8, 16, 32, 64]
    output_dim = 1

    dec = PallasDecoder(num_layers=4, output_dim=output_dim,
                        hidden_dims=hidden_dims, key=key)

    kx = jax.random.fold_in(key, 999)
    x = jax.random.normal(kx, (B, 1, hidden_dims[0]), jnp.float32)

    out = dec(x, seq_len)
    out = jax.block_until_ready(out)

    ref = dec.reference(x, seq_len)
    assert out.shape == (B, seq_len, output_dim), out.shape
    assert jnp.allclose(out, ref, atol=1e-5, rtol=1e-5), float(jnp.abs(out - ref).max())

    print("KERNEL_OK")
</pallas_src>

<mosaic_0001>
module attributes {stable_mosaic.version = 11 : i64} {
  func.func @decoder_kernel(%arg0: i32, %arg1: memref<2x8xf32, #tpu.memory_space<vmem>>, %arg2: memref<8x512xf32, #tpu.memory_space<vmem>>, %arg3: memref<128x512xf32, #tpu.memory_space<vmem>>, %arg4: memref<1x512xf32, #tpu.memory_space<vmem>>, %arg5: memref<128x512xf32, #tpu.memory_space<vmem>>, %arg6: memref<128x512xf32, #tpu.memory_space<vmem>>, %arg7: memref<1x512xf32, #tpu.memory_space<vmem>>, %arg8: memref<128x512xf32, #tpu.memory_space<vmem>>, %arg9: memref<128x512xf32, #tpu.memory_space<vmem>>, %arg10: memref<1x512xf32, #tpu.memory_space<vmem>>, %arg11: memref<1024x8xf32, #tpu.memory_space<vmem>>, %arg12: memref<2x8xf32, #tpu.memory_space<vmem>>, %arg13: memref<16x128xf32, #tpu.memory_space<vmem>>, %arg14: memref<16x128xf32, #tpu.memory_space<vmem>>, %arg15: memref<2x1024xf32, #tpu.memory_space<vmem>>) attributes {dimension_semantics = [#tpu.dimension_semantics<arbitrary>], iteration_bounds = array<i64: 1>, scalar_prefetch = 0 : i64, scratch_operands = 3 : i64, tpu.core_type = #tpu.core_type<tc>, window_params = [{pipeline_mode = #tpu.pipeline_mode<synchronous>, transform_indices = @transform_0, window_bounds = array<i64: 2, 8>}, {pipeline_mode = #tpu.pipeline_mode<synchronous>, transform_indices = @transform_1, window_bounds = array<i64: 8, 512>}, {pipeline_mode = #tpu.pipeline_mode<synchronous>, transform_indices = @transform_2, window_bounds = array<i64: 128, 512>}, {pipeline_mode = #tpu.pipeline_mode<synchronous>, transform_indices = @transform_3, window_bounds = array<i64: 1, 512>}, {pipeline_mode = #tpu.pipeline_mode<synchronous>, transform_indices = @transform_4, window_bounds = array<i64: 128, 512>}, {pipeline_mode = #tpu.pipeline_mode<synchronous>, transform_indices = @transform_5, window_bounds = array<i64: 128, 512>}, {pipeline_mode = #tpu.pipeline_mode<synchronous>, transform_indices = @transform_6, window_bounds = array<i64: 1, 512>}, {pipeline_mode = #tpu.pipeline_mode<synchronous>, transform_indices = @transform_7, window_bounds = array<i64: 128, 512>}, {pipeline_mode = #tpu.pipeline_mode<synchronous>, transform_indices = @transform_8, window_bounds = array<i64: 128, 512>}, {pipeline_mode = #tpu.pipeline_mode<synchronous>, transform_indices = @transform_9, window_bounds = array<i64: 1, 512>}, {pipeline_mode = #tpu.pipeline_mode<synchronous>, transform_indices = @transform_10, window_bounds = array<i64: 1024, 8>}, {pipeline_mode = #tpu.pipeline_mode<synchronous>, transform_indices = @transform_11, window_bounds = array<i64: 2, 8>}]} {
    %c0 = arith.constant 0 : index
    %c0_0 = arith.constant 0 : index
    %0 = vector.load %arg3[%c0, %c0_0] : memref<128x512xf32, #tpu.memory_space<vmem>>, vector<128x512xf32>
    %c0_1 = arith.constant 0 : index
    %c0_2 = arith.constant 0 : index
    %1 = vector.load %arg6[%c0_1, %c0_2] : memref<128x512xf32, #tpu.memory_space<vmem>>, vector<128x512xf32>
    %c0_3 = arith.constant 0 : index
    %c0_4 = arith.constant 0 : index
    %2 = vector.load %arg9[%c0_3, %c0_4] : memref<128x512xf32, #tpu.memory_space<vmem>>, vector<128x512xf32>
    %c0_5 = arith.constant 0 : index
    %c0_6 = arith.constant 0 : index
    %3 = vector.load %arg1[%c0_5, %c0_6] : memref<2x8xf32, #tpu.memory_space<vmem>>, vector<2x8xf32>
    %c0_7 = arith.constant 0 : index
    %c0_8 = arith.constant 0 : index
    %4 = vector.load %arg2[%c0_7, %c0_8] : memref<8x512xf32, #tpu.memory_space<vmem>>, vector<8x512xf32>
    %cst = arith.constant dense<0.000000e+00> : vector<2x512xf32>
    %5 = tpu.matmul %3, %4, %cst {dimension_numbers = #tpu.dot_dimension_numbers<[1], [0], [0], [1], [0, 0, 1, 1], [], []>} : vector<2x8xf32>, vector<8x512xf32>, vector<2x512xf32> -> vector<2x512xf32>
    %c0_9 = arith.constant 0 : index
    %c0_10 = arith.constant 0 : index
    %6 = vector.load %arg4[%c0_9, %c0_10] : memref<1x512xf32, #tpu.memory_space<vmem>>, vector<1x512xf32>
    %7 = vector.broadcast %6 : vector<1x512xf32> to vector<2x512xf32>
    %8 = arith.addf %5, %7 : vector<2x512xf32>
    %cst_11 = arith.constant 0.000000e+00 : f32
    %9 = vector.broadcast %cst_11 : f32 to vector<2x128xf32>
    %cst_12 = arith.constant 0.000000e+00 : f32
    %10 = vector.broadcast %cst_12 : f32 to vector<2x128xf32>
    %cst_13 = arith.constant dense<0.000000e+00> : vector<2x512xf32>
    %11 = tpu.matmul %9, %0, %cst_13 {dimension_numbers = #tpu.dot_dimension_numbers<[1], [0], [0], [1], [0, 0, 1, 1], [], []>} : vector<2x128xf32>, vector<128x512xf32>, vector<2x512xf32> -> vector<2x512xf32>
    %12 = arith.addf %8, %11 : vector<2x512xf32>
    %13 = vector.extract_strided_slice %12 {offsets = [0, 0], sizes = [2, 128], strides = [1, 1]} : vector<2x512xf32> to vector<2x128xf32>
    %14 = arith.negf %13 : vector<2x128xf32>
    %15 = math.exp %14 : vector<2x128xf32>
    %cst_14 = arith.constant 1.000000e+00 : f32
    %16 = vector.broadcast %cst_14 : f32 to vector<2x128xf32>
    %17 = arith.addf %16, %15 : vector<2x128xf32>
    %18 = arith.divf %16, %17 : vector<2x128xf32>
    %19 = vector.extract_strided_slice %12 {offsets = [0, 128], sizes = [2, 128], strides = [1, 1]} : vector<2x512xf32> to vector<2x128xf32>
    %20 = arith.negf %19 : vector<2x128xf32>
    %21 = math.exp %20 : vector<2x128xf32>
    %cst_15 = arith.constant 1.000000e+00 : f32
    %22 = vector.broadcast %cst_15 : f32 to vector<2x128xf32>
    %23 = arith.addf %22, %21 : vector<2x128xf32>
    %24 = arith.divf %22, %23 : vector<2x128xf32>
    %25 = vector.extract_strided_slice %12 {offsets = [0, 256], sizes = [2, 128], strides = [1, 1]} : vector<2x512xf32> to vector<2x128xf32>
    %26 = math.tanh %25 : vector<2x128xf32>
    %27 = vector.extract_strided_slice %12 {offsets = [0, 384], sizes = [2, 128], strides = [1, 1]} : vector<2x512xf32> to vector<2x128xf32>
    %28 = arith.negf %27 : vector<2x128xf32>
    %29 = math.exp %28 : vector<2x128xf32>
    %cst_16 = arith.constant 1.000000e+00 : f32
    %30 = vector.broadcast %cst_16 : f32 to vector<2x128xf32>
    %31 = arith.addf %30, %29 : vector<2x128xf32>
    %32 = arith.divf %30, %31 : vector<2x128xf32>
    %33 = arith.mulf %24, %10 : vector<2x128xf32>
    %34 = arith.mulf %18, %26 : vector<2x128xf32>
    %35 = arith.addf %33, %34 : vector<2x128xf32>
    %36 = math.tanh %35 : vector<2x128xf32>
    %37 = arith.mulf %32, %36 : vector<2x128xf32>
    %38 = math.tanh %37 : vector<2x128xf32>
    %c0_17 = arith.constant 0 : index
    %c0_18 = arith.constant 0 : index
    %39 = vector.load %arg13[%c0_17, %c0_18] : memref<16x128xf32, #tpu.memory_space<vmem>>, vector<2x128xf32>
    tpu.vector_store %arg13[%c0_17, %c0_18], %38 {strides = array<i32>} : memref<16x128xf32, #tpu.memory_space<vmem>>, vector<2x128xf32>,
    %cst_19 = arith.constant dense<0.000000e+00> : vector<2x512xf32>
    %40 = tpu.matmul %37, %0, %cst_19 {dimension_numbers = #tpu.dot_dimension_numbers<[1], [0], [0], [1], [0, 0, 1, 1], [], []>} : vector<2x128xf32>, vector<128x512xf32>, vector<2x512xf32> -> vector<2x512xf32>
    %41 = arith.addf %8, %40 : vector<2x512xf32>
    %42 = vector.extract_strided_slice %41 {offsets = [0, 0], sizes = [2, 128], strides = [1, 1]} : vector<2x512xf32> to vector<2x128xf32>
    %43 = arith.negf %42 : vector<2x128xf32>
    %44 = math.exp %43 : vector<2x128xf32>
    %cst_20 = arith.constant 1.000000e+00 : f32
    %45 = vector.broadcast %cst_20 : f32 to vector<2x128xf32>
    %46 = arith.addf %45, %44 : vector<2x128xf32>
    %47 = arith.divf %45, %46 : vector<2x128xf32>
    %48 = vector.extract_strided_slice %41 {offsets = [0, 128], sizes = [2, 128], strides = [1, 1]} : vector<2x512xf32> to vector<2x128xf32>
    %49 = arith.negf %48 : vector<2x128xf32>
    %50 = math.exp %49 : vector<2x128xf32>
    %cst_21 = arith.constant 1.000000e+00 : f32
    %51 = vector.broadcast %cst_21 : f32 to vector<2x128xf32>
    %52 = arith.addf %51, %50 : vector<2x128xf32>
    %53 = arith.divf %51, %52 : vector<2x128xf32>
    %54 = vector.extract_strided_slice %41 {offsets = [0, 256], sizes = [2, 128], strides = [1, 1]} : vector<2x512xf32> to vector<2x128xf32>
    %55 = math.tanh %54 : vector<2x128xf32>
    %56 = vector.extract_strided_slice %41 {offsets = [0, 384], sizes = [2, 128], strides = [1, 1]} : vector<2x512xf32> to vector<2x128xf32>
    %57 = arith.negf %56 : vector<2x128xf32>
    %58 = math.exp %57 : vector<2x128xf32>
    %cst_22 = arith.constant 1.000000e+00 : f32
    %59 = vector.broadcast %cst_22 : f32 to vector<2x128xf32>
    %60 = arith.addf %59, %58 : vector<2x128xf32>
    %61 = arith.divf %59, %60 : vector<2x128xf32>
    %62 = arith.mulf %53, %35 : vector<2x128xf32>
    %63 = arith.mulf %47, %55 : vector<2x128xf32>
    %64 = arith.addf %62, %63 : vector<2x128xf32>
    %65 = math.tanh %64 : vector<2x128xf32>
    %66 = arith.mulf %61, %65 : vector<2x128xf32>
    %67 = math.tanh %66 : vector<2x128xf32>
    %c2 = arith.constant 2 : index
    %c0_23 = arith.constant 0 : index
    %68 = vector.load %arg13[%c2, %c0_23] : memref<16x128xf32, #tpu.memory_space<vmem>>, vector<2x128xf32>
    tpu.vector_store %arg13[%c2, %c0_23], %67 {strides = array<i32>} : memref<16x128xf32, #tpu.memory_space<vmem>>, vector<2x128xf32>,
    %cst_24 = arith.constant dense<0.000000e+00> : vector<2x512xf32>
    %69 = tpu.matmul %66, %0, %cst_24 {dimension_numbers = #tpu.dot_dimension_numbers<[1], [0], [0], [1], [0, 0, 1, 1], [], []>} : vector<2x128xf32>, vector<128x512xf32>, vector<2x512xf32> -> vector<2x512xf32>
    %70 = arith.addf %8, %69 : vector<2x512xf32>
    %71 = vector.extract_strided_slice %70 {offsets = [0, 0], sizes = [2, 128], strides = [1, 1]} : vector<2x512xf32> to vector<2x128xf32>
    %72 = arith.negf %71 : vector<2x128xf32>
    %73 = math.exp %72 : vector<2x128xf32>
    %cst_25 = arith.constant 1.000000e+00 : f32
    %74 = vector.broadcast %cst_25 : f32 to vector<2x128xf32>
    %75 = arith.addf %74, %73 : vector<2x128xf32>
    %76 = arith.divf %74, %75 : vector<2x128xf32>
    %77 = vector.extract_strided_slice %70 {offsets = [0, 128], sizes = [2, 128], strides = [1, 1]} : vector<2x512xf32> to vector<2x128xf32>
    %78 = arith.negf %77 : vector<2x128xf32>
    %79 = math.exp %78 : vector<2x128xf32>
    %cst_26 = arith.constant 1.000000e+00 : f32
    %80 = vector.broadcast %cst_26 : f32 to vector<2x128xf32>
    %81 = arith.addf %80, %79 : vector<2x128xf32>
    %82 = arith.divf %80, %81 : vector<2x128xf32>
    %83 = vector.extract_strided_slice %70 {offsets = [0, 256], sizes = [2, 128], strides = [1, 1]} : vector<2x512xf32> to vector<2x128xf32>
    %84 = math.tanh %83 : vector<2x128xf32>
    %85 = vector.extract_strided_slice %70 {offsets = [0, 384], sizes = [2, 128], strides = [1, 1]} : vector<2x512xf32> to vector<2x128xf32>
    %86 = arith.negf %85 : vector<2x128xf32>
    %87 = math.exp %86 : vector<2x128xf32>
    %cst_27 = arith.constant 1.000000e+00 : f32
    %88 = vector.broadcast %cst_27 : f32 to vector<2x128xf32>
    %89 = arith.addf %88, %87 : vector<2x128xf32>
    %90 = arith.divf %88, %89 : vector<2x128xf32>
    %91 = arith.mulf %82, %64 : vector<2x128xf32>
    %92 = arith.mulf %76, %84 : vector<2x128xf32>
    %93 = arith.addf %91, %92 : vector<2x128xf32>
    %94 = math.tanh %93 : vector<2x128xf32>
    %95 = arith.mulf %90, %94 : vector<2x128xf32>
    %96 = math.tanh %95 : vector<2x128xf32>
    %c4 = arith.constant 4 : index
    %c0_28 = arith.constant 0 : index
    %97 = vector.load %arg13[%c4, %c0_28] : memref<16x128xf32, #tpu.memory_space<vmem>>, vector<2x128xf32>
    tpu.vector_store %arg13[%c4, %c0_28], %96 {strides = array<i32>} : memref<16x128xf32, #tpu.memory_space<vmem>>, vector<2x128xf32>,
    %cst_29 = arith.constant dense<0.000000e+00> : vector<2x512xf32>
    %98 = tpu.matmul %95, %0, %cst_29 {dimension_numbers = #tpu.dot_dimension_numbers<[1], [0], [0], [1], [0, 0, 1, 1], [], []>} : vector<2x128xf32>, vector<128x512xf32>, vector<2x512xf32> -> vector<2x512xf32>
    %99 = arith.addf %8, %98 : vector<2x512xf32>
    %100 = vector.extract_strided_slice %99 {offsets = [0, 0], sizes = [2, 128], strides = [1, 1]} : vector<2x512xf32> to vector<2x128xf32>
    %101 = arith.negf %100 : vector<2x128xf32>
    %102 = math.exp %101 : vector<2x128xf32>
    %cst_30 = arith.constant 1.000000e+00 : f32
    %103 = vector.broadcast %cst_30 : f32 to vector<2x128xf32>
    %104 = arith.addf %103, %102 : vector<2x128xf32>
    %105 = arith.divf %103, %104 : vector<2x128xf32>
    %106 = vector.extract_strided_slice %99 {offsets = [0, 128], sizes = [2, 128], strides = [1, 1]} : vector<2x512xf32> to vector<2x128xf32>
    %107 = arith.negf %106 : vector<2x128xf32>
    %108 = math.exp %107 : vector<2x128xf32>
    %cst_31 = arith.constant 1.000000e+00 : f32
    %109 = vector.broadcast %cst_31 : f32 to vector<2x128xf32>
    %110 = arith.addf %109, %108 : vector<2x128xf32>
    %111 = arith.divf %109, %110 : vector<2x128xf32>
    %112 = vector.extract_strided_slice %99 {offsets = [0, 256], sizes = [2, 128], strides = [1, 1]} : vector<2x512xf32> to vector<2x128xf32>
    %113 = math.tanh %112 : vector<2x128xf32>
    %114 = vector.extract_strided_slice %99 {offsets = [0, 384], sizes = [2, 128], strides = [1, 1]} : vector<2x512xf32> to vector<2x128xf32>
    %115 = arith.negf %114 : vector<2x128xf32>
    %116 = math.exp %115 : vector<2x128xf32>
    %cst_32 = arith.constant 1.000000e+00 : f32
    %117 = vector.broadcast %cst_32 : f32 to vector<2x128xf32>
    %118 = arith.addf %117, %116 : vector<2x128xf32>
    %119 = arith.divf %117, %118 : vector<2x128xf32>
    %120 = arith.mulf %111, %93 : vector<2x128xf32>
    %121 = arith.mulf %105, %113 : vector<2x128xf32>
    %122 = arith.addf %120, %121 : vector<2x128xf32>
    %123 = math.tanh %122 : vector<2x128xf32>
    %124 = arith.mulf %119, %123 : vector<2x128xf32>
    %125 = math.tanh %124 : vector<2x128xf32>
    %c6 = arith.constant 6 : index
    %c0_33 = arith.constant 0 : index
    %126 = vector.load %arg13[%c6, %c0_33] : memref<16x128xf32, #tpu.memory_space<vmem>>, vector<2x128xf32>
    tpu.vector_store %arg13[%c6, %c0_33], %125 {strides = array<i32>} : memref<16x128xf32, #tpu.memory_space<vmem>>, vector<2x128xf32>,
    %cst_34 = arith.constant dense<0.000000e+00> : vector<2x512xf32>
    %127 = tpu.matmul %124, %0, %cst_34 {dimension_numbers = #tpu.dot_dimension_numbers<[1], [0], [0], [1], [0, 0, 1, 1], [], []>} : vector<2x128xf32>, vector<128x512xf32>, vector<2x512xf32> -> vector<2x512xf32>
    %128 = arith.addf %8, %127 : vector<2x512xf32>
    %129 = vector.extract_strided_slice %128 {offsets = [0, 0], sizes = [2, 128], strides = [1, 1]} : vector<2x512xf32> to vector<2x128xf32>
    %130 = arith.negf %129 : vector<2x128xf32>
    %131 = math.exp %130 : vector<2x128xf32>
    %cst_35 = arith.constant 1.000000e+00 : f32
    %132 = vector.broadcast %cst_35 : f32 to vector<2x128xf32>
    %133 = arith.addf %132, %131 : vector<2x128xf32>
    %134 = arith.divf %132, %133 : vector<2x128xf32>
    %135 = vector.extract_strided_slice %128 {offsets = [0, 128], sizes = [2, 128], strides = [1, 1]} : vector<2x512xf32> to vector<2x128xf32>
    %136 = arith.negf %135 : vector<2x128xf32>
    %137 = math.exp %136 : vector<2x128xf32>
    %cst_36 = arith.constant 1.000000e+00 : f32
    %138 = vector.broadcast %cst_36 : f32 to vector<2x128xf32>
    %139 = arith.addf %138, %137 : vector<2x128xf32>
    %140 = arith.divf %138, %139 : vector<2x128xf32>
    %141 = vector.extract_strided_slice %128 {offsets = [0, 256], sizes = [2, 128], strides = [1, 1]} : vector<2x512xf32> to vector<2x128xf32>
    %142 = math.tanh %141 : vector<2x128xf32>
    %143 = vector.extract_strided_slice %128 {offsets = [0, 384], sizes = [2, 128], strides = [1, 1]} : vector<2x512xf32> to vector<2x128xf32>
    %144 = arith.negf %143 : vector<2x128xf32>
    %145 = math.exp %144 : vector<2x128xf32>
    %cst_37 = arith.constant 1.000000e+00 : f32
    %146 = vector.broadcast %cst_37 : f32 to vector<2x128xf32>
    %147 = arith.addf %146, %145 : vector<2x128xf32>
    %148 = arith.divf %146, %147 : vector<2x128xf32>
    %149 = arith.mulf %140, %122 : vector<2x128xf32>
    %150 = arith.mulf %134, %142 : vector<2x128xf32>
    %151 = arith.addf %149, %150 : vector<2x128xf32>
    %152 = math.tanh %151 : vector<2x128xf32>
    %153 = arith.mulf %148, %152 : vector<2x128xf32>
    %154 = math.tanh %153 : vector<2x128xf32>
    %c8 = arith.constant 8 : index
    %c0_38 = arith.constant 0 : index
    %155 = vector.load %arg13[%c8, %c0_38] : memref<16x128xf32, #tpu.memory_space<vmem>>, vector<2x128xf32>
    tpu.vector_store %arg13[%c8, %c0_38], %154 {strides = array<i32>} : memref<16x128xf32, #tpu.memory_space<vmem>>, vector<2x128xf32>,
    %cst_39 = arith.constant dense<0.000000e+00> : vector<2x512xf32>
    %156 = tpu.matmul %153, %0, %cst_39 {dimension_numbers = #tpu.dot_dimension_numbers<[1], [0], [0], [1], [0, 0, 1, 1], [], []>} : vector<2x128xf32>, vector<128x512xf32>, vector<2x512xf32> -> vector<2x512xf32>
    %157 = arith.addf %8, %156 : vector<2x512xf32>
    %158 = vector.extract_strided_slice %157 {offsets = [0, 0], sizes = [2, 128], strides = [1, 1]} : vector<2x512xf32> to vector<2x128xf32>
    %159 = arith.negf %158 : vector<2x128xf32>
    %160 = math.exp %159 : vector<2x128xf32>
    %cst_40 = arith.constant 1.000000e+00 : f32
    %161 = vector.broadcast %cst_40 : f32 to vector<2x128xf32>
    %162 = arith.addf %161, %160 : vector<2x128xf32>
    %163 = arith.divf %161, %162 : vector<2x128xf32>
    %164 = vector.extract_strided_slice %157 {offsets = [0, 128], sizes = [2, 128], strides = [1, 1]} : vector<2x512xf32> to vector<2x128xf32>
    %165 = arith.negf %164 : vector<2x128xf32>
    %166 = math.exp %165 : vector<2x128xf32>
    %cst_41 = arith.constant 1.000000e+00 : f32
    %167 = vector.broadcast %cst_41 : f32 to vector<2x128xf32>
    %168 = arith.addf %167, %166 : vector<2x128xf32>
    %169 = arith.divf %167, %168 : vector<2x128xf32>
    %170 = vector.extract_strided_slice %157 {offsets = [0, 256], sizes = [2, 128], strides = [1, 1]} : vector<2x512xf32> to vector<2x128xf32>
    %171 = math.tanh %170 : vector<2x128xf32>
    %172 = vector.extract_strided_slice %157 {offsets = [0, 384], sizes = [2, 128], strides = [1, 1]} : vector<2x512xf32> to vector<2x128xf32>
    %173 = arith.negf %172 : vector<2x128xf32>
    %174 = math.exp %173 : vector<2x128xf32>
    %cst_42 = arith.constant 1.000000e+00 : f32
    %175 = vector.broadcast %cst_42 : f32 to vector<2x128xf32>
    %176 = arith.addf %175, %174 : vector<2x128xf32>
    %177 = arith.divf %175, %176 : vector<2x128xf32>
    %178 = arith.mulf %169, %151 : vector<2x128xf32>
    %179 = arith.mulf %163, %171 : vector<2x128xf32>
    %180 = arith.addf %178, %179 : vector<2x128xf32>
    %181 = math.tanh %180 : vector<2x128xf32>
    %182 = arith.mulf %177, %181 : vector<2x128xf32>
    %183 = math.tanh %182 : vector<2x128xf32>
    %c10 = arith.constant 10 : index
    %c0_43 = arith.constant 0 : index
    %184 = vector.load %arg13[%c10, %c0_43] : memref<16x128xf32, #tpu.memory_space<vmem>>, vector<2x128xf32>
    tpu.vector_store %arg13[%c10, %c0_43], %183 {strides = array<i32>} : memref<16x128xf32, #tpu.memory_space<vmem>>, vector<2x128xf32>,
    %cst_44 = arith.constant dense<0.000000e+00> : vector<2x512xf32>
    %185 = tpu.matmul %182, %0, %cst_44 {dimension_numbers = #tpu.dot_dimension_numbers<[1], [0], [0], [1], [0, 0, 1, 1], [], []>} : vector<2x128xf32>, vector<128x512xf32>, vector<2x512xf32> -> vector<2x512xf32>
    %186 = arith.addf %8, %185 : vector<2x512xf32>
    %187 = vector.extract_strided_slice %186 {offsets = [0, 0], sizes = [2, 128], strides = [1, 1]} : vector<2x512xf32> to vector<2x128xf32>
    %188 = arith.negf %187 : vector<2x128xf32>
    %189 = math.exp %188 : vector<2x128xf32>
    %cst_45 = arith.constant 1.000000e+00 : f32
    %190 = vector.broadcast %cst_45 : f32 to vector<2x128xf32>
    %191 = arith.addf %190, %189 : vector<2x128xf32>
    %192 = arith.divf %190, %191 : vector<2x128xf32>
    %193 = vector.extract_strided_slice %186 {offsets = [0, 128], sizes = [2, 128], strides = [1, 1]} : vector<2x512xf32> to vector<2x128xf32>
    %194 = arith.negf %193 : vector<2x128xf32>
    %195 = math.exp %194 : vector<2x128xf32>
    %cst_46 = arith.constant 1.000000e+00 : f32
    %196 = vector.broadcast %cst_46 : f32 to vector<2x128xf32>
    %197 = arith.addf %196, %195 : vector<2x128xf32>
    %198 = arith.divf %196, %197 : vector<2x128xf32>
    %199 = vector.extract_strided_slice %186 {offsets = [0, 256], sizes = [2, 128], strides = [1, 1]} : vector<2x512xf32> to vector<2x128xf32>
    %200 = math.tanh %199 : vector<2x128xf32>
    %201 = vector.extract_strided_slice %186 {offsets = [0, 384], sizes = [2, 128], strides = [1, 1]} : vector<2x512xf32> to vector<2x128xf32>
    %202 = arith.negf %201 : vector<2x128xf32>
    %203 = math.exp %202 : vector<2x128xf32>
    %cst_47 = arith.constant 1.000000e+00 : f32
    %204 = vector.broadcast %cst_47 : f32 to vector<2x128xf32>
    %205 = arith.addf %204, %203 : vector<2x128xf32>
    %206 = arith.divf %204, %205 : vector<2x128xf32>
    %207 = arith.mulf %198, %180 : vector<2x128xf32>
    %208 = arith.mulf %192, %200 : vector<2x128xf32>
    %209 = arith.addf %207, %208 : vector<2x128xf32>
    %210 = math.tanh %209 : vector<2x128xf32>
    %211 = arith.mulf %206, %210 : vector<2x128xf32>
    %212 = math.tanh %211 : vector<2x128xf32>
    %c12 = arith.constant 12 : index
    %c0_48 = arith.constant 0 : index
    %213 = vector.load %arg13[%c12, %c0_48] : memref<16x128xf32, #tpu.memory_space<vmem>>, vector<2x128xf32>
    tpu.vector_store %arg13[%c12, %c0_48], %212 {strides = array<i32>} : memref<16x128xf32, #tpu.memory_space<vmem>>, vector<2x128xf32>,
    %cst_49 = arith.constant dense<0.000000e+00> : vector<2x512xf32>
    %214 = tpu.matmul %211, %0, %cst_49 {dimension_numbers = #tpu.dot_dimension_numbers<[1], [0], [0], [1], [0, 0, 1, 1], [], []>} : vector<2x128xf32>, vector<128x512xf32>, vector<2x512xf32> -> vector<2x512xf32>
    %215 = arith.addf %8, %214 : vector<2x512xf32>
    %216 = vector.extract_strided_slice %215 {offsets = [0, 0], sizes = [2, 128], strides = [1, 1]} : vector<2x512xf32> to vector<2x128xf32>
    %217 = arith.negf %216 : vector<2x128xf32>
    %218 = math.exp %217 : vector<2x128xf32>
    %cst_50 = arith.constant 1.000000e+00 : f32
    %219 = vector.broadcast %cst_50 : f32 to vector<2x128xf32>
    %220 = arith.addf %219, %218 : vector<2x128xf32>
    %221 = arith.divf %219, %220 : vector<2x128xf32>
    %222 = vector.extract_strided_slice %215 {offsets = [0, 128], sizes = [2, 128], strides = [1, 1]} : vector<2x512xf32> to vector<2x128xf32>
    %223 = arith.negf %222 : vector<2x128xf32>
    %224 = math.exp %223 : vector<2x128xf32>
    %cst_51 = arith.constant 1.000000e+00 : f32
    %225 = vector.broadcast %cst_51 : f32 to vector<2x128xf32>
    %226 = arith.addf %225, %224 : vector<2x128xf32>
    %227 = arith.divf %225, %226 : vector<2x128xf32>
    %228 = vector.extract_strided_slice %215 {offsets = [0, 256], sizes = [2, 128], strides = [1, 1]} : vector<2x512xf32> to vector<2x128xf32>
    %229 = math.tanh %228 : vector<2x128xf32>
    %230 = vector.extract_strided_slice %215 {offsets = [0, 384], sizes = [2, 128], strides = [1, 1]} : vector<2x512xf32> to vector<2x128xf32>
    %231 = arith.negf %230 : vector<2x128xf32>
    %232 = math.exp %231 : vector<2x128xf32>
    %cst_52 = arith.constant 1.000000e+00 : f32
    %233 = vector.broadcast %cst_52 : f32 to vector<2x128xf32>
    %234 = arith.addf %233, %232 : vector<2x128xf32>
    %235 = arith.divf %233, %234 : vector<2x128xf32>
    %236 = arith.mulf %227, %209 : vector<2x128xf32>
    %237 = arith.mulf %221, %229 : vector<2x128xf32>
    %238 = arith.addf %236, %237 : vector<2x128xf32>
    %239 = math.tanh %238 : vector<2x128xf32>
    %240 = arith.mulf %235, %239 : vector<2x128xf32>
    %241 = math.tanh %240 : vector<2x128xf32>
    %c14 = arith.constant 14 : index
    %c0_53 = arith.constant 0 : index
    %242 = vector.load %arg13[%c14, %c0_53] : memref<16x128xf32, #tpu.memory_space<vmem>>, vector<2x128xf32>
    tpu.vector_store %arg13[%c14, %c0_53], %241 {strides = array<i32>} : memref<16x128xf32, #tpu.memory_space<vmem>>, vector<2x128xf32>,
    %c0_54 = arith.constant 0 : index
    %c0_55 = arith.constant 0 : index
    %243 = vector.load %arg13[%c0_54, %c0_55] : memref<16x128xf32, #tpu.memory_space<vmem>>, vector<16x128xf32>
    %c0_56 = arith.constant 0 : index
    %c0_57 = arith.constant 0 : index
    %244 = vector.load %arg5[%c0_56, %c0_57] : memref<128x512xf32, #tpu.memory_space<vmem>>, vector<128x512xf32>
    %cst_58 = arith.constant dense<0.000000e+00> : vector<16x512xf32>
    %245 = tpu.matmul %243, %244, %cst_58 {dimension_numbers = #tpu.dot_dimension_numbers<[1], [0], [0], [1], [0, 0, 1, 1], [], []>} : vector<16x128xf32>, vector<128x512xf32>, vector<16x512xf32> -> vector<16x512xf32>
    %c0_59 = arith.constant 0 : index
    %c0_60 = arith.constant 0 : index
    %246 = vector.load %arg7[%c0_59, %c0_60] : memref<1x512xf32, #tpu.memory_space<vmem>>, vector<1x512xf32>
    %247 = vector.broadcast %246 : vector<1x512xf32> to vector<16x512xf32>
    %248 = arith.addf %245, %247 : vector<16x512xf32>
    %cst_61 = arith.constant 0.000000e+00 : f32
    %249 = vector.broadcast %cst_61 : f32 to vector<2x128xf32>
    %cst_62 = arith.constant 0.000000e+00 : f32
    %250 = vector.broadcast %cst_62 : f32 to vector<2x128xf32>
    %251 = vector.extract_strided_slice %248 {offsets = [0, 0], sizes = [2, 512], strides = [1, 1]} : vector<16x512xf32> to vector<2x512xf32>
    %cst_63 = arith.constant dense<0.000000e+00> : vector<2x512xf32>
    %252 = tpu.matmul %249, %1, %cst_63 {dimension_numbers = #tpu.dot_dimension_numbers<[1], [0], [0], [1], [0, 0, 1, 1], [], []>} : vector<2x128xf32>, vector<128x512xf32>, vector<2x512xf32> -> vector<2x512xf32>
    %253 = arith.addf %251, %252 : vector<2x512xf32>
    %254 = vector.extract_strided_slice %253 {offsets = [0, 0], sizes = [2, 128], strides = [1, 1]} : vector<2x512xf32> to vector<2x128xf32>
    %255 = arith.negf %254 : vector<2x128xf32>
    %256 = math.exp %255 : vector<2x128xf32>
    %cst_64 = arith.constant 1.000000e+00 : f32
    %257 = vector.broadcast %cst_64 : f32 to vector<2x128xf32>
    %258 = arith.addf %257, %256 : vector<2x128xf32>
    %259 = arith.divf %257, %258 : vector<2x128xf32>
    %260 = vector.extract_strided_slice %253 {offsets = [0, 128], sizes = [2, 128], strides = [1, 1]} : vector<2x512xf32> to vector<2x128xf32>
    %261 = arith.negf %260 : vector<2x128xf32>
    %262 = math.exp %261 : vector<2x128xf32>
    %cst_65 = arith.constant 1.000000e+00 : f32
    %263 = vector.broadcast %cst_65 : f32 to vector<2x128xf32>
    %264 = arith.addf %263, %262 : vector<2x128xf32>
    %265 = arith.divf %263, %264 : vector<2x128xf32>
    %266 = vector.extract_strided_slice %253 {offsets = [0, 256], sizes = [2, 128], strides = [1, 1]} : vector<2x512xf32> to vector<2x128xf32>
    %267 = math.tanh %266 : vector<2x128xf32>
    %268 = vector.extract_strided_slice %253 {offsets = [0, 384], sizes = [2, 128], strides = [1, 1]} : vector<2x512xf32> to vector<2x128xf32>
    %269 = arith.negf %268 : vector<2x128xf32>
    %270 = math.exp %269 : vector<2x128xf32>
    %cst_66 = arith.constant 1.000000e+00 : f32
    %271 = vector.broadcast %cst_66 : f32 to vector<2x128xf32>
    %272 = arith.addf %271, %270 : vector<2x128xf32>
    %273 = arith.divf %271, %272 : vector<2x128xf32>
    %274 = arith.mulf %265, %250 : vector<2x128xf32>
    %275 = arith.mulf %259, %267 : vector<2x128xf32>
    %276 = arith.addf %274, %275 : vector<2x128xf32>
    %277 = math.tanh %276 : vector<2x128xf32>
    %278 = arith.mulf %273, %277 : vector<2x128xf32>
    %279 = math.tanh %278 : vector<2x128xf32>
    %c0_67 = arith.constant 0 : index
    %c0_68 = arith.constant 0 : index
    %280 = vector.load %arg14[%c0_67, %c0_68] : memref<16x128xf32, #tpu.memory_space<vmem>>, vector<2x128xf32>
    tpu.vector_store %arg14[%c0_67, %c0_68], %279 {strides = array<i32>} : memref<16x128xf32, #tpu.memory_space<vmem>>, vector<2x128xf32>,
    %281 = vector.extract_strided_slice %248 {offsets = [2, 0], sizes = [2, 512], strides = [1, 1]} : vector<16x512xf32> to vector<2x512xf32>
    %cst_69 = arith.constant dense<0.000000e+00> : vector<2x512xf32>
    %282 = tpu.matmul %278, %1, %cst_69 {dimension_numbers = #tpu.dot_dimension_numbers<[1], [0], [0], [1], [0, 0, 1, 1], [], []>} : vector<2x128xf32>, vector<128x512xf32>, vector<2x512xf32> -> vector<2x512xf32>
    %283 = arith.addf %281, %282 : vector<2x512xf32>
    %284 = vector.extract_strided_slice %283 {offsets = [0, 0], sizes = [2, 128], strides = [1, 1]} : vector<2x512xf32> to vector<2x128xf32>
    %285 = arith.negf %284 : vector<2x128xf32>
    %286 = math.exp %285 : vector<2x128xf32>
    %cst_70 = arith.constant 1.000000e+00 : f32
    %287 = vector.broadcast %cst_70 : f32 to vector<2x128xf32>
    %288 = arith.addf %287, %286 : vector<2x128xf32>
    %289 = arith.divf %287, %288 : vector<2x128xf32>
    %290 = vector.extract_strided_slice %283 {offsets = [0, 128], sizes = [2, 128], strides = [1, 1]} : vector<2x512xf32> to vector<2x128xf32>
    %291 = arith.negf %290 : vector<2x128xf32>
    %292 = math.exp %291 : vector<2x128xf32>
    %cst_71 = arith.constant 1.000000e+00 : f32
    %293 = vector.broadcast %cst_71 : f32 to vector<2x128xf32>
    %294 = arith.addf %293, %292 : vector<2x128xf32>
    %295 = arith.divf %293, %294 : vector<2x128xf32>
    %296 = vector.extract_strided_slice %283 {offsets = [0, 256], sizes = [2, 128], strides = [1, 1]} : vector<2x512xf32> to vector<2x128xf32>
    %297 = math.tanh %296 : vector<2x128xf32>
    %298 = vector.extract_strided_slice %283 {offsets = [0, 384], sizes = [2, 128], strides = [1, 1]} : vector<2x512xf32> to vector<2x128xf32>
    %299 = arith.negf %298 : vector<2x128xf32>
    %300 = math.exp %299 : vector<2x128xf32>
    %cst_72 = arith.constant 1.000000e+00 : f32
    %301 = vector.broadcast %cst_72 : f32 to vector<2x128xf32>
    %302 = arith.addf %301, %300 : vector<2x128xf32>
    %303 = arith.divf %301, %302 : vector<2x128xf32>
    %304 = arith.mulf %295, %276 : vector<2x128xf32>
    %305 = arith.mulf %289, %297 : vector<2x128xf32>
    %306 = arith.addf %304, %305 : vector<2x128xf32>
    %307 = math.tanh %306 : vector<2x128xf32>
    %308 = arith.mulf %303, %307 : vector<2x128xf32>
    %309 = math.tanh %308 : vector<2x128xf32>
    %c2_73 = arith.constant 2 : index
    %c0_74 = arith.constant 0 : index
    %310 = vector.load %arg14[%c2_73, %c0_74] : memref<16x128xf32, #tpu.memory_space<vmem>>, vector<2x128xf32>
    tpu.vector_store %arg14[%c2_73, %c0_74], %309 {strides = array<i32>} : memref<16x128xf32, #tpu.memory_space<vmem>>, vector<2x128xf32>,
    %311 = vector.extract_strided_slice %248 {offsets = [4, 0], sizes = [2, 512], strides = [1, 1]} : vector<16x512xf32> to vector<2x512xf32>
    %cst_75 = arith.constant dense<0.000000e+00> : vector<2x512xf32>
    %312 = tpu.matmul %308, %1, %cst_75 {dimension_numbers = #tpu.dot_dimension_numbers<[1], [0], [0], [1], [0, 0, 1, 1], [], []>} : vector<2x128xf32>, vector<128x512xf32>, vector<2x512xf32> -> vector<2x512xf32>
    %313 = arith.addf %311, %312 : vector<2x512xf32>
    %314 = vector.extract_strided_slice %313 {offsets = [0, 0], sizes = [2, 128], strides = [1, 1]} : vector<2x512xf32> to vector<2x128xf32>
    %315 = arith.negf %314 : vector<2x128xf32>
    %316 = math.exp %315 : vector<2x128xf32>
    %cst_76 = arith.constant 1.000000e+00 : f32
    %317 = vector.broadcast %cst_76 : f32 to vector<2x128xf32>
    %318 = arith.addf %317, %316 : vector<2x128xf32>
    %319 = arith.divf %317, %318 : vector<2x128xf32>
    %320 = vector.extract_strided_slice %313 {offsets = [0, 128], sizes = [2, 128], strides = [1, 1]} : vector<2x512xf32> to vector<2x128xf32>
    %321 = arith.negf %320 : vector<2x128xf32>
    %322 = math.exp %321 : vector<2x128xf32>
    %cst_77 = arith.constant 1.000000e+00 : f32
    %323 = vector.broadcast %cst_77 : f32 to vector<2x128xf32>
    %324 = arith.addf %323, %322 : vector<2x128xf32>
    %325 = arith.divf %323, %324 : vector<2x128xf32>
    %326 = vector.extract_strided_slice %313 {offsets = [0, 256], sizes = [2, 128], strides = [1, 1]} : vector<2x512xf32> to vector<2x128xf32>
    %327 = math.tanh %326 : vector<2x128xf32>
    %328 = vector.extract_strided_slice %313 {offsets = [0, 384], sizes = [2, 128], strides = [1, 1]} : vector<2x512xf32> to vector<2x128xf32>
    %329 = arith.negf %328 : vector<2x128xf32>
    %330 = math.exp %329 : vector<2x128xf32>
    %cst_78 = arith.constant 1.000000e+00 : f32
    %331 = vector.broadcast %cst_78 : f32 to vector<2x128xf32>
    %332 = arith.addf %331, %330 : vector<2x128xf32>
    %333 = arith.divf %331, %332 : vector<2x128xf32>
    %334 = arith.mulf %325, %306 : vector<2x128xf32>
    %335 = arith.mulf %319, %327 : vector<2x128xf32>
    %336 = arith.addf %334, %335 : vector<2x128xf32>
    %337 = math.tanh %336 : vector<2x128xf32>
    %338 = arith.mulf %333, %337 : vector<2x128xf32>
    %339 = math.tanh %338 : vector<2x128xf32>
    %c4_79 = arith.constant 4 : index
    %c0_80 = arith.constant 0 : index
    %340 = vector.load %arg14[%c4_79, %c0_80] : memref<16x128xf32, #tpu.memory_space<vmem>>, vector<2x128xf32>
    tpu.vector_store %arg14[%c4_79, %c0_80], %339 {strides = array<i32>} : memref<16x128xf32, #tpu.memory_space<vmem>>, vector<2x128xf32>,
    %341 = vector.extract_strided_slice %248 {offsets = [6, 0], sizes = [2, 512], strides = [1, 1]} : vector<16x512xf32> to vector<2x512xf32>
    %cst_81 = arith.constant dense<0.000000e+00> : vector<2x512xf32>
    %342 = tpu.matmul %338, %1, %cst_81 {dimension_numbers = #tpu.dot_dimension_numbers<[1], [0], [0], [1], [0, 0, 1, 1], [], []>} : vector<2x128xf32>, vector<128x512xf32>, vector<2x512xf32> -> vector<2x512xf32>
    %343 = arith.addf %341, %342 : vector<2x512xf32>
    %344 = vector.extract_strided_slice %343 {offsets = [0, 0], sizes = [2, 128], strides = [1, 1]} : vector<2x512xf32> to vector<2x128xf32>
    %345 = arith.negf %344 : vector<2x128xf32>
    %346 = math.exp %345 : vector<2x128xf32>
    %cst_82 = arith.constant 1.000000e+00 : f32
    %347 = vector.broadcast %cst_82 : f32 to vector<2x128xf32>
    %348 = arith.addf %347, %346 : vector<2x128xf32>
    %349 = arith.divf %347, %348 : vector<2x128xf32>
    %350 = vector.extract_strided_slice %343 {offsets = [0, 128], sizes = [2, 128], strides = [1, 1]} : vector<2x512xf32> to vector<2x128xf32>
    %351 = arith.negf %350 : vector<2x128xf32>
    %352 = math.exp %351 : vector<2x128xf32>
    %cst_83 = arith.constant 1.000000e+00 : f32
    %353 = vector.broadcast %cst_83 : f32 to vector<2x128xf32>
    %354 = arith.addf %353, %352 : vector<2x128xf32>
    %355 = arith.divf %353, %354 : vector<2x128xf32>
    %356 = vector.extract_strided_slice %343 {offsets = [0, 256], sizes = [2, 128], strides = [1, 1]} : vector<2x512xf32> to vector<2x128xf32>
    %357 = math.tanh %356 : vector<2x128xf32>
    %358 = vector.extract_strided_slice %343 {offsets = [0, 384], sizes = [2, 128], strides = [1, 1]} : vector<2x512xf32> to vector<2x128xf32>
    %359 = arith.negf %358 : vector<2x128xf32>
    %360 = math.exp %359 : vector<2x128xf32>
    %cst_84 = arith.constant 1.000000e+00 : f32
    %361 = vector.broadcast %cst_84 : f32 to vector<2x128xf32>
    %362 = arith.addf %361, %360 : vector<2x128xf32>
    %363 = arith.divf %361, %362 : vector<2x128xf32>
    %364 = arith.mulf %355, %336 : vector<2x128xf32>
    %365 = arith.mulf %349, %357 : vector<2x128xf32>
    %366 = arith.addf %364, %365 : vector<2x128xf32>
    %367 = math.tanh %366 : vector<2x128xf32>
    %368 = arith.mulf %363, %367 : vector<2x128xf32>
    %369 = math.tanh %368 : vector<2x128xf32>
    %c6_85 = arith.constant 6 : index
    %c0_86 = arith.constant 0 : index
    %370 = vector.load %arg14[%c6_85, %c0_86] : memref<16x128xf32, #tpu.memory_space<vmem>>, vector<2x128xf32>
    tpu.vector_store %arg14[%c6_85, %c0_86], %369 {strides = array<i32>} : memref<16x128xf32, #tpu.memory_space<vmem>>, vector<2x128xf32>,
    %371 = vector.extract_strided_slice %248 {offsets = [8, 0], sizes = [2, 512], strides = [1, 1]} : vector<16x512xf32> to vector<2x512xf32>
    %cst_87 = arith.constant dense<0.000000e+00> : vector<2x512xf32>
    %372 = tpu.matmul %368, %1, %cst_87 {dimension_numbers = #tpu.dot_dimension_numbers<[1], [0], [0], [1], [0, 0, 1, 1], [], []>} : vector<2x128xf32>, vector<128x512xf32>, vector<2x512xf32> -> vector<2x512xf32>
    %373 = arith.addf %371, %372 : vector<2x512xf32>
    %374 = vector.extract_strided_slice %373 {offsets = [0, 0], sizes = [2, 128], strides = [1, 1]} : vector<2x512xf32> to vector<2x128xf32>
    %375 = arith.negf %374 : vector<2x128xf32>
    %376 = math.exp %375 : vector<2x128xf32>
    %cst_88 = arith.constant 1.000000e+00 : f32
    %377 = vector.broadcast %cst_88 : f32 to vector<2x128xf32>
    %378 = arith.addf %377, %376 : vector<2x128xf32>
    %379 = arith.divf %377, %378 : vector<2x128xf32>
    %380 = vector.extract_strided_slice %373 {offsets = [0, 128], sizes = [2, 128], strides = [1, 1]} : vector<2x512xf32> to vector<2x128xf32>
    %381 = arith.negf %380 : vector<2x128xf32>
    %382 = math.exp %381 : vector<2x128xf32>
    %cst_89 = arith.constant 1.000000e+00 : f32
    %383 = vector.broadcast %cst_89 : f32 to vector<2x128xf32>
    %384 = arith.addf %383, %382 : vector<2x128xf32>
    %385 = arith.divf %383, %384 : vector<2x128xf32>
    %386 = vector.extract_strided_slice %373 {offsets = [0, 256], sizes = [2, 128], strides = [1, 1]} : vector<2x512xf32> to vector<2x128xf32>
    %387 = math.tanh %386 : vector<2x128xf32>
    %388 = vector.extract_strided_slice %373 {offsets = [0, 384], sizes = [2, 128], strides = [1, 1]} : vector<2x512xf32> to vector<2x128xf32>
    %389 = arith.negf %388 : vector<2x128xf32>
    %390 = math.exp %389 : vector<2x128xf32>
    %cst_90 = arith.constant 1.000000e+00 : f32
    %391 = vector.broadcast %cst_90 : f32 to vector<2x128xf32>
    %392 = arith.addf %391, %390 : vector<2x128xf32>
    %393 = arith.divf %391, %392 : vector<2x128xf32>
    %394 = arith.mulf %385, %366 : vector<2x128xf32>
    %395 = arith.mulf %379, %387 : vector<2x128xf32>
    %396 = arith.addf %394, %395 : vector<2x128xf32>
    %397 = math.tanh %396 : vector<2x128xf32>
    %398 = arith.mulf %393, %397 : vector<2x128xf32>
    %399 = math.tanh %398 : vector<2x128xf32>
    %c8_91 = arith.constant 8 : index
    %c0_92 = arith.constant 0 : index
    %400 = vector.load %arg14[%c8_91, %c0_92] : memref<16x128xf32, #tpu.memory_space<vmem>>, vector<2x128xf32>
    tpu.vector_store %arg14[%c8_91, %c0_92], %399 {strides = array<i32>} : memref<16x128xf32, #tpu.memory_space<vmem>>, vector<2x128xf32>,
    %401 = vector.extract_strided_slice %248 {offsets = [10, 0], sizes = [2, 512], strides = [1, 1]} : vector<16x512xf32> to vector<2x512xf32>
    %cst_93 = arith.constant dense<0.000000e+00> : vector<2x512xf32>
    %402 = tpu.matmul %398, %1, %cst_93 {dimension_numbers = #tpu.dot_dimension_numbers<[1], [0], [0], [1], [0, 0, 1, 1], [], []>} : vector<2x128xf32>, vector<128x512xf32>, vector<2x512xf32> -> vector<2x512xf32>
    %403 = arith.addf %401, %402 : vector<2x512xf32>
    %404 = vector.extract_strided_slice %403 {offsets = [0, 0], sizes = [2, 128], strides = [1, 1]} : vector<2x512xf32> to vector<2x128xf32>
    %405 = arith.negf %404 : vector<2x128xf32>
    %406 = math.exp %405 : vector<2x128xf32>
    %cst_94 = arith.constant 1.000000e+00 : f32
    %407 = vector.broadcast %cst_94 : f32 to vector<2x128xf32>
    %408 = arith.addf %407, %406 : vector<2x128xf32>
    %409 = arith.divf %407, %408 : vector<2x128xf32>
    %410 = vector.extract_strided_slice %403 {offsets = [0, 128], sizes = [2, 128], strides = [1, 1]} : vector<2x512xf32> to vector<2x128xf32>
    %411 = arith.negf %410 : vector<2x128xf32>
    %412 = math.exp %411 : vector<2x128xf32>
    %cst_95 = arith.constant 1.000000e+00 : f32
    %413 = vector.broadcast %cst_95 : f32 to vector<2x128xf32>
    %414 = arith.addf %413, %412 : vector<2x128xf32>
    %415 = arith.divf %413, %414 : vector<2x128xf32>
    %416 = vector.extract_strided_slice %403 {offsets = [0, 256], sizes = [2, 128], strides = [1, 1]} : vector<2x512xf32> to vector<2x128xf32>
    %417 = math.tanh %416 : vector<2x128xf32>
    %418 = vector.extract_strided_slice %403 {offsets = [0, 384], sizes = [2, 128], strides = [1, 1]} : vector<2x512xf32> to vector<2x128xf32>
    %419 = arith.negf %418 : vector<2x128xf32>
    %420 = math.exp %419 : vector<2x128xf32>
    %cst_96 = arith.constant 1.000000e+00 : f32
    %421 = vector.broadcast %cst_96 : f32 to vector<2x128xf32>
    %422 = arith.addf %421, %420 : vector<2x128xf32>
    %423 = arith.divf %421, %422 : vector<2x128xf32>
    %424 = arith.mulf %415, %396 : vector<2x128xf32>
    %425 = arith.mulf %409, %417 : vector<2x128xf32>
    %426 = arith.addf %424, %425 : vector<2x128xf32>
    %427 = math.tanh %426 : vector<2x128xf32>
    %428 = arith.mulf %423, %427 : vector<2x128xf32>
    %429 = math.tanh %428 : vector<2x128xf32>
    %c10_97 = arith.constant 10 : index
    %c0_98 = arith.constant 0 : index
    %430 = vector.load %arg14[%c10_97, %c0_98] : memref<16x128xf32, #tpu.memory_space<vmem>>, vector<2x128xf32>
    tpu.vector_store %arg14[%c10_97, %c0_98], %429 {strides = array<i32>} : memref<16x128xf32, #tpu.memory_space<vmem>>, vector<2x128xf32>,
    %431 = vector.extract_strided_slice %248 {offsets = [12, 0], sizes = [2, 512], strides = [1, 1]} : vector<16x512xf32> to vector<2x512xf32>
    %cst_99 = arith.constant dense<0.000000e+00> : vector<2x512xf32>
    %432 = tpu.matmul %428, %1, %cst_99 {dimension_numbers = #tpu.dot_dimension_numbers<[1], [0], [0], [1], [0, 0, 1, 1], [], []>} : vector<2x128xf32>, vector<128x512xf32>, vector<2x512xf32> -> vector<2x512xf32>
    %433 = arith.addf %431, %432 : vector<2x512xf32>
    %434 = vector.extract_strided_slice %433 {offsets = [0, 0], sizes = [2, 128], strides = [1, 1]} : vector<2x512xf32> to vector<2x128xf32>
    %435 = arith.negf %434 : vector<2x128xf32>
    %436 = math.exp %435 : vector<2x128xf32>
    %cst_100 = arith.constant 1.000000e+00 : f32
    %437 = vector.broadcast %cst_100 : f32 to vector<2x128xf32>
    %438 = arith.addf %437, %436 : vector<2x128xf32>
    %439 = arith.divf %437, %438 : vector<2x128xf32>
    %440 = vector.extract_strided_slice %433 {offsets = [0, 128], sizes = [2, 128], strides = [1, 1]} : vector<2x512xf32> to vector<2x128xf32>
    %441 = arith.negf %440 : vector<2x128xf32>
    %442 = math.exp %441 : vector<2x128xf32>
    %cst_101 = arith.constant 1.000000e+00 : f32
    %443 = vector.broadcast %cst_101 : f32 to vector<2x128xf32>
    %444 = arith.addf %443, %442 : vector<2x128xf32>
    %445 = arith.divf %443, %444 : vector<2x128xf32>
    %446 = vector.extract_strided_slice %433 {offsets = [0, 256], sizes = [2, 128], strides = [1, 1]} : vector<2x512xf32> to vector<2x128xf32>
    %447 = math.tanh %446 : vector<2x128xf32>
    %448 = vector.extract_strided_slice %433 {offsets = [0, 384], sizes = [2, 128], strides = [1, 1]} : vector<2x512xf32> to vector<2x128xf32>
    %449 = arith.negf %448 : vector<2x128xf32>
    %450 = math.exp %449 : vector<2x128xf32>
    %cst_102 = arith.constant 1.000000e+00 : f32
    %451 = vector.broadcast %cst_102 : f32 to vector<2x128xf32>
    %452 = arith.addf %451, %450 : vector<2x128xf32>
    %453 = arith.divf %451, %452 : vector<2x128xf32>
    %454 = arith.mulf %445, %426 : vector<2x128xf32>
    %455 = arith.mulf %439, %447 : vector<2x128xf32>
    %456 = arith.addf %454, %455 : vector<2x128xf32>
    %457 = math.tanh %456 : vector<2x128xf32>
    %458 = arith.mulf %453, %457 : vector<2x128xf32>
    %459 = math.tanh %458 : vector<2x128xf32>
    %c12_103 = arith.constant 12 : index
    %c0_104 = arith.constant 0 : index
    %460 = vector.load %arg14[%c12_103, %c0_104] : memref<16x128xf32, #tpu.memory_space<vmem>>, vector<2x128xf32>
    tpu.vector_store %arg14[%c12_103, %c0_104], %459 {strides = array<i32>} : memref<16x128xf32, #tpu.memory_space<vmem>>, vector<2x128xf32>,
    %461 = vector.extract_strided_slice %248 {offsets = [14, 0], sizes = [2, 512], strides = [1, 1]} : vector<16x512xf32> to vector<2x512xf32>
    %cst_105 = arith.constant dense<0.000000e+00> : vector<2x512xf32>
    %462 = tpu.matmul %458, %1, %cst_105 {dimension_numbers = #tpu.dot_dimension_numbers<[1], [0], [0], [1], [0, 0, 1, 1], [], []>} : vector<2x128xf32>, vector<128x512xf32>, vector<2x512xf32> -> vector<2x512xf32>
    %463 = arith.addf %461, %462 : vector<2x512xf32>
    %464 = vector.extract_strided_slice %463 {offsets = [0, 0], sizes = [2, 128], strides = [1, 1]} : vector<2x512xf32> to vector<2x128xf32>
    %465 = arith.negf %464 : vector<2x128xf32>
    %466 = math.exp %465 : vector<2x128xf32>
    %cst_106 = arith.constant 1.000000e+00 : f32
    %467 = vector.broadcast %cst_106 : f32 to vector<2x128xf32>
    %468 = arith.addf %467, %466 : vector<2x128xf32>
    %469 = arith.divf %467, %468 : vector<2x128xf32>
    %470 = vector.extract_strided_slice %463 {offsets = [0, 128], sizes = [2, 128], strides = [1, 1]} : vector<2x512xf32> to vector<2x128xf32>
    %471 = arith.negf %470 : vector<2x128xf32>
    %472 = math.exp %471 : vector<2x128xf32>
    %cst_107 = arith.constant 1.000000e+00 : f32
    %473 = vector.broadcast %cst_107 : f32 to vector<2x128xf32>
    %474 = arith.addf %473, %472 : vector<2x128xf32>
    %475 = arith.divf %473, %474 : vector<2x128xf32>
    %476 = vector.extract_strided_slice %463 {offsets = [0, 256], sizes = [2, 128], strides = [1, 1]} : vector<2x512xf32> to vector<2x128xf32>
    %477 = math.tanh %476 : vector<2x128xf32>
    %478 = vector.extract_strided_slice %463 {offsets = [0, 384], sizes = [2, 128], strides = [1, 1]} : vector<2x512xf32> to vector<2x128xf32>
    %479 = arith.negf %478 : vector<2x128xf32>
    %480 = math.exp %479 : vector<2x128xf32>
    %cst_108 = arith.constant 1.000000e+00 : f32
    %481 = vector.broadcast %cst_108 : f32 to vector<2x128xf32>
    %482 = arith.addf %481, %480 : vector<2x128xf32>
    %483 = arith.divf %481, %482 : vector<2x128xf32>
    %484 = arith.mulf %475, %456 : vector<2x128xf32>
    %485 = arith.mulf %469, %477 : vector<2x128xf32>
    %486 = arith.addf %484, %485 : vector<2x128xf32>
    %487 = math.tanh %486 : vector<2x128xf32>
    %488 = arith.mulf %483, %487 : vector<2x128xf32>
    %489 = math.tanh %488 : vector<2x128xf32>
    %c14_109 = arith.constant 14 : index
    %c0_110 = arith.constant 0 : index
    %490 = vector.load %arg14[%c14_109, %c0_110] : memref<16x128xf32, #tpu.memory_space<vmem>>, vector<2x128xf32>
    tpu.vector_store %arg14[%c14_109, %c0_110], %489 {strides = array<i32>} : memref<16x128xf32, #tpu.memory_space<vmem>>, vector<2x128xf32>,
    %c0_111 = arith.constant 0 : index
    %c0_112 = arith.constant 0 : index
    %491 = vector.load %arg14[%c0_111, %c0_112] : memref<16x128xf32, #tpu.memory_space<vmem>>, vector<16x128xf32>
    %c0_113 = arith.constant 0 : index
    %c0_114 = arith.constant 0 : index
    %492 = vector.load %arg8[%c0_113, %c0_114] : memref<128x512xf32, #tpu.memory_space<vmem>>, vector<128x512xf32>
    %cst_115 = arith.constant dense<0.000000e+00> : vector<16x512xf32>
    %493 = tpu.matmul %491, %492, %cst_115 {dimension_numbers = #tpu.dot_dimension_numbers<[1], [0], [0], [1], [0, 0, 1, 1], [], []>} : vector<16x128xf32>, vector<128x512xf32>, vector<16x512xf32> -> vector<16x512xf32>
    %c0_116 = arith.constant 0 : index
    %c0_117 = arith.constant 0 : index
    %494 = vector.load %arg10[%c0_116, %c0_117] : memref<1x512xf32, #tpu.memory_space<vmem>>, vector<1x512xf32>
    %495 = vector.broadcast %494 : vector<1x512xf32> to vector<16x512xf32>
    %496 = arith.addf %493, %495 : vector<16x512xf32>
    %cst_118 = arith.constant 0.000000e+00 : f32
    %497 = vector.broadcast %cst_118 : f32 to vector<2x128xf32>
    %cst_119 = arith.constant 0.000000e+00 : f32
    %498 = vector.broadcast %cst_119 : f32 to vector<2x128xf32>
    %499 = vector.extract_strided_slice %496 {offsets = [0, 0], sizes = [2, 512], strides = [1, 1]} : vector<16x512xf32> to vector<2x512xf32>
    %cst_120 = arith.constant dense<0.000000e+00> : vector<2x512xf32>
    %500 = tpu.matmul %497, %2, %cst_120 {dimension_numbers = #tpu.dot_dimension_numbers<[1], [0], [0], [1], [0, 0, 1, 1], [], []>} : vector<2x128xf32>, vector<128x512xf32>, vector<2x512xf32> -> vector<2x512xf32>
    %501 = arith.addf %499, %500 : vector<2x512xf32>
    %502 = vector.extract_strided_slice %501 {offsets = [0, 0], sizes = [2, 128], strides = [1, 1]} : vector<2x512xf32> to vector<2x128xf32>
    %503 = arith.negf %502 : vector<2x128xf32>
    %504 = math.exp %503 : vector<2x128xf32>
    %cst_121 = arith.constant 1.000000e+00 : f32
    %505 = vector.broadcast %cst_121 : f32 to vector<2x128xf32>
    %506 = arith.addf %505, %504 : vector<2x128xf32>
    %507 = arith.divf %505, %506 : vector<2x128xf32>
    %508 = vector.extract_strided_slice %501 {offsets = [0, 128], sizes = [2, 128], strides = [1, 1]} : vector<2x512xf32> to vector<2x128xf32>
    %509 = arith.negf %508 : vector<2x128xf32>
    %510 = math.exp %509 : vector<2x128xf32>
    %cst_122 = arith.constant 1.000000e+00 : f32
    %511 = vector.broadcast %cst_122 : f32 to vector<2x128xf32>
    %512 = arith.addf %511, %510 : vector<2x128xf32>
    %513 = arith.divf %511, %512 : vector<2x128xf32>
    %514 = vector.extract_strided_slice %501 {offsets = [0, 256], sizes = [2, 128], strides = [1, 1]} : vector<2x512xf32> to vector<2x128xf32>
    %515 = math.tanh %514 : vector<2x128xf32>
    %516 = vector.extract_strided_slice %501 {offsets = [0, 384], sizes = [2, 128], strides = [1, 1]} : vector<2x512xf32> to vector<2x128xf32>
    %517 = arith.negf %516 : vector<2x128xf32>
    %518 = math.exp %517 : vector<2x128xf32>
    %cst_123 = arith.constant 1.000000e+00 : f32
    %519 = vector.broadcast %cst_123 : f32 to vector<2x128xf32>
    %520 = arith.addf %519, %518 : vector<2x128xf32>
    %521 = arith.divf %519, %520 : vector<2x128xf32>
    %522 = arith.mulf %513, %498 : vector<2x128xf32>
    %523 = arith.mulf %507, %515 : vector<2x128xf32>
    %524 = arith.addf %522, %523 : vector<2x128xf32>
    %525 = math.tanh %524 : vector<2x128xf32>
    %526 = arith.mulf %521, %525 : vector<2x128xf32>
    %527 = math.tanh %526 : vector<2x128xf32>
    %c0_124 = arith.constant 0 : index
    %c0_125 = arith.constant 0 : index
    %528 = vector.load %arg15[%c0_124, %c0_125] : memref<2x1024xf32, #tpu.memory_space<vmem>>, vector<2x128xf32>
    tpu.vector_store %arg15[%c0_124, %c0_125], %527 {strides = array<i32>} : memref<2x1024xf32, #tpu.memory_space<vmem>>, vector<2x128xf32>,
    %529 = vector.extract_strided_slice %496 {offsets = [2, 0], sizes = [2, 512], strides = [1, 1]} : vector<16x512xf32> to vector<2x512xf32>
    %cst_126 = arith.constant dense<0.000000e+00> : vector<2x512xf32>
    %530 = tpu.matmul %526, %2, %cst_126 {dimension_numbers = #tpu.dot_dimension_numbers<[1], [0], [0], [1], [0, 0, 1, 1], [], []>} : vector<2x128xf32>, vector<128x512xf32>, vector<2x512xf32> -> vector<2x512xf32>
    %531 = arith.addf %529, %530 : vector<2x512xf32>
    %532 = vector.extract_strided_slice %531 {offsets = [0, 0], sizes = [2, 128], strides = [1, 1]} : vector<2x512xf32> to vector<2x128xf32>
    %533 = arith.negf %532 : vector<2x128xf32>
    %534 = math.exp %533 : vector<2x128xf32>
    %cst_127 = arith.constant 1.000000e+00 : f32
    %535 = vector.broadcast %cst_127 : f32 to vector<2x128xf32>
    %536 = arith.addf %535, %534 : vector<2x128xf32>
    %537 = arith.divf %535, %536 : vector<2x128xf32>
    %538 = vector.extract_strided_slice %531 {offsets = [0, 128], sizes = [2, 128], strides = [1, 1]} : vector<2x512xf32> to vector<2x128xf32>
    %539 = arith.negf %538 : vector<2x128xf32>
    %540 = math.exp %539 : vector<2x128xf32>
    %cst_128 = arith.constant 1.000000e+00 : f32
    %541 = vector.broadcast %cst_128 : f32 to vector<2x128xf32>
    %542 = arith.addf %541, %540 : vector<2x128xf32>
    %543 = arith.divf %541, %542 : vector<2x128xf32>
    %544 = vector.extract_strided_slice %531 {offsets = [0, 256], sizes = [2, 128], strides = [1, 1]} : vector<2x512xf32> to vector<2x128xf32>
    %545 = math.tanh %544 : vector<2x128xf32>
    %546 = vector.extract_strided_slice %531 {offsets = [0, 384], sizes = [2, 128], strides = [1, 1]} : vector<2x512xf32> to vector<2x128xf32>
    %547 = arith.negf %546 : vector<2x128xf32>
    %548 = math.exp %547 : vector<2x128xf32>
    %cst_129 = arith.constant 1.000000e+00 : f32
    %549 = vector.broadcast %cst_129 : f32 to vector<2x128xf32>
    %550 = arith.addf %549, %548 : vector<2x128xf32>
    %551 = arith.divf %549, %550 : vector<2x128xf32>
    %552 = arith.mulf %543, %524 : vector<2x128xf32>
    %553 = arith.mulf %537, %545 : vector<2x128xf32>
    %554 = arith.addf %552, %553 : vector<2x128xf32>
    %555 = math.tanh %554 : vector<2x128xf32>
    %556 = arith.mulf %551, %555 : vector<2x128xf32>
    %557 = math.tanh %556 : vector<2x128xf32>
    %c0_130 = arith.constant 0 : index
    %c128 = arith.constant 128 : index
    %558 = vector.load %arg15[%c0_130, %c128] : memref<2x1024xf32, #tpu.memory_space<vmem>>, vector<2x128xf32>
    tpu.vector_store %arg15[%c0_130, %c128], %557 {strides = array<i32>} : memref<2x1024xf32, #tpu.memory_space<vmem>>, vector<2x128xf32>,
    %559 = vector.extract_strided_slice %496 {offsets = [4, 0], sizes = [2, 512], strides = [1, 1]} : vector<16x512xf32> to vector<2x512xf32>
    %cst_131 = arith.constant dense<0.000000e+00> : vector<2x512xf32>
    %560 = tpu.matmul %556, %2, %cst_131 {dimension_numbers = #tpu.dot_dimension_numbers<[1], [0], [0], [1], [0, 0, 1, 1], [], []>} : vector<2x128xf32>, vector<128x512xf32>, vector<2x512xf32> -> vector<2x512xf32>
    %561 = arith.addf %559, %560 : vector<2x512xf32>
    %562 = vector.extract_strided_slice %561 {offsets = [0, 0], sizes = [2, 128], strides = [1, 1]} : vector<2x512xf32> to vector<2x128xf32>
    %563 = arith.negf %562 : vector<2x128xf32>
    %564 = math.exp %563 : vector<2x128xf32>
    %cst_132 = arith.constant 1.000000e+00 : f32
    %565 = vector.broadcast %cst_132 : f32 to vector<2x128xf32>
    %566 = arith.addf %565, %564 : vector<2x128xf32>
    %567 = arith.divf %565, %566 : vector<2x128xf32>
    %568 = vector.extract_strided_slice %561 {offsets = [0, 128], sizes = [2, 128], strides = [1, 1]} : vector<2x512xf32> to vector<2x128xf32>
    %569 = arith.negf %568 : vector<2x128xf32>
    %570 = math.exp %569 : vector<2x128xf32>
    %cst_133 = arith.constant 1.000000e+00 : f32
    %571 = vector.broadcast %cst_133 : f32 to vector<2x128xf32>
    %572 = arith.addf %571, %570 : vector<2x128xf32>
    %573 = arith.divf %571, %572 : vector<2x128xf32>
    %574 = vector.extract_strided_slice %561 {offsets = [0, 256], sizes = [2, 128], strides = [1, 1]} : vector<2x512xf32> to vector<2x128xf32>
    %575 = math.tanh %574 : vector<2x128xf32>
    %576 = vector.extract_strided_slice %561 {offsets = [0, 384], sizes = [2, 128], strides = [1, 1]} : vector<2x512xf32> to vector<2x128xf32>
    %577 = arith.negf %576 : vector<2x128xf32>
    %578 = math.exp %577 : vector<2x128xf32>
    %cst_134 = arith.constant 1.000000e+00 : f32
    %579 = vector.broadcast %cst_134 : f32 to vector<2x128xf32>
    %580 = arith.addf %579, %578 : vector<2x128xf32>
    %581 = arith.divf %579, %580 : vector<2x128xf32>
    %582 = arith.mulf %573, %554 : vector<2x128xf32>
    %583 = arith.mulf %567, %575 : vector<2x128xf32>
    %584 = arith.addf %582, %583 : vector<2x128xf32>
    %585 = math.tanh %584 : vector<2x128xf32>
    %586 = arith.mulf %581, %585 : vector<2x128xf32>
    %587 = math.tanh %586 : vector<2x128xf32>
    %c0_135 = arith.constant 0 : index
    %c256 = arith.constant 256 : index
    %588 = vector.load %arg15[%c0_135, %c256] : memref<2x1024xf32, #tpu.memory_space<vmem>>, vector<2x128xf32>
    tpu.vector_store %arg15[%c0_135, %c256], %587 {strides = array<i32>} : memref<2x1024xf32, #tpu.memory_space<vmem>>, vector<2x128xf32>,
    %589 = vector.extract_strided_slice %496 {offsets = [6, 0], sizes = [2, 512], strides = [1, 1]} : vector<16x512xf32> to vector<2x512xf32>
    %cst_136 = arith.constant dense<0.000000e+00> : vector<2x512xf32>
    %590 = tpu.matmul %586, %2, %cst_136 {dimension_numbers = #tpu.dot_dimension_numbers<[1], [0], [0], [1], [0, 0, 1, 1], [], []>} : vector<2x128xf32>, vector<128x512xf32>, vector<2x512xf32> -> vector<2x512xf32>
    %591 = arith.addf %589, %590 : vector<2x512xf32>
    %592 = vector.extract_strided_slice %591 {offsets = [0, 0], sizes = [2, 128], strides = [1, 1]} : vector<2x512xf32> to vector<2x128xf32>
    %593 = arith.negf %592 : vector<2x128xf32>
    %594 = math.exp %593 : vector<2x128xf32>
    %cst_137 = arith.constant 1.000000e+00 : f32
    %595 = vector.broadcast %cst_137 : f32 to vector<2x128xf32>
    %596 = arith.addf %595, %594 : vector<2x128xf32>
    %597 = arith.divf %595, %596 : vector<2x128xf32>
    %598 = vector.extract_strided_slice %591 {offsets = [0, 128], sizes = [2, 128], strides = [1, 1]} : vector<2x512xf32> to vector<2x128xf32>
    %599 = arith.negf %598 : vector<2x128xf32>
    %600 = math.exp %599 : vector<2x128xf32>
    %cst_138 = arith.constant 1.000000e+00 : f32
    %601 = vector.broadcast %cst_138 : f32 to vector<2x128xf32>
    %602 = arith.addf %601, %600 : vector<2x128xf32>
    %603 = arith.divf %601, %602 : vector<2x128xf32>
    %604 = vector.extract_strided_slice %591 {offsets = [0, 256], sizes = [2, 128], strides = [1, 1]} : vector<2x512xf32> to vector<2x128xf32>
    %605 = math.tanh %604 : vector<2x128xf32>
    %606 = vector.extract_strided_slice %591 {offsets = [0, 384], sizes = [2, 128], strides = [1, 1]} : vector<2x512xf32> to vector<2x128xf32>
    %607 = arith.negf %606 : vector<2x128xf32>
    %608 = math.exp %607 : vector<2x128xf32>
    %cst_139 = arith.constant 1.000000e+00 : f32
    %609 = vector.broadcast %cst_139 : f32 to vector<2x128xf32>
    %610 = arith.addf %609, %608 : vector<2x128xf32>
    %611 = arith.divf %609, %610 : vector<2x128xf32>
    %612 = arith.mulf %603, %584 : vector<2x128xf32>
    %613 = arith.mulf %597, %605 : vector<2x128xf32>
    %614 = arith.addf %612, %613 : vector<2x128xf32>
    %615 = math.tanh %614 : vector<2x128xf32>
    %616 = arith.mulf %611, %615 : vector<2x128xf32>
    %617 = math.tanh %616 : vector<2x128xf32>
    %c0_140 = arith.constant 0 : index
    %c384 = arith.constant 384 : index
    %618 = vector.load %arg15[%c0_140, %c384] : memref<2x1024xf32, #tpu.memory_space<vmem>>, vector<2x128xf32>
    tpu.vector_store %arg15[%c0_140, %c384], %617 {strides = array<i32>} : memref<2x1024xf32, #tpu.memory_space<vmem>>, vector<2x128xf32>,
    %619 = vector.extract_strided_slice %496 {offsets = [8, 0], sizes = [2, 512], strides = [1, 1]} : vector<16x512xf32> to vector<2x512xf32>
    %cst_141 = arith.constant dense<0.000000e+00> : vector<2x512xf32>
    %620 = tpu.matmul %616, %2, %cst_141 {dimension_numbers = #tpu.dot_dimension_numbers<[1], [0], [0], [1], [0, 0, 1, 1], [], []>} : vector<2x128xf32>, vector<128x512xf32>, vector<2x512xf32> -> vector<2x512xf32>
    %621 = arith.addf %619, %620 : vector<2x512xf32>
    %622 = vector.extract_strided_slice %621 {offsets = [0, 0], sizes = [2, 128], strides = [1, 1]} : vector<2x512xf32> to vector<2x128xf32>
    %623 = arith.negf %622 : vector<2x128xf32>
    %624 = math.exp %623 : vector<2x128xf32>
    %cst_142 = arith.constant 1.000000e+00 : f32
    %625 = vector.broadcast %cst_142 : f32 to vector<2x128xf32>
    %626 = arith.addf %625, %624 : vector<2x128xf32>
    %627 = arith.divf %625, %626 : vector<2x128xf32>
    %628 = vector.extract_strided_slice %621 {offsets = [0, 128], sizes = [2, 128], strides = [1, 1]} : vector<2x512xf32> to vector<2x128xf32>
    %629 = arith.negf %628 : vector<2x128xf32>
    %630 = math.exp %629 : vector<2x128xf32>
    %cst_143 = arith.constant 1.000000e+00 : f32
    %631 = vector.broadcast %cst_143 : f32 to vector<2x128xf32>
    %632 = arith.addf %631, %630 : vector<2x128xf32>
    %633 = arith.divf %631, %632 : vector<2x128xf32>
    %634 = vector.extract_strided_slice %621 {offsets = [0, 256], sizes = [2, 128], strides = [1, 1]} : vector<2x512xf32> to vector<2x128xf32>
    %635 = math.tanh %634 : vector<2x128xf32>
    %636 = vector.extract_strided_slice %621 {offsets = [0, 384], sizes = [2, 128], strides = [1, 1]} : vector<2x512xf32> to vector<2x128xf32>
    %637 = arith.negf %636 : vector<2x128xf32>
    %638 = math.exp %637 : vector<2x128xf32>
    %cst_144 = arith.constant 1.000000e+00 : f32
    %639 = vector.broadcast %cst_144 : f32 to vector<2x128xf32>
    %640 = arith.addf %639, %638 : vector<2x128xf32>
    %641 = arith.divf %639, %640 : vector<2x128xf32>
    %642 = arith.mulf %633, %614 : vector<2x128xf32>
    %643 = arith.mulf %627, %635 : vector<2x128xf32>
    %644 = arith.addf %642, %643 : vector<2x128xf32>
    %645 = math.tanh %644 : vector<2x128xf32>
    %646 = arith.mulf %641, %645 : vector<2x128xf32>
    %647 = math.tanh %646 : vector<2x128xf32>
    %c0_145 = arith.constant 0 : index
    %c512 = arith.constant 512 : index
    %648 = vector.load %arg15[%c0_145, %c512] : memref<2x1024xf32, #tpu.memory_space<vmem>>, vector<2x128xf32>
    tpu.vector_store %arg15[%c0_145, %c512], %647 {strides = array<i32>} : memref<2x1024xf32, #tpu.memory_space<vmem>>, vector<2x128xf32>,
    %649 = vector.extract_strided_slice %496 {offsets = [10, 0], sizes = [2, 512], strides = [1, 1]} : vector<16x512xf32> to vector<2x512xf32>
    %cst_146 = arith.constant dense<0.000000e+00> : vector<2x512xf32>
    %650 = tpu.matmul %646, %2, %cst_146 {dimension_numbers = #tpu.dot_dimension_numbers<[1], [0], [0], [1], [0, 0, 1, 1], [], []>} : vector<2x128xf32>, vector<128x512xf32>, vector<2x512xf32> -> vector<2x512xf32>
    %651 = arith.addf %649, %650 : vector<2x512xf32>
    %652 = vector.extract_strided_slice %651 {offsets = [0, 0], sizes = [2, 128], strides = [1, 1]} : vector<2x512xf32> to vector<2x128xf32>
    %653 = arith.negf %652 : vector<2x128xf32>
    %654 = math.exp %653 : vector<2x128xf32>
    %cst_147 = arith.constant 1.000000e+00 : f32
    %655 = vector.broadcast %cst_147 : f32 to vector<2x128xf32>
    %656 = arith.addf %655, %654 : vector<2x128xf32>
    %657 = arith.divf %655, %656 : vector<2x128xf32>
    %658 = vector.extract_strided_slice %651 {offsets = [0, 128], sizes = [2, 128], strides = [1, 1]} : vector<2x512xf32> to vector<2x128xf32>
    %659 = arith.negf %658 : vector<2x128xf32>
    %660 = math.exp %659 : vector<2x128xf32>
    %cst_148 = arith.constant 1.000000e+00 : f32
    %661 = vector.broadcast %cst_148 : f32 to vector<2x128xf32>
    %662 = arith.addf %661, %660 : vector<2x128xf32>
    %663 = arith.divf %661, %662 : vector<2x128xf32>
    %664 = vector.extract_strided_slice %651 {offsets = [0, 256], sizes = [2, 128], strides = [1, 1]} : vector<2x512xf32> to vector<2x128xf32>
    %665 = math.tanh %664 : vector<2x128xf32>
    %666 = vector.extract_strided_slice %651 {offsets = [0, 384], sizes = [2, 128], strides = [1, 1]} : vector<2x512xf32> to vector<2x128xf32>
    %667 = arith.negf %666 : vector<2x128xf32>
    %668 = math.exp %667 : vector<2x128xf32>
    %cst_149 = arith.constant 1.000000e+00 : f32
    %669 = vector.broadcast %cst_149 : f32 to vector<2x128xf32>
    %670 = arith.addf %669, %668 : vector<2x128xf32>
    %671 = arith.divf %669, %670 : vector<2x128xf32>
    %672 = arith.mulf %663, %644 : vector<2x128xf32>
    %673 = arith.mulf %657, %665 : vector<2x128xf32>
    %674 = arith.addf %672, %673 : vector<2x128xf32>
    %675 = math.tanh %674 : vector<2x128xf32>
    %676 = arith.mulf %671, %675 : vector<2x128xf32>
    %677 = math.tanh %676 : vector<2x128xf32>
    %c0_150 = arith.constant 0 : index
    %c640 = arith.constant 640 : index
    %678 = vector.load %arg15[%c0_150, %c640] : memref<2x1024xf32, #tpu.memory_space<vmem>>, vector<2x128xf32>
    tpu.vector_store %arg15[%c0_150, %c640], %677 {strides = array<i32>} : memref<2x1024xf32, #tpu.memory_space<vmem>>, vector<2x128xf32>,
    %679 = vector.extract_strided_slice %496 {offsets = [12, 0], sizes = [2, 512], strides = [1, 1]} : vector<16x512xf32> to vector<2x512xf32>
    %cst_151 = arith.constant dense<0.000000e+00> : vector<2x512xf32>
    %680 = tpu.matmul %676, %2, %cst_151 {dimension_numbers = #tpu.dot_dimension_numbers<[1], [0], [0], [1], [0, 0, 1, 1], [], []>} : vector<2x128xf32>, vector<128x512xf32>, vector<2x512xf32> -> vector<2x512xf32>
    %681 = arith.addf %679, %680 : vector<2x512xf32>
    %682 = vector.extract_strided_slice %681 {offsets = [0, 0], sizes = [2, 128], strides = [1, 1]} : vector<2x512xf32> to vector<2x128xf32>
    %683 = arith.negf %682 : vector<2x128xf32>
    %684 = math.exp %683 : vector<2x128xf32>
    %cst_152 = arith.constant 1.000000e+00 : f32
    %685 = vector.broadcast %cst_152 : f32 to vector<2x128xf32>
    %686 = arith.addf %685, %684 : vector<2x128xf32>
    %687 = arith.divf %685, %686 : vector<2x128xf32>
    %688 = vector.extract_strided_slice %681 {offsets = [0, 128], sizes = [2, 128], strides = [1, 1]} : vector<2x512xf32> to vector<2x128xf32>
    %689 = arith.negf %688 : vector<2x128xf32>
    %690 = math.exp %689 : vector<2x128xf32>
    %cst_153 = arith.constant 1.000000e+00 : f32
    %691 = vector.broadcast %cst_153 : f32 to vector<2x128xf32>
    %692 = arith.addf %691, %690 : vector<2x128xf32>
    %693 = arith.divf %691, %692 : vector<2x128xf32>
    %694 = vector.extract_strided_slice %681 {offsets = [0, 256], sizes = [2, 128], strides = [1, 1]} : vector<2x512xf32> to vector<2x128xf32>
    %695 = math.tanh %694 : vector<2x128xf32>
    %696 = vector.extract_strided_slice %681 {offsets = [0, 384], sizes = [2, 128], strides = [1, 1]} : vector<2x512xf32> to vector<2x128xf32>
    %697 = arith.negf %696 : vector<2x128xf32>
    %698 = math.exp %697 : vector<2x128xf32>
    %cst_154 = arith.constant 1.000000e+00 : f32
    %699 = vector.broadcast %cst_154 : f32 to vector<2x128xf32>
    %700 = arith.addf %699, %698 : vector<2x128xf32>
    %701 = arith.divf %699, %700 : vector<2x128xf32>
    %702 = arith.mulf %693, %674 : vector<2x128xf32>
    %703 = arith.mulf %687, %695 : vector<2x128xf32>
    %704 = arith.addf %702, %703 : vector<2x128xf32>
    %705 = math.tanh %704 : vector<2x128xf32>
    %706 = arith.mulf %701, %705 : vector<2x128xf32>
    %707 = math.tanh %706 : vector<2x128xf32>
    %c0_155 = arith.constant 0 : index
    %c768 = arith.constant 768 : index
    %708 = vector.load %arg15[%c0_155, %c768] : memref<2x1024xf32, #tpu.memory_space<vmem>>, vector<2x128xf32>
    tpu.vector_store %arg15[%c0_155, %c768], %707 {strides = array<i32>} : memref<2x1024xf32, #tpu.memory_space<vmem>>, vector<2x128xf32>,
    %709 = vector.extract_strided_slice %496 {offsets = [14, 0], sizes = [2, 512], strides = [1, 1]} : vector<16x512xf32> to vector<2x512xf32>
    %cst_156 = arith.constant dense<0.000000e+00> : vector<2x512xf32>
    %710 = tpu.matmul %706, %2, %cst_156 {dimension_numbers = #tpu.dot_dimension_numbers<[1], [0], [0], [1], [0, 0, 1, 1], [], []>} : vector<2x128xf32>, vector<128x512xf32>, vector<2x512xf32> -> vector<2x512xf32>
    %711 = arith.addf %709, %710 : vector<2x512xf32>
    %712 = vector.extract_strided_slice %711 {offsets = [0, 0], sizes = [2, 128], strides = [1, 1]} : vector<2x512xf32> to vector<2x128xf32>
    %713 = arith.negf %712 : vector<2x128xf32>
    %714 = math.exp %713 : vector<2x128xf32>
    %cst_157 = arith.constant 1.000000e+00 : f32
    %715 = vector.broadcast %cst_157 : f32 to vector<2x128xf32>
    %716 = arith.addf %715, %714 : vector<2x128xf32>
    %717 = arith.divf %715, %716 : vector<2x128xf32>
    %718 = vector.extract_strided_slice %711 {offsets = [0, 128], sizes = [2, 128], strides = [1, 1]} : vector<2x512xf32> to vector<2x128xf32>
    %719 = arith.negf %718 : vector<2x128xf32>
    %720 = math.exp %719 : vector<2x128xf32>
    %cst_158 = arith.constant 1.000000e+00 : f32
    %721 = vector.broadcast %cst_158 : f32 to vector<2x128xf32>
    %722 = arith.addf %721, %720 : vector<2x128xf32>
    %723 = arith.divf %721, %722 : vector<2x128xf32>
    %724 = vector.extract_strided_slice %711 {offsets = [0, 256], sizes = [2, 128], strides = [1, 1]} : vector<2x512xf32> to vector<2x128xf32>
    %725 = math.tanh %724 : vector<2x128xf32>
    %726 = vector.extract_strided_slice %711 {offsets = [0, 384], sizes = [2, 128], strides = [1, 1]} : vector<2x512xf32> to vector<2x128xf32>
    %727 = arith.negf %726 : vector<2x128xf32>
    %728 = math.exp %727 : vector<2x128xf32>
    %cst_159 = arith.constant 1.000000e+00 : f32
    %729 = vector.broadcast %cst_159 : f32 to vector<2x128xf32>
    %730 = arith.addf %729, %728 : vector<2x128xf32>
    %731 = arith.divf %729, %730 : vector<2x128xf32>
    %732 = arith.mulf %723, %704 : vector<2x128xf32>
    %733 = arith.mulf %717, %725 : vector<2x128xf32>
    %734 = arith.addf %732, %733 : vector<2x128xf32>
    %735 = math.tanh %734 : vector<2x128xf32>
    %736 = arith.mulf %731, %735 : vector<2x128xf32>
    %737 = math.tanh %736 : vector<2x128xf32>
    %c0_160 = arith.constant 0 : index
    %c896 = arith.constant 896 : index
    %738 = vector.load %arg15[%c0_160, %c896] : memref<2x1024xf32, #tpu.memory_space<vmem>>, vector<2x128xf32>
    tpu.vector_store %arg15[%c0_160, %c896], %737 {strides = array<i32>} : memref<2x1024xf32, #tpu.memory_space<vmem>>, vector<2x128xf32>,
    %c0_161 = arith.constant 0 : index
    %c0_162 = arith.constant 0 : index
    %739 = vector.load %arg15[%c0_161, %c0_162] : memref<2x1024xf32, #tpu.memory_space<vmem>>, vector<2x1024xf32>
    %c0_163 = arith.constant 0 : index
    %c0_164 = arith.constant 0 : index
    %740 = vector.load %arg11[%c0_163, %c0_164] : memref<1024x8xf32, #tpu.memory_space<vmem>>, vector<1024x8xf32>
    %cst_165 = arith.constant dense<0.000000e+00> : vector<2x8xf32>
    %741 = tpu.matmul %739, %740, %cst_165 {dimension_numbers = #tpu.dot_dimension_numbers<[1], [0], [0], [1], [0, 0, 1, 1], [], []>} : vector<2x1024xf32>, vector<1024x8xf32>, vector<2x8xf32> -> vector<2x8xf32>
    %c0_166 = arith.constant 0 : index
    %c0_167 = arith.constant 0 : index
    %742 = vector.load %arg12[%c0_166, %c0_167] : memref<2x8xf32, #tpu.memory_space<vmem>>, vector<2x8xf32>
    tpu.vector_store %arg12[%c0_166, %c0_167], %741 {strides = array<i32>} : memref<2x8xf32, #tpu.memory_space<vmem>>, vector<2x8xf32>,
    return
  }
  func.func @transform_0(%arg0: i32) -> (i32, i32) {
    %c0_i32 = arith.constant 0 : i32
    %c0_i32_0 = arith.constant 0 : i32
    %c0_i32_1 = arith.constant 0 : i32
    return %c0_i32, %c0_i32_0 : i32, i32
  }
  func.func @transform_1(%arg0: i32) -> (i32, i32) {
    %c0_i32 = arith.constant 0 : i32
    %c0_i32_0 = arith.constant 0 : i32
    %c0_i32_1 = arith.constant 0 : i32
    return %c0_i32, %c0_i32_0 : i32, i32
  }
  func.func @transform_2(%arg0: i32) -> (i32, i32) {
    %c0_i32 = arith.constant 0 : i32
    %c0_i32_0 = arith.constant 0 : i32
    %c0_i32_1 = arith.constant 0 : i32
    return %c0_i32, %c0_i32_0 : i32, i32
  }
  func.func @transform_3(%arg0: i32) -> (i32, i32) {
    %c0_i32 = arith.constant 0 : i32
    %c0_i32_0 = arith.constant 0 : i32
    %c0_i32_1 = arith.constant 0 : i32
    return %c0_i32, %c0_i32_0 : i32, i32
  }
  func.func @transform_4(%arg0: i32) -> (i32, i32) {
    %c0_i32 = arith.constant 0 : i32
    %c0_i32_0 = arith.constant 0 : i32
    %c0_i32_1 = arith.constant 0 : i32
    return %c0_i32, %c0_i32_0 : i32, i32
  }
  func.func @transform_5(%arg0: i32) -> (i32, i32) {
    %c0_i32 = arith.constant 0 : i32
    %c0_i32_0 = arith.constant 0 : i32
    %c0_i32_1 = arith.constant 0 : i32
    return %c0_i32, %c0_i32_0 : i32, i32
  }
  func.func @transform_6(%arg0: i32) -> (i32, i32) {
    %c0_i32 = arith.constant 0 : i32
    %c0_i32_0 = arith.constant 0 : i32
    %c0_i32_1 = arith.constant 0 : i32
    return %c0_i32, %c0_i32_0 : i32, i32
  }
  func.func @transform_7(%arg0: i32) -> (i32, i32) {
    %c0_i32 = arith.constant 0 : i32
    %c0_i32_0 = arith.constant 0 : i32
    %c0_i32_1 = arith.constant 0 : i32
    return %c0_i32, %c0_i32_0 : i32, i32
  }
  func.func @transform_8(%arg0: i32) -> (i32, i32) {
    %c0_i32 = arith.constant 0 : i32
    %c0_i32_0 = arith.constant 0 : i32
    %c0_i32_1 = arith.constant 0 : i32
    return %c0_i32, %c0_i32_0 : i32, i32
  }
  func.func @transform_9(%arg0: i32) -> (i32, i32) {
    %c0_i32 = arith.constant 0 : i32
    %c0_i32_0 = arith.constant 0 : i32
    %c0_i32_1 = arith.constant 0 : i32
    return %c0_i32, %c0_i32_0 : i32, i32
  }
  func.func @transform_10(%arg0: i32) -> (i32, i32) {
    %c0_i32 = arith.constant 0 : i32
    %c0_i32_0 = arith.constant 0 : i32
    %c0_i32_1 = arith.constant 0 : i32
    return %c0_i32, %c0_i32_0 : i32, i32
  }
  func.func @transform_11(%arg0: i32) -> (i32, i32) {
    %c0_i32 = arith.constant 0 : i32
    %c0_i32_0 = arith.constant 0 : i32
    %c0_i32_1 = arith.constant 0 : i32
    return %c0_i32, %c0_i32_0 : i32, i32
  }
}

</mosaic_0001>

<llo_original>
// kernel: tpu_custom_call.1
$region0: #{tpu_custom_call.1}
  #allocation0 [shape = 'u32[]', space=smem, size = 0x4, offset = 0x4, fixed_abs, tag = 'smem constant byte address 0x4 - core index']
  #allocation1 [shape = 'u32[144,128]{1,0:T(1,128)}', space=vmem, size = 0x12000, scoped, tag = 'internal scratch']
  #allocation2 [shape = 'f32[16,128]{1,0:T(8,128)}', space=vmem, size = 0x2000, scoped, tag = 'scratch operand']
  #allocation3 [shape = 'f32[16,128]{1,0:T(8,128)}', space=vmem, size = 0x2000, scoped, tag = 'scratch operand']
  #allocation4 [shape = 'f32[2,1024]{1,0:T(2,128)}', space=vmem, size = 0x2000, scoped, tag = 'scratch operand']
  %s0 = inlined_call_operand.vmem [shape: f32[2,8], index: 0, kind: input, shape index: {}]
  %s1 = inlined_call_operand.vmem [shape: f32[8,512], index: 1, kind: input, shape index: {}]
  %s2 = inlined_call_operand.vmem [shape: f32[128,512], index: 2, kind: input, shape index: {}]
  %s3 = inlined_call_operand.vmem [shape: f32[1,512], index: 3, kind: input, shape index: {}]
  %s4 = inlined_call_operand.vmem [shape: f32[128,512], index: 4, kind: input, shape index: {}]
  %s5 = inlined_call_operand.hbm [shape: f32[128,512], index: 5, kind: input, shape index: {}]
  %s6 = inlined_call_operand.vmem [shape: f32[1,512], index: 6, kind: input, shape index: {}]
  %s7 = inlined_call_operand.hbm [shape: f32[128,512], index: 7, kind: input, shape index: {}]
  %s8 = inlined_call_operand.hbm [shape: f32[128,512], index: 8, kind: input, shape index: {}]
  %s9 = inlined_call_operand.vmem [shape: f32[1,512], index: 9, kind: input, shape index: {}]
  %s10 = inlined_call_operand.vmem [shape: f32[1024,8], index: 10, kind: input, shape index: {}]
  %s11 = inlined_call_operand.hbm [shape: f32[2,8], index: 11, kind: output, shape index: {}]
  %s12 = sld [smem:[#allocation0]]
  $region66: #{tpu_custom_call.1} parent=0
    _
  %s14 = ssub.s32 1, %s12
  %s15 = scalar_select 0, %s14, %s12
  $region1: #{tpu_custom_call.1} parent=0
    #allocation5 [shape = 'u8[262144]{0}', space=vmem, size = 0x40000, scoped, tag = 'input window, operand 5, single buffered']
    #allocation6 [shape = 's32[1]{0}', space=sflag, size = 0x4, scoped, tag = 'scoped memory for tpu_custom_call.1']
    #allocation7 [shape = 's32[1]{0}', space=sflag, size = 0x4, scoped, tag = 'scoped memory for tpu_custom_call.1']
    #allocation8 [shape = 'u8[262144]{0}', space=vmem, size = 0x40000, scoped, tag = 'input window, operand 7, single buffered']
    #allocation9 [shape = 's32[1]{0}', space=sflag, size = 0x4, scoped, tag = 'scoped memory for tpu_custom_call.1']
    #allocation10 [shape = 'u8[262144]{0}', space=vmem, size = 0x40000, scoped, tag = 'input window, operand 8, single buffered']
    #allocation11 [shape = 'u8[1024]{0}', space=vmem, size = 0x400, scoped, tag = 'output window, operand 0, single buffered']
    %16 = vsyncpa [#allocation6], 0
    %17 = vsyncpa [#allocation9], 0
    %18 = vsyncpa [#allocation7], 0
    // Predicated region
    $region2: #{tpu_custom_call.1} parent=1 // pred_check
      _
    $region3: #{tpu_custom_call.1} parent=1 // pred_check_branch
      %20 = sbr.rel (0) target = $region5
    $region4: #{tpu_custom_call.1} parent=1 // pred_region
      _
    $region5: #{tpu_custom_call.1} parent=1 // pred_fallthru
      _
    // Predicated region
    $region6: #{tpu_custom_call.1} parent=1 // pred_check
      _
    $region7: #{tpu_custom_call.1} parent=1 // pred_check_branch
      %22 = sbr.rel (0) target = $region9
    $region8: #{tpu_custom_call.1} parent=1 // pred_region
      _
    $region9: #{tpu_custom_call.1} parent=1 // pred_fallthru
      _
    // Predicated region
    $region10: #{tpu_custom_call.1} parent=1 // pred_check
      _
    $region11: #{tpu_custom_call.1} parent=1 // pred_check_branch
      %24 = sbr.rel (0) target = $region13
    $region12: #{tpu_custom_call.1} parent=1 // pred_region
      _
    $region13: #{tpu_custom_call.1} parent=1 // pred_fallthru
      _
    // Predicated region
    $region14: #{tpu_custom_call.1} parent=1 // pred_check
      _
    $region15: #{tpu_custom_call.1} parent=1 // pred_check_branch
      %26 = sbr.rel (0) target = $region17
    $region16: #{tpu_custom_call.1} parent=1 // pred_region
      _
    $region17: #{tpu_custom_call.1} parent=1 // pred_fallthru
      _
    // Predicated region
    $region18: #{tpu_custom_call.1} parent=1 // pred_check
      _
    $region19: #{tpu_custom_call.1} parent=1 // pred_check_branch
      %28 = sbr.rel (0) target = $region21
    $region20: #{tpu_custom_call.1} parent=1 // pred_region
      _
    $region21: #{tpu_custom_call.1} parent=1 // pred_fallthru
      _
    // Predicated region
    $region22: #{tpu_custom_call.1} parent=1 // pred_check
      _
    $region23: #{tpu_custom_call.1} parent=1 // pred_check_branch
      %30 = sbr.rel (0) target = $region25
    $region24: #{tpu_custom_call.1} parent=1 // pred_region
      %s32 = ssub.s32 8192, 8192
      %33 = vsyncadd [#allocation6], %s32
      %s34 = sshll.u32 [#allocation5], 4
      %s35 = int_to_ptr.vmem [resolvable:$true] %s34
      %40 = dma.hbm_to_vmem [thread:$0]  %s5, 8192, %s35, [#allocation6], 512, 512, 32
    $region25: #{tpu_custom_call.1} parent=1 // pred_fallthru
      _
    // Predicated region
    $region26: #{tpu_custom_call.1} parent=1 // pred_check
      _
    $region27: #{tpu_custom_call.1} parent=1 // pred_check_branch
      %42 = sbr.rel (0) target = $region29
    $region28: #{tpu_custom_call.1} parent=1 // pred_region
      _
    $region29: #{tpu_custom_call.1} parent=1 // pred_fallthru
      _
    // Predicated region
    $region30: #{tpu_custom_call.1} parent=1 // pred_check
      _
    $region31: #{tpu_custom_call.1} parent=1 // pred_check_branch
      %44 = sbr.rel (0) target = $region33
    $region32: #{tpu_custom_call.1} parent=1 // pred_region
      %s46 = ssub.s32 8192, 8192
      %47 = vsyncadd [#allocation9], %s46
      %s48 = sshll.u32 [#allocation8], 4
      %s49 = int_to_ptr.vmem [resolvable:$true] %s48
      %54 = dma.hbm_to_vmem [thread:$0]  %s7, 8192, %s49, [#allocation9], 512, 512, 32
    $region33: #{tpu_custom_call.1} parent=1 // pred_fallthru
      _
    // Predicated region
    $region34: #{tpu_custom_call.1} parent=1 // pred_check
      _
    $region35: #{tpu_custom_call.1} parent=1 // pred_check_branch
      %56 = sbr.rel (0) target = $region37
    $region36: #{tpu_custom_call.1} parent=1 // pred_region
      %s58 = ssub.s32 8192, 8192
      %59 = vsyncadd [#allocation9], %s58
      %s60 = sshll.u32 [#allocation10], 4
      %s61 = int_to_ptr.vmem [resolvable:$true] %s60
      %66 = dma.hbm_to_vmem [thread:$0]  %s8, 8192, %s61, [#allocation9], 512, 512, 32
    $region37: #{tpu_custom_call.1} parent=1 // pred_fallthru
      _
    // Predicated region
    $region38: #{tpu_custom_call.1} parent=1 // pred_check
      _
    $region39: #{tpu_custom_call.1} parent=1 // pred_check_branch
      %68 = sbr.rel (0) target = $region41
    $region40: #{tpu_custom_call.1} parent=1 // pred_region
      _
    $region41: #{tpu_custom_call.1} parent=1 // pred_fallthru
      _
    // Predicated region
    $region42: #{tpu_custom_call.1} parent=1 // pred_check
      _
    $region43: #{tpu_custom_call.1} parent=1 // pred_check_branch
      %70 = sbr.rel (0) target = $region45
    $region44: #{tpu_custom_call.1} parent=1 // pred_region
      _
    $region45: #{tpu_custom_call.1} parent=1 // pred_fallthru
      _
    // Predicated region
    $region46: #{tpu_custom_call.1} parent=1 // pred_check
      _
    $region47: #{tpu_custom_call.1} parent=1 // pred_check_branch
      %72 = sbr.rel (0) target = $region49
    $region48: #{tpu_custom_call.1} parent=1 // pred_region
      %73 = dma.done [#allocation6], 8192
    $region49: #{tpu_custom_call.1} parent=1 // pred_fallthru
      _
    // Predicated region
    $region50: #{tpu_custom_call.1} parent=1 // pred_check
      _
    $region51: #{tpu_custom_call.1} parent=1 // pred_check_branch
      %75 = sbr.rel (0) target = $region53
    $region52: #{tpu_custom_call.1} parent=1 // pred_region
      %76 = dma.done [#allocation9], 8192
    $region53: #{tpu_custom_call.1} parent=1 // pred_fallthru
      _
    // Predicated region
    $region54: #{tpu_custom_call.1} parent=1 // pred_check
      _
    $region55: #{tpu_custom_call.1} parent=1 // pred_check_branch
      %78 = sbr.rel (0) target = $region57
    $region56: #{tpu_custom_call.1} parent=1 // pred_region
      %79 = dma.done [#allocation9], 8192
    $region57: #{tpu_custom_call.1} parent=1 // pred_fallthru
      _
    %v80 = vld [vmem:[%s2] sm:$0xff]
    %v81 = vld [vmem:[%s2 + $0x8] sm:$0xff]
    %v82 = vld [vmem:[%s2 + $0x10] sm:$0xff]
    %v83 = vld [vmem:[%s2 + $0x18] sm:$0xff]
    %v84 = vld [vmem:[%s2 + $0x20] sm:$0xff]
    %v85 = vld [vmem:[%s2 + $0x28] sm:$0xff]
    %v86 = vld [vmem:[%s2 + $0x30] sm:$0xff]
    %v87 = vld [vmem:[%s2 + $0x38] sm:$0xff]
    %v88 = vld [vmem:[%s2 + $0x40] sm:$0xff]
    %v89 = vld [vmem:[%s2 + $0x48] sm:$0xff]
    %v90 = vld [vmem:[%s2 + $0x50] sm:$0xff]
    %v91 = vld [vmem:[%s2 + $0x58] sm:$0xff]
    %v92 = vld [vmem:[%s2 + $0x60] sm:$0xff]
    %v93 = vld [vmem:[%s2 + $0x68] sm:$0xff]
    %v94 = vld [vmem:[%s2 + $0x70] sm:$0xff]
    %v95 = vld [vmem:[%s2 + $0x78] sm:$0xff]
    %v96 = vld [vmem:[%s2 + $0x80] sm:$0xff]
    %v97 = vld [vmem:[%s2 + $0x88] sm:$0xff]
    %v98 = vld [vmem:[%s2 + $0x90] sm:$0xff]
    %v99 = vld [vmem:[%s2 + $0x98] sm:$0xff]
    %v100 = vld [vmem:[%s2 + $0xa0] sm:$0xff]
    %v101 = vld [vmem:[%s2 + $0xa8] sm:$0xff]
    %v102 = vld [vmem:[%s2 + $0xb0] sm:$0xff]
    %v103 = vld [vmem:[%s2 + $0xb8] sm:$0xff]
    %v104 = vld [vmem:[%s2 + $0xc0] sm:$0xff]
    %v105 = vld [vmem:[%s2 + $0xc8] sm:$0xff]
    %v106 = vld [vmem:[%s2 + $0xd0] sm:$0xff]
    %v107 = vld [vmem:[%s2 + $0xd8] sm:$0xff]
    %v108 = vld [vmem:[%s2 + $0xe0] sm:$0xff]
    %v109 = vld [vmem:[%s2 + $0xe8] sm:$0xff]
    %v110 = vld [vmem:[%s2 + $0xf0] sm:$0xff]
    %v111 = vld [vmem:[%s2 + $0xf8] sm:$0xff]
    %v112 = vld [vmem:[%s2 + $0x100] sm:$0xff]
    %v113 = vld [vmem:[%s2 + $0x108] sm:$0xff]
    %v114 = vld [vmem:[%s2 + $0x110] sm:$0xff]
    %v115 = vld [vmem:[%s2 + $0x118] sm:$0xff]
    %v116 = vld [vmem:[%s2 + $0x120] sm:$0xff]
    %v117 = vld [vmem:[%s2 + $0x128] sm:$0xff]
    %v118 = vld [vmem:[%s2 + $0x130] sm:$0xff]
    %v119 = vld [vmem:[%s2 + $0x138] sm:$0xff]
    %v120 = vld [vmem:[%s2 + $0x140] sm:$0xff]
    %v121 = vld [vmem:[%s2 + $0x148] sm:$0xff]
    %v122 = vld [vmem:[%s2 + $0x150] sm:$0xff]
    %v123 = vld [vmem:[%s2 + $0x158] sm:$0xff]
    %v124 = vld [vmem:[%s2 + $0x160] sm:$0xff]
    %v125 = vld [vmem:[%s2 + $0x168] sm:$0xff]
    %v126 = vld [vmem:[%s2 + $0x170] sm:$0xff]
    %v127 = vld [vmem:[%s2 + $0x178] sm:$0xff]
    %v128 = vld [vmem:[%s2 + $0x180] sm:$0xff]
    %v129 = vld [vmem:[%s2 + $0x188] sm:$0xff]
    %v130 = vld [vmem:[%s2 + $0x190] sm:$0xff]
    %v131 = vld [vmem:[%s2 + $0x198] sm:$0xff]
    %v132 = vld [vmem:[%s2 + $0x1a0] sm:$0xff]
    %v133 = vld [vmem:[%s2 + $0x1a8] sm:$0xff]
    %v134 = vld [vmem:[%s2 + $0x1b0] sm:$0xff]
    %v135 = vld [vmem:[%s2 + $0x1b8] sm:$0xff]
    %v136 = vld [vmem:[%s2 + $0x1c0] sm:$0xff]
    %v137 = vld [vmem:[%s2 + $0x1c8] sm:$0xff]
    %v138 = vld [vmem:[%s2 + $0x1d0] sm:$0xff]
    %v139 = vld [vmem:[%s2 + $0x1d8] sm:$0xff]
    %v140 = vld [vmem:[%s2 + $0x1e0] sm:$0xff]
    %v141 = vld [vmem:[%s2 + $0x1e8] sm:$0xff]
    %v142 = vld [vmem:[%s2 + $0x1f0] sm:$0xff]
    %v143 = vld [vmem:[%s2 + $0x1f8] sm:$0xff]
    %v144 = vld [vmem:[#allocation5] sm:$0xff]
    %v145 = vld [vmem:[#allocation5 + $0x8] sm:$0xff]
    %v146 = vld [vmem:[#allocation5 + $0x10] sm:$0xff]
    %v147 = vld [vmem:[#allocation5 + $0x18] sm:$0xff]
    %v148 = vld [vmem:[#allocation5 + $0x20] sm:$0xff]
    %v149 = vld [vmem:[#allocation5 + $0x28] sm:$0xff]
    %v150 = vld [vmem:[#allocation5 + $0x30] sm:$0xff]
    %v151 = vld [vmem:[#allocation5 + $0x38] sm:$0xff]
    %v152 = vld [vmem:[#allocation5 + $0x40] sm:$0xff]
    %v153 = vld [vmem:[#allocation5 + $0x48] sm:$0xff]
    %v154 = vld [vmem:[#allocation5 + $0x50] sm:$0xff]
    %v155 = vld [vmem:[#allocation5 + $0x58] sm:$0xff]
    %v156 = vld [vmem:[#allocation5 + $0x60] sm:$0xff]
    %v157 = vld [vmem:[#allocation5 + $0x68] sm:$0xff]
    %v158 = vld [vmem:[#allocation5 + $0x70] sm:$0xff]
    %v159 = vld [vmem:[#allocation5 + $0x78] sm:$0xff]
    %v160 = vld [vmem:[#allocation5 + $0x80] sm:$0xff]
    %v161 = vld [vmem:[#allocation5 + $0x88] sm:$0xff]
    %v162 = vld [vmem:[#allocation5 + $0x90] sm:$0xff]
    %v163 = vld [vmem:[#allocation5 + $0x98] sm:$0xff]
    %v164 = vld [vmem:[#allocation5 + $0xa0] sm:$0xff]
    %v165 = vld [vmem:[#allocation5 + $0xa8] sm:$0xff]
    %v166 = vld [vmem:[#allocation5 + $0xb0] sm:$0xff]
    %v167 = vld [vmem:[#allocation5 + $0xb8] sm:$0xff]
    %v168 = vld [vmem:[#allocation5 + $0xc0] sm:$0xff]
    %v169 = vld [vmem:[#allocation5 + $0xc8] sm:$0xff]
    %v170 = vld [vmem:[#allocation5 + $0xd0] sm:$0xff]
    %v171 = vld [vmem:[#allocation5 + $0xd8] sm:$0xff]
    %v172 = vld [vmem:[#allocation5 + $0xe0] sm:$0xff]
    %v173 = vld [vmem:[#allocation5 + $0xe8] sm:$0xff]
    %v174 = vld [vmem:[#allocation5 + $0xf0] sm:$0xff]
    %v175 = vld [vmem:[#allocation5 + $0xf8] sm:$0xff]
    %v176 = vld [vmem:[#allocation5 + $0x100] sm:$0xff]
    %v177 = vld [vmem:[#allocation5 + $0x108] sm:$0xff]
    %v178 = vld [vmem:[#allocation5 + $0x110] sm:$0xff]
    %v179 = vld [vmem:[#allocation5 + $0x118] sm:$0xff]
    %v180 = vld [vmem:[#allocation5 + $0x120] sm:$0xff]
    %v181 = vld [vmem:[#allocation5 + $0x128] sm:$0xff]
    %v182 = vld [vmem:[#allocation5 + $0x130] sm:$0xff]
    %v183 = vld [vmem:[#allocation5 + $0x138] sm:$0xff]
    %v184 = vld [vmem:[#allocation5 + $0x140] sm:$0xff]
    %v185 = vld [vmem:[#allocation5 + $0x148] sm:$0xff]
    %v186 = vld [vmem:[#allocation5 + $0x150] sm:$0xff]
    %v187 = vld [vmem:[#allocation5 + $0x158] sm:$0xff]
    %v188 = vld [vmem:[#allocation5 + $0x160] sm:$0xff]
    %v189 = vld [vmem:[#allocation5 + $0x168] sm:$0xff]
    %v190 = vld [vmem:[#allocation5 + $0x170] sm:$0xff]
    %v191 = vld [vmem:[#allocation5 + $0x178] sm:$0xff]
    %v192 = vld [vmem:[#allocation5 + $0x180] sm:$0xff]
    %v193 = vld [vmem:[#allocation5 + $0x188] sm:$0xff]
    %v194 = vld [vmem:[#allocation5 + $0x190] sm:$0xff]
    %v195 = vld [vmem:[#allocation5 + $0x198] sm:$0xff]
    %v196 = vld [vmem:[#allocation5 + $0x1a0] sm:$0xff]
    %v197 = vld [vmem:[#allocation5 + $0x1a8] sm:$0xff]
    %v198 = vld [vmem:[#allocation5 + $0x1b0] sm:$0xff]
    %v199 = vld [vmem:[#allocation5 + $0x1b8] sm:$0xff]
    %v200 = vld [vmem:[#allocation5 + $0x1c0] sm:$0xff]
    %v201 = vld [vmem:[#allocation5 + $0x1c8] sm:$0xff]
    %v202 = vld [vmem:[#allocation5 + $0x1d0] sm:$0xff]
    %v203 = vld [vmem:[#allocation5 + $0x1d8] sm:$0xff]
    %v204 = vld [vmem:[#allocation5 + $0x1e0] sm:$0xff]
    %v205 = vld [vmem:[#allocation5 + $0x1e8] sm:$0xff]
    %v206 = vld [vmem:[#allocation5 + $0x1f0] sm:$0xff]
    %v207 = vld [vmem:[#allocation5 + $0x1f8] sm:$0xff]
    %v208 = vld [vmem:[#allocation10] sm:$0xff]
    %v209 = vld [vmem:[#allocation10 + $0x8] sm:$0xff]
    %v210 = vld [vmem:[#allocation10 + $0x10] sm:$0xff]
    %v211 = vld [vmem:[#allocation10 + $0x18] sm:$0xff]
    %v212 = vld [vmem:[#allocation10 + $0x20] sm:$0xff]
    %v213 = vld [vmem:[#allocation10 + $0x28] sm:$0xff]
    %v214 = vld [vmem:[#allocation10 + $0x30] sm:$0xff]
    %v215 = vld [vmem:[#allocation10 + $0x38] sm:$0xff]
    %v216 = vld [vmem:[#allocation10 + $0x40] sm:$0xff]
    %v217 = vld [vmem:[#allocation10 + $0x48] sm:$0xff]
    %v218 = vld [vmem:[#allocation10 + $0x50] sm:$0xff]
    %v219 = vld [vmem:[#allocation10 + $0x58] sm:$0xff]
    %v220 = vld [vmem:[#allocation10 + $0x60] sm:$0xff]
    %v221 = vld [vmem:[#allocation10 + $0x68] sm:$0xff]
    %v222 = vld [vmem:[#allocation10 + $0x70] sm:$0xff]
    %v223 = vld [vmem:[#allocation10 + $0x78] sm:$0xff]
    %v224 = vld [vmem:[#allocation10 + $0x80] sm:$0xff]
    %v225 = vld [vmem:[#allocation10 + $0x88] sm:$0xff]
    %v226 = vld [vmem:[#allocation10 + $0x90] sm:$0xff]
    %v227 = vld [vmem:[#allocation10 + $0x98] sm:$0xff]
    %v228 = vld [vmem:[#allocation10 + $0xa0] sm:$0xff]
    %v229 = vld [vmem:[#allocation10 + $0xa8] sm:$0xff]
    %v230 = vld [vmem:[#allocation10 + $0xb0] sm:$0xff]
    %v231 = vld [vmem:[#allocation10 + $0xb8] sm:$0xff]
    %v232 = vld [vmem:[#allocation10 + $0xc0] sm:$0xff]
    %v233 = vld [vmem:[#allocation10 + $0xc8] sm:$0xff]
    %v234 = vld [vmem:[#allocation10 + $0xd0] sm:$0xff]
    %v235 = vld [vmem:[#allocation10 + $0xd8] sm:$0xff]
    %v236 = vld [vmem:[#allocation10 + $0xe0] sm:$0xff]
    %v237 = vld [vmem:[#allocation10 + $0xe8] sm:$0xff]
    %v238 = vld [vmem:[#allocation10 + $0xf0] sm:$0xff]
    %v239 = vld [vmem:[#allocation10 + $0xf8] sm:$0xff]
    %v240 = vld [vmem:[#allocation10 + $0x100] sm:$0xff]
    %v241 = vld [vmem:[#allocation10 + $0x108] sm:$0xff]
    %v242 = vld [vmem:[#allocation10 + $0x110] sm:$0xff]
    %v243 = vld [vmem:[#allocation10 + $0x118] sm:$0xff]
    %v244 = vld [vmem:[#allocation10 + $0x120] sm:$0xff]
    %v245 = vld [vmem:[#allocation10 + $0x128] sm:$0xff]
    %v246 = vld [vmem:[#allocation10 + $0x130] sm:$0xff]
    %v247 = vld [vmem:[#allocation10 + $0x138] sm:$0xff]
    %v248 = vld [vmem:[#allocation10 + $0x140] sm:$0xff]
    %v249 = vld [vmem:[#allocation10 + $0x148] sm:$0xff]
    %v250 = vld [vmem:[#allocation10 + $0x150] sm:$0xff]
    %v251 = vld [vmem:[#allocation10 + $0x158] sm:$0xff]
    %v252 = vld [vmem:[#allocation10 + $0x160] sm:$0xff]
    %v253 = vld [vmem:[#allocation10 + $0x168] sm:$0xff]
    %v254 = vld [vmem:[#allocation10 + $0x170] sm:$0xff]
    %v255 = vld [vmem:[#allocation10 + $0x178] sm:$0xff]
    %v256 = vld [vmem:[#allocation10 + $0x180] sm:$0xff]
    %v257 = vld [vmem:[#allocation10 + $0x188] sm:$0xff]
    %v258 = vld [vmem:[#allocation10 + $0x190] sm:$0xff]
    %v259 = vld [vmem:[#allocation10 + $0x198] sm:$0xff]
    %v260 = vld [vmem:[#allocation10 + $0x1a0] sm:$0xff]
    %v261 = vld [vmem:[#allocation10 + $0x1a8] sm:$0xff]
    %v262 = vld [vmem:[#allocation10 + $0x1b0] sm:$0xff]
    %v263 = vld [vmem:[#allocation10 + $0x1b8] sm:$0xff]
    %v264 = vld [vmem:[#allocation10 + $0x1c0] sm:$0xff]
    %v265 = vld [vmem:[#allocation10 + $0x1c8] sm:$0xff]
    %v266 = vld [vmem:[#allocation10 + $0x1d0] sm:$0xff]
    %v267 = vld [vmem:[#allocation10 + $0x1d8] sm:$0xff]
    %v268 = vld [vmem:[#allocation10 + $0x1e0] sm:$0xff]
    %v269 = vld [vmem:[#allocation10 + $0x1e8] sm:$0xff]
    %v270 = vld [vmem:[#allocation10 + $0x1f0] sm:$0xff]
    %v271 = vld [vmem:[#allocation10 + $0x1f8] sm:$0xff]
    %v272 = vld [vmem:[%s0] sm:$0x3]
    %v273 = vld [vmem:[%s1] sm:$0xff]
    %v274 = vld [vmem:[%s1 + $0x8] sm:$0xff]
    %v275 = vld [vmem:[%s1 + $0x10] sm:$0xff]
    %v276 = vld [vmem:[%s1 + $0x18] sm:$0xff]
    %v277 = vld [vmem:[%s3] sm:$0xf]
    %v279 = vlaneseq
    %v280 = vshrl.u32 %v279, 7
    %v281 = vsub.s32 0, %v280
    %v282 = vrot.slane %v277, %v281
    %v283 = vlaneseq
    %v284 = vshrl.u32 %v283, 7
    %v285 = vsub.s32 1, %v284
    %v286 = vrot.slane %v277, %v285
    %v287 = vlaneseq
    %v288 = vshrl.u32 %v287, 7
    %v289 = vsub.s32 2, %v288
    %v290 = vrot.slane %v277, %v289
    %v291 = vlaneseq
    %v292 = vshrl.u32 %v291, 7
    %v293 = vsub.s32 3, %v292
    %v294 = vrot.slane %v277, %v293
    %vm299 = vcmask 64512
    %v301 = vsel %vm299, %v272, 0
    %303 = vmatprep.subr.mxu0 0.0
    %304 = vmatpush1.msra.mxu0 0.0
    %305 = vmatprep.subr.mxu0 0.0
    %306 = vmatpush1.msra.mxu0 0.0
    %307 = vmatprep.subr.mxu0 0.0
    %308 = vmatpush1.msra.mxu0 0.0
    %309 = vmatprep.subr.mxu0 0.0
    %310 = vmatpush1.msra.mxu0 0.0
    %311 = vmatprep.subr.mxu0 0.0
    %312 = vmatpush1.msra.mxu0 0.0
    %313 = vmatprep.subr.mxu0 0.0
    %314 = vmatpush1.msra.mxu0 0.0
    %315 = vmatprep.subr.mxu0 0.0
    %316 = vmatpush1.msra.mxu0 0.0
    %317 = vmatprep.subr.mxu0 0.0
    %318 = vmatpush1.msra.mxu0 0.0
    %319 = vmatprep.subr.mxu0 0.0
    %320 = vmatpush1.msra.mxu0 0.0
    %321 = vmatprep.subr.mxu0 0.0
    %322 = vmatpush1.msra.mxu0 0.0
    %323 = vmatprep.subr.mxu0 0.0
    %324 = vmatpush1.msra.mxu0 0.0
    %325 = vmatprep.subr.mxu0 0.0
    %326 = vmatpush1.msra.mxu0 0.0
    %327 = vmatprep.subr.mxu0 0.0
    %328 = vmatpush1.msra.mxu0 0.0
    %329 = vmatprep.subr.mxu0 0.0
    %330 = vmatpush1.msra.mxu0 0.0
    %331 = vmatprep.subr.mxu0 0.0
    %332 = vmatpush1.msra.mxu0 0.0
    %333 = vmatprep.subr.mxu0 %v274
    %334 = vmatpush1.msra.mxu0 %v273
    %335 = vmatprep.subr.mxu0 0.0
    %336 = vmatpush2.msra.mxu0 0.0
    %337 = vmatprep.subr.mxu0 0.0
    %338 = vmatpush2.msra.mxu0 0.0
    %339 = vmatprep.subr.mxu0 0.0
    %340 = vmatpush2.msra.mxu0 0.0
    %341 = vmatprep.subr.mxu0 0.0
    %342 = vmatpush2.msra.mxu0 0.0
    %343 = vmatprep.subr.mxu0 0.0
    %344 = vmatpush2.msra.mxu0 0.0
    %345 = vmatprep.subr.mxu0 0.0
    %346 = vmatpush2.msra.mxu0 0.0
    %347 = vmatprep.subr.mxu0 0.0
    %348 = vmatpush2.msra.mxu0 0.0
    %349 = vmatprep.subr.mxu0 0.0
    %350 = vmatpush2.msra.mxu0 0.0
    %351 = vmatprep.subr.mxu0 0.0
    %352 = vmatpush2.msra.mxu0 0.0
    %353 = vmatprep.subr.mxu0 0.0
    %354 = vmatpush2.msra.mxu0 0.0
    %355 = vmatprep.subr.mxu0 0.0
    %356 = vmatpush2.msra.mxu0 0.0
    %357 = vmatprep.subr.mxu0 0.0
    %358 = vmatpush2.msra.mxu0 0.0
    %359 = vmatprep.subr.mxu0 0.0
    %360 = vmatpush2.msra.mxu0 0.0
    %361 = vmatprep.subr.mxu0 0.0
    %362 = vmatpush2.msra.mxu0 0.0
    %363 = vmatprep.subr.mxu0 0.0
    %364 = vmatpush2.msra.mxu0 0.0
    %365 = vmatprep.subr.mxu0 0.0
    %366 = vmatpush2.msra.mxu0 0.0
    %367 = vmatprep.mubr.f32.mxu0 0.0
    %368 = vmatmul.mubr.f32.gmra.mxu0 %v301
    %v369 = vpop.f32.mrf.mxu0
    %v370 = vadd.f32 %v282, %v369
    %v371 = vpop.f32.mrf.mxu0
    %v372 = vadd.f32 %v286, %v371
    %373 = vdwg.mxu0
    %374 = vmatprep.subr.mxu0 0.0
    %375 = vmatpush1.msra.mxu0 0.0
    %376 = vmatprep.subr.mxu0 0.0
    %377 = vmatpush1.msra.mxu0 0.0
    %378 = vmatprep.subr.mxu0 0.0
    %379 = vmatpush1.msra.mxu0 0.0
    %380 = vmatprep.subr.mxu0 0.0
    %381 = vmatpush1.msra.mxu0 0.0
    %382 = vmatprep.subr.mxu0 0.0
    %383 = vmatpush1.msra.mxu0 0.0
    %384 = vmatprep.subr.mxu0 0.0
    %385 = vmatpush1.msra.mxu0 0.0
    %386 = vmatprep.subr.mxu0 0.0
    %387 = vmatpush1.msra.mxu0 0.0
    %388 = vmatprep.subr.mxu0 0.0
    %389 = vmatpush1.msra.mxu0 0.0
    %390 = vmatprep.subr.mxu0 0.0
    %391 = vmatpush1.msra.mxu0 0.0
    %392 = vmatprep.subr.mxu0 0.0
    %393 = vmatpush1.msra.mxu0 0.0
    %394 = vmatprep.subr.mxu0 0.0
    %395 = vmatpush1.msra.mxu0 0.0
    %396 = vmatprep.subr.mxu0 0.0
    %397 = vmatpush1.msra.mxu0 0.0
    %398 = vmatprep.subr.mxu0 0.0
    %399 = vmatpush1.msra.mxu0 0.0
    %400 = vmatprep.subr.mxu0 0.0
    %401 = vmatpush1.msra.mxu0 0.0
    %402 = vmatprep.subr.mxu0 0.0
    %403 = vmatpush1.msra.mxu0 0.0
    %404 = vmatprep.subr.mxu0 %v276
    %405 = vmatpush1.msra.mxu0 %v275
    %406 = vmatprep.subr.mxu0 0.0
    %407 = vmatpush2.msra.mxu0 0.0
    %408 = vmatprep.subr.mxu0 0.0
    %409 = vmatpush2.msra.mxu0 0.0
    %410 = vmatprep.subr.mxu0 0.0
    %411 = vmatpush2.msra.mxu0 0.0
    %412 = vmatprep.subr.mxu0 0.0
    %413 = vmatpush2.msra.mxu0 0.0
    %414 = vmatprep.subr.mxu0 0.0
    %415 = vmatpush2.msra.mxu0 0.0
    %416 = vmatprep.subr.mxu0 0.0
    %417 = vmatpush2.msra.mxu0 0.0
    %418 = vmatprep.subr.mxu0 0.0
    %419 = vmatpush2.msra.mxu0 0.0
    %420 = vmatprep.subr.mxu0 0.0
    %421 = vmatpush2.msra.mxu0 0.0
    %422 = vmatprep.subr.mxu0 0.0
    %423 = vmatpush2.msra.mxu0 0.0
    %424 = vmatprep.subr.mxu0 0.0
    %425 = vmatpush2.msra.mxu0 0.0
    %426 = vmatprep.subr.mxu0 0.0
    %427 = vmatpush2.msra.mxu0 0.0
    %428 = vmatprep.subr.mxu0 0.0
    %429 = vmatpush2.msra.mxu0 0.0
    %430 = vmatprep.subr.mxu0 0.0
    %431 = vmatpush2.msra.mxu0 0.0
    %432 = vmatprep.subr.mxu0 0.0
    %433 = vmatpush2.msra.mxu0 0.0
    %434 = vmatprep.subr.mxu0 0.0
    %435 = vmatpush2.msra.mxu0 0.0
    %436 = vmatprep.subr.mxu0 0.0
    %437 = vmatpush2.msra.mxu0 0.0
    %438 = vmatprep.mubr.f32.mxu0 0.0
    %439 = vmatmul.mubr.f32.gmra.mxu0 %v301
    %v440 = vpop.f32.mrf.mxu0
    %v441 = vadd.f32 %v290, %v440
    %v442 = vpop.f32.mrf.mxu0
    %v443 = vadd.f32 %v294, %v442
    %444 = vdwg.mxu0
    %445 = vmatprep.subr.mxu0 %v141
    %446 = vmatpush1.msra.mxu0 %v140
    %447 = vmatprep.subr.mxu0 %v137
    %448 = vmatpush1.msra.mxu0 %v136
    %449 = vmatprep.subr.mxu0 %v133
    %450 = vmatpush1.msra.mxu0 %v132
    %451 = vmatprep.subr.mxu0 %v129
    %452 = vmatpush1.msra.mxu0 %v128
    %453 = vmatprep.subr.mxu0 %v125
    %454 = vmatpush1.msra.mxu0 %v124
    %455 = vmatprep.subr.mxu0 %v121
    %456 = vmatpush1.msra.mxu0 %v120
    %457 = vmatprep.subr.mxu0 %v117
    %458 = vmatpush1.msra.mxu0 %v116
    %459 = vmatprep.subr.mxu0 %v113
    %460 = vmatpush1.msra.mxu0 %v112
    %461 = vmatprep.subr.mxu0 %v109
    %462 = vmatpush1.msra.mxu0 %v108
    %463 = vmatprep.subr.mxu0 %v105
    %464 = vmatpush1.msra.mxu0 %v104
    %465 = vmatprep.subr.mxu0 %v101
    %466 = vmatpush1.msra.mxu0 %v100
    %467 = vmatprep.subr.mxu0 %v97
    %468 = vmatpush1.msra.mxu0 %v96
    %469 = vmatprep.subr.mxu0 %v93
    %470 = vmatpush1.msra.mxu0 %v92
    %471 = vmatprep.subr.mxu0 %v89
    %472 = vmatpush1.msra.mxu0 %v88
    %473 = vmatprep.subr.mxu0 %v85
    %474 = vmatpush1.msra.mxu0 %v84
    %475 = vmatprep.subr.mxu0 %v81
    %476 = vmatpush1.msra.mxu0 %v80
    %477 = vmatprep.subr.mxu0 0.0
    %478 = vmatpush2.msra.mxu0 0.0
    %479 = vmatprep.subr.mxu0 0.0
    %480 = vmatpush2.msra.mxu0 0.0
    %481 = vmatprep.subr.mxu0 0.0
    %482 = vmatpush2.msra.mxu0 0.0
    %483 = vmatprep.subr.mxu0 0.0
    %484 = vmatpush2.msra.mxu0 0.0
    %485 = vmatprep.subr.mxu0 0.0
    %486 = vmatpush2.msra.mxu0 0.0
    %487 = vmatprep.subr.mxu0 0.0
    %488 = vmatpush2.msra.mxu0 0.0
    %489 = vmatprep.subr.mxu0 0.0
    %490 = vmatpush2.msra.mxu0 0.0
    %491 = vmatprep.subr.mxu0 0.0
    %492 = vmatpush2.msra.mxu0 0.0
    %493 = vmatprep.subr.mxu0 0.0
    %494 = vmatpush2.msra.mxu0 0.0
    %495 = vmatprep.subr.mxu0 0.0
    %496 = vmatpush2.msra.mxu0 0.0
    %497 = vmatprep.subr.mxu0 0.0
    %498 = vmatpush2.msra.mxu0 0.0
    %499 = vmatprep.subr.mxu0 0.0
    %500 = vmatpush2.msra.mxu0 0.0
    %501 = vmatprep.subr.mxu0 0.0
    %502 = vmatpush2.msra.mxu0 0.0
    %503 = vmatprep.subr.mxu0 0.0
    %504 = vmatpush2.msra.mxu0 0.0
    %505 = vmatprep.subr.mxu0 0.0
    %506 = vmatpush2.msra.mxu0 0.0
    %507 = vmatprep.subr.mxu0 0.0
    %508 = vmatpush2.msra.mxu0 0.0
    %509 = vmatprep.mubr.f32.mxu0 0.0
    %510 = vmatmul.mubr.f32.gmra.mxu0 0.0
    %v511 = vpop.f32.mrf.mxu0
    %v512 = vadd.f32 0.0, %v511
    %v513 = vpop.f32.mrf.mxu0
    %v514 = vadd.f32 0.0, %v513
    %515 = vdwg.mxu0
    %516 = vmatprep.subr.mxu0 %v143
    %517 = vmatpush1.msra.mxu0 %v142
    %518 = vmatprep.subr.mxu0 %v139
    %519 = vmatpush1.msra.mxu0 %v138
    %520 = vmatprep.subr.mxu0 %v135
    %521 = vmatpush1.msra.mxu0 %v134
    %522 = vmatprep.subr.mxu0 %v131
    %523 = vmatpush1.msra.mxu0 %v130
    %524 = vmatprep.subr.mxu0 %v127
    %525 = vmatpush1.msra.mxu0 %v126
    %526 = vmatprep.subr.mxu0 %v123
    %527 = vmatpush1.msra.mxu0 %v122
    %528 = vmatprep.subr.mxu0 %v119
    %529 = vmatpush1.msra.mxu0 %v118
    %530 = vmatprep.subr.mxu0 %v115
    %531 = vmatpush1.msra.mxu0 %v114
    %532 = vmatprep.subr.mxu0 %v111
    %533 = vmatpush1.msra.mxu0 %v110
    %534 = vmatprep.subr.mxu0 %v107
    %535 = vmatpush1.msra.mxu0 %v106
    %536 = vmatprep.subr.mxu0 %v103
    %537 = vmatpush1.msra.mxu0 %v102
    %538 = vmatprep.subr.mxu0 %v99
    %539 = vmatpush1.msra.mxu0 %v98
    %540 = vmatprep.subr.mxu0 %v95
    %541 = vmatpush1.msra.mxu0 %v94
    %542 = vmatprep.subr.mxu0 %v91
    %543 = vmatpush1.msra.mxu0 %v90
    %544 = vmatprep.subr.mxu0 %v87
    %545 = vmatpush1.msra.mxu0 %v86
    %546 = vmatprep.subr.mxu0 %v83
    %547 = vmatpush1.msra.mxu0 %v82
    %548 = vmatprep.subr.mxu0 0.0
    %549 = vmatpush2.msra.mxu0 0.0
    %550 = vmatprep.subr.mxu0 0.0
    %551 = vmatpush2.msra.mxu0 0.0
    %552 = vmatprep.subr.mxu0 0.0
    %553 = vmatpush2.msra.mxu0 0.0
    %554 = vmatprep.subr.mxu0 0.0
    %555 = vmatpush2.msra.mxu0 0.0
    %556 = vmatprep.subr.mxu0 0.0
    %557 = vmatpush2.msra.mxu0 0.0
    %558 = vmatprep.subr.mxu0 0.0
    %559 = vmatpush2.msra.mxu0 0.0
    %560 = vmatprep.subr.mxu0 0.0
    %561 = vmatpush2.msra.mxu0 0.0
    %562 = vmatprep.subr.mxu0 0.0
    %563 = vmatpush2.msra.mxu0 0.0
    %564 = vmatprep.subr.mxu0 0.0
    %565 = vmatpush2.msra.mxu0 0.0
    %566 = vmatprep.subr.mxu0 0.0
    %567 = vmatpush2.msra.mxu0 0.0
    %568 = vmatprep.subr.mxu0 0.0
    %569 = vmatpush2.msra.mxu0 0.0
    %570 = vmatprep.subr.mxu0 0.0
    %571 = vmatpush2.msra.mxu0 0.0
    %572 = vmatprep.subr.mxu0 0.0
    %573 = vmatpush2.msra.mxu0 0.0
    %574 = vmatprep.subr.mxu0 0.0
    %575 = vmatpush2.msra.mxu0 0.0
    %576 = vmatprep.subr.mxu0 0.0
    %577 = vmatpush2.msra.mxu0 0.0
    %578 = vmatprep.subr.mxu0 0.0
    %579 = vmatpush2.msra.mxu0 0.0
    %580 = vmatprep.mubr.f32.mxu0 0.0
    %581 = vmatmul.mubr.f32.gmra.mxu0 0.0
    %v582 = vpop.f32.mrf.mxu0
    %v583 = vadd.f32 0.0, %v582
    %v584 = vpop.f32.mrf.mxu0
    %v585 = vadd.f32 0.0, %v584
    %586 = vdwg.mxu0
    %v587 = vadd.f32 %v370, %v512
    %v588 = vadd.f32 %v372, %v514
    %v589 = vadd.f32 %v441, %v583
    %v590 = vadd.f32 %v443, %v585
    %v591 = vxor.u32 %v587, 2147483648
    %v592 = vmul.f32 %v591, 1.442695
    %v593 = vpow.pop %v592
    %v594 = vadd.f32 %v593, 1.0
    %v595 = vrcp.pop %v594
    %v596 = vmul.f32 1.0, %v595
    %v597 = vxor.u32 %v588, 2147483648
    %v598 = vmul.f32 %v597, 1.442695
    %v599 = vpow.pop %v598
    %v600 = vadd.f32 %v599, 1.0
    %v601 = vrcp.pop %v600
    %v602 = vmul.f32 1.0, %v601
    %v603 = vtanh.pop %v589
    %v604 = vxor.u32 %v590, 2147483648
    %v605 = vmul.f32 %v604, 1.442695
    %v606 = vpow.pop %v605
    %v607 = vadd.f32 %v606, 1.0
    %v608 = vrcp.pop %v607
    %v609 = vmul.f32 1.0, %v608
    %v610 = vmul.f32 %v602, 0.0
    %v611 = vmul.f32 %v596, %v603
    %v612 = vadd.f32 %v610, %v611
    %v613 = vtanh.pop %v612
    %v614 = vmul.f32 %v609, %v613
    %v615 = vtanh.pop %v614
    %616 = vst [vmem:[#allocation2] sm:$0x3] %v615
    %617 = vmatprep.subr.mxu0 %v141
    %618 = vmatpush1.msra.mxu0 %v140
    %619 = vmatprep.subr.mxu0 %v137
    %620 = vmatpush1.msra.mxu0 %v136
    %621 = vmatprep.subr.mxu0 %v133
    %622 = vmatpush1.msra.mxu0 %v132
    %623 = vmatprep.subr.mxu0 %v129
    %624 = vmatpush1.msra.mxu0 %v128
    %625 = vmatprep.subr.mxu0 %v125
    %626 = vmatpush1.msra.mxu0 %v124
    %627 = vmatprep.subr.mxu0 %v121
    %628 = vmatpush1.msra.mxu0 %v120
    %629 = vmatprep.subr.mxu0 %v117
    %630 = vmatpush1.msra.mxu0 %v116
    %631 = vmatprep.subr.mxu0 %v113
    %632 = vmatpush1.msra.mxu0 %v112
    %633 = vmatprep.subr.mxu0 %v109
    %634 = vmatpush1.msra.mxu0 %v108
    %635 = vmatprep.subr.mxu0 %v105
    %636 = vmatpush1.msra.mxu0 %v104
    %637 = vmatprep.subr.mxu0 %v101
    %638 = vmatpush1.msra.mxu0 %v100
    %639 = vmatprep.subr.mxu0 %v97
    %640 = vmatpush1.msra.mxu0 %v96
    %641 = vmatprep.subr.mxu0 %v93
    %642 = vmatpush1.msra.mxu0 %v92
    %643 = vmatprep.subr.mxu0 %v89
    %644 = vmatpush1.msra.mxu0 %v88
    %645 = vmatprep.subr.mxu0 %v85
    %646 = vmatpush1.msra.mxu0 %v84
    %647 = vmatprep.subr.mxu0 %v81
    %648 = vmatpush1.msra.mxu0 %v80
    %649 = vmatprep.subr.mxu0 0.0
    %650 = vmatpush2.msra.mxu0 0.0
    %651 = vmatprep.subr.mxu0 0.0
    %652 = vmatpush2.msra.mxu0 0.0
    %653 = vmatprep.subr.mxu0 0.0
    %654 = vmatpush2.msra.mxu0 0.0
    %655 = vmatprep.subr.mxu0 0.0
    %656 = vmatpush2.msra.mxu0 0.0
    %657 = vmatprep.subr.mxu0 0.0
    %658 = vmatpush2.msra.mxu0 0.0
    %659 = vmatprep.subr.mxu0 0.0
    %660 = vmatpush2.msra.mxu0 0.0
    %661 = vmatprep.subr.mxu0 0.0
    %662 = vmatpush2.msra.mxu0 0.0
    %663 = vmatprep.subr.mxu0 0.0
    %664 = vmatpush2.msra.mxu0 0.0
    %665 = vmatprep.subr.mxu0 0.0
    %666 = vmatpush2.msra.mxu0 0.0
    %667 = vmatprep.subr.mxu0 0.0
    %668 = vmatpush2.msra.mxu0 0.0
    %669 = vmatprep.subr.mxu0 0.0
    %670 = vmatpush2.msra.mxu0 0.0
    %671 = vmatprep.subr.mxu0 0.0
    %672 = vmatpush2.msra.mxu0 0.0
    %673 = vmatprep.subr.mxu0 0.0
    %674 = vmatpush2.msra.mxu0 0.0
    %675 = vmatprep.subr.mxu0 0.0
    %676 = vmatpush2.msra.mxu0 0.0
    %677 = vmatprep.subr.mxu0 0.0
    %678 = vmatpush2.msra.mxu0 0.0
    %679 = vmatprep.subr.mxu0 0.0
    %680 = vmatpush2.msra.mxu0 0.0
    %681 = vmatprep.mubr.f32.mxu0 0.0
    %682 = vmatmul.mubr.f32.gmra.mxu0 %v614
    %v683 = vpop.f32.mrf.mxu0
    %v684 = vadd.f32 0.0, %v683
    %v685 = vpop.f32.mrf.mxu0
    %v686 = vadd.f32 0.0, %v685
    %687 = vdwg.mxu0
    %688 = vmatprep.subr.mxu0 %v143
    %689 = vmatpush1.msra.mxu0 %v142
    %690 = vmatprep.subr.mxu0 %v139
    %691 = vmatpush1.msra.mxu0 %v138
    %692 = vmatprep.subr.mxu0 %v135
    %693 = vmatpush1.msra.mxu0 %v134
    %694 = vmatprep.subr.mxu0 %v131
    %695 = vmatpush1.msra.mxu0 %v130
    %696 = vmatprep.subr.mxu0 %v127
    %697 = vmatpush1.msra.mxu0 %v126
    %698 = vmatprep.subr.mxu0 %v123
    %699 = vmatpush1.msra.mxu0 %v122
    %700 = vmatprep.subr.mxu0 %v119
    %701 = vmatpush1.msra.mxu0 %v118
    %702 = vmatprep.subr.mxu0 %v115
    %703 = vmatpush1.msra.mxu0 %v114
    %704 = vmatprep.subr.mxu0 %v111
    %705 = vmatpush1.msra.mxu0 %v110
    %706 = vmatprep.subr.mxu0 %v107
    %707 = vmatpush1.msra.mxu0 %v106
    %708 = vmatprep.subr.mxu0 %v103
    %709 = vmatpush1.msra.mxu0 %v102
    %710 = vmatprep.subr.mxu0 %v99
    %711 = vmatpush1.msra.mxu0 %v98
    %712 = vmatprep.subr.mxu0 %v95
    %713 = vmatpush1.msra.mxu0 %v94
    %714 = vmatprep.subr.mxu0 %v91
    %715 = vmatpush1.msra.mxu0 %v90
    %716 = vmatprep.subr.mxu0 %v87
    %717 = vmatpush1.msra.mxu0 %v86
    %718 = vmatprep.subr.mxu0 %v83
    %719 = vmatpush1.msra.mxu0 %v82
    %720 = vmatprep.subr.mxu0 0.0
    %721 = vmatpush2.msra.mxu0 0.0
    %722 = vmatprep.subr.mxu0 0.0
    %723 = vmatpush2.msra.mxu0 0.0
    %724 = vmatprep.subr.mxu0 0.0
    %725 = vmatpush2.msra.mxu0 0.0
    %726 = vmatprep.subr.mxu0 0.0
    %727 = vmatpush2.msra.mxu0 0.0
    %728 = vmatprep.subr.mxu0 0.0
    %729 = vmatpush2.msra.mxu0 0.0
    %730 = vmatprep.subr.mxu0 0.0
    %731 = vmatpush2.msra.mxu0 0.0
    %732 = vmatprep.subr.mxu0 0.0
    %733 = vmatpush2.msra.mxu0 0.0
    %734 = vmatprep.subr.mxu0 0.0
    %735 = vmatpush2.msra.mxu0 0.0
    %736 = vmatprep.subr.mxu0 0.0
    %737 = vmatpush2.msra.mxu0 0.0
    %738 = vmatprep.subr.mxu0 0.0
    %739 = vmatpush2.msra.mxu0 0.0
    %740 = vmatprep.subr.mxu0 0.0
    %741 = vmatpush2.msra.mxu0 0.0
    %742 = vmatprep.subr.mxu0 0.0
    %743 = vmatpush2.msra.mxu0 0.0
    %744 = vmatprep.subr.mxu0 0.0
    %745 = vmatpush2.msra.mxu0 0.0
    %746 = vmatprep.subr.mxu0 0.0
    %747 = vmatpush2.msra.mxu0 0.0
    %748 = vmatprep.subr.mxu0 0.0
    %749 = vmatpush2.msra.mxu0 0.0
    %750 = vmatprep.subr.mxu0 0.0
    %751 = vmatpush2.msra.mxu0 0.0
    %752 = vmatprep.mubr.f32.mxu0 0.0
    %753 = vmatmul.mubr.f32.gmra.mxu0 %v614
    %v754 = vpop.f32.mrf.mxu0
    %v755 = vadd.f32 0.0, %v754
    %v756 = vpop.f32.mrf.mxu0
    %v757 = vadd.f32 0.0, %v756
    %758 = vdwg.mxu0
    %v759 = vadd.f32 %v370, %v684
    %v760 = vadd.f32 %v372, %v686
    %v761 = vadd.f32 %v441, %v755
    %v762 = vadd.f32 %v443, %v757
    %v763 = vxor.u32 %v759, 2147483648
    %v764 = vmul.f32 %v763, 1.442695
    %v765 = vpow.pop %v764
    %v766 = vadd.f32 %v765, 1.0
    %v767 = vrcp.pop %v766
    %v768 = vmul.f32 1.0, %v767
    %v769 = vxor.u32 %v760, 2147483648
    %v770 = vmul.f32 %v769, 1.442695
    %v771 = vpow.pop %v770
    %v772 = vadd.f32 %v771, 1.0
    %v773 = vrcp.pop %v772
    %v774 = vmul.f32 1.0, %v773
    %v775 = vtanh.pop %v761
    %v776 = vxor.u32 %v762, 2147483648
    %v777 = vmul.f32 %v776, 1.442695
    %v778 = vpow.pop %v777
    %v779 = vadd.f32 %v778, 1.0
    %v780 = vrcp.pop %v779
    %v781 = vmul.f32 1.0, %v780
    %v782 = vmul.f32 %v774, %v612
    %v783 = vmul.f32 %v768, %v775
    %v784 = vadd.f32 %v782, %v783
    %v785 = vtanh.pop %v784
    %v786 = vmul.f32 %v781, %v785
    %v787 = vtanh.pop %v786
    %788 = vst [vmem:[#allocation2 + $0x2] sm:$0x3] %v787
    %789 = vmatprep.subr.mxu0 %v141
    %790 = vmatpush1.msra.mxu0 %v140
    %791 = vmatprep.subr.mxu0 %v137
    %792 = vmatpush1.msra.mxu0 %v136
    %793 = vmatprep.subr.mxu0 %v133
    %794 = vmatpush1.msra.mxu0 %v132
    %795 = vmatprep.subr.mxu0 %v129
    %796 = vmatpush1.msra.mxu0 %v128
    %797 = vmatprep.subr.mxu0 %v125
    %798 = vmatpush1.msra.mxu0 %v124
    %799 = vmatprep.subr.mxu0 %v121
    %800 = vmatpush1.msra.mxu0 %v120
    %801 = vmatprep.subr.mxu0 %v117
    %802 = vmatpush1.msra.mxu0 %v116
    %803 = vmatprep.subr.mxu0 %v113
    %804 = vmatpush1.msra.mxu0 %v112
    %805 = vmatprep.subr.mxu0 %v109
    %806 = vmatpush1.msra.mxu0 %v108
    %807 = vmatprep.subr.mxu0 %v105
    %808 = vmatpush1.msra.mxu0 %v104
    %809 = vmatprep.subr.mxu0 %v101
    %810 = vmatpush1.msra.mxu0 %v100
    %811 = vmatprep.subr.mxu0 %v97
    %812 = vmatpush1.msra.mxu0 %v96
    %813 = vmatprep.subr.mxu0 %v93
    %814 = vmatpush1.msra.mxu0 %v92
    %815 = vmatprep.subr.mxu0 %v89
    %816 = vmatpush1.msra.mxu0 %v88
    %817 = vmatprep.subr.mxu0 %v85
    %818 = vmatpush1.msra.mxu0 %v84
    %819 = vmatprep.subr.mxu0 %v81
    %820 = vmatpush1.msra.mxu0 %v80
    %821 = vmatprep.subr.mxu0 0.0
    %822 = vmatpush2.msra.mxu0 0.0
    %823 = vmatprep.subr.mxu0 0.0
    %824 = vmatpush2.msra.mxu0 0.0
    %825 = vmatprep.subr.mxu0 0.0
    %826 = vmatpush2.msra.mxu0 0.0
    %827 = vmatprep.subr.mxu0 0.0
    %828 = vmatpush2.msra.mxu0 0.0
    %829 = vmatprep.subr.mxu0 0.0
    %830 = vmatpush2.msra.mxu0 0.0
    %831 = vmatprep.subr.mxu0 0.0
    %832 = vmatpush2.msra.mxu0 0.0
    %833 = vmatprep.subr.mxu0 0.0
    %834 = vmatpush2.msra.mxu0 0.0
    %835 = vmatprep.subr.mxu0 0.0
    %836 = vmatpush2.msra.mxu0 0.0
    %837 = vmatprep.subr.mxu0 0.0
    %838 = vmatpush2.msra.mxu0 0.0
    %839 = vmatprep.subr.mxu0 0.0
    %840 = vmatpush2.msra.mxu0 0.0
    %841 = vmatprep.subr.mxu0 0.0
    %842 = vmatpush2.msra.mxu0 0.0
    %843 = vmatprep.subr.mxu0 0.0
    %844 = vmatpush2.msra.mxu0 0.0
    %845 = vmatprep.subr.mxu0 0.0
    %846 = vmatpush2.msra.mxu0 0.0
    %847 = vmatprep.subr.mxu0 0.0
    %848 = vmatpush2.msra.mxu0 0.0
    %849 = vmatprep.subr.mxu0 0.0
    %850 = vmatpush2.msra.mxu0 0.0
    %851 = vmatprep.subr.mxu0 0.0
    %852 = vmatpush2.msra.mxu0 0.0
    %853 = vmatprep.mubr.f32.mxu0 0.0
    %854 = vmatmul.mubr.f32.gmra.mxu0 %v786
    %v855 = vpop.f32.mrf.mxu0
    %v856 = vadd.f32 0.0, %v855
    %v857 = vpop.f32.mrf.mxu0
    %v858 = vadd.f32 0.0, %v857
    %859 = vdwg.mxu0
    %860 = vmatprep.subr.mxu0 %v143
    %861 = vmatpush1.msra.mxu0 %v142
    %862 = vmatprep.subr.mxu0 %v139
    %863 = vmatpush1.msra.mxu0 %v138
    %864 = vmatprep.subr.mxu0 %v135
    %865 = vmatpush1.msra.mxu0 %v134
    %866 = vmatprep.subr.mxu0 %v131
    %867 = vmatpush1.msra.mxu0 %v130
    %868 = vmatprep.subr.mxu0 %v127
    %869 = vmatpush1.msra.mxu0 %v126
    %870 = vmatprep.subr.mxu0 %v123
    %871 = vmatpush1.msra.mxu0 %v122
    %872 = vmatprep.subr.mxu0 %v119
    %873 = vmatpush1.msra.mxu0 %v118
    %874 = vmatprep.subr.mxu0 %v115
    %875 = vmatpush1.msra.mxu0 %v114
    %876 = vmatprep.subr.mxu0 %v111
    %877 = vmatpush1.msra.mxu0 %v110
    %878 = vmatprep.subr.mxu0 %v107
    %879 = vmatpush1.msra.mxu0 %v106
    %880 = vmatprep.subr.mxu0 %v103
    %881 = vmatpush1.msra.mxu0 %v102
    %882 = vmatprep.subr.mxu0 %v99
    %883 = vmatpush1.msra.mxu0 %v98
    %884 = vmatprep.subr.mxu0 %v95
    %885 = vmatpush1.msra.mxu0 %v94
    %886 = vmatprep.subr.mxu0 %v91
    %887 = vmatpush1.msra.mxu0 %v90
    %888 = vmatprep.subr.mxu0 %v87
    %889 = vmatpush1.msra.mxu0 %v86
    %890 = vmatprep.subr.mxu0 %v83
    %891 = vmatpush1.msra.mxu0 %v82
    %892 = vmatprep.subr.mxu0 0.0
    %893 = vmatpush2.msra.mxu0 0.0
    %894 = vmatprep.subr.mxu0 0.0
    %895 = vmatpush2.msra.mxu0 0.0
    %896 = vmatprep.subr.mxu0 0.0
    %897 = vmatpush2.msra.mxu0 0.0
    %898 = vmatprep.subr.mxu0 0.0
    %899 = vmatpush2.msra.mxu0 0.0
    %900 = vmatprep.subr.mxu0 0.0
    %901 = vmatpush2.msra.mxu0 0.0
    %902 = vmatprep.subr.mxu0 0.0
    %903 = vmatpush2.msra.mxu0 0.0
    %904 = vmatprep.subr.mxu0 0.0
    %905 = vmatpush2.msra.mxu0 0.0
    %906 = vmatprep.subr.mxu0 0.0
    %907 = vmatpush2.msra.mxu0 0.0
    %908 = vmatprep.subr.mxu0 0.0
    %909 = vmatpush2.msra.mxu0 0.0
    %910 = vmatprep.subr.mxu0 0.0
    %911 = vmatpush2.msra.mxu0 0.0
    %912 = vmatprep.subr.mxu0 0.0
    %913 = vmatpush2.msra.mxu0 0.0
    %914 = vmatprep.subr.mxu0 0.0
    %915 = vmatpush2.msra.mxu0 0.0
    %916 = vmatprep.subr.mxu0 0.0
    %917 = vmatpush2.msra.mxu0 0.0
    %918 = vmatprep.subr.mxu0 0.0
    %919 = vmatpush2.msra.mxu0 0.0
    %920 = vmatprep.subr.mxu0 0.0
    %921 = vmatpush2.msra.mxu0 0.0
    %922 = vmatprep.subr.mxu0 0.0
    %923 = vmatpush2.msra.mxu0 0.0
    %924 = vmatprep.mubr.f32.mxu0 0.0
    %925 = vmatmul.mubr.f32.gmra.mxu0 %v786
    %v926 = vpop.f32.mrf.mxu0
    %v927 = vadd.f32 0.0, %v926
    %v928 = vpop.f32.mrf.mxu0
    %v929 = vadd.f32 0.0, %v928
    %930 = vdwg.mxu0
    %v931 = vadd.f32 %v370, %v856
    %v932 = vadd.f32 %v372, %v858
    %v933 = vadd.f32 %v441, %v927
    %v934 = vadd.f32 %v443, %v929
    %v935 = vxor.u32 %v931, 2147483648
    %v936 = vmul.f32 %v935, 1.442695
    %v937 = vpow.pop %v936
    %v938 = vadd.f32 %v937, 1.0
    %v939 = vrcp.pop %v938
    %v940 = vmul.f32 1.0, %v939
    %v941 = vxor.u32 %v932, 2147483648
    %v942 = vmul.f32 %v941, 1.442695
    %v943 = vpow.pop %v942
    %v944 = vadd.f32 %v943, 1.0
    %v945 = vrcp.pop %v944
    %v946 = vmul.f32 1.0, %v945
    %v947 = vtanh.pop %v933
    %v948 = vxor.u32 %v934, 2147483648
    %v949 = vmul.f32 %v948, 1.442695
    %v950 = vpow.pop %v949
    %v951 = vadd.f32 %v950, 1.0
    %v952 = vrcp.pop %v951
    %v953 = vmul.f32 1.0, %v952
    %v954 = vmul.f32 %v946, %v784
    %v955 = vmul.f32 %v940, %v947
    %v956 = vadd.f32 %v954, %v955
    %v957 = vtanh.pop %v956
    %v958 = vmul.f32 %v953, %v957
    %v959 = vtanh.pop %v958
    %960 = vst [vmem:[#allocation2 + $0x4] sm:$0x3] %v959
    %961 = vmatprep.subr.mxu0 %v141
    %962 = vmatpush1.msra.mxu0 %v140
    %963 = vmatprep.subr.mxu0 %v137
    %964 = vmatpush1.msra.mxu0 %v136
    %965 = vmatprep.subr.mxu0 %v133
    %966 = vmatpush1.msra.mxu0 %v132
    %967 = vmatprep.subr.mxu0 %v129
    %968 = vmatpush1.msra.mxu0 %v128
    %969 = vmatprep.subr.mxu0 %v125
    %970 = vmatpush1.msra.mxu0 %v124
    %971 = vmatprep.subr.mxu0 %v121
    %972 = vmatpush1.msra.mxu0 %v120
    %973 = vmatprep.subr.mxu0 %v117
    %974 = vmatpush1.msra.mxu0 %v116
    %975 = vmatprep.subr.mxu0 %v113
    %976 = vmatpush1.msra.mxu0 %v112
    %977 = vmatprep.subr.mxu0 %v109
    %978 = vmatpush1.msra.mxu0 %v108
    %979 = vmatprep.subr.mxu0 %v105
    %980 = vmatpush1.msra.mxu0 %v104
    %981 = vmatprep.subr.mxu0 %v101
    %982 = vmatpush1.msra.mxu0 %v100
    %983 = vmatprep.subr.mxu0 %v97
    %984 = vmatpush1.msra.mxu0 %v96
    %985 = vmatprep.subr.mxu0 %v93
    %986 = vmatpush1.msra.mxu0 %v92
    %987 = vmatprep.subr.mxu0 %v89
    %988 = vmatpush1.msra.mxu0 %v88
    %989 = vmatprep.subr.mxu0 %v85
    %990 = vmatpush1.msra.mxu0 %v84
    %991 = vmatprep.subr.mxu0 %v81
    %992 = vmatpush1.msra.mxu0 %v80
    %993 = vmatprep.subr.mxu0 0.0
    %994 = vmatpush2.msra.mxu0 0.0
    %995 = vmatprep.subr.mxu0 0.0
    %996 = vmatpush2.msra.mxu0 0.0
    %997 = vmatprep.subr.mxu0 0.0
    %998 = vmatpush2.msra.mxu0 0.0
    %999 = vmatprep.subr.mxu0 0.0
    %1000 = vmatpush2.msra.mxu0 0.0
    %1001 = vmatprep.subr.mxu0 0.0
    %1002 = vmatpush2.msra.mxu0 0.0
    %1003 = vmatprep.subr.mxu0 0.0
    %1004 = vmatpush2.msra.mxu0 0.0
    %1005 = vmatprep.subr.mxu0 0.0
    %1006 = vmatpush2.msra.mxu0 0.0
    %1007 = vmatprep.subr.mxu0 0.0
    %1008 = vmatpush2.msra.mxu0 0.0
    %1009 = vmatprep.subr.mxu0 0.0
    %1010 = vmatpush2.msra.mxu0 0.0
    %1011 = vmatprep.subr.mxu0 0.0
    %1012 = vmatpush2.msra.mxu0 0.0
    %1013 = vmatprep.subr.mxu0 0.0
    %1014 = vmatpush2.msra.mxu0 0.0
    %1015 = vmatprep.subr.mxu0 0.0
    %1016 = vmatpush2.msra.mxu0 0.0
    %1017 = vmatprep.subr.mxu0 0.0
    %1018 = vmatpush2.msra.mxu0 0.0
    %1019 = vmatprep.subr.mxu0 0.0
    %1020 = vmatpush2.msra.mxu0 0.0
    %1021 = vmatprep.subr.mxu0 0.0
    %1022 = vmatpush2.msra.mxu0 0.0
    %1023 = vmatprep.subr.mxu0 0.0
    %1024 = vmatpush2.msra.mxu0 0.0
    %1025 = vmatprep.mubr.f32.mxu0 0.0
    %1026 = vmatmul.mubr.f32.gmra.mxu0 %v958
    %v1027 = vpop.f32.mrf.mxu0
    %v1028 = vadd.f32 0.0, %v1027
    %v1029 = vpop.f32.mrf.mxu0
    %v1030 = vadd.f32 0.0, %v1029
    %1031 = vdwg.mxu0
    %1032 = vmatprep.subr.mxu0 %v143
    %1033 = vmatpush1.msra.mxu0 %v142
    %1034 = vmatprep.subr.mxu0 %v139
    %1035 = vmatpush1.msra.mxu0 %v138
    %1036 = vmatprep.subr.mxu0 %v135
    %1037 = vmatpush1.msra.mxu0 %v134
    %1038 = vmatprep.subr.mxu0 %v131
    %1039 = vmatpush1.msra.mxu0 %v130
    %1040 = vmatprep.subr.mxu0 %v127
    %1041 = vmatpush1.msra.mxu0 %v126
    %1042 = vmatprep.subr.mxu0 %v123
    %1043 = vmatpush1.msra.mxu0 %v122
    %1044 = vmatprep.subr.mxu0 %v119
    %1045 = vmatpush1.msra.mxu0 %v118
    %1046 = vmatprep.subr.mxu0 %v115
    %1047 = vmatpush1.msra.mxu0 %v114
    %1048 = vmatprep.subr.mxu0 %v111
    %1049 = vmatpush1.msra.mxu0 %v110
    %1050 = vmatprep.subr.mxu0 %v107
    %1051 = vmatpush1.msra.mxu0 %v106
    %1052 = vmatprep.subr.mxu0 %v103
    %1053 = vmatpush1.msra.mxu0 %v102
    %1054 = vmatprep.subr.mxu0 %v99
    %1055 = vmatpush1.msra.mxu0 %v98
    %1056 = vmatprep.subr.mxu0 %v95
    %1057 = vmatpush1.msra.mxu0 %v94
    %1058 = vmatprep.subr.mxu0 %v91
    %1059 = vmatpush1.msra.mxu0 %v90
    %1060 = vmatprep.subr.mxu0 %v87
    %1061 = vmatpush1.msra.mxu0 %v86
    %1062 = vmatprep.subr.mxu0 %v83
    %1063 = vmatpush1.msra.mxu0 %v82
    %1064 = vmatprep.subr.mxu0 0.0
    %1065 = vmatpush2.msra.mxu0 0.0
    %1066 = vmatprep.subr.mxu0 0.0
    %1067 = vmatpush2.msra.mxu0 0.0
    %1068 = vmatprep.subr.mxu0 0.0
    %1069 = vmatpush2.msra.mxu0 0.0
    %1070 = vmatprep.subr.mxu0 0.0
    %1071 = vmatpush2.msra.mxu0 0.0
    %1072 = vmatprep.subr.mxu0 0.0
    %1073 = vmatpush2.msra.mxu0 0.0
    %1074 = vmatprep.subr.mxu0 0.0
    %1075 = vmatpush2.msra.mxu0 0.0
    %1076 = vmatprep.subr.mxu0 0.0
    %1077 = vmatpush2.msra.mxu0 0.0
    %1078 = vmatprep.subr.mxu0 0.0
    %1079 = vmatpush2.msra.mxu0 0.0
    %1080 = vmatprep.subr.mxu0 0.0
    %1081 = vmatpush2.msra.mxu0 0.0
    %1082 = vmatprep.subr.mxu0 0.0
    %1083 = vmatpush2.msra.mxu0 0.0
    %1084 = vmatprep.subr.mxu0 0.0
    %1085 = vmatpush2.msra.mxu0 0.0
    %1086 = vmatprep.subr.mxu0 0.0
    %1087 = vmatpush2.msra.mxu0 0.0
    %1088 = vmatprep.subr.mxu0 0.0
    %1089 = vmatpush2.msra.mxu0 0.0
    %1090 = vmatprep.subr.mxu0 0.0
    %1091 = vmatpush2.msra.mxu0 0.0
    %1092 = vmatprep.subr.mxu0 0.0
    %1093 = vmatpush2.msra.mxu0 0.0
    %1094 = vmatprep.subr.mxu0 0.0
    %1095 = vmatpush2.msra.mxu0 0.0
    %1096 = vmatprep.mubr.f32.mxu0 0.0
    %1097 = vmatmul.mubr.f32.gmra.mxu0 %v958
    %v1098 = vpop.f32.mrf.mxu0
    %v1099 = vadd.f32 0.0, %v1098
    %v1100 = vpop.f32.mrf.mxu0
    %v1101 = vadd.f32 0.0, %v1100
    %1102 = vdwg.mxu0
    %v1103 = vadd.f32 %v370, %v1028
    %v1104 = vadd.f32 %v372, %v1030
    %v1105 = vadd.f32 %v441, %v1099
    %v1106 = vadd.f32 %v443, %v1101
    %v1107 = vxor.u32 %v1103, 2147483648
    %v1108 = vmul.f32 %v1107, 1.442695
    %v1109 = vpow.pop %v1108
    %v1110 = vadd.f32 %v1109, 1.0
    %v1111 = vrcp.pop %v1110
    %v1112 = vmul.f32 1.0, %v1111
    %v1113 = vxor.u32 %v1104, 2147483648
    %v1114 = vmul.f32 %v1113, 1.442695
    %v1115 = vpow.pop %v1114
    %v1116 = vadd.f32 %v1115, 1.0
    %v1117 = vrcp.pop %v1116
    %v1118 = vmul.f32 1.0, %v1117
    %v1119 = vtanh.pop %v1105
    %v1120 = vxor.u32 %v1106, 2147483648
    %v1121 = vmul.f32 %v1120, 1.442695
    %v1122 = vpow.pop %v1121
    %v1123 = vadd.f32 %v1122, 1.0
    %v1124 = vrcp.pop %v1123
    %v1125 = vmul.f32 1.0, %v1124
    %v1126 = vmul.f32 %v1118, %v956
    %v1127 = vmul.f32 %v1112, %v1119
    %v1128 = vadd.f32 %v1126, %v1127
    %v1129 = vtanh.pop %v1128
    %v1130 = vmul.f32 %v1125, %v1129
    %v1131 = vtanh.pop %v1130
    %1132 = vst [vmem:[#allocation2 + $0x6] sm:$0x3] %v1131
    %1133 = vmatprep.subr.mxu0 %v141
    %1134 = vmatpush1.msra.mxu0 %v140
    %1135 = vmatprep.subr.mxu0 %v137
    %1136 = vmatpush1.msra.mxu0 %v136
    %1137 = vmatprep.subr.mxu0 %v133
    %1138 = vmatpush1.msra.mxu0 %v132
    %1139 = vmatprep.subr.mxu0 %v129
    %1140 = vmatpush1.msra.mxu0 %v128
    %1141 = vmatprep.subr.mxu0 %v125
    %1142 = vmatpush1.msra.mxu0 %v124
    %1143 = vmatprep.subr.mxu0 %v121
    %1144 = vmatpush1.msra.mxu0 %v120
    %1145 = vmatprep.subr.mxu0 %v117
    %1146 = vmatpush1.msra.mxu0 %v116
    %1147 = vmatprep.subr.mxu0 %v113
    %1148 = vmatpush1.msra.mxu0 %v112
    %1149 = vmatprep.subr.mxu0 %v109
    %1150 = vmatpush1.msra.mxu0 %v108
    %1151 = vmatprep.subr.mxu0 %v105
    %1152 = vmatpush1.msra.mxu0 %v104
    %1153 = vmatprep.subr.mxu0 %v101
    %1154 = vmatpush1.msra.mxu0 %v100
    %1155 = vmatprep.subr.mxu0 %v97
    %1156 = vmatpush1.msra.mxu0 %v96
    %1157 = vmatprep.subr.mxu0 %v93
    %1158 = vmatpush1.msra.mxu0 %v92
    %1159 = vmatprep.subr.mxu0 %v89
    %1160 = vmatpush1.msra.mxu0 %v88
    %1161 = vmatprep.subr.mxu0 %v85
    %1162 = vmatpush1.msra.mxu0 %v84
    %1163 = vmatprep.subr.mxu0 %v81
    %1164 = vmatpush1.msra.mxu0 %v80
    %1165 = vmatprep.subr.mxu0 0.0
    %1166 = vmatpush2.msra.mxu0 0.0
    %1167 = vmatprep.subr.mxu0 0.0
    %1168 = vmatpush2.msra.mxu0 0.0
    %1169 = vmatprep.subr.mxu0 0.0
    %1170 = vmatpush2.msra.mxu0 0.0
    %1171 = vmatprep.subr.mxu0 0.0
    %1172 = vmatpush2.msra.mxu0 0.0
    %1173 = vmatprep.subr.mxu0 0.0
    %1174 = vmatpush2.msra.mxu0 0.0
    %1175 = vmatprep.subr.mxu0 0.0
    %1176 = vmatpush2.msra.mxu0 0.0
    %1177 = vmatprep.subr.mxu0 0.0
    %1178 = vmatpush2.msra.mxu0 0.0
    %1179 = vmatprep.subr.mxu0 0.0
    %1180 = vmatpush2.msra.mxu0 0.0
    %1181 = vmatprep.subr.mxu0 0.0
    %1182 = vmatpush2.msra.mxu0 0.0
    %1183 = vmatprep.subr.mxu0 0.0
    %1184 = vmatpush2.msra.mxu0 0.0
    %1185 = vmatprep.subr.mxu0 0.0
    %1186 = vmatpush2.msra.mxu0 0.0
    %1187 = vmatprep.subr.mxu0 0.0
    %1188 = vmatpush2.msra.mxu0 0.0
    %1189 = vmatprep.subr.mxu0 0.0
    %1190 = vmatpush2.msra.mxu0 0.0
    %1191 = vmatprep.subr.mxu0 0.0
    %1192 = vmatpush2.msra.mxu0 0.0
    %1193 = vmatprep.subr.mxu0 0.0
    %1194 = vmatpush2.msra.mxu0 0.0
    %1195 = vmatprep.subr.mxu0 0.0
    %1196 = vmatpush2.msra.mxu0 0.0
    %1197 = vmatprep.mubr.f32.mxu0 0.0
    %1198 = vmatmul.mubr.f32.gmra.mxu0 %v1130
    %v1199 = vpop.f32.mrf.mxu0
    %v1200 = vadd.f32 0.0, %v1199
    %v1201 = vpop.f32.mrf.mxu0
    %v1202 = vadd.f32 0.0, %v1201
    %1203 = vdwg.mxu0
    %1204 = vmatprep.subr.mxu0 %v143
    %1205 = vmatpush1.msra.mxu0 %v142
    %1206 = vmatprep.subr.mxu0 %v139
    %1207 = vmatpush1.msra.mxu0 %v138
    %1208 = vmatprep.subr.mxu0 %v135
    %1209 = vmatpush1.msra.mxu0 %v134
    %1210 = vmatprep.subr.mxu0 %v131
    %1211 = vmatpush1.msra.mxu0 %v130
    %1212 = vmatprep.subr.mxu0 %v127
    %1213 = vmatpush1.msra.mxu0 %v126
    %1214 = vmatprep.subr.mxu0 %v123
    %1215 = vmatpush1.msra.mxu0 %v122
    %1216 = vmatprep.subr.mxu0 %v119
    %1217 = vmatpush1.msra.mxu0 %v118
    %1218 = vmatprep.subr.mxu0 %v115
    %1219 = vmatpush1.msra.mxu0 %v114
    %1220 = vmatprep.subr.mxu0 %v111
    %1221 = vmatpush1.msra.mxu0 %v110
    %1222 = vmatprep.subr.mxu0 %v107
    %1223 = vmatpush1.msra.mxu0 %v106
    %1224 = vmatprep.subr.mxu0 %v103
    %1225 = vmatpush1.msra.mxu0 %v102
    %1226 = vmatprep.subr.mxu0 %v99
    %1227 = vmatpush1.msra.mxu0 %v98
    %1228 = vmatprep.subr.mxu0 %v95
    %1229 = vmatpush1.msra.mxu0 %v94
    %1230 = vmatprep.subr.mxu0 %v91
    %1231 = vmatpush1.msra.mxu0 %v90
    %1232 = vmatprep.subr.mxu0 %v87
    %1233 = vmatpush1.msra.mxu0 %v86
    %1234 = vmatprep.subr.mxu0 %v83
    %1235 = vmatpush1.msra.mxu0 %v82
    %1236 = vmatprep.subr.mxu0 0.0
    %1237 = vmatpush2.msra.mxu0 0.0
    %1238 = vmatprep.subr.mxu0 0.0
    %1239 = vmatpush2.msra.mxu0 0.0
    %1240 = vmatprep.subr.mxu0 0.0
    %1241 = vmatpush2.msra.mxu0 0.0
    %1242 = vmatprep.subr.mxu0 0.0
    %1243 = vmatpush2.msra.mxu0 0.0
    %1244 = vmatprep.subr.mxu0 0.0
    %1245 = vmatpush2.msra.mxu0 0.0
    %1246 = vmatprep.subr.mxu0 0.0
    %1247 = vmatpush2.msra.mxu0 0.0
    %1248 = vmatprep.subr.mxu0 0.0
    %1249 = vmatpush2.msra.mxu0 0.0
    %1250 = vmatprep.subr.mxu0 0.0
    %1251 = vmatpush2.msra.mxu0 0.0
    %1252 = vmatprep.subr.mxu0 0.0
    %1253 = vmatpush2.msra.mxu0 0.0
    %1254 = vmatprep.subr.mxu0 0.0
    %1255 = vmatpush2.msra.mxu0 0.0
    %1256 = vmatprep.subr.mxu0 0.0
    %1257 = vmatpush2.msra.mxu0 0.0
    %1258 = vmatprep.subr.mxu0 0.0
    %1259 = vmatpush2.msra.mxu0 0.0
    %1260 = vmatprep.subr.mxu0 0.0
    %1261 = vmatpush2.msra.mxu0 0.0
    %1262 = vmatprep.subr.mxu0 0.0
    %1263 = vmatpush2.msra.mxu0 0.0
    %1264 = vmatprep.subr.mxu0 0.0
    %1265 = vmatpush2.msra.mxu0 0.0
    %1266 = vmatprep.subr.mxu0 0.0
    %1267 = vmatpush2.msra.mxu0 0.0
    %1268 = vmatprep.mubr.f32.mxu0 0.0
    %1269 = vmatmul.mubr.f32.gmra.mxu0 %v1130
    %v1270 = vpop.f32.mrf.mxu0
    %v1271 = vadd.f32 0.0, %v1270
    %v1272 = vpop.f32.mrf.mxu0
    %v1273 = vadd.f32 0.0, %v1272
    %1274 = vdwg.mxu0
    %v1275 = vadd.f32 %v370, %v1200
    %v1276 = vadd.f32 %v372, %v1202
    %v1277 = vadd.f32 %v441, %v1271
    %v1278 = vadd.f32 %v443, %v1273
    %v1279 = vxor.u32 %v1275, 2147483648
    %v1280 = vmul.f32 %v1279, 1.442695
    %v1281 = vpow.pop %v1280
    %v1282 = vadd.f32 %v1281, 1.0
    %v1283 = vrcp.pop %v1282
    %v1284 = vmul.f32 1.0, %v1283
    %v1285 = vxor.u32 %v1276, 2147483648
    %v1286 = vmul.f32 %v1285, 1.442695
    %v1287 = vpow.pop %v1286
    %v1288 = vadd.f32 %v1287, 1.0
    %v1289 = vrcp.pop %v1288
    %v1290 = vmul.f32 1.0, %v1289
    %v1291 = vtanh.pop %v1277
    %v1292 = vxor.u32 %v1278, 2147483648
    %v1293 = vmul.f32 %v1292, 1.442695
    %v1294 = vpow.pop %v1293
    %v1295 = vadd.f32 %v1294, 1.0
    %v1296 = vrcp.pop %v1295
    %v1297 = vmul.f32 1.0, %v1296
    %v1298 = vmul.f32 %v1290, %v1128
    %v1299 = vmul.f32 %v1284, %v1291
    %v1300 = vadd.f32 %v1298, %v1299
    %v1301 = vtanh.pop %v1300
    %v1302 = vmul.f32 %v1297, %v1301
    %v1303 = vtanh.pop %v1302
    %1304 = vst [vmem:[#allocation2 + $0x8] sm:$0x3] %v1303
    %1305 = vmatprep.subr.mxu0 %v141
    %1306 = vmatpush1.msra.mxu0 %v140
    %1307 = vmatprep.subr.mxu0 %v137
    %1308 = vmatpush1.msra.mxu0 %v136
    %1309 = vmatprep.subr.mxu0 %v133
    %1310 = vmatpush1.msra.mxu0 %v132
    %1311 = vmatprep.subr.mxu0 %v129
    %1312 = vmatpush1.msra.mxu0 %v128
    %1313 = vmatprep.subr.mxu0 %v125
    %1314 = vmatpush1.msra.mxu0 %v124
    %1315 = vmatprep.subr.mxu0 %v121
    %1316 = vmatpush1.msra.mxu0 %v120
    %1317 = vmatprep.subr.mxu0 %v117
    %1318 = vmatpush1.msra.mxu0 %v116
    %1319 = vmatprep.subr.mxu0 %v113
    %1320 = vmatpush1.msra.mxu0 %v112
    %1321 = vmatprep.subr.mxu0 %v109
    %1322 = vmatpush1.msra.mxu0 %v108
    %1323 = vmatprep.subr.mxu0 %v105
    %1324 = vmatpush1.msra.mxu0 %v104
    %1325 = vmatprep.subr.mxu0 %v101
    %1326 = vmatpush1.msra.mxu0 %v100
    %1327 = vmatprep.subr.mxu0 %v97
    %1328 = vmatpush1.msra.mxu0 %v96
    %1329 = vmatprep.subr.mxu0 %v93
    %1330 = vmatpush1.msra.mxu0 %v92
    %1331 = vmatprep.subr.mxu0 %v89
    %1332 = vmatpush1.msra.mxu0 %v88
    %1333 = vmatprep.subr.mxu0 %v85
    %1334 = vmatpush1.msra.mxu0 %v84
    %1335 = vmatprep.subr.mxu0 %v81
    %1336 = vmatpush1.msra.mxu0 %v80
    %1337 = vmatprep.subr.mxu0 0.0
    %1338 = vmatpush2.msra.mxu0 0.0
    %1339 = vmatprep.subr.mxu0 0.0
    %1340 = vmatpush2.msra.mxu0 0.0
    %1341 = vmatprep.subr.mxu0 0.0
    %1342 = vmatpush2.msra.mxu0 0.0
    %1343 = vmatprep.subr.mxu0 0.0
    %1344 = vmatpush2.msra.mxu0 0.0
    %1345 = vmatprep.subr.mxu0 0.0
    %1346 = vmatpush2.msra.mxu0 0.0
    %1347 = vmatprep.subr.mxu0 0.0
    %1348 = vmatpush2.msra.mxu0 0.0
    %1349 = vmatprep.subr.mxu0 0.0
    %1350 = vmatpush2.msra.mxu0 0.0
    %1351 = vmatprep.subr.mxu0 0.0
    %1352 = vmatpush2.msra.mxu0 0.0
    %1353 = vmatprep.subr.mxu0 0.0
    %1354 = vmatpush2.msra.mxu0 0.0
    %1355 = vmatprep.subr.mxu0 0.0
    %1356 = vmatpush2.msra.mxu0 0.0
    %1357 = vmatprep.subr.mxu0 0.0
    %1358 = vmatpush2.msra.mxu0 0.0
    %1359 = vmatprep.subr.mxu0 0.0
    %1360 = vmatpush2.msra.mxu0 0.0
    %1361 = vmatprep.subr.mxu0 0.0
    %1362 = vmatpush2.msra.mxu0 0.0
    %1363 = vmatprep.subr.mxu0 0.0
    %1364 = vmatpush2.msra.mxu0 0.0
    %1365 = vmatprep.subr.mxu0 0.0
    %1366 = vmatpush2.msra.mxu0 0.0
    %1367 = vmatprep.subr.mxu0 0.0
    %1368 = vmatpush2.msra.mxu0 0.0
    %1369 = vmatprep.mubr.f32.mxu0 0.0
    %1370 = vmatmul.mubr.f32.gmra.mxu0 %v1302
    %v1371 = vpop.f32.mrf.mxu0
    %v1372 = vadd.f32 0.0, %v1371
    %v1373 = vpop.f32.mrf.mxu0
    %v1374 = vadd.f32 0.0, %v1373
    %1375 = vdwg.mxu0
    %1376 = vmatprep.subr.mxu0 %v143
    %1377 = vmatpush1.msra.mxu0 %v142
    %1378 = vmatprep.subr.mxu0 %v139
    %1379 = vmatpush1.msra.mxu0 %v138
    %1380 = vmatprep.subr.mxu0 %v135
    %1381 = vmatpush1.msra.mxu0 %v134
    %1382 = vmatprep.subr.mxu0 %v131
    %1383 = vmatpush1.msra.mxu0 %v130
    %1384 = vmatprep.subr.mxu0 %v127
    %1385 = vmatpush1.msra.mxu0 %v126
    %1386 = vmatprep.subr.mxu0 %v123
    %1387 = vmatpush1.msra.mxu0 %v122
    %1388 = vmatprep.subr.mxu0 %v119
    %1389 = vmatpush1.msra.mxu0 %v118
    %1390 = vmatprep.subr.mxu0 %v115
    %1391 = vmatpush1.msra.mxu0 %v114
    %1392 = vmatprep.subr.mxu0 %v111
    %1393 = vmatpush1.msra.mxu0 %v110
    %1394 = vmatprep.subr.mxu0 %v107
    %1395 = vmatpush1.msra.mxu0 %v106
    %1396 = vmatprep.subr.mxu0 %v103
    %1397 = vmatpush1.msra.mxu0 %v102
    %1398 = vmatprep.subr.mxu0 %v99
    %1399 = vmatpush1.msra.mxu0 %v98
    %1400 = vmatprep.subr.mxu0 %v95
    %1401 = vmatpush1.msra.mxu0 %v94
    %1402 = vmatprep.subr.mxu0 %v91
    %1403 = vmatpush1.msra.mxu0 %v90
    %1404 = vmatprep.subr.mxu0 %v87
    %1405 = vmatpush1.msra.mxu0 %v86
    %1406 = vmatprep.subr.mxu0 %v83
    %1407 = vmatpush1.msra.mxu0 %v82
    %1408 = vmatprep.subr.mxu0 0.0
    %1409 = vmatpush2.msra.mxu0 0.0
    %1410 = vmatprep.subr.mxu0 0.0
    %1411 = vmatpush2.msra.mxu0 0.0
    %1412 = vmatprep.subr.mxu0 0.0
    %1413 = vmatpush2.msra.mxu0 0.0
    %1414 = vmatprep.subr.mxu0 0.0
    %1415 = vmatpush2.msra.mxu0 0.0
    %1416 = vmatprep.subr.mxu0 0.0
    %1417 = vmatpush2.msra.mxu0 0.0
    %1418 = vmatprep.subr.mxu0 0.0
    %1419 = vmatpush2.msra.mxu0 0.0
    %1420 = vmatprep.subr.mxu0 0.0
    %1421 = vmatpush2.msra.mxu0 0.0
    %1422 = vmatprep.subr.mxu0 0.0
    %1423 = vmatpush2.msra.mxu0 0.0
    %1424 = vmatprep.subr.mxu0 0.0
    %1425 = vmatpush2.msra.mxu0 0.0
    %1426 = vmatprep.subr.mxu0 0.0
    %1427 = vmatpush2.msra.mxu0 0.0
    %1428 = vmatprep.subr.mxu0 0.0
    %1429 = vmatpush2.msra.mxu0 0.0
    %1430 = vmatprep.subr.mxu0 0.0
    %1431 = vmatpush2.msra.mxu0 0.0
    %1432 = vmatprep.subr.mxu0 0.0
    %1433 = vmatpush2.msra.mxu0 0.0
    %1434 = vmatprep.subr.mxu0 0.0
    %1435 = vmatpush2.msra.mxu0 0.0
    %1436 = vmatprep.subr.mxu0 0.0
    %1437 = vmatpush2.msra.mxu0 0.0
    %1438 = vmatprep.subr.mxu0 0.0
    %1439 = vmatpush2.msra.mxu0 0.0
    %1440 = vmatprep.mubr.f32.mxu0 0.0
    %1441 = vmatmul.mubr.f32.gmra.mxu0 %v1302
    %v1442 = vpop.f32.mrf.mxu0
    %v1443 = vadd.f32 0.0, %v1442
    %v1444 = vpop.f32.mrf.mxu0
    %v1445 = vadd.f32 0.0, %v1444
    %1446 = vdwg.mxu0
    %v1447 = vadd.f32 %v370, %v1372
    %v1448 = vadd.f32 %v372, %v1374
    %v1449 = vadd.f32 %v441, %v1443
    %v1450 = vadd.f32 %v443, %v1445
    %v1451 = vxor.u32 %v1447, 2147483648
    %v1452 = vmul.f32 %v1451, 1.442695
    %v1453 = vpow.pop %v1452
    %v1454 = vadd.f32 %v1453, 1.0
    %v1455 = vrcp.pop %v1454
    %v1456 = vmul.f32 1.0, %v1455
    %v1457 = vxor.u32 %v1448, 2147483648
    %v1458 = vmul.f32 %v1457, 1.442695
    %v1459 = vpow.pop %v1458
    %v1460 = vadd.f32 %v1459, 1.0
    %v1461 = vrcp.pop %v1460
    %v1462 = vmul.f32 1.0, %v1461
    %v1463 = vtanh.pop %v1449
    %v1464 = vxor.u32 %v1450, 2147483648
    %v1465 = vmul.f32 %v1464, 1.442695
    %v1466 = vpow.pop %v1465
    %v1467 = vadd.f32 %v1466, 1.0
    %v1468 = vrcp.pop %v1467
    %v1469 = vmul.f32 1.0, %v1468
    %v1470 = vmul.f32 %v1462, %v1300
    %v1471 = vmul.f32 %v1456, %v1463
    %v1472 = vadd.f32 %v1470, %v1471
    %v1473 = vtanh.pop %v1472
    %v1474 = vmul.f32 %v1469, %v1473
    %v1475 = vtanh.pop %v1474
    %1476 = vst [vmem:[#allocation2 + $0xa] sm:$0x3] %v1475
    %1477 = vmatprep.subr.mxu0 %v141
    %1478 = vmatpush1.msra.mxu0 %v140
    %1479 = vmatprep.subr.mxu0 %v137
    %1480 = vmatpush1.msra.mxu0 %v136
    %1481 = vmatprep.subr.mxu0 %v133
    %1482 = vmatpush1.msra.mxu0 %v132
    %1483 = vmatprep.subr.mxu0 %v129
    %1484 = vmatpush1.msra.mxu0 %v128
    %1485 = vmatprep.subr.mxu0 %v125
    %1486 = vmatpush1.msra.mxu0 %v124
    %1487 = vmatprep.subr.mxu0 %v121
    %1488 = vmatpush1.msra.mxu0 %v120
    %1489 = vmatprep.subr.mxu0 %v117
    %1490 = vmatpush1.msra.mxu0 %v116
    %1491 = vmatprep.subr.mxu0 %v113
    %1492 = vmatpush1.msra.mxu0 %v112
    %1493 = vmatprep.subr.mxu0 %v109
    %1494 = vmatpush1.msra.mxu0 %v108
    %1495 = vmatprep.subr.mxu0 %v105
    %1496 = vmatpush1.msra.mxu0 %v104
    %1497 = vmatprep.subr.mxu0 %v101
    %1498 = vmatpush1.msra.mxu0 %v100
    %1499 = vmatprep.subr.mxu0 %v97
    %1500 = vmatpush1.msra.mxu0 %v96
    %1501 = vmatprep.subr.mxu0 %v93
    %1502 = vmatpush1.msra.mxu0 %v92
    %1503 = vmatprep.subr.mxu0 %v89
    %1504 = vmatpush1.msra.mxu0 %v88
    %1505 = vmatprep.subr.mxu0 %v85
    %1506 = vmatpush1.msra.mxu0 %v84
    %1507 = vmatprep.subr.mxu0 %v81
    %1508 = vmatpush1.msra.mxu0 %v80
    %1509 = vmatprep.subr.mxu0 0.0
    %1510 = vmatpush2.msra.mxu0 0.0
    %1511 = vmatprep.subr.mxu0 0.0
    %1512 = vmatpush2.msra.mxu0 0.0
    %1513 = vmatprep.subr.mxu0 0.0
    %1514 = vmatpush2.msra.mxu0 0.0
    %1515 = vmatprep.subr.mxu0 0.0
    %1516 = vmatpush2.msra.mxu0 0.0
    %1517 = vmatprep.subr.mxu0 0.0
    %1518 = vmatpush2.msra.mxu0 0.0
    %1519 = vmatprep.subr.mxu0 0.0
    %1520 = vmatpush2.msra.mxu0 0.0
    %1521 = vmatprep.subr.mxu0 0.0
    %1522 = vmatpush2.msra.mxu0 0.0
    %1523 = vmatprep.subr.mxu0 0.0
    %1524 = vmatpush2.msra.mxu0 0.0
    %1525 = vmatprep.subr.mxu0 0.0
    %1526 = vmatpush2.msra.mxu0 0.0
    %1527 = vmatprep.subr.mxu0 0.0
    %1528 = vmatpush2.msra.mxu0 0.0
    %1529 = vmatprep.subr.mxu0 0.0
    %1530 = vmatpush2.msra.mxu0 0.0
    %1531 = vmatprep.subr.mxu0 0.0
    %1532 = vmatpush2.msra.mxu0 0.0
    %1533 = vmatprep.subr.mxu0 0.0
    %1534 = vmatpush2.msra.mxu0 0.0
    %1535 = vmatprep.subr.mxu0 0.0
    %1536 = vmatpush2.msra.mxu0 0.0
    %1537 = vmatprep.subr.mxu0 0.0
    %1538 = vmatpush2.msra.mxu0 0.0
    %1539 = vmatprep.subr.mxu0 0.0
    %1540 = vmatpush2.msra.mxu0 0.0
    %1541 = vmatprep.mubr.f32.mxu0 0.0
    %1542 = vmatmul.mubr.f32.gmra.mxu0 %v1474
    %v1543 = vpop.f32.mrf.mxu0
    %v1544 = vadd.f32 0.0, %v1543
    %v1545 = vpop.f32.mrf.mxu0
    %v1546 = vadd.f32 0.0, %v1545
    %1547 = vdwg.mxu0
    %1548 = vmatprep.subr.mxu0 %v143
    %1549 = vmatpush1.msra.mxu0 %v142
    %1550 = vmatprep.subr.mxu0 %v139
    %1551 = vmatpush1.msra.mxu0 %v138
    %1552 = vmatprep.subr.mxu0 %v135
    %1553 = vmatpush1.msra.mxu0 %v134
    %1554 = vmatprep.subr.mxu0 %v131
    %1555 = vmatpush1.msra.mxu0 %v130
    %1556 = vmatprep.subr.mxu0 %v127
    %1557 = vmatpush1.msra.mxu0 %v126
    %1558 = vmatprep.subr.mxu0 %v123
    %1559 = vmatpush1.msra.mxu0 %v122
    %1560 = vmatprep.subr.mxu0 %v119
    %1561 = vmatpush1.msra.mxu0 %v118
    %1562 = vmatprep.subr.mxu0 %v115
    %1563 = vmatpush1.msra.mxu0 %v114
    %1564 = vmatprep.subr.mxu0 %v111
    %1565 = vmatpush1.msra.mxu0 %v110
    %1566 = vmatprep.subr.mxu0 %v107
    %1567 = vmatpush1.msra.mxu0 %v106
    %1568 = vmatprep.subr.mxu0 %v103
    %1569 = vmatpush1.msra.mxu0 %v102
    %1570 = vmatprep.subr.mxu0 %v99
    %1571 = vmatpush1.msra.mxu0 %v98
    %1572 = vmatprep.subr.mxu0 %v95
    %1573 = vmatpush1.msra.mxu0 %v94
    %1574 = vmatprep.subr.mxu0 %v91
    %1575 = vmatpush1.msra.mxu0 %v90
    %1576 = vmatprep.subr.mxu0 %v87
    %1577 = vmatpush1.msra.mxu0 %v86
    %1578 = vmatprep.subr.mxu0 %v83
    %1579 = vmatpush1.msra.mxu0 %v82
    %1580 = vmatprep.subr.mxu0 0.0
    %1581 = vmatpush2.msra.mxu0 0.0
    %1582 = vmatprep.subr.mxu0 0.0
    %1583 = vmatpush2.msra.mxu0 0.0
    %1584 = vmatprep.subr.mxu0 0.0
    %1585 = vmatpush2.msra.mxu0 0.0
    %1586 = vmatprep.subr.mxu0 0.0
    %1587 = vmatpush2.msra.mxu0 0.0
    %1588 = vmatprep.subr.mxu0 0.0
    %1589 = vmatpush2.msra.mxu0 0.0
    %1590 = vmatprep.subr.mxu0 0.0
    %1591 = vmatpush2.msra.mxu0 0.0
    %1592 = vmatprep.subr.mxu0 0.0
    %1593 = vmatpush2.msra.mxu0 0.0
    %1594 = vmatprep.subr.mxu0 0.0
    %1595 = vmatpush2.msra.mxu0 0.0
    %1596 = vmatprep.subr.mxu0 0.0
    %1597 = vmatpush2.msra.mxu0 0.0
    %1598 = vmatprep.subr.mxu0 0.0
    %1599 = vmatpush2.msra.mxu0 0.0
    %1600 = vmatprep.subr.mxu0 0.0
    %1601 = vmatpush2.msra.mxu0 0.0
    %1602 = vmatprep.subr.mxu0 0.0
    %1603 = vmatpush2.msra.mxu0 0.0
    %1604 = vmatprep.subr.mxu0 0.0
    %1605 = vmatpush2.msra.mxu0 0.0
    %1606 = vmatprep.subr.mxu0 0.0
    %1607 = vmatpush2.msra.mxu0 0.0
    %1608 = vmatprep.subr.mxu0 0.0
    %1609 = vmatpush2.msra.mxu0 0.0
    %1610 = vmatprep.subr.mxu0 0.0
    %1611 = vmatpush2.msra.mxu0 0.0
    %1612 = vmatprep.mubr.f32.mxu0 0.0
    %1613 = vmatmul.mubr.f32.gmra.mxu0 %v1474
    %v1614 = vpop.f32.mrf.mxu0
    %v1615 = vadd.f32 0.0, %v1614
    %v1616 = vpop.f32.mrf.mxu0
    %v1617 = vadd.f32 0.0, %v1616
    %1618 = vdwg.mxu0
    %v1619 = vadd.f32 %v370, %v1544
    %v1620 = vadd.f32 %v372, %v1546
    %v1621 = vadd.f32 %v441, %v1615
    %v1622 = vadd.f32 %v443, %v1617
    %v1623 = vxor.u32 %v1619, 2147483648
    %v1624 = vmul.f32 %v1623, 1.442695
    %v1625 = vpow.pop %v1624
    %v1626 = vadd.f32 %v1625, 1.0
    %v1627 = vrcp.pop %v1626
    %v1628 = vmul.f32 1.0, %v1627
    %v1629 = vxor.u32 %v1620, 2147483648
    %v1630 = vmul.f32 %v1629, 1.442695
    %v1631 = vpow.pop %v1630
    %v1632 = vadd.f32 %v1631, 1.0
    %v1633 = vrcp.pop %v1632
    %v1634 = vmul.f32 1.0, %v1633
    %v1635 = vtanh.pop %v1621
    %v1636 = vxor.u32 %v1622, 2147483648
    %v1637 = vmul.f32 %v1636, 1.442695
    %v1638 = vpow.pop %v1637
    %v1639 = vadd.f32 %v1638, 1.0
    %v1640 = vrcp.pop %v1639
    %v1641 = vmul.f32 1.0, %v1640
    %v1642 = vmul.f32 %v1634, %v1472
    %v1643 = vmul.f32 %v1628, %v1635
    %v1644 = vadd.f32 %v1642, %v1643
    %v1645 = vtanh.pop %v1644
    %v1646 = vmul.f32 %v1641, %v1645
    %v1647 = vtanh.pop %v1646
    %1648 = vst [vmem:[#allocation2 + $0xc] sm:$0x3] %v1647
    %1649 = vmatprep.subr.mxu0 %v141
    %1650 = vmatpush1.msra.mxu0 %v140
    %1651 = vmatprep.subr.mxu0 %v137
    %1652 = vmatpush1.msra.mxu0 %v136
    %1653 = vmatprep.subr.mxu0 %v133
    %1654 = vmatpush1.msra.mxu0 %v132
    %1655 = vmatprep.subr.mxu0 %v129
    %1656 = vmatpush1.msra.mxu0 %v128
    %1657 = vmatprep.subr.mxu0 %v125
    %1658 = vmatpush1.msra.mxu0 %v124
    %1659 = vmatprep.subr.mxu0 %v121
    %1660 = vmatpush1.msra.mxu0 %v120
    %1661 = vmatprep.subr.mxu0 %v117
    %1662 = vmatpush1.msra.mxu0 %v116
    %1663 = vmatprep.subr.mxu0 %v113
    %1664 = vmatpush1.msra.mxu0 %v112
    %1665 = vmatprep.subr.mxu0 %v109
    %1666 = vmatpush1.msra.mxu0 %v108
    %1667 = vmatprep.subr.mxu0 %v105
    %1668 = vmatpush1.msra.mxu0 %v104
    %1669 = vmatprep.subr.mxu0 %v101
    %1670 = vmatpush1.msra.mxu0 %v100
    %1671 = vmatprep.subr.mxu0 %v97
    %1672 = vmatpush1.msra.mxu0 %v96
    %1673 = vmatprep.subr.mxu0 %v93
    %1674 = vmatpush1.msra.mxu0 %v92
    %1675 = vmatprep.subr.mxu0 %v89
    %1676 = vmatpush1.msra.mxu0 %v88
    %1677 = vmatprep.subr.mxu0 %v85
    %1678 = vmatpush1.msra.mxu0 %v84
    %1679 = vmatprep.subr.mxu0 %v81
    %1680 = vmatpush1.msra.mxu0 %v80
    %1681 = vmatprep.subr.mxu0 0.0
    %1682 = vmatpush2.msra.mxu0 0.0
    %1683 = vmatprep.subr.mxu0 0.0
    %1684 = vmatpush2.msra.mxu0 0.0
    %1685 = vmatprep.subr.mxu0 0.0
    %1686 = vmatpush2.msra.mxu0 0.0
    %1687 = vmatprep.subr.mxu0 0.0
    %1688 = vmatpush2.msra.mxu0 0.0
    %1689 = vmatprep.subr.mxu0 0.0
    %1690 = vmatpush2.msra.mxu0 0.0
    %1691 = vmatprep.subr.mxu0 0.0
    %1692 = vmatpush2.msra.mxu0 0.0
    %1693 = vmatprep.subr.mxu0 0.0
    %1694 = vmatpush2.msra.mxu0 0.0
    %1695 = vmatprep.subr.mxu0 0.0
    %1696 = vmatpush2.msra.mxu0 0.0
    %1697 = vmatprep.subr.mxu0 0.0
    %1698 = vmatpush2.msra.mxu0 0.0
    %1699 = vmatprep.subr.mxu0 0.0
    %1700 = vmatpush2.msra.mxu0 0.0
    %1701 = vmatprep.subr.mxu0 0.0
    %1702 = vmatpush2.msra.mxu0 0.0
    %1703 = vmatprep.subr.mxu0 0.0
    %1704 = vmatpush2.msra.mxu0 0.0
    %1705 = vmatprep.subr.mxu0 0.0
    %1706 = vmatpush2.msra.mxu0 0.0
    %1707 = vmatprep.subr.mxu0 0.0
    %1708 = vmatpush2.msra.mxu0 0.0
    %1709 = vmatprep.subr.mxu0 0.0
    %1710 = vmatpush2.msra.mxu0 0.0
    %1711 = vmatprep.subr.mxu0 0.0
    %1712 = vmatpush2.msra.mxu0 0.0
    %1713 = vmatprep.mubr.f32.mxu0 0.0
    %1714 = vmatmul.mubr.f32.gmra.mxu0 %v1646
    %v1715 = vpop.f32.mrf.mxu0
    %v1716 = vadd.f32 0.0, %v1715
    %v1717 = vpop.f32.mrf.mxu0
    %v1718 = vadd.f32 0.0, %v1717
    %1719 = vdwg.mxu0
    %1720 = vmatprep.subr.mxu0 %v143
    %1721 = vmatpush1.msra.mxu0 %v142
    %1722 = vmatprep.subr.mxu0 %v139
    %1723 = vmatpush1.msra.mxu0 %v138
    %1724 = vmatprep.subr.mxu0 %v135
    %1725 = vmatpush1.msra.mxu0 %v134
    %1726 = vmatprep.subr.mxu0 %v131
    %1727 = vmatpush1.msra.mxu0 %v130
    %1728 = vmatprep.subr.mxu0 %v127
    %1729 = vmatpush1.msra.mxu0 %v126
    %1730 = vmatprep.subr.mxu0 %v123
    %1731 = vmatpush1.msra.mxu0 %v122
    %1732 = vmatprep.subr.mxu0 %v119
    %1733 = vmatpush1.msra.mxu0 %v118
    %1734 = vmatprep.subr.mxu0 %v115
    %1735 = vmatpush1.msra.mxu0 %v114
    %1736 = vmatprep.subr.mxu0 %v111
    %1737 = vmatpush1.msra.mxu0 %v110
    %1738 = vmatprep.subr.mxu0 %v107
    %1739 = vmatpush1.msra.mxu0 %v106
    %1740 = vmatprep.subr.mxu0 %v103
    %1741 = vmatpush1.msra.mxu0 %v102
    %1742 = vmatprep.subr.mxu0 %v99
    %1743 = vmatpush1.msra.mxu0 %v98
    %1744 = vmatprep.subr.mxu0 %v95
    %1745 = vmatpush1.msra.mxu0 %v94
    %1746 = vmatprep.subr.mxu0 %v91
    %1747 = vmatpush1.msra.mxu0 %v90
    %1748 = vmatprep.subr.mxu0 %v87
    %1749 = vmatpush1.msra.mxu0 %v86
    %1750 = vmatprep.subr.mxu0 %v83
    %1751 = vmatpush1.msra.mxu0 %v82
    %1752 = vmatprep.subr.mxu0 0.0
    %1753 = vmatpush2.msra.mxu0 0.0
    %1754 = vmatprep.subr.mxu0 0.0
    %1755 = vmatpush2.msra.mxu0 0.0
    %1756 = vmatprep.subr.mxu0 0.0
    %1757 = vmatpush2.msra.mxu0 0.0
    %1758 = vmatprep.subr.mxu0 0.0
    %1759 = vmatpush2.msra.mxu0 0.0
    %1760 = vmatprep.subr.mxu0 0.0
    %1761 = vmatpush2.msra.mxu0 0.0
    %1762 = vmatprep.subr.mxu0 0.0
    %1763 = vmatpush2.msra.mxu0 0.0
    %1764 = vmatprep.subr.mxu0 0.0
    %1765 = vmatpush2.msra.mxu0 0.0
    %1766 = vmatprep.subr.mxu0 0.0
    %1767 = vmatpush2.msra.mxu0 0.0
    %1768 = vmatprep.subr.mxu0 0.0
    %1769 = vmatpush2.msra.mxu0 0.0
    %1770 = vmatprep.subr.mxu0 0.0
    %1771 = vmatpush2.msra.mxu0 0.0
    %1772 = vmatprep.subr.mxu0 0.0
    %1773 = vmatpush2.msra.mxu0 0.0
    %1774 = vmatprep.subr.mxu0 0.0
    %1775 = vmatpush2.msra.mxu0 0.0
    %1776 = vmatprep.subr.mxu0 0.0
    %1777 = vmatpush2.msra.mxu0 0.0
    %1778 = vmatprep.subr.mxu0 0.0
    %1779 = vmatpush2.msra.mxu0 0.0
    %1780 = vmatprep.subr.mxu0 0.0
    %1781 = vmatpush2.msra.mxu0 0.0
    %1782 = vmatprep.subr.mxu0 0.0
    %1783 = vmatpush2.msra.mxu0 0.0
    %1784 = vmatprep.mubr.f32.mxu0 0.0
    %1785 = vmatmul.mubr.f32.gmra.mxu0 %v1646
    %v1786 = vpop.f32.mrf.mxu0
    %v1787 = vadd.f32 0.0, %v1786
    %v1788 = vpop.f32.mrf.mxu0
    %v1789 = vadd.f32 0.0, %v1788
    %1790 = vdwg.mxu0
    %v1791 = vadd.f32 %v370, %v1716
    %v1792 = vadd.f32 %v372, %v1718
    %v1793 = vadd.f32 %v441, %v1787
    %v1794 = vadd.f32 %v443, %v1789
    %v1795 = vxor.u32 %v1791, 2147483648
    %v1796 = vmul.f32 %v1795, 1.442695
    %v1797 = vpow.pop %v1796
    %v1798 = vadd.f32 %v1797, 1.0
    %v1799 = vrcp.pop %v1798
    %v1800 = vmul.f32 1.0, %v1799
    %v1801 = vxor.u32 %v1792, 2147483648
    %v1802 = vmul.f32 %v1801, 1.442695
    %v1803 = vpow.pop %v1802
    %v1804 = vadd.f32 %v1803, 1.0
    %v1805 = vrcp.pop %v1804
    %v1806 = vmul.f32 1.0, %v1805
    %v1807 = vtanh.pop %v1793
    %v1808 = vxor.u32 %v1794, 2147483648
    %v1809 = vmul.f32 %v1808, 1.442695
    %v1810 = vpow.pop %v1809
    %v1811 = vadd.f32 %v1810, 1.0
    %v1812 = vrcp.pop %v1811
    %v1813 = vmul.f32 1.0, %v1812
    %v1814 = vmul.f32 %v1806, %v1644
    %v1815 = vmul.f32 %v1800, %v1807
    %v1816 = vadd.f32 %v1814, %v1815
    %v1817 = vtanh.pop %v1816
    %v1818 = vmul.f32 %v1813, %v1817
    %v1819 = vtanh.pop %v1818
    %1820 = vst [vmem:[#allocation2 + $0xe] sm:$0x3] %v1819
    %v1821 = vld [vmem:[#allocation2] sm:$0xff]
    %v1822 = vld [vmem:[#allocation2 + $0x8] sm:$0xff]
    %v1823 = vld [vmem:[%s4] sm:$0xff]
    %v1824 = vld [vmem:[%s4 + $0x8] sm:$0xff]
    %v1825 = vld [vmem:[%s4 + $0x10] sm:$0xff]
    %v1826 = vld [vmem:[%s4 + $0x18] sm:$0xff]
    %v1827 = vld [vmem:[%s4 + $0x20] sm:$0xff]
    %v1828 = vld [vmem:[%s4 + $0x28] sm:$0xff]
    %v1829 = vld [vmem:[%s4 + $0x30] sm:$0xff]
    %v1830 = vld [vmem:[%s4 + $0x38] sm:$0xff]
    %v1831 = vld [vmem:[%s4 + $0x40] sm:$0xff]
    %v1832 = vld [vmem:[%s4 + $0x48] sm:$0xff]
    %v1833 = vld [vmem:[%s4 + $0x50] sm:$0xff]
    %v1834 = vld [vmem:[%s4 + $0x58] sm:$0xff]
    %v1835 = vld [vmem:[%s4 + $0x60] sm:$0xff]
    %v1836 = vld [vmem:[%s4 + $0x68] sm:$0xff]
    %v1837 = vld [vmem:[%s4 + $0x70] sm:$0xff]
    %v1838 = vld [vmem:[%s4 + $0x78] sm:$0xff]
    %v1839 = vld [vmem:[%s4 + $0x80] sm:$0xff]
    %v1840 = vld [vmem:[%s4 + $0x88] sm:$0xff]
    %v1841 = vld [vmem:[%s4 + $0x90] sm:$0xff]
    %v1842 = vld [vmem:[%s4 + $0x98] sm:$0xff]
    %v1843 = vld [vmem:[%s4 + $0xa0] sm:$0xff]
    %v1844 = vld [vmem:[%s4 + $0xa8] sm:$0xff]
    %v1845 = vld [vmem:[%s4 + $0xb0] sm:$0xff]
    %v1846 = vld [vmem:[%s4 + $0xb8] sm:$0xff]
    %v1847 = vld [vmem:[%s4 + $0xc0] sm:$0xff]
    %v1848 = vld [vmem:[%s4 + $0xc8] sm:$0xff]
    %v1849 = vld [vmem:[%s4 + $0xd0] sm:$0xff]
    %v1850 = vld [vmem:[%s4 + $0xd8] sm:$0xff]
    %v1851 = vld [vmem:[%s4 + $0xe0] sm:$0xff]
    %v1852 = vld [vmem:[%s4 + $0xe8] sm:$0xff]
    %v1853 = vld [vmem:[%s4 + $0xf0] sm:$0xff]
    %v1854 = vld [vmem:[%s4 + $0xf8] sm:$0xff]
    %v1855 = vld [vmem:[%s4 + $0x100] sm:$0xff]
    %v1856 = vld [vmem:[%s4 + $0x108] sm:$0xff]
    %v1857 = vld [vmem:[%s4 + $0x110] sm:$0xff]
    %v1858 = vld [vmem:[%s4 + $0x118] sm:$0xff]
    %v1859 = vld [vmem:[%s4 + $0x120] sm:$0xff]
    %v1860 = vld [vmem:[%s4 + $0x128] sm:$0xff]
    %v1861 = vld [vmem:[%s4 + $0x130] sm:$0xff]
    %v1862 = vld [vmem:[%s4 + $0x138] sm:$0xff]
    %v1863 = vld [vmem:[%s4 + $0x140] sm:$0xff]
    %v1864 = vld [vmem:[%s4 + $0x148] sm:$0xff]
    %v1865 = vld [vmem:[%s4 + $0x150] sm:$0xff]
    %v1866 = vld [vmem:[%s4 + $0x158] sm:$0xff]
    %v1867 = vld [vmem:[%s4 + $0x160] sm:$0xff]
    %v1868 = vld [vmem:[%s4 + $0x168] sm:$0xff]
    %v1869 = vld [vmem:[%s4 + $0x170] sm:$0xff]
    %v1870 = vld [vmem:[%s4 + $0x178] sm:$0xff]
    %v1871 = vld [vmem:[%s4 + $0x180] sm:$0xff]
    %v1872 = vld [vmem:[%s4 + $0x188] sm:$0xff]
    %v1873 = vld [vmem:[%s4 + $0x190] sm:$0xff]
    %v1874 = vld [vmem:[%s4 + $0x198] sm:$0xff]
    %v1875 = vld [vmem:[%s4 + $0x1a0] sm:$0xff]
    %v1876 = vld [vmem:[%s4 + $0x1a8] sm:$0xff]
    %v1877 = vld [vmem:[%s4 + $0x1b0] sm:$0xff]
    %v1878 = vld [vmem:[%s4 + $0x1b8] sm:$0xff]
    %v1879 = vld [vmem:[%s4 + $0x1c0] sm:$0xff]
    %v1880 = vld [vmem:[%s4 + $0x1c8] sm:$0xff]
    %v1881 = vld [vmem:[%s4 + $0x1d0] sm:$0xff]
    %v1882 = vld [vmem:[%s4 + $0x1d8] sm:$0xff]
    %v1883 = vld [vmem:[%s4 + $0x1e0] sm:$0xff]
    %v1884 = vld [vmem:[%s4 + $0x1e8] sm:$0xff]
    %v1885 = vld [vmem:[%s4 + $0x1f0] sm:$0xff]
    %v1886 = vld [vmem:[%s4 + $0x1f8] sm:$0xff]
    %v1887 = vld [vmem:[%s6] sm:$0xf]
    %v1889 = vlaneseq
    %v1890 = vshrl.u32 %v1889, 7
    %v1891 = vsub.s32 0, %v1890
    %v1892 = vrot.slane %v1887, %v1891
    %v1893 = vlaneseq
    %v1894 = vshrl.u32 %v1893, 7
    %v1895 = vsub.s32 1, %v1894
    %v1896 = vrot.slane %v1887, %v1895
    %v1897 = vlaneseq
    %v1898 = vshrl.u32 %v1897, 7
    %v1899 = vsub.s32 2, %v1898
    %v1900 = vrot.slane %v1887, %v1899
    %v1901 = vlaneseq
    %v1902 = vshrl.u32 %v1901, 7
    %v1903 = vsub.s32 3, %v1902
    %v1904 = vrot.slane %v1887, %v1903
    %1909 = vmatprep.subr.mxu0 %v1884
    %1910 = vmatpush1.msra.mxu0 %v1883
    %1911 = vmatprep.subr.mxu0 %v1880
    %1912 = vmatpush1.msra.mxu0 %v1879
    %1913 = vmatprep.subr.mxu0 %v1876
    %1914 = vmatpush1.msra.mxu0 %v1875
    %1915 = vmatprep.subr.mxu0 %v1872
    %1916 = vmatpush1.msra.mxu0 %v1871
    %1917 = vmatprep.subr.mxu0 %v1868
    %1918 = vmatpush1.msra.mxu0 %v1867
    %1919 = vmatprep.subr.mxu0 %v1864
    %1920 = vmatpush1.msra.mxu0 %v1863
    %1921 = vmatprep.subr.mxu0 %v1860
    %1922 = vmatpush1.msra.mxu0 %v1859
    %1923 = vmatprep.subr.mxu0 %v1856
    %1924 = vmatpush1.msra.mxu0 %v1855
    %1925 = vmatprep.subr.mxu0 %v1852
    %1926 = vmatpush1.msra.mxu0 %v1851
    %1927 = vmatprep.subr.mxu0 %v1848
    %1928 = vmatpush1.msra.mxu0 %v1847
    %1929 = vmatprep.subr.mxu0 %v1844
    %1930 = vmatpush1.msra.mxu0 %v1843
    %1931 = vmatprep.subr.mxu0 %v1840
    %1932 = vmatpush1.msra.mxu0 %v1839
    %1933 = vmatprep.subr.mxu0 %v1836
    %1934 = vmatpush1.msra.mxu0 %v1835
    %1935 = vmatprep.subr.mxu0 %v1832
    %1936 = vmatpush1.msra.mxu0 %v1831
    %1937 = vmatprep.subr.mxu0 %v1828
    %1938 = vmatpush1.msra.mxu0 %v1827
    %1939 = vmatprep.subr.mxu0 %v1824
    %1940 = vmatpush1.msra.mxu0 %v1823
    %1941 = vmatprep.subr.mxu0 0.0
    %1942 = vmatpush2.msra.mxu0 0.0
    %1943 = vmatprep.subr.mxu0 0.0
    %1944 = vmatpush2.msra.mxu0 0.0
    %1945 = vmatprep.subr.mxu0 0.0
    %1946 = vmatpush2.msra.mxu0 0.0
    %1947 = vmatprep.subr.mxu0 0.0
    %1948 = vmatpush2.msra.mxu0 0.0
    %1949 = vmatprep.subr.mxu0 0.0
    %1950 = vmatpush2.msra.mxu0 0.0
    %1951 = vmatprep.subr.mxu0 0.0
    %1952 = vmatpush2.msra.mxu0 0.0
    %1953 = vmatprep.subr.mxu0 0.0
    %1954 = vmatpush2.msra.mxu0 0.0
    %1955 = vmatprep.subr.mxu0 0.0
    %1956 = vmatpush2.msra.mxu0 0.0
    %1957 = vmatprep.subr.mxu0 0.0
    %1958 = vmatpush2.msra.mxu0 0.0
    %1959 = vmatprep.subr.mxu0 0.0
    %1960 = vmatpush2.msra.mxu0 0.0
    %1961 = vmatprep.subr.mxu0 0.0
    %1962 = vmatpush2.msra.mxu0 0.0
    %1963 = vmatprep.subr.mxu0 0.0
    %1964 = vmatpush2.msra.mxu0 0.0
    %1965 = vmatprep.subr.mxu0 0.0
    %1966 = vmatpush2.msra.mxu0 0.0
    %1967 = vmatprep.subr.mxu0 0.0
    %1968 = vmatpush2.msra.mxu0 0.0
    %1969 = vmatprep.subr.mxu0 0.0
    %1970 = vmatpush2.msra.mxu0 0.0
    %1971 = vmatprep.subr.mxu0 0.0
    %1972 = vmatpush2.msra.mxu0 0.0
    %1973 = vmatprep.mubr.f32.mxu0 0.0
    %1974 = vmatmul.mubr.f32.gmra.mxu0 %v1821
    %v1975 = vpop.f32.mrf.mxu0
    %v1976 = vadd.f32 %v1892, %v1975
    %v1977 = vpop.f32.mrf.mxu0
    %v1978 = vadd.f32 %v1896, %v1977
    %1979 = vmatprep.mubr.f32.mxu0 0.0
    %1980 = vmatmul.mubr.f32.gmra.mxu0 %v1822
    %v1981 = vpop.f32.mrf.mxu0
    %v1982 = vadd.f32 %v1892, %v1981
    %v1983 = vpop.f32.mrf.mxu0
    %v1984 = vadd.f32 %v1896, %v1983
    %1985 = vdwg.mxu0
    %1986 = vmatprep.subr.mxu0 %v1886
    %1987 = vmatpush1.msra.mxu0 %v1885
    %1988 = vmatprep.subr.mxu0 %v1882
    %1989 = vmatpush1.msra.mxu0 %v1881
    %1990 = vmatprep.subr.mxu0 %v1878
    %1991 = vmatpush1.msra.mxu0 %v1877
    %1992 = vmatprep.subr.mxu0 %v1874
    %1993 = vmatpush1.msra.mxu0 %v1873
    %1994 = vmatprep.subr.mxu0 %v1870
    %1995 = vmatpush1.msra.mxu0 %v1869
    %1996 = vmatprep.subr.mxu0 %v1866
    %1997 = vmatpush1.msra.mxu0 %v1865
    %1998 = vmatprep.subr.mxu0 %v1862
    %1999 = vmatpush1.msra.mxu0 %v1861
    %2000 = vmatprep.subr.mxu0 %v1858
    %2001 = vmatpush1.msra.mxu0 %v1857
    %2002 = vmatprep.subr.mxu0 %v1854
    %2003 = vmatpush1.msra.mxu0 %v1853
    %2004 = vmatprep.subr.mxu0 %v1850
    %2005 = vmatpush1.msra.mxu0 %v1849
    %2006 = vmatprep.subr.mxu0 %v1846
    %2007 = vmatpush1.msra.mxu0 %v1845
    %2008 = vmatprep.subr.mxu0 %v1842
    %2009 = vmatpush1.msra.mxu0 %v1841
    %2010 = vmatprep.subr.mxu0 %v1838
    %2011 = vmatpush1.msra.mxu0 %v1837
    %2012 = vmatprep.subr.mxu0 %v1834
    %2013 = vmatpush1.msra.mxu0 %v1833
    %2014 = vmatprep.subr.mxu0 %v1830
    %2015 = vmatpush1.msra.mxu0 %v1829
    %2016 = vmatprep.subr.mxu0 %v1826
    %2017 = vmatpush1.msra.mxu0 %v1825
    %2018 = vmatprep.subr.mxu0 0.0
    %2019 = vmatpush2.msra.mxu0 0.0
    %2020 = vmatprep.subr.mxu0 0.0
    %2021 = vmatpush2.msra.mxu0 0.0
    %2022 = vmatprep.subr.mxu0 0.0
    %2023 = vmatpush2.msra.mxu0 0.0
    %2024 = vmatprep.subr.mxu0 0.0
    %2025 = vmatpush2.msra.mxu0 0.0
    %2026 = vmatprep.subr.mxu0 0.0
    %2027 = vmatpush2.msra.mxu0 0.0
    %2028 = vmatprep.subr.mxu0 0.0
    %2029 = vmatpush2.msra.mxu0 0.0
    %2030 = vmatprep.subr.mxu0 0.0
    %2031 = vmatpush2.msra.mxu0 0.0
    %2032 = vmatprep.subr.mxu0 0.0
    %2033 = vmatpush2.msra.mxu0 0.0
    %2034 = vmatprep.subr.mxu0 0.0
    %2035 = vmatpush2.msra.mxu0 0.0
    %2036 = vmatprep.subr.mxu0 0.0
    %2037 = vmatpush2.msra.mxu0 0.0
    %2038 = vmatprep.subr.mxu0 0.0
    %2039 = vmatpush2.msra.mxu0 0.0
    %2040 = vmatprep.subr.mxu0 0.0
    %2041 = vmatpush2.msra.mxu0 0.0
    %2042 = vmatprep.subr.mxu0 0.0
    %2043 = vmatpush2.msra.mxu0 0.0
    %2044 = vmatprep.subr.mxu0 0.0
    %2045 = vmatpush2.msra.mxu0 0.0
    %2046 = vmatprep.subr.mxu0 0.0
    %2047 = vmatpush2.msra.mxu0 0.0
    %2048 = vmatprep.subr.mxu0 0.0
    %2049 = vmatpush2.msra.mxu0 0.0
    %2050 = vmatprep.mubr.f32.mxu0 0.0
    %2051 = vmatmul.mubr.f32.gmra.mxu0 %v1821
    %v2052 = vpop.f32.mrf.mxu0
    %v2053 = vadd.f32 %v1900, %v2052
    %v2054 = vpop.f32.mrf.mxu0
    %v2055 = vadd.f32 %v1904, %v2054
    %2056 = vmatprep.mubr.f32.mxu0 0.0
    %2057 = vmatmul.mubr.f32.gmra.mxu0 %v1822
    %v2058 = vpop.f32.mrf.mxu0
    %v2059 = vadd.f32 %v1900, %v2058
    %v2060 = vpop.f32.mrf.mxu0
    %v2061 = vadd.f32 %v1904, %v2060
    %2062 = vdwg.mxu0
    %2063 = vmatprep.subr.mxu0 %v205
    %2064 = vmatpush1.msra.mxu0 %v204
    %2065 = vmatprep.subr.mxu0 %v201
    %2066 = vmatpush1.msra.mxu0 %v200
    %2067 = vmatprep.subr.mxu0 %v197
    %2068 = vmatpush1.msra.mxu0 %v196
    %2069 = vmatprep.subr.mxu0 %v193
    %2070 = vmatpush1.msra.mxu0 %v192
    %2071 = vmatprep.subr.mxu0 %v189
    %2072 = vmatpush1.msra.mxu0 %v188
    %2073 = vmatprep.subr.mxu0 %v185
    %2074 = vmatpush1.msra.mxu0 %v184
    %2075 = vmatprep.subr.mxu0 %v181
    %2076 = vmatpush1.msra.mxu0 %v180
    %2077 = vmatprep.subr.mxu0 %v177
    %2078 = vmatpush1.msra.mxu0 %v176
    %2079 = vmatprep.subr.mxu0 %v173
    %2080 = vmatpush1.msra.mxu0 %v172
    %2081 = vmatprep.subr.mxu0 %v169
    %2082 = vmatpush1.msra.mxu0 %v168
    %2083 = vmatprep.subr.mxu0 %v165
    %2084 = vmatpush1.msra.mxu0 %v164
    %2085 = vmatprep.subr.mxu0 %v161
    %2086 = vmatpush1.msra.mxu0 %v160
    %2087 = vmatprep.subr.mxu0 %v157
    %2088 = vmatpush1.msra.mxu0 %v156
    %2089 = vmatprep.subr.mxu0 %v153
    %2090 = vmatpush1.msra.mxu0 %v152
    %2091 = vmatprep.subr.mxu0 %v149
    %2092 = vmatpush1.msra.mxu0 %v148
    %2093 = vmatprep.subr.mxu0 %v145
    %2094 = vmatpush1.msra.mxu0 %v144
    %2095 = vmatprep.subr.mxu0 0.0
    %2096 = vmatpush2.msra.mxu0 0.0
    %2097 = vmatprep.subr.mxu0 0.0
    %2098 = vmatpush2.msra.mxu0 0.0
    %2099 = vmatprep.subr.mxu0 0.0
    %2100 = vmatpush2.msra.mxu0 0.0
    %2101 = vmatprep.subr.mxu0 0.0
    %2102 = vmatpush2.msra.mxu0 0.0
    %2103 = vmatprep.subr.mxu0 0.0
    %2104 = vmatpush2.msra.mxu0 0.0
    %2105 = vmatprep.subr.mxu0 0.0
    %2106 = vmatpush2.msra.mxu0 0.0
    %2107 = vmatprep.subr.mxu0 0.0
    %2108 = vmatpush2.msra.mxu0 0.0
    %2109 = vmatprep.subr.mxu0 0.0
    %2110 = vmatpush2.msra.mxu0 0.0
    %2111 = vmatprep.subr.mxu0 0.0
    %2112 = vmatpush2.msra.mxu0 0.0
    %2113 = vmatprep.subr.mxu0 0.0
    %2114 = vmatpush2.msra.mxu0 0.0
    %2115 = vmatprep.subr.mxu0 0.0
    %2116 = vmatpush2.msra.mxu0 0.0
    %2117 = vmatprep.subr.mxu0 0.0
    %2118 = vmatpush2.msra.mxu0 0.0
    %2119 = vmatprep.subr.mxu0 0.0
    %2120 = vmatpush2.msra.mxu0 0.0
    %2121 = vmatprep.subr.mxu0 0.0
    %2122 = vmatpush2.msra.mxu0 0.0
    %2123 = vmatprep.subr.mxu0 0.0
    %2124 = vmatpush2.msra.mxu0 0.0
    %2125 = vmatprep.subr.mxu0 0.0
    %2126 = vmatpush2.msra.mxu0 0.0
    %2127 = vmatprep.mubr.f32.mxu0 0.0
    %2128 = vmatmul.mubr.f32.gmra.mxu0 0.0
    %v2129 = vpop.f32.mrf.mxu0
    %v2130 = vadd.f32 0.0, %v2129
    %v2131 = vpop.f32.mrf.mxu0
    %v2132 = vadd.f32 0.0, %v2131
    %2133 = vdwg.mxu0
    %2134 = vmatprep.subr.mxu0 %v207
    %2135 = vmatpush1.msra.mxu0 %v206
    %2136 = vmatprep.subr.mxu0 %v203
    %2137 = vmatpush1.msra.mxu0 %v202
    %2138 = vmatprep.subr.mxu0 %v199
    %2139 = vmatpush1.msra.mxu0 %v198
    %2140 = vmatprep.subr.mxu0 %v195
    %2141 = vmatpush1.msra.mxu0 %v194
    %2142 = vmatprep.subr.mxu0 %v191
    %2143 = vmatpush1.msra.mxu0 %v190
    %2144 = vmatprep.subr.mxu0 %v187
    %2145 = vmatpush1.msra.mxu0 %v186
    %2146 = vmatprep.subr.mxu0 %v183
    %2147 = vmatpush1.msra.mxu0 %v182
    %2148 = vmatprep.subr.mxu0 %v179
    %2149 = vmatpush1.msra.mxu0 %v178
    %2150 = vmatprep.subr.mxu0 %v175
    %2151 = vmatpush1.msra.mxu0 %v174
    %2152 = vmatprep.subr.mxu0 %v171
    %2153 = vmatpush1.msra.mxu0 %v170
    %2154 = vmatprep.subr.mxu0 %v167
    %2155 = vmatpush1.msra.mxu0 %v166
    %2156 = vmatprep.subr.mxu0 %v163
    %2157 = vmatpush1.msra.mxu0 %v162
    %2158 = vmatprep.subr.mxu0 %v159
    %2159 = vmatpush1.msra.mxu0 %v158
    %2160 = vmatprep.subr.mxu0 %v155
    %2161 = vmatpush1.msra.mxu0 %v154
    %2162 = vmatprep.subr.mxu0 %v151
    %2163 = vmatpush1.msra.mxu0 %v150
    %2164 = vmatprep.subr.mxu0 %v147
    %2165 = vmatpush1.msra.mxu0 %v146
    %2166 = vmatprep.subr.mxu0 0.0
    %2167 = vmatpush2.msra.mxu0 0.0
    %2168 = vmatprep.subr.mxu0 0.0
    %2169 = vmatpush2.msra.mxu0 0.0
    %2170 = vmatprep.subr.mxu0 0.0
    %2171 = vmatpush2.msra.mxu0 0.0
    %2172 = vmatprep.subr.mxu0 0.0
    %2173 = vmatpush2.msra.mxu0 0.0
    %2174 = vmatprep.subr.mxu0 0.0
    %2175 = vmatpush2.msra.mxu0 0.0
    %2176 = vmatprep.subr.mxu0 0.0
    %2177 = vmatpush2.msra.mxu0 0.0
    %2178 = vmatprep.subr.mxu0 0.0
    %2179 = vmatpush2.msra.mxu0 0.0
    %2180 = vmatprep.subr.mxu0 0.0
    %2181 = vmatpush2.msra.mxu0 0.0
    %2182 = vmatprep.subr.mxu0 0.0
    %2183 = vmatpush2.msra.mxu0 0.0
    %2184 = vmatprep.subr.mxu0 0.0
    %2185 = vmatpush2.msra.mxu0 0.0
    %2186 = vmatprep.subr.mxu0 0.0
    %2187 = vmatpush2.msra.mxu0 0.0
    %2188 = vmatprep.subr.mxu0 0.0
    %2189 = vmatpush2.msra.mxu0 0.0
    %2190 = vmatprep.subr.mxu0 0.0
    %2191 = vmatpush2.msra.mxu0 0.0
    %2192 = vmatprep.subr.mxu0 0.0
    %2193 = vmatpush2.msra.mxu0 0.0
    %2194 = vmatprep.subr.mxu0 0.0
    %2195 = vmatpush2.msra.mxu0 0.0
    %2196 = vmatprep.subr.mxu0 0.0
    %2197 = vmatpush2.msra.mxu0 0.0
    %2198 = vmatprep.mubr.f32.mxu0 0.0
    %2199 = vmatmul.mubr.f32.gmra.mxu0 0.0
    %v2200 = vpop.f32.mrf.mxu0
    %v2201 = vadd.f32 0.0, %v2200
    %v2202 = vpop.f32.mrf.mxu0
    %v2203 = vadd.f32 0.0, %v2202
    %2204 = vdwg.mxu0
    %v2205 = vadd.f32 %v1976, %v2130
    %v2206 = vadd.f32 %v1978, %v2132
    %v2207 = vadd.f32 %v2053, %v2201
    %v2208 = vadd.f32 %v2055, %v2203
    %v2209 = vxor.u32 %v2205, 2147483648
    %v2210 = vmul.f32 %v2209, 1.442695
    %v2211 = vpow.pop %v2210
    %v2212 = vadd.f32 %v2211, 1.0
    %v2213 = vrcp.pop %v2212
    %v2214 = vmul.f32 1.0, %v2213
    %v2215 = vxor.u32 %v2206, 2147483648
    %v2216 = vmul.f32 %v2215, 1.442695
    %v2217 = vpow.pop %v2216
    %v2218 = vadd.f32 %v2217, 1.0
    %v2219 = vrcp.pop %v2218
    %v2220 = vmul.f32 1.0, %v2219
    %v2221 = vtanh.pop %v2207
    %v2222 = vxor.u32 %v2208, 2147483648
    %v2223 = vmul.f32 %v2222, 1.442695
    %v2224 = vpow.pop %v2223
    %v2225 = vadd.f32 %v2224, 1.0
    %v2226 = vrcp.pop %v2225
    %v2227 = vmul.f32 1.0, %v2226
    %v2228 = vmul.f32 %v2220, 0.0
    %v2229 = vmul.f32 %v2214, %v2221
    %v2230 = vadd.f32 %v2228, %v2229
    %v2231 = vtanh.pop %v2230
    %v2232 = vmul.f32 %v2227, %v2231
    %v2233 = vtanh.pop %v2232
    %2234 = vst [vmem:[#allocation3] sm:$0x3] %v2233
    %2235 = vmatprep.subr.mxu0 %v205
    %2236 = vmatpush1.msra.mxu0 %v204
    %2237 = vmatprep.subr.mxu0 %v201
    %2238 = vmatpush1.msra.mxu0 %v200
    %2239 = vmatprep.subr.mxu0 %v197
    %2240 = vmatpush1.msra.mxu0 %v196
    %2241 = vmatprep.subr.mxu0 %v193
    %2242 = vmatpush1.msra.mxu0 %v192
    %2243 = vmatprep.subr.mxu0 %v189
    %2244 = vmatpush1.msra.mxu0 %v188
    %2245 = vmatprep.subr.mxu0 %v185
    %2246 = vmatpush1.msra.mxu0 %v184
    %2247 = vmatprep.subr.mxu0 %v181
    %2248 = vmatpush1.msra.mxu0 %v180
    %2249 = vmatprep.subr.mxu0 %v177
    %2250 = vmatpush1.msra.mxu0 %v176
    %2251 = vmatprep.subr.mxu0 %v173
    %2252 = vmatpush1.msra.mxu0 %v172
    %2253 = vmatprep.subr.mxu0 %v169
    %2254 = vmatpush1.msra.mxu0 %v168
    %2255 = vmatprep.subr.mxu0 %v165
    %2256 = vmatpush1.msra.mxu0 %v164
    %2257 = vmatprep.subr.mxu0 %v161
    %2258 = vmatpush1.msra.mxu0 %v160
    %2259 = vmatprep.subr.mxu0 %v157
    %2260 = vmatpush1.msra.mxu0 %v156
    %2261 = vmatprep.subr.mxu0 %v153
    %2262 = vmatpush1.msra.mxu0 %v152
    %2263 = vmatprep.subr.mxu0 %v149
    %2264 = vmatpush1.msra.mxu0 %v148
    %2265 = vmatprep.subr.mxu0 %v145
    %2266 = vmatpush1.msra.mxu0 %v144
    %2267 = vmatprep.subr.mxu0 0.0
    %2268 = vmatpush2.msra.mxu0 0.0
    %2269 = vmatprep.subr.mxu0 0.0
    %2270 = vmatpush2.msra.mxu0 0.0
    %2271 = vmatprep.subr.mxu0 0.0
    %2272 = vmatpush2.msra.mxu0 0.0
    %2273 = vmatprep.subr.mxu0 0.0
    %2274 = vmatpush2.msra.mxu0 0.0
    %2275 = vmatprep.subr.mxu0 0.0
    %2276 = vmatpush2.msra.mxu0 0.0
    %2277 = vmatprep.subr.mxu0 0.0
    %2278 = vmatpush2.msra.mxu0 0.0
    %2279 = vmatprep.subr.mxu0 0.0
    %2280 = vmatpush2.msra.mxu0 0.0
    %2281 = vmatprep.subr.mxu0 0.0
    %2282 = vmatpush2.msra.mxu0 0.0
    %2283 = vmatprep.subr.mxu0 0.0
    %2284 = vmatpush2.msra.mxu0 0.0
    %2285 = vmatprep.subr.mxu0 0.0
    %2286 = vmatpush2.msra.mxu0 0.0
    %2287 = vmatprep.subr.mxu0 0.0
    %2288 = vmatpush2.msra.mxu0 0.0
    %2289 = vmatprep.subr.mxu0 0.0
    %2290 = vmatpush2.msra.mxu0 0.0
    %2291 = vmatprep.subr.mxu0 0.0
    %2292 = vmatpush2.msra.mxu0 0.0
    %2293 = vmatprep.subr.mxu0 0.0
    %2294 = vmatpush2.msra.mxu0 0.0
    %2295 = vmatprep.subr.mxu0 0.0
    %2296 = vmatpush2.msra.mxu0 0.0
    %2297 = vmatprep.subr.mxu0 0.0
    %2298 = vmatpush2.msra.mxu0 0.0
    %2299 = vmatprep.mubr.f32.mxu0 0.0
    %2300 = vmatmul.mubr.f32.gmra.mxu0 %v2232
    %v2301 = vpop.f32.mrf.mxu0
    %v2302 = vadd.f32 0.0, %v2301
    %v2303 = vpop.f32.mrf.mxu0
    %v2304 = vadd.f32 0.0, %v2303
    %2305 = vdwg.mxu0
    %2306 = vmatprep.subr.mxu0 %v207
    %2307 = vmatpush1.msra.mxu0 %v206
    %2308 = vmatprep.subr.mxu0 %v203
    %2309 = vmatpush1.msra.mxu0 %v202
    %2310 = vmatprep.subr.mxu0 %v199
    %2311 = vmatpush1.msra.mxu0 %v198
    %2312 = vmatprep.subr.mxu0 %v195
    %2313 = vmatpush1.msra.mxu0 %v194
    %2314 = vmatprep.subr.mxu0 %v191
    %2315 = vmatpush1.msra.mxu0 %v190
    %2316 = vmatprep.subr.mxu0 %v187
    %2317 = vmatpush1.msra.mxu0 %v186
    %2318 = vmatprep.subr.mxu0 %v183
    %2319 = vmatpush1.msra.mxu0 %v182
    %2320 = vmatprep.subr.mxu0 %v179
    %2321 = vmatpush1.msra.mxu0 %v178
    %2322 = vmatprep.subr.mxu0 %v175
    %2323 = vmatpush1.msra.mxu0 %v174
    %2324 = vmatprep.subr.mxu0 %v171
    %2325 = vmatpush1.msra.mxu0 %v170
    %2326 = vmatprep.subr.mxu0 %v167
    %2327 = vmatpush1.msra.mxu0 %v166
    %2328 = vmatprep.subr.mxu0 %v163
    %2329 = vmatpush1.msra.mxu0 %v162
    %2330 = vmatprep.subr.mxu0 %v159
    %2331 = vmatpush1.msra.mxu0 %v158
    %2332 = vmatprep.subr.mxu0 %v155
    %2333 = vmatpush1.msra.mxu0 %v154
    %2334 = vmatprep.subr.mxu0 %v151
    %2335 = vmatpush1.msra.mxu0 %v150
    %2336 = vmatprep.subr.mxu0 %v147
    %2337 = vmatpush1.msra.mxu0 %v146
    %2338 = vmatprep.subr.mxu0 0.0
    %2339 = vmatpush2.msra.mxu0 0.0
    %2340 = vmatprep.subr.mxu0 0.0
    %2341 = vmatpush2.msra.mxu0 0.0
    %2342 = vmatprep.subr.mxu0 0.0
    %2343 = vmatpush2.msra.mxu0 0.0
    %2344 = vmatprep.subr.mxu0 0.0
    %2345 = vmatpush2.msra.mxu0 0.0
    %2346 = vmatprep.subr.mxu0 0.0
    %2347 = vmatpush2.msra.mxu0 0.0
    %2348 = vmatprep.subr.mxu0 0.0
    %2349 = vmatpush2.msra.mxu0 0.0
    %2350 = vmatprep.subr.mxu0 0.0
    %2351 = vmatpush2.msra.mxu0 0.0
    %2352 = vmatprep.subr.mxu0 0.0
    %2353 = vmatpush2.msra.mxu0 0.0
    %2354 = vmatprep.subr.mxu0 0.0
    %2355 = vmatpush2.msra.mxu0 0.0
    %2356 = vmatprep.subr.mxu0 0.0
    %2357 = vmatpush2.msra.mxu0 0.0
    %2358 = vmatprep.subr.mxu0 0.0
    %2359 = vmatpush2.msra.mxu0 0.0
    %2360 = vmatprep.subr.mxu0 0.0
    %2361 = vmatpush2.msra.mxu0 0.0
    %2362 = vmatprep.subr.mxu0 0.0
    %2363 = vmatpush2.msra.mxu0 0.0
    %2364 = vmatprep.subr.mxu0 0.0
    %2365 = vmatpush2.msra.mxu0 0.0
    %2366 = vmatprep.subr.mxu0 0.0
    %2367 = vmatpush2.msra.mxu0 0.0
    %2368 = vmatprep.subr.mxu0 0.0
    %2369 = vmatpush2.msra.mxu0 0.0
    %2370 = vmatprep.mubr.f32.mxu0 0.0
    %2371 = vmatmul.mubr.f32.gmra.mxu0 %v2232
    %v2372 = vpop.f32.mrf.mxu0
    %v2373 = vadd.f32 0.0, %v2372
    %v2374 = vpop.f32.mrf.mxu0
    %v2375 = vadd.f32 0.0, %v2374
    %2376 = vdwg.mxu0
    %v2381 = vrot.slane %v2302, 6
    %v2382 = vrot.slane %v2304, 6
    %v2383 = vrot.slane %v2373, 6
    %v2384 = vrot.slane %v2375, 6
    %v2389 = vadd.f32 %v1976, %v2381
    %v2390 = vadd.f32 %v1978, %v2382
    %v2391 = vadd.f32 %v2053, %v2383
    %v2392 = vadd.f32 %v2055, %v2384
    %v2393 = vxor.u32 %v2389, 2147483648
    %v2394 = vmul.f32 %v2393, 1.442695
    %v2395 = vpow.pop %v2394
    %v2396 = vadd.f32 %v2395, 1.0
    %v2397 = vrcp.pop %v2396
    %v2398 = vmul.f32 1.0, %v2397
    %v2399 = vxor.u32 %v2390, 2147483648
    %v2400 = vmul.f32 %v2399, 1.442695
    %v2401 = vpow.pop %v2400
    %v2402 = vadd.f32 %v2401, 1.0
    %v2403 = vrcp.pop %v2402
    %v2404 = vmul.f32 1.0, %v2403
    %v2405 = vtanh.pop %v2391
    %v2406 = vxor.u32 %v2392, 2147483648
    %v2407 = vmul.f32 %v2406, 1.442695
    %v2408 = vpow.pop %v2407
    %v2409 = vadd.f32 %v2408, 1.0
    %v2410 = vrcp.pop %v2409
    %v2411 = vmul.f32 1.0, %v2410
    %v2413 = vrot.slane %v2230, 6
    %v2415 = vmul.f32 %v2404, %v2413
    %v2416 = vmul.f32 %v2398, %v2405
    %v2417 = vadd.f32 %v2415, %v2416
    %v2418 = vtanh.pop %v2417
    %v2419 = vmul.f32 %v2411, %v2418
    %v2420 = vtanh.pop %v2419
    %2421 = vst [vmem:[#allocation3] sm:$0xc] %v2420
    %v2423 = vrot.slane %v2419, 2
    %2425 = vmatprep.subr.mxu0 %v205
    %2426 = vmatpush1.msra.mxu0 %v204
    %2427 = vmatprep.subr.mxu0 %v201
    %2428 = vmatpush1.msra.mxu0 %v200
    %2429 = vmatprep.subr.mxu0 %v197
    %2430 = vmatpush1.msra.mxu0 %v196
    %2431 = vmatprep.subr.mxu0 %v193
    %2432 = vmatpush1.msra.mxu0 %v192
    %2433 = vmatprep.subr.mxu0 %v189
    %2434 = vmatpush1.msra.mxu0 %v188
    %2435 = vmatprep.subr.mxu0 %v185
    %2436 = vmatpush1.msra.mxu0 %v184
    %2437 = vmatprep.subr.mxu0 %v181
    %2438 = vmatpush1.msra.mxu0 %v180
    %2439 = vmatprep.subr.mxu0 %v177
    %2440 = vmatpush1.msra.mxu0 %v176
    %2441 = vmatprep.subr.mxu0 %v173
    %2442 = vmatpush1.msra.mxu0 %v172
    %2443 = vmatprep.subr.mxu0 %v169
    %2444 = vmatpush1.msra.mxu0 %v168
    %2445 = vmatprep.subr.mxu0 %v165
    %2446 = vmatpush1.msra.mxu0 %v164
    %2447 = vmatprep.subr.mxu0 %v161
    %2448 = vmatpush1.msra.mxu0 %v160
    %2449 = vmatprep.subr.mxu0 %v157
    %2450 = vmatpush1.msra.mxu0 %v156
    %2451 = vmatprep.subr.mxu0 %v153
    %2452 = vmatpush1.msra.mxu0 %v152
    %2453 = vmatprep.subr.mxu0 %v149
    %2454 = vmatpush1.msra.mxu0 %v148
    %2455 = vmatprep.subr.mxu0 %v145
    %2456 = vmatpush1.msra.mxu0 %v144
    %2457 = vmatprep.subr.mxu0 0.0
    %2458 = vmatpush2.msra.mxu0 0.0
    %2459 = vmatprep.subr.mxu0 0.0
    %2460 = vmatpush2.msra.mxu0 0.0
    %2461 = vmatprep.subr.mxu0 0.0
    %2462 = vmatpush2.msra.mxu0 0.0
    %2463 = vmatprep.subr.mxu0 0.0
    %2464 = vmatpush2.msra.mxu0 0.0
    %2465 = vmatprep.subr.mxu0 0.0
    %2466 = vmatpush2.msra.mxu0 0.0
    %2467 = vmatprep.subr.mxu0 0.0
    %2468 = vmatpush2.msra.mxu0 0.0
    %2469 = vmatprep.subr.mxu0 0.0
    %2470 = vmatpush2.msra.mxu0 0.0
    %2471 = vmatprep.subr.mxu0 0.0
    %2472 = vmatpush2.msra.mxu0 0.0
    %2473 = vmatprep.subr.mxu0 0.0
    %2474 = vmatpush2.msra.mxu0 0.0
    %2475 = vmatprep.subr.mxu0 0.0
    %2476 = vmatpush2.msra.mxu0 0.0
    %2477 = vmatprep.subr.mxu0 0.0
    %2478 = vmatpush2.msra.mxu0 0.0
    %2479 = vmatprep.subr.mxu0 0.0
    %2480 = vmatpush2.msra.mxu0 0.0
    %2481 = vmatprep.subr.mxu0 0.0
    %2482 = vmatpush2.msra.mxu0 0.0
    %2483 = vmatprep.subr.mxu0 0.0
    %2484 = vmatpush2.msra.mxu0 0.0
    %2485 = vmatprep.subr.mxu0 0.0
    %2486 = vmatpush2.msra.mxu0 0.0
    %2487 = vmatprep.subr.mxu0 0.0
    %2488 = vmatpush2.msra.mxu0 0.0
    %2489 = vmatprep.mubr.f32.mxu0 0.0
    %2490 = vmatmul.mubr.f32.gmra.mxu0 %v2423
    %v2491 = vpop.f32.mrf.mxu0
    %v2492 = vadd.f32 0.0, %v2491
    %v2493 = vpop.f32.mrf.mxu0
    %v2494 = vadd.f32 0.0, %v2493
    %2495 = vdwg.mxu0
    %2496 = vmatprep.subr.mxu0 %v207
    %2497 = vmatpush1.msra.mxu0 %v206
    %2498 = vmatprep.subr.mxu0 %v203
    %2499 = vmatpush1.msra.mxu0 %v202
    %2500 = vmatprep.subr.mxu0 %v199
    %2501 = vmatpush1.msra.mxu0 %v198
    %2502 = vmatprep.subr.mxu0 %v195
    %2503 = vmatpush1.msra.mxu0 %v194
    %2504 = vmatprep.subr.mxu0 %v191
    %2505 = vmatpush1.msra.mxu0 %v190
    %2506 = vmatprep.subr.mxu0 %v187
    %2507 = vmatpush1.msra.mxu0 %v186
    %2508 = vmatprep.subr.mxu0 %v183
    %2509 = vmatpush1.msra.mxu0 %v182
    %2510 = vmatprep.subr.mxu0 %v179
    %2511 = vmatpush1.msra.mxu0 %v178
    %2512 = vmatprep.subr.mxu0 %v175
    %2513 = vmatpush1.msra.mxu0 %v174
    %2514 = vmatprep.subr.mxu0 %v171
    %2515 = vmatpush1.msra.mxu0 %v170
    %2516 = vmatprep.subr.mxu0 %v167
    %2517 = vmatpush1.msra.mxu0 %v166
    %2518 = vmatprep.subr.mxu0 %v163
    %2519 = vmatpush1.msra.mxu0 %v162
    %2520 = vmatprep.subr.mxu0 %v159
    %2521 = vmatpush1.msra.mxu0 %v158
    %2522 = vmatprep.subr.mxu0 %v155
    %2523 = vmatpush1.msra.mxu0 %v154
    %2524 = vmatprep.subr.mxu0 %v151
    %2525 = vmatpush1.msra.mxu0 %v150
    %2526 = vmatprep.subr.mxu0 %v147
    %2527 = vmatpush1.msra.mxu0 %v146
    %2528 = vmatprep.subr.mxu0 0.0
    %2529 = vmatpush2.msra.mxu0 0.0
    %2530 = vmatprep.subr.mxu0 0.0
    %2531 = vmatpush2.msra.mxu0 0.0
    %2532 = vmatprep.subr.mxu0 0.0
    %2533 = vmatpush2.msra.mxu0 0.0
    %2534 = vmatprep.subr.mxu0 0.0
    %2535 = vmatpush2.msra.mxu0 0.0
    %2536 = vmatprep.subr.mxu0 0.0
    %2537 = vmatpush2.msra.mxu0 0.0
    %2538 = vmatprep.subr.mxu0 0.0
    %2539 = vmatpush2.msra.mxu0 0.0
    %2540 = vmatprep.subr.mxu0 0.0
    %2541 = vmatpush2.msra.mxu0 0.0
    %2542 = vmatprep.subr.mxu0 0.0
    %2543 = vmatpush2.msra.mxu0 0.0
    %2544 = vmatprep.subr.mxu0 0.0
    %2545 = vmatpush2.msra.mxu0 0.0
    %2546 = vmatprep.subr.mxu0 0.0
    %2547 = vmatpush2.msra.mxu0 0.0
    %2548 = vmatprep.subr.mxu0 0.0
    %2549 = vmatpush2.msra.mxu0 0.0
    %2550 = vmatprep.subr.mxu0 0.0
    %2551 = vmatpush2.msra.mxu0 0.0
    %2552 = vmatprep.subr.mxu0 0.0
    %2553 = vmatpush2.msra.mxu0 0.0
    %2554 = vmatprep.subr.mxu0 0.0
    %2555 = vmatpush2.msra.mxu0 0.0
    %2556 = vmatprep.subr.mxu0 0.0
    %2557 = vmatpush2.msra.mxu0 0.0
    %2558 = vmatprep.subr.mxu0 0.0
    %2559 = vmatpush2.msra.mxu0 0.0
    %2560 = vmatprep.mubr.f32.mxu0 0.0
    %2561 = vmatmul.mubr.f32.gmra.mxu0 %v2423
    %v2562 = vpop.f32.mrf.mxu0
    %v2563 = vadd.f32 0.0, %v2562
    %v2564 = vpop.f32.mrf.mxu0
    %v2565 = vadd.f32 0.0, %v2564
    %2566 = vdwg.mxu0
    %v2571 = vrot.slane %v2492, 4
    %v2572 = vrot.slane %v2494, 4
    %v2573 = vrot.slane %v2563, 4
    %v2574 = vrot.slane %v2565, 4
    %v2579 = vadd.f32 %v1976, %v2571
    %v2580 = vadd.f32 %v1978, %v2572
    %v2581 = vadd.f32 %v2053, %v2573
    %v2582 = vadd.f32 %v2055, %v2574
    %v2583 = vxor.u32 %v2579, 2147483648
    %v2584 = vmul.f32 %v2583, 1.442695
    %v2585 = vpow.pop %v2584
    %v2586 = vadd.f32 %v2585, 1.0
    %v2587 = vrcp.pop %v2586
    %v2588 = vmul.f32 1.0, %v2587
    %v2589 = vxor.u32 %v2580, 2147483648
    %v2590 = vmul.f32 %v2589, 1.442695
    %v2591 = vpow.pop %v2590
    %v2592 = vadd.f32 %v2591, 1.0
    %v2593 = vrcp.pop %v2592
    %v2594 = vmul.f32 1.0, %v2593
    %v2595 = vtanh.pop %v2581
    %v2596 = vxor.u32 %v2582, 2147483648
    %v2597 = vmul.f32 %v2596, 1.442695
    %v2598 = vpow.pop %v2597
    %v2599 = vadd.f32 %v2598, 1.0
    %v2600 = vrcp.pop %v2599
    %v2601 = vmul.f32 1.0, %v2600
    %v2603 = vrot.slane %v2417, 6
    %v2605 = vmul.f32 %v2594, %v2603
    %v2606 = vmul.f32 %v2588, %v2595
    %v2607 = vadd.f32 %v2605, %v2606
    %v2608 = vtanh.pop %v2607
    %v2609 = vmul.f32 %v2601, %v2608
    %v2610 = vtanh.pop %v2609
    %2611 = vst [vmem:[#allocation3] sm:$0x30] %v2610
    %v2613 = vrot.slane %v2609, 4
    %2615 = vmatprep.subr.mxu0 %v205
    %2616 = vmatpush1.msra.mxu0 %v204
    %2617 = vmatprep.subr.mxu0 %v201
    %2618 = vmatpush1.msra.mxu0 %v200
    %2619 = vmatprep.subr.mxu0 %v197
    %2620 = vmatpush1.msra.mxu0 %v196
    %2621 = vmatprep.subr.mxu0 %v193
    %2622 = vmatpush1.msra.mxu0 %v192
    %2623 = vmatprep.subr.mxu0 %v189
    %2624 = vmatpush1.msra.mxu0 %v188
    %2625 = vmatprep.subr.mxu0 %v185
    %2626 = vmatpush1.msra.mxu0 %v184
    %2627 = vmatprep.subr.mxu0 %v181
    %2628 = vmatpush1.msra.mxu0 %v180
    %2629 = vmatprep.subr.mxu0 %v177
    %2630 = vmatpush1.msra.mxu0 %v176
    %2631 = vmatprep.subr.mxu0 %v173
    %2632 = vmatpush1.msra.mxu0 %v172
    %2633 = vmatprep.subr.mxu0 %v169
    %2634 = vmatpush1.msra.mxu0 %v168
    %2635 = vmatprep.subr.mxu0 %v165
    %2636 = vmatpush1.msra.mxu0 %v164
    %2637 = vmatprep.subr.mxu0 %v161
    %2638 = vmatpush1.msra.mxu0 %v160
    %2639 = vmatprep.subr.mxu0 %v157
    %2640 = vmatpush1.msra.mxu0 %v156
    %2641 = vmatprep.subr.mxu0 %v153
    %2642 = vmatpush1.msra.mxu0 %v152
    %2643 = vmatprep.subr.mxu0 %v149
    %2644 = vmatpush1.msra.mxu0 %v148
    %2645 = vmatprep.subr.mxu0 %v145
    %2646 = vmatpush1.msra.mxu0 %v144
    %2647 = vmatprep.subr.mxu0 0.0
    %2648 = vmatpush2.msra.mxu0 0.0
    %2649 = vmatprep.subr.mxu0 0.0
    %2650 = vmatpush2.msra.mxu0 0.0
    %2651 = vmatprep.subr.mxu0 0.0
    %2652 = vmatpush2.msra.mxu0 0.0
    %2653 = vmatprep.subr.mxu0 0.0
    %2654 = vmatpush2.msra.mxu0 0.0
    %2655 = vmatprep.subr.mxu0 0.0
    %2656 = vmatpush2.msra.mxu0 0.0
    %2657 = vmatprep.subr.mxu0 0.0
    %2658 = vmatpush2.msra.mxu0 0.0
    %2659 = vmatprep.subr.mxu0 0.0
    %2660 = vmatpush2.msra.mxu0 0.0
    %2661 = vmatprep.subr.mxu0 0.0
    %2662 = vmatpush2.msra.mxu0 0.0
    %2663 = vmatprep.subr.mxu0 0.0
    %2664 = vmatpush2.msra.mxu0 0.0
    %2665 = vmatprep.subr.mxu0 0.0
    %2666 = vmatpush2.msra.mxu0 0.0
    %2667 = vmatprep.subr.mxu0 0.0
    %2668 = vmatpush2.msra.mxu0 0.0
    %2669 = vmatprep.subr.mxu0 0.0
    %2670 = vmatpush2.msra.mxu0 0.0
    %2671 = vmatprep.subr.mxu0 0.0
    %2672 = vmatpush2.msra.mxu0 0.0
    %2673 = vmatprep.subr.mxu0 0.0
    %2674 = vmatpush2.msra.mxu0 0.0
    %2675 = vmatprep.subr.mxu0 0.0
    %2676 = vmatpush2.msra.mxu0 0.0
    %2677 = vmatprep.subr.mxu0 0.0
    %2678 = vmatpush2.msra.mxu0 0.0
    %2679 = vmatprep.mubr.f32.mxu0 0.0
    %2680 = vmatmul.mubr.f32.gmra.mxu0 %v2613
    %v2681 = vpop.f32.mrf.mxu0
    %v2682 = vadd.f32 0.0, %v2681
    %v2683 = vpop.f32.mrf.mxu0
    %v2684 = vadd.f32 0.0, %v2683
    %2685 = vdwg.mxu0
    %2686 = vmatprep.subr.mxu0 %v207
    %2687 = vmatpush1.msra.mxu0 %v206
    %2688 = vmatprep.subr.mxu0 %v203
    %2689 = vmatpush1.msra.mxu0 %v202
    %2690 = vmatprep.subr.mxu0 %v199
    %2691 = vmatpush1.msra.mxu0 %v198
    %2692 = vmatprep.subr.mxu0 %v195
    %2693 = vmatpush1.msra.mxu0 %v194
    %2694 = vmatprep.subr.mxu0 %v191
    %2695 = vmatpush1.msra.mxu0 %v190
    %2696 = vmatprep.subr.mxu0 %v187
    %2697 = vmatpush1.msra.mxu0 %v186
    %2698 = vmatprep.subr.mxu0 %v183
    %2699 = vmatpush1.msra.mxu0 %v182
    %2700 = vmatprep.subr.mxu0 %v179
    %2701 = vmatpush1.msra.mxu0 %v178
    %2702 = vmatprep.subr.mxu0 %v175
    %2703 = vmatpush1.msra.mxu0 %v174
    %2704 = vmatprep.subr.mxu0 %v171
    %2705 = vmatpush1.msra.mxu0 %v170
    %2706 = vmatprep.subr.mxu0 %v167
    %2707 = vmatpush1.msra.mxu0 %v166
    %2708 = vmatprep.subr.mxu0 %v163
    %2709 = vmatpush1.msra.mxu0 %v162
    %2710 = vmatprep.subr.mxu0 %v159
    %2711 = vmatpush1.msra.mxu0 %v158
    %2712 = vmatprep.subr.mxu0 %v155
    %2713 = vmatpush1.msra.mxu0 %v154
    %2714 = vmatprep.subr.mxu0 %v151
    %2715 = vmatpush1.msra.mxu0 %v150
    %2716 = vmatprep.subr.mxu0 %v147
    %2717 = vmatpush1.msra.mxu0 %v146
    %2718 = vmatprep.subr.mxu0 0.0
    %2719 = vmatpush2.msra.mxu0 0.0
    %2720 = vmatprep.subr.mxu0 0.0
    %2721 = vmatpush2.msra.mxu0 0.0
    %2722 = vmatprep.subr.mxu0 0.0
    %2723 = vmatpush2.msra.mxu0 0.0
    %2724 = vmatprep.subr.mxu0 0.0
    %2725 = vmatpush2.msra.mxu0 0.0
    %2726 = vmatprep.subr.mxu0 0.0
    %2727 = vmatpush2.msra.mxu0 0.0
    %2728 = vmatprep.subr.mxu0 0.0
    %2729 = vmatpush2.msra.mxu0 0.0
    %2730 = vmatprep.subr.mxu0 0.0
    %2731 = vmatpush2.msra.mxu0 0.0
    %2732 = vmatprep.subr.mxu0 0.0
    %2733 = vmatpush2.msra.mxu0 0.0
    %2734 = vmatprep.subr.mxu0 0.0
    %2735 = vmatpush2.msra.mxu0 0.0
    %2736 = vmatprep.subr.mxu0 0.0
    %2737 = vmatpush2.msra.mxu0 0.0
    %2738 = vmatprep.subr.mxu0 0.0
    %2739 = vmatpush2.msra.mxu0 0.0
    %2740 = vmatprep.subr.mxu0 0.0
    %2741 = vmatpush2.msra.mxu0 0.0
    %2742 = vmatprep.subr.mxu0 0.0
    %2743 = vmatpush2.msra.mxu0 0.0
    %2744 = vmatprep.subr.mxu0 0.0
    %2745 = vmatpush2.msra.mxu0 0.0
    %2746 = vmatprep.subr.mxu0 0.0
    %2747 = vmatpush2.msra.mxu0 0.0
    %2748 = vmatprep.subr.mxu0 0.0
    %2749 = vmatpush2.msra.mxu0 0.0
    %2750 = vmatprep.mubr.f32.mxu0 0.0
    %2751 = vmatmul.mubr.f32.gmra.mxu0 %v2613
    %v2752 = vpop.f32.mrf.mxu0
    %v2753 = vadd.f32 0.0, %v2752
    %v2754 = vpop.f32.mrf.mxu0
    %v2755 = vadd.f32 0.0, %v2754
    %2756 = vdwg.mxu0
    %v2761 = vrot.slane %v2682, 2
    %v2762 = vrot.slane %v2684, 2
    %v2763 = vrot.slane %v2753, 2
    %v2764 = vrot.slane %v2755, 2
    %v2769 = vadd.f32 %v1976, %v2761
    %v2770 = vadd.f32 %v1978, %v2762
    %v2771 = vadd.f32 %v2053, %v2763
    %v2772 = vadd.f32 %v2055, %v2764
    %v2773 = vxor.u32 %v2769, 2147483648
    %v2774 = vmul.f32 %v2773, 1.442695
    %v2775 = vpow.pop %v2774
    %v2776 = vadd.f32 %v2775, 1.0
    %v2777 = vrcp.pop %v2776
    %v2778 = vmul.f32 1.0, %v2777
    %v2779 = vxor.u32 %v2770, 2147483648
    %v2780 = vmul.f32 %v2779, 1.442695
    %v2781 = vpow.pop %v2780
    %v2782 = vadd.f32 %v2781, 1.0
    %v2783 = vrcp.pop %v2782
    %v2784 = vmul.f32 1.0, %v2783
    %v2785 = vtanh.pop %v2771
    %v2786 = vxor.u32 %v2772, 2147483648
    %v2787 = vmul.f32 %v2786, 1.442695
    %v2788 = vpow.pop %v2787
    %v2789 = vadd.f32 %v2788, 1.0
    %v2790 = vrcp.pop %v2789
    %v2791 = vmul.f32 1.0, %v2790
    %v2793 = vrot.slane %v2607, 6
    %v2795 = vmul.f32 %v2784, %v2793
    %v2796 = vmul.f32 %v2778, %v2785
    %v2797 = vadd.f32 %v2795, %v2796
    %v2798 = vtanh.pop %v2797
    %v2799 = vmul.f32 %v2791, %v2798
    %v2800 = vtanh.pop %v2799
    %2801 = vst [vmem:[#allocation3] sm:$0xc0] %v2800
    %v2803 = vrot.slane %v2799, 6
    %2805 = vmatprep.subr.mxu0 %v205
    %2806 = vmatpush1.msra.mxu0 %v204
    %2807 = vmatprep.subr.mxu0 %v201
    %2808 = vmatpush1.msra.mxu0 %v200
    %2809 = vmatprep.subr.mxu0 %v197
    %2810 = vmatpush1.msra.mxu0 %v196
    %2811 = vmatprep.subr.mxu0 %v193
    %2812 = vmatpush1.msra.mxu0 %v192
    %2813 = vmatprep.subr.mxu0 %v189
    %2814 = vmatpush1.msra.mxu0 %v188
    %2815 = vmatprep.subr.mxu0 %v185
    %2816 = vmatpush1.msra.mxu0 %v184
    %2817 = vmatprep.subr.mxu0 %v181
    %2818 = vmatpush1.msra.mxu0 %v180
    %2819 = vmatprep.subr.mxu0 %v177
    %2820 = vmatpush1.msra.mxu0 %v176
    %2821 = vmatprep.subr.mxu0 %v173
    %2822 = vmatpush1.msra.mxu0 %v172
    %2823 = vmatprep.subr.mxu0 %v169
    %2824 = vmatpush1.msra.mxu0 %v168
    %2825 = vmatprep.subr.mxu0 %v165
    %2826 = vmatpush1.msra.mxu0 %v164
    %2827 = vmatprep.subr.mxu0 %v161
    %2828 = vmatpush1.msra.mxu0 %v160
    %2829 = vmatprep.subr.mxu0 %v157
    %2830 = vmatpush1.msra.mxu0 %v156
    %2831 = vmatprep.subr.mxu0 %v153
    %2832 = vmatpush1.msra.mxu0 %v152
    %2833 = vmatprep.subr.mxu0 %v149
    %2834 = vmatpush1.msra.mxu0 %v148
    %2835 = vmatprep.subr.mxu0 %v145
    %2836 = vmatpush1.msra.mxu0 %v144
    %2837 = vmatprep.subr.mxu0 0.0
    %2838 = vmatpush2.msra.mxu0 0.0
    %2839 = vmatprep.subr.mxu0 0.0
    %2840 = vmatpush2.msra.mxu0 0.0
    %2841 = vmatprep.subr.mxu0 0.0
    %2842 = vmatpush2.msra.mxu0 0.0
    %2843 = vmatprep.subr.mxu0 0.0
    %2844 = vmatpush2.msra.mxu0 0.0
    %2845 = vmatprep.subr.mxu0 0.0
    %2846 = vmatpush2.msra.mxu0 0.0
    %2847 = vmatprep.subr.mxu0 0.0
    %2848 = vmatpush2.msra.mxu0 0.0
    %2849 = vmatprep.subr.mxu0 0.0
    %2850 = vmatpush2.msra.mxu0 0.0
    %2851 = vmatprep.subr.mxu0 0.0
    %2852 = vmatpush2.msra.mxu0 0.0
    %2853 = vmatprep.subr.mxu0 0.0
    %2854 = vmatpush2.msra.mxu0 0.0
    %2855 = vmatprep.subr.mxu0 0.0
    %2856 = vmatpush2.msra.mxu0 0.0
    %2857 = vmatprep.subr.mxu0 0.0
    %2858 = vmatpush2.msra.mxu0 0.0
    %2859 = vmatprep.subr.mxu0 0.0
    %2860 = vmatpush2.msra.mxu0 0.0
    %2861 = vmatprep.subr.mxu0 0.0
    %2862 = vmatpush2.msra.mxu0 0.0
    %2863 = vmatprep.subr.mxu0 0.0
    %2864 = vmatpush2.msra.mxu0 0.0
    %2865 = vmatprep.subr.mxu0 0.0
    %2866 = vmatpush2.msra.mxu0 0.0
    %2867 = vmatprep.subr.mxu0 0.0
    %2868 = vmatpush2.msra.mxu0 0.0
    %2869 = vmatprep.mubr.f32.mxu0 0.0
    %2870 = vmatmul.mubr.f32.gmra.mxu0 %v2803
    %v2871 = vpop.f32.mrf.mxu0
    %v2872 = vadd.f32 0.0, %v2871
    %v2873 = vpop.f32.mrf.mxu0
    %v2874 = vadd.f32 0.0, %v2873
    %2875 = vdwg.mxu0
    %2876 = vmatprep.subr.mxu0 %v207
    %2877 = vmatpush1.msra.mxu0 %v206
    %2878 = vmatprep.subr.mxu0 %v203
    %2879 = vmatpush1.msra.mxu0 %v202
    %2880 = vmatprep.subr.mxu0 %v199
    %2881 = vmatpush1.msra.mxu0 %v198
    %2882 = vmatprep.subr.mxu0 %v195
    %2883 = vmatpush1.msra.mxu0 %v194
    %2884 = vmatprep.subr.mxu0 %v191
    %2885 = vmatpush1.msra.mxu0 %v190
    %2886 = vmatprep.subr.mxu0 %v187
    %2887 = vmatpush1.msra.mxu0 %v186
    %2888 = vmatprep.subr.mxu0 %v183
    %2889 = vmatpush1.msra.mxu0 %v182
    %2890 = vmatprep.subr.mxu0 %v179
    %2891 = vmatpush1.msra.mxu0 %v178
    %2892 = vmatprep.subr.mxu0 %v175
    %2893 = vmatpush1.msra.mxu0 %v174
    %2894 = vmatprep.subr.mxu0 %v171
    %2895 = vmatpush1.msra.mxu0 %v170
    %2896 = vmatprep.subr.mxu0 %v167
    %2897 = vmatpush1.msra.mxu0 %v166
    %2898 = vmatprep.subr.mxu0 %v163
    %2899 = vmatpush1.msra.mxu0 %v162
    %2900 = vmatprep.subr.mxu0 %v159
    %2901 = vmatpush1.msra.mxu0 %v158
    %2902 = vmatprep.subr.mxu0 %v155
    %2903 = vmatpush1.msra.mxu0 %v154
    %2904 = vmatprep.subr.mxu0 %v151
    %2905 = vmatpush1.msra.mxu0 %v150
    %2906 = vmatprep.subr.mxu0 %v147
    %2907 = vmatpush1.msra.mxu0 %v146
    %2908 = vmatprep.subr.mxu0 0.0
    %2909 = vmatpush2.msra.mxu0 0.0
    %2910 = vmatprep.subr.mxu0 0.0
    %2911 = vmatpush2.msra.mxu0 0.0
    %2912 = vmatprep.subr.mxu0 0.0
    %2913 = vmatpush2.msra.mxu0 0.0
    %2914 = vmatprep.subr.mxu0 0.0
    %2915 = vmatpush2.msra.mxu0 0.0
    %2916 = vmatprep.subr.mxu0 0.0
    %2917 = vmatpush2.msra.mxu0 0.0
    %2918 = vmatprep.subr.mxu0 0.0
    %2919 = vmatpush2.msra.mxu0 0.0
    %2920 = vmatprep.subr.mxu0 0.0
    %2921 = vmatpush2.msra.mxu0 0.0
    %2922 = vmatprep.subr.mxu0 0.0
    %2923 = vmatpush2.msra.mxu0 0.0
    %2924 = vmatprep.subr.mxu0 0.0
    %2925 = vmatpush2.msra.mxu0 0.0
    %2926 = vmatprep.subr.mxu0 0.0
    %2927 = vmatpush2.msra.mxu0 0.0
    %2928 = vmatprep.subr.mxu0 0.0
    %2929 = vmatpush2.msra.mxu0 0.0
    %2930 = vmatprep.subr.mxu0 0.0
    %2931 = vmatpush2.msra.mxu0 0.0
    %2932 = vmatprep.subr.mxu0 0.0
    %2933 = vmatpush2.msra.mxu0 0.0
    %2934 = vmatprep.subr.mxu0 0.0
    %2935 = vmatpush2.msra.mxu0 0.0
    %2936 = vmatprep.subr.mxu0 0.0
    %2937 = vmatpush2.msra.mxu0 0.0
    %2938 = vmatprep.subr.mxu0 0.0
    %2939 = vmatpush2.msra.mxu0 0.0
    %2940 = vmatprep.mubr.f32.mxu0 0.0
    %2941 = vmatmul.mubr.f32.gmra.mxu0 %v2803
    %v2942 = vpop.f32.mrf.mxu0
    %v2943 = vadd.f32 0.0, %v2942
    %v2944 = vpop.f32.mrf.mxu0
    %v2945 = vadd.f32 0.0, %v2944
    %2946 = vdwg.mxu0
    %v2947 = vadd.f32 %v1982, %v2872
    %v2948 = vadd.f32 %v1984, %v2874
    %v2949 = vadd.f32 %v2059, %v2943
    %v2950 = vadd.f32 %v2061, %v2945
    %v2951 = vxor.u32 %v2947, 2147483648
    %v2952 = vmul.f32 %v2951, 1.442695
    %v2953 = vpow.pop %v2952
    %v2954 = vadd.f32 %v2953, 1.0
    %v2955 = vrcp.pop %v2954
    %v2956 = vmul.f32 1.0, %v2955
    %v2957 = vxor.u32 %v2948, 2147483648
    %v2958 = vmul.f32 %v2957, 1.442695
    %v2959 = vpow.pop %v2958
    %v2960 = vadd.f32 %v2959, 1.0
    %v2961 = vrcp.pop %v2960
    %v2962 = vmul.f32 1.0, %v2961
    %v2963 = vtanh.pop %v2949
    %v2964 = vxor.u32 %v2950, 2147483648
    %v2965 = vmul.f32 %v2964, 1.442695
    %v2966 = vpow.pop %v2965
    %v2967 = vadd.f32 %v2966, 1.0
    %v2968 = vrcp.pop %v2967
    %v2969 = vmul.f32 1.0, %v2968
    %v2971 = vrot.slane %v2797, 6
    %v2973 = vmul.f32 %v2962, %v2971
    %v2974 = vmul.f32 %v2956, %v2963
    %v2975 = vadd.f32 %v2973, %v2974
    %v2976 = vtanh.pop %v2975
    %v2977 = vmul.f32 %v2969, %v2976
    %v2978 = vtanh.pop %v2977
    %2979 = vst [vmem:[#allocation3 + $0x8] sm:$0x3] %v2978
    %2980 = vmatprep.subr.mxu0 %v205
    %2981 = vmatpush1.msra.mxu0 %v204
    %2982 = vmatprep.subr.mxu0 %v201
    %2983 = vmatpush1.msra.mxu0 %v200
    %2984 = vmatprep.subr.mxu0 %v197
    %2985 = vmatpush1.msra.mxu0 %v196
    %2986 = vmatprep.subr.mxu0 %v193
    %2987 = vmatpush1.msra.mxu0 %v192
    %2988 = vmatprep.subr.mxu0 %v189
    %2989 = vmatpush1.msra.mxu0 %v188
    %2990 = vmatprep.subr.mxu0 %v185
    %2991 = vmatpush1.msra.mxu0 %v184
    %2992 = vmatprep.subr.mxu0 %v181
    %2993 = vmatpush1.msra.mxu0 %v180
    %2994 = vmatprep.subr.mxu0 %v177
    %2995 = vmatpush1.msra.mxu0 %v176
    %2996 = vmatprep.subr.mxu0 %v173
    %2997 = vmatpush1.msra.mxu0 %v172
    %2998 = vmatprep.subr.mxu0 %v169
    %2999 = vmatpush1.msra.mxu0 %v168
    %3000 = vmatprep.subr.mxu0 %v165
    %3001 = vmatpush1.msra.mxu0 %v164
    %3002 = vmatprep.subr.mxu0 %v161
    %3003 = vmatpush1.msra.mxu0 %v160
    %3004 = vmatprep.subr.mxu0 %v157
    %3005 = vmatpush1.msra.mxu0 %v156
    %3006 = vmatprep.subr.mxu0 %v153
    %3007 = vmatpush1.msra.mxu0 %v152
    %3008 = vmatprep.subr.mxu0 %v149
    %3009 = vmatpush1.msra.mxu0 %v148
    %3010 = vmatprep.subr.mxu0 %v145
    %3011 = vmatpush1.msra.mxu0 %v144
    %3012 = vmatprep.subr.mxu0 0.0
    %3013 = vmatpush2.msra.mxu0 0.0
    %3014 = vmatprep.subr.mxu0 0.0
    %3015 = vmatpush2.msra.mxu0 0.0
    %3016 = vmatprep.subr.mxu0 0.0
    %3017 = vmatpush2.msra.mxu0 0.0
    %3018 = vmatprep.subr.mxu0 0.0
    %3019 = vmatpush2.msra.mxu0 0.0
    %3020 = vmatprep.subr.mxu0 0.0
    %3021 = vmatpush2.msra.mxu0 0.0
    %3022 = vmatprep.subr.mxu0 0.0
    %3023 = vmatpush2.msra.mxu0 0.0
    %3024 = vmatprep.subr.mxu0 0.0
    %3025 = vmatpush2.msra.mxu0 0.0
    %3026 = vmatprep.subr.mxu0 0.0
    %3027 = vmatpush2.msra.mxu0 0.0
    %3028 = vmatprep.subr.mxu0 0.0
    %3029 = vmatpush2.msra.mxu0 0.0
    %3030 = vmatprep.subr.mxu0 0.0
    %3031 = vmatpush2.msra.mxu0 0.0
    %3032 = vmatprep.subr.mxu0 0.0
    %3033 = vmatpush2.msra.mxu0 0.0
    %3034 = vmatprep.subr.mxu0 0.0
    %3035 = vmatpush2.msra.mxu0 0.0
    %3036 = vmatprep.subr.mxu0 0.0
    %3037 = vmatpush2.msra.mxu0 0.0
    %3038 = vmatprep.subr.mxu0 0.0
    %3039 = vmatpush2.msra.mxu0 0.0
    %3040 = vmatprep.subr.mxu0 0.0
    %3041 = vmatpush2.msra.mxu0 0.0
    %3042 = vmatprep.subr.mxu0 0.0
    %3043 = vmatpush2.msra.mxu0 0.0
    %3044 = vmatprep.mubr.f32.mxu0 0.0
    %3045 = vmatmul.mubr.f32.gmra.mxu0 %v2977
    %v3046 = vpop.f32.mrf.mxu0
    %v3047 = vadd.f32 0.0, %v3046
    %v3048 = vpop.f32.mrf.mxu0
    %v3049 = vadd.f32 0.0, %v3048
    %3050 = vdwg.mxu0
    %3051 = vmatprep.subr.mxu0 %v207
    %3052 = vmatpush1.msra.mxu0 %v206
    %3053 = vmatprep.subr.mxu0 %v203
    %3054 = vmatpush1.msra.mxu0 %v202
    %3055 = vmatprep.subr.mxu0 %v199
    %3056 = vmatpush1.msra.mxu0 %v198
    %3057 = vmatprep.subr.mxu0 %v195
    %3058 = vmatpush1.msra.mxu0 %v194
    %3059 = vmatprep.subr.mxu0 %v191
    %3060 = vmatpush1.msra.mxu0 %v190
    %3061 = vmatprep.subr.mxu0 %v187
    %3062 = vmatpush1.msra.mxu0 %v186
    %3063 = vmatprep.subr.mxu0 %v183
    %3064 = vmatpush1.msra.mxu0 %v182
    %3065 = vmatprep.subr.mxu0 %v179
    %3066 = vmatpush1.msra.mxu0 %v178
    %3067 = vmatprep.subr.mxu0 %v175
    %3068 = vmatpush1.msra.mxu0 %v174
    %3069 = vmatprep.subr.mxu0 %v171
    %3070 = vmatpush1.msra.mxu0 %v170
    %3071 = vmatprep.subr.mxu0 %v167
    %3072 = vmatpush1.msra.mxu0 %v166
    %3073 = vmatprep.subr.mxu0 %v163
    %3074 = vmatpush1.msra.mxu0 %v162
    %3075 = vmatprep.subr.mxu0 %v159
    %3076 = vmatpush1.msra.mxu0 %v158
    %3077 = vmatprep.subr.mxu0 %v155
    %3078 = vmatpush1.msra.mxu0 %v154
    %3079 = vmatprep.subr.mxu0 %v151
    %3080 = vmatpush1.msra.mxu0 %v150
    %3081 = vmatprep.subr.mxu0 %v147
    %3082 = vmatpush1.msra.mxu0 %v146
    %3083 = vmatprep.subr.mxu0 0.0
    %3084 = vmatpush2.msra.mxu0 0.0
    %3085 = vmatprep.subr.mxu0 0.0
    %3086 = vmatpush2.msra.mxu0 0.0
    %3087 = vmatprep.subr.mxu0 0.0
    %3088 = vmatpush2.msra.mxu0 0.0
    %3089 = vmatprep.subr.mxu0 0.0
    %3090 = vmatpush2.msra.mxu0 0.0
    %3091 = vmatprep.subr.mxu0 0.0
    %3092 = vmatpush2.msra.mxu0 0.0
    %3093 = vmatprep.subr.mxu0 0.0
    %3094 = vmatpush2.msra.mxu0 0.0
    %3095 = vmatprep.subr.mxu0 0.0
    %3096 = vmatpush2.msra.mxu0 0.0
    %3097 = vmatprep.subr.mxu0 0.0
    %3098 = vmatpush2.msra.mxu0 0.0
    %3099 = vmatprep.subr.mxu0 0.0
    %3100 = vmatpush2.msra.mxu0 0.0
    %3101 = vmatprep.subr.mxu0 0.0
    %3102 = vmatpush2.msra.mxu0 0.0
    %3103 = vmatprep.subr.mxu0 0.0
    %3104 = vmatpush2.msra.mxu0 0.0
    %3105 = vmatprep.subr.mxu0 0.0
    %3106 = vmatpush2.msra.mxu0 0.0
    %3107 = vmatprep.subr.mxu0 0.0
    %3108 = vmatpush2.msra.mxu0 0.0
    %3109 = vmatprep.subr.mxu0 0.0
    %3110 = vmatpush2.msra.mxu0 0.0
    %3111 = vmatprep.subr.mxu0 0.0
    %3112 = vmatpush2.msra.mxu0 0.0
    %3113 = vmatprep.subr.mxu0 0.0
    %3114 = vmatpush2.msra.mxu0 0.0
    %3115 = vmatprep.mubr.f32.mxu0 0.0
    %3116 = vmatmul.mubr.f32.gmra.mxu0 %v2977
    %v3117 = vpop.f32.mrf.mxu0
    %v3118 = vadd.f32 0.0, %v3117
    %v3119 = vpop.f32.mrf.mxu0
    %v3120 = vadd.f32 0.0, %v3119
    %3121 = vdwg.mxu0
    %v3126 = vrot.slane %v3047, 6
    %v3127 = vrot.slane %v3049, 6
    %v3128 = vrot.slane %v3118, 6
    %v3129 = vrot.slane %v3120, 6
    %v3134 = vadd.f32 %v1982, %v3126
    %v3135 = vadd.f32 %v1984, %v3127
    %v3136 = vadd.f32 %v2059, %v3128
    %v3137 = vadd.f32 %v2061, %v3129
    %v3138 = vxor.u32 %v3134, 2147483648
    %v3139 = vmul.f32 %v3138, 1.442695
    %v3140 = vpow.pop %v3139
    %v3141 = vadd.f32 %v3140, 1.0
    %v3142 = vrcp.pop %v3141
    %v3143 = vmul.f32 1.0, %v3142
    %v3144 = vxor.u32 %v3135, 2147483648
    %v3145 = vmul.f32 %v3144, 1.442695
    %v3146 = vpow.pop %v3145
    %v3147 = vadd.f32 %v3146, 1.0
    %v3148 = vrcp.pop %v3147
    %v3149 = vmul.f32 1.0, %v3148
    %v3150 = vtanh.pop %v3136
    %v3151 = vxor.u32 %v3137, 2147483648
    %v3152 = vmul.f32 %v3151, 1.442695
    %v3153 = vpow.pop %v3152
    %v3154 = vadd.f32 %v3153, 1.0
    %v3155 = vrcp.pop %v3154
    %v3156 = vmul.f32 1.0, %v3155
    %v3158 = vrot.slane %v2975, 6
    %v3160 = vmul.f32 %v3149, %v3158
    %v3161 = vmul.f32 %v3143, %v3150
    %v3162 = vadd.f32 %v3160, %v3161
    %v3163 = vtanh.pop %v3162
    %v3164 = vmul.f32 %v3156, %v3163
    %v3165 = vtanh.pop %v3164
    %3166 = vst [vmem:[#allocation3 + $0x8] sm:$0xc] %v3165
    %v3168 = vrot.slane %v3164, 2
    %3170 = vmatprep.subr.mxu0 %v205
    %3171 = vmatpush1.msra.mxu0 %v204
    %3172 = vmatprep.subr.mxu0 %v201
    %3173 = vmatpush1.msra.mxu0 %v200
    %3174 = vmatprep.subr.mxu0 %v197
    %3175 = vmatpush1.msra.mxu0 %v196
    %3176 = vmatprep.subr.mxu0 %v193
    %3177 = vmatpush1.msra.mxu0 %v192
    %3178 = vmatprep.subr.mxu0 %v189
    %3179 = vmatpush1.msra.mxu0 %v188
    %3180 = vmatprep.subr.mxu0 %v185
    %3181 = vmatpush1.msra.mxu0 %v184
    %3182 = vmatprep.subr.mxu0 %v181
    %3183 = vmatpush1.msra.mxu0 %v180
    %3184 = vmatprep.subr.mxu0 %v177
    %3185 = vmatpush1.msra.mxu0 %v176
    %3186 = vmatprep.subr.mxu0 %v173
    %3187 = vmatpush1.msra.mxu0 %v172
    %3188 = vmatprep.subr.mxu0 %v169
    %3189 = vmatpush1.msra.mxu0 %v168
    %3190 = vmatprep.subr.mxu0 %v165
    %3191 = vmatpush1.msra.mxu0 %v164
    %3192 = vmatprep.subr.mxu0 %v161
    %3193 = vmatpush1.msra.mxu0 %v160
    %3194 = vmatprep.subr.mxu0 %v157
    %3195 = vmatpush1.msra.mxu0 %v156
    %3196 = vmatprep.subr.mxu0 %v153
    %3197 = vmatpush1.msra.mxu0 %v152
    %3198 = vmatprep.subr.mxu0 %v149
    %3199 = vmatpush1.msra.mxu0 %v148
    %3200 = vmatprep.subr.mxu0 %v145
    %3201 = vmatpush1.msra.mxu0 %v144
    %3202 = vmatprep.subr.mxu0 0.0
    %3203 = vmatpush2.msra.mxu0 0.0
    %3204 = vmatprep.subr.mxu0 0.0
    %3205 = vmatpush2.msra.mxu0 0.0
    %3206 = vmatprep.subr.mxu0 0.0
    %3207 = vmatpush2.msra.mxu0 0.0
    %3208 = vmatprep.subr.mxu0 0.0
    %3209 = vmatpush2.msra.mxu0 0.0
    %3210 = vmatprep.subr.mxu0 0.0
    %3211 = vmatpush2.msra.mxu0 0.0
    %3212 = vmatprep.subr.mxu0 0.0
    %3213 = vmatpush2.msra.mxu0 0.0
    %3214 = vmatprep.subr.mxu0 0.0
    %3215 = vmatpush2.msra.mxu0 0.0
    %3216 = vmatprep.subr.mxu0 0.0
    %3217 = vmatpush2.msra.mxu0 0.0
    %3218 = vmatprep.subr.mxu0 0.0
    %3219 = vmatpush2.msra.mxu0 0.0
    %3220 = vmatprep.subr.mxu0 0.0
    %3221 = vmatpush2.msra.mxu0 0.0
    %3222 = vmatprep.subr.mxu0 0.0
    %3223 = vmatpush2.msra.mxu0 0.0
    %3224 = vmatprep.subr.mxu0 0.0
    %3225 = vmatpush2.msra.mxu0 0.0
    %3226 = vmatprep.subr.mxu0 0.0
    %3227 = vmatpush2.msra.mxu0 0.0
    %3228 = vmatprep.subr.mxu0 0.0
    %3229 = vmatpush2.msra.mxu0 0.0
    %3230 = vmatprep.subr.mxu0 0.0
    %3231 = vmatpush2.msra.mxu0 0.0
    %3232 = vmatprep.subr.mxu0 0.0
    %3233 = vmatpush2.msra.mxu0 0.0
    %3234 = vmatprep.mubr.f32.mxu0 0.0
    %3235 = vmatmul.mubr.f32.gmra.mxu0 %v3168
    %v3236 = vpop.f32.mrf.mxu0
    %v3237 = vadd.f32 0.0, %v3236
    %v3238 = vpop.f32.mrf.mxu0
    %v3239 = vadd.f32 0.0, %v3238
    %3240 = vdwg.mxu0
    %3241 = vmatprep.subr.mxu0 %v207
    %3242 = vmatpush1.msra.mxu0 %v206
    %3243 = vmatprep.subr.mxu0 %v203
    %3244 = vmatpush1.msra.mxu0 %v202
    %3245 = vmatprep.subr.mxu0 %v199
    %3246 = vmatpush1.msra.mxu0 %v198
    %3247 = vmatprep.subr.mxu0 %v195
    %3248 = vmatpush1.msra.mxu0 %v194
    %3249 = vmatprep.subr.mxu0 %v191
    %3250 = vmatpush1.msra.mxu0 %v190
    %3251 = vmatprep.subr.mxu0 %v187
    %3252 = vmatpush1.msra.mxu0 %v186
    %3253 = vmatprep.subr.mxu0 %v183
    %3254 = vmatpush1.msra.mxu0 %v182
    %3255 = vmatprep.subr.mxu0 %v179
    %3256 = vmatpush1.msra.mxu0 %v178
    %3257 = vmatprep.subr.mxu0 %v175
    %3258 = vmatpush1.msra.mxu0 %v174
    %3259 = vmatprep.subr.mxu0 %v171
    %3260 = vmatpush1.msra.mxu0 %v170
    %3261 = vmatprep.subr.mxu0 %v167
    %3262 = vmatpush1.msra.mxu0 %v166
    %3263 = vmatprep.subr.mxu0 %v163
    %3264 = vmatpush1.msra.mxu0 %v162
    %3265 = vmatprep.subr.mxu0 %v159
    %3266 = vmatpush1.msra.mxu0 %v158
    %3267 = vmatprep.subr.mxu0 %v155
    %3268 = vmatpush1.msra.mxu0 %v154
    %3269 = vmatprep.subr.mxu0 %v151
    %3270 = vmatpush1.msra.mxu0 %v150
    %3271 = vmatprep.subr.mxu0 %v147
    %3272 = vmatpush1.msra.mxu0 %v146
    %3273 = vmatprep.subr.mxu0 0.0
    %3274 = vmatpush2.msra.mxu0 0.0
    %3275 = vmatprep.subr.mxu0 0.0
    %3276 = vmatpush2.msra.mxu0 0.0
    %3277 = vmatprep.subr.mxu0 0.0
    %3278 = vmatpush2.msra.mxu0 0.0
    %3279 = vmatprep.subr.mxu0 0.0
    %3280 = vmatpush2.msra.mxu0 0.0
    %3281 = vmatprep.subr.mxu0 0.0
    %3282 = vmatpush2.msra.mxu0 0.0
    %3283 = vmatprep.subr.mxu0 0.0
    %3284 = vmatpush2.msra.mxu0 0.0
    %3285 = vmatprep.subr.mxu0 0.0
    %3286 = vmatpush2.msra.mxu0 0.0
    %3287 = vmatprep.subr.mxu0 0.0
    %3288 = vmatpush2.msra.mxu0 0.0
    %3289 = vmatprep.subr.mxu0 0.0
    %3290 = vmatpush2.msra.mxu0 0.0
    %3291 = vmatprep.subr.mxu0 0.0
    %3292 = vmatpush2.msra.mxu0 0.0
    %3293 = vmatprep.subr.mxu0 0.0
    %3294 = vmatpush2.msra.mxu0 0.0
    %3295 = vmatprep.subr.mxu0 0.0
    %3296 = vmatpush2.msra.mxu0 0.0
    %3297 = vmatprep.subr.mxu0 0.0
    %3298 = vmatpush2.msra.mxu0 0.0
    %3299 = vmatprep.subr.mxu0 0.0
    %3300 = vmatpush2.msra.mxu0 0.0
    %3301 = vmatprep.subr.mxu0 0.0
    %3302 = vmatpush2.msra.mxu0 0.0
    %3303 = vmatprep.subr.mxu0 0.0
    %3304 = vmatpush2.msra.mxu0 0.0
    %3305 = vmatprep.mubr.f32.mxu0 0.0
    %3306 = vmatmul.mubr.f32.gmra.mxu0 %v3168
    %v3307 = vpop.f32.mrf.mxu0
    %v3308 = vadd.f32 0.0, %v3307
    %v3309 = vpop.f32.mrf.mxu0
    %v3310 = vadd.f32 0.0, %v3309
    %3311 = vdwg.mxu0
    %v3316 = vrot.slane %v3237, 4
    %v3317 = vrot.slane %v3239, 4
    %v3318 = vrot.slane %v3308, 4
    %v3319 = vrot.slane %v3310, 4
    %v3324 = vadd.f32 %v1982, %v3316
    %v3325 = vadd.f32 %v1984, %v3317
    %v3326 = vadd.f32 %v2059, %v3318
    %v3327 = vadd.f32 %v2061, %v3319
    %v3328 = vxor.u32 %v3324, 2147483648
    %v3329 = vmul.f32 %v3328, 1.442695
    %v3330 = vpow.pop %v3329
    %v3331 = vadd.f32 %v3330, 1.0
    %v3332 = vrcp.pop %v3331
    %v3333 = vmul.f32 1.0, %v3332
    %v3334 = vxor.u32 %v3325, 2147483648
    %v3335 = vmul.f32 %v3334, 1.442695
    %v3336 = vpow.pop %v3335
    %v3337 = vadd.f32 %v3336, 1.0
    %v3338 = vrcp.pop %v3337
    %v3339 = vmul.f32 1.0, %v3338
    %v3340 = vtanh.pop %v3326
    %v3341 = vxor.u32 %v3327, 2147483648
    %v3342 = vmul.f32 %v3341, 1.442695
    %v3343 = vpow.pop %v3342
    %v3344 = vadd.f32 %v3343, 1.0
    %v3345 = vrcp.pop %v3344
    %v3346 = vmul.f32 1.0, %v3345
    %v3348 = vrot.slane %v3162, 6
    %v3350 = vmul.f32 %v3339, %v3348
    %v3351 = vmul.f32 %v3333, %v3340
    %v3352 = vadd.f32 %v3350, %v3351
    %v3353 = vtanh.pop %v3352
    %v3354 = vmul.f32 %v3346, %v3353
    %v3355 = vtanh.pop %v3354
    %3356 = vst [vmem:[#allocation3 + $0x8] sm:$0x30] %v3355
    %v3358 = vrot.slane %v3354, 4
    %3360 = vmatprep.subr.mxu0 %v205
    %3361 = vmatpush1.msra.mxu0 %v204
    %3362 = vmatprep.subr.mxu0 %v201
    %3363 = vmatpush1.msra.mxu0 %v200
    %3364 = vmatprep.subr.mxu0 %v197
    %3365 = vmatpush1.msra.mxu0 %v196
    %3366 = vmatprep.subr.mxu0 %v193
    %3367 = vmatpush1.msra.mxu0 %v192
    %3368 = vmatprep.subr.mxu0 %v189
    %3369 = vmatpush1.msra.mxu0 %v188
    %3370 = vmatprep.subr.mxu0 %v185
    %3371 = vmatpush1.msra.mxu0 %v184
    %3372 = vmatprep.subr.mxu0 %v181
    %3373 = vmatpush1.msra.mxu0 %v180
    %3374 = vmatprep.subr.mxu0 %v177
    %3375 = vmatpush1.msra.mxu0 %v176
    %3376 = vmatprep.subr.mxu0 %v173
    %3377 = vmatpush1.msra.mxu0 %v172
    %3378 = vmatprep.subr.mxu0 %v169
    %3379 = vmatpush1.msra.mxu0 %v168
    %3380 = vmatprep.subr.mxu0 %v165
    %3381 = vmatpush1.msra.mxu0 %v164
    %3382 = vmatprep.subr.mxu0 %v161
    %3383 = vmatpush1.msra.mxu0 %v160
    %3384 = vmatprep.subr.mxu0 %v157
    %3385 = vmatpush1.msra.mxu0 %v156
    %3386 = vmatprep.subr.mxu0 %v153
    %3387 = vmatpush1.msra.mxu0 %v152
    %3388 = vmatprep.subr.mxu0 %v149
    %3389 = vmatpush1.msra.mxu0 %v148
    %3390 = vmatprep.subr.mxu0 %v145
    %3391 = vmatpush1.msra.mxu0 %v144
    %3392 = vmatprep.subr.mxu0 0.0
    %3393 = vmatpush2.msra.mxu0 0.0
    %3394 = vmatprep.subr.mxu0 0.0
    %3395 = vmatpush2.msra.mxu0 0.0
    %3396 = vmatprep.subr.mxu0 0.0
    %3397 = vmatpush2.msra.mxu0 0.0
    %3398 = vmatprep.subr.mxu0 0.0
    %3399 = vmatpush2.msra.mxu0 0.0
    %3400 = vmatprep.subr.mxu0 0.0
    %3401 = vmatpush2.msra.mxu0 0.0
    %3402 = vmatprep.subr.mxu0 0.0
    %3403 = vmatpush2.msra.mxu0 0.0
    %3404 = vmatprep.subr.mxu0 0.0
    %3405 = vmatpush2.msra.mxu0 0.0
    %3406 = vmatprep.subr.mxu0 0.0
    %3407 = vmatpush2.msra.mxu0 0.0
    %3408 = vmatprep.subr.mxu0 0.0
    %3409 = vmatpush2.msra.mxu0 0.0
    %3410 = vmatprep.subr.mxu0 0.0
    %3411 = vmatpush2.msra.mxu0 0.0
    %3412 = vmatprep.subr.mxu0 0.0
    %3413 = vmatpush2.msra.mxu0 0.0
    %3414 = vmatprep.subr.mxu0 0.0
    %3415 = vmatpush2.msra.mxu0 0.0
    %3416 = vmatprep.subr.mxu0 0.0
    %3417 = vmatpush2.msra.mxu0 0.0
    %3418 = vmatprep.subr.mxu0 0.0
    %3419 = vmatpush2.msra.mxu0 0.0
    %3420 = vmatprep.subr.mxu0 0.0
    %3421 = vmatpush2.msra.mxu0 0.0
    %3422 = vmatprep.subr.mxu0 0.0
    %3423 = vmatpush2.msra.mxu0 0.0
    %3424 = vmatprep.mubr.f32.mxu0 0.0
    %3425 = vmatmul.mubr.f32.gmra.mxu0 %v3358
    %v3426 = vpop.f32.mrf.mxu0
    %v3427 = vadd.f32 0.0, %v3426
    %v3428 = vpop.f32.mrf.mxu0
    %v3429 = vadd.f32 0.0, %v3428
    %3430 = vdwg.mxu0
    %3431 = vmatprep.subr.mxu0 %v207
    %3432 = vmatpush1.msra.mxu0 %v206
    %3433 = vmatprep.subr.mxu0 %v203
    %3434 = vmatpush1.msra.mxu0 %v202
    %3435 = vmatprep.subr.mxu0 %v199
    %3436 = vmatpush1.msra.mxu0 %v198
    %3437 = vmatprep.subr.mxu0 %v195
    %3438 = vmatpush1.msra.mxu0 %v194
    %3439 = vmatprep.subr.mxu0 %v191
    %3440 = vmatpush1.msra.mxu0 %v190
    %3441 = vmatprep.subr.mxu0 %v187
    %3442 = vmatpush1.msra.mxu0 %v186
    %3443 = vmatprep.subr.mxu0 %v183
    %3444 = vmatpush1.msra.mxu0 %v182
    %3445 = vmatprep.subr.mxu0 %v179
    %3446 = vmatpush1.msra.mxu0 %v178
    %3447 = vmatprep.subr.mxu0 %v175
    %3448 = vmatpush1.msra.mxu0 %v174
    %3449 = vmatprep.subr.mxu0 %v171
    %3450 = vmatpush1.msra.mxu0 %v170
    %3451 = vmatprep.subr.mxu0 %v167
    %3452 = vmatpush1.msra.mxu0 %v166
    %3453 = vmatprep.subr.mxu0 %v163
    %3454 = vmatpush1.msra.mxu0 %v162
    %3455 = vmatprep.subr.mxu0 %v159
    %3456 = vmatpush1.msra.mxu0 %v158
    %3457 = vmatprep.subr.mxu0 %v155
    %3458 = vmatpush1.msra.mxu0 %v154
    %3459 = vmatprep.subr.mxu0 %v151
    %3460 = vmatpush1.msra.mxu0 %v150
    %3461 = vmatprep.subr.mxu0 %v147
    %3462 = vmatpush1.msra.mxu0 %v146
    %3463 = vmatprep.subr.mxu0 0.0
    %3464 = vmatpush2.msra.mxu0 0.0
    %3465 = vmatprep.subr.mxu0 0.0
    %3466 = vmatpush2.msra.mxu0 0.0
    %3467 = vmatprep.subr.mxu0 0.0
    %3468 = vmatpush2.msra.mxu0 0.0
    %3469 = vmatprep.subr.mxu0 0.0
    %3470 = vmatpush2.msra.mxu0 0.0
    %3471 = vmatprep.subr.mxu0 0.0
    %3472 = vmatpush2.msra.mxu0 0.0
    %3473 = vmatprep.subr.mxu0 0.0
    %3474 = vmatpush2.msra.mxu0 0.0
    %3475 = vmatprep.subr.mxu0 0.0
    %3476 = vmatpush2.msra.mxu0 0.0
    %3477 = vmatprep.subr.mxu0 0.0
    %3478 = vmatpush2.msra.mxu0 0.0
    %3479 = vmatprep.subr.mxu0 0.0
    %3480 = vmatpush2.msra.mxu0 0.0
    %3481 = vmatprep.subr.mxu0 0.0
    %3482 = vmatpush2.msra.mxu0 0.0
    %3483 = vmatprep.subr.mxu0 0.0
    %3484 = vmatpush2.msra.mxu0 0.0
    %3485 = vmatprep.subr.mxu0 0.0
    %3486 = vmatpush2.msra.mxu0 0.0
    %3487 = vmatprep.subr.mxu0 0.0
    %3488 = vmatpush2.msra.mxu0 0.0
    %3489 = vmatprep.subr.mxu0 0.0
    %3490 = vmatpush2.msra.mxu0 0.0
    %3491 = vmatprep.subr.mxu0 0.0
    %3492 = vmatpush2.msra.mxu0 0.0
    %3493 = vmatprep.subr.mxu0 0.0
    %3494 = vmatpush2.msra.mxu0 0.0
    %3495 = vmatprep.mubr.f32.mxu0 0.0
    %3496 = vmatmul.mubr.f32.gmra.mxu0 %v3358
    %v3497 = vpop.f32.mrf.mxu0
    %v3498 = vadd.f32 0.0, %v3497
    %v3499 = vpop.f32.mrf.mxu0
    %v3500 = vadd.f32 0.0, %v3499
    %3501 = vdwg.mxu0
    %v3506 = vrot.slane %v3427, 2
    %v3507 = vrot.slane %v3429, 2
    %v3508 = vrot.slane %v3498, 2
    %v3509 = vrot.slane %v3500, 2
    %v3514 = vadd.f32 %v1982, %v3506
    %v3515 = vadd.f32 %v1984, %v3507
    %v3516 = vadd.f32 %v2059, %v3508
    %v3517 = vadd.f32 %v2061, %v3509
    %v3518 = vxor.u32 %v3514, 2147483648
    %v3519 = vmul.f32 %v3518, 1.442695
    %v3520 = vpow.pop %v3519
    %v3521 = vadd.f32 %v3520, 1.0
    %v3522 = vrcp.pop %v3521
    %v3523 = vmul.f32 1.0, %v3522
    %v3524 = vxor.u32 %v3515, 2147483648
    %v3525 = vmul.f32 %v3524, 1.442695
    %v3526 = vpow.pop %v3525
    %v3527 = vadd.f32 %v3526, 1.0
    %v3528 = vrcp.pop %v3527
    %v3529 = vmul.f32 1.0, %v3528
    %v3530 = vtanh.pop %v3516
    %v3531 = vxor.u32 %v3517, 2147483648
    %v3532 = vmul.f32 %v3531, 1.442695
    %v3533 = vpow.pop %v3532
    %v3534 = vadd.f32 %v3533, 1.0
    %v3535 = vrcp.pop %v3534
    %v3536 = vmul.f32 1.0, %v3535
    %v3538 = vrot.slane %v3352, 6
    %v3540 = vmul.f32 %v3529, %v3538
    %v3541 = vmul.f32 %v3523, %v3530
    %v3542 = vadd.f32 %v3540, %v3541
    %v3543 = vtanh.pop %v3542
    %v3544 = vmul.f32 %v3536, %v3543
    %v3545 = vtanh.pop %v3544
    %3546 = vst [vmem:[#allocation3 + $0x8] sm:$0xc0] %v3545
    %v3547 = vld [vmem:[#allocation3] sm:$0xff]
    %v3548 = vld [vmem:[#allocation3 + $0x8] sm:$0xff]
    %v3549 = vld [vmem:[#allocation8] sm:$0xff]
    %v3550 = vld [vmem:[#allocation8 + $0x8] sm:$0xff]
    %v3551 = vld [vmem:[#allocation8 + $0x10] sm:$0xff]
    %v3552 = vld [vmem:[#allocation8 + $0x18] sm:$0xff]
    %v3553 = vld [vmem:[#allocation8 + $0x20] sm:$0xff]
    %v3554 = vld [vmem:[#allocation8 + $0x28] sm:$0xff]
    %v3555 = vld [vmem:[#allocation8 + $0x30] sm:$0xff]
    %v3556 = vld [vmem:[#allocation8 + $0x38] sm:$0xff]
    %v3557 = vld [vmem:[#allocation8 + $0x40] sm:$0xff]
    %v3558 = vld [vmem:[#allocation8 + $0x48] sm:$0xff]
    %v3559 = vld [vmem:[#allocation8 + $0x50] sm:$0xff]
    %v3560 = vld [vmem:[#allocation8 + $0x58] sm:$0xff]
    %v3561 = vld [vmem:[#allocation8 + $0x60] sm:$0xff]
    %v3562 = vld [vmem:[#allocation8 + $0x68] sm:$0xff]
    %v3563 = vld [vmem:[#allocation8 + $0x70] sm:$0xff]
    %v3564 = vld [vmem:[#allocation8 + $0x78] sm:$0xff]
    %v3565 = vld [vmem:[#allocation8 + $0x80] sm:$0xff]
    %v3566 = vld [vmem:[#allocation8 + $0x88] sm:$0xff]
    %v3567 = vld [vmem:[#allocation8 + $0x90] sm:$0xff]
    %v3568 = vld [vmem:[#allocation8 + $0x98] sm:$0xff]
    %v3569 = vld [vmem:[#allocation8 + $0xa0] sm:$0xff]
    %v3570 = vld [vmem:[#allocation8 + $0xa8] sm:$0xff]
    %v3571 = vld [vmem:[#allocation8 + $0xb0] sm:$0xff]
    %v3572 = vld [vmem:[#allocation8 + $0xb8] sm:$0xff]
    %v3573 = vld [vmem:[#allocation8 + $0xc0] sm:$0xff]
    %v3574 = vld [vmem:[#allocation8 + $0xc8] sm:$0xff]
    %v3575 = vld [vmem:[#allocation8 + $0xd0] sm:$0xff]
    %v3576 = vld [vmem:[#allocation8 + $0xd8] sm:$0xff]
    %v3577 = vld [vmem:[#allocation8 + $0xe0] sm:$0xff]
    %v3578 = vld [vmem:[#allocation8 + $0xe8] sm:$0xff]
    %v3579 = vld [vmem:[#allocation8 + $0xf0] sm:$0xff]
    %v3580 = vld [vmem:[#allocation8 + $0xf8] sm:$0xff]
    %v3581 = vld [vmem:[#allocation8 + $0x100] sm:$0xff]
    %v3582 = vld [vmem:[#allocation8 + $0x108] sm:$0xff]
    %v3583 = vld [vmem:[#allocation8 + $0x110] sm:$0xff]
    %v3584 = vld [vmem:[#allocation8 + $0x118] sm:$0xff]
    %v3585 = vld [vmem:[#allocation8 + $0x120] sm:$0xff]
    %v3586 = vld [vmem:[#allocation8 + $0x128] sm:$0xff]
    %v3587 = vld [vmem:[#allocation8 + $0x130] sm:$0xff]
    %v3588 = vld [vmem:[#allocation8 + $0x138] sm:$0xff]
    %v3589 = vld [vmem:[#allocation8 + $0x140] sm:$0xff]
    %v3590 = vld [vmem:[#allocation8 + $0x148] sm:$0xff]
    %v3591 = vld [vmem:[#allocation8 + $0x150] sm:$0xff]
    %v3592 = vld [vmem:[#allocation8 + $0x158] sm:$0xff]
    %v3593 = vld [vmem:[#allocation8 + $0x160] sm:$0xff]
    %v3594 = vld [vmem:[#allocation8 + $0x168] sm:$0xff]
    %v3595 = vld [vmem:[#allocation8 + $0x170] sm:$0xff]
    %v3596 = vld [vmem:[#allocation8 + $0x178] sm:$0xff]
    %v3597 = vld [vmem:[#allocation8 + $0x180] sm:$0xff]
    %v3598 = vld [vmem:[#allocation8 + $0x188] sm:$0xff]
    %v3599 = vld [vmem:[#allocation8 + $0x190] sm:$0xff]
    %v3600 = vld [vmem:[#allocation8 + $0x198] sm:$0xff]
    %v3601 = vld [vmem:[#allocation8 + $0x1a0] sm:$0xff]
    %v3602 = vld [vmem:[#allocation8 + $0x1a8] sm:$0xff]
    %v3603 = vld [vmem:[#allocation8 + $0x1b0] sm:$0xff]
    %v3604 = vld [vmem:[#allocation8 + $0x1b8] sm:$0xff]
    %v3605 = vld [vmem:[#allocation8 + $0x1c0] sm:$0xff]
    %v3606 = vld [vmem:[#allocation8 + $0x1c8] sm:$0xff]
    %v3607 = vld [vmem:[#allocation8 + $0x1d0] sm:$0xff]
    %v3608 = vld [vmem:[#allocation8 + $0x1d8] sm:$0xff]
    %v3609 = vld [vmem:[#allocation8 + $0x1e0] sm:$0xff]
    %v3610 = vld [vmem:[#allocation8 + $0x1e8] sm:$0xff]
    %v3611 = vld [vmem:[#allocation8 + $0x1f0] sm:$0xff]
    %v3612 = vld [vmem:[#allocation8 + $0x1f8] sm:$0xff]
    %v3613 = vld [vmem:[%s9] sm:$0xf]
    %v3615 = vlaneseq
    %v3616 = vshrl.u32 %v3615, 7
    %v3617 = vsub.s32 0, %v3616
    %v3618 = vrot.slane %v3613, %v3617
    %v3619 = vlaneseq
    %v3620 = vshrl.u32 %v3619, 7
    %v3621 = vsub.s32 1, %v3620
    %v3622 = vrot.slane %v3613, %v3621
    %v3623 = vlaneseq
    %v3624 = vshrl.u32 %v3623, 7
    %v3625 = vsub.s32 2, %v3624
    %v3626 = vrot.slane %v3613, %v3625
    %v3627 = vlaneseq
    %v3628 = vshrl.u32 %v3627, 7
    %v3629 = vsub.s32 3, %v3628
    %v3630 = vrot.slane %v3613, %v3629
    %3635 = vmatprep.subr.mxu0 %v3610
    %3636 = vmatpush1.msra.mxu0 %v3609
    %3637 = vmatprep.subr.mxu0 %v3606
    %3638 = vmatpush1.msra.mxu0 %v3605
    %3639 = vmatprep.subr.mxu0 %v3602
    %3640 = vmatpush1.msra.mxu0 %v3601
    %3641 = vmatprep.subr.mxu0 %v3598
    %3642 = vmatpush1.msra.mxu0 %v3597
    %3643 = vmatprep.subr.mxu0 %v3594
    %3644 = vmatpush1.msra.mxu0 %v3593
    %3645 = vmatprep.subr.mxu0 %v3590
    %3646 = vmatpush1.msra.mxu0 %v3589
    %3647 = vmatprep.subr.mxu0 %v3586
    %3648 = vmatpush1.msra.mxu0 %v3585
    %3649 = vmatprep.subr.mxu0 %v3582
    %3650 = vmatpush1.msra.mxu0 %v3581
    %3651 = vmatprep.subr.mxu0 %v3578
    %3652 = vmatpush1.msra.mxu0 %v3577
    %3653 = vmatprep.subr.mxu0 %v3574
    %3654 = vmatpush1.msra.mxu0 %v3573
    %3655 = vmatprep.subr.mxu0 %v3570
    %3656 = vmatpush1.msra.mxu0 %v3569
    %3657 = vmatprep.subr.mxu0 %v3566
    %3658 = vmatpush1.msra.mxu0 %v3565
    %3659 = vmatprep.subr.mxu0 %v3562
    %3660 = vmatpush1.msra.mxu0 %v3561
    %3661 = vmatprep.subr.mxu0 %v3558
    %3662 = vmatpush1.msra.mxu0 %v3557
    %3663 = vmatprep.subr.mxu0 %v3554
    %3664 = vmatpush1.msra.mxu0 %v3553
    %3665 = vmatprep.subr.mxu0 %v3550
    %3666 = vmatpush1.msra.mxu0 %v3549
    %3667 = vmatprep.subr.mxu0 0.0
    %3668 = vmatpush2.msra.mxu0 0.0
    %3669 = vmatprep.subr.mxu0 0.0
    %3670 = vmatpush2.msra.mxu0 0.0
    %3671 = vmatprep.subr.mxu0 0.0
    %3672 = vmatpush2.msra.mxu0 0.0
    %3673 = vmatprep.subr.mxu0 0.0
    %3674 = vmatpush2.msra.mxu0 0.0
    %3675 = vmatprep.subr.mxu0 0.0
    %3676 = vmatpush2.msra.mxu0 0.0
    %3677 = vmatprep.subr.mxu0 0.0
    %3678 = vmatpush2.msra.mxu0 0.0
    %3679 = vmatprep.subr.mxu0 0.0
    %3680 = vmatpush2.msra.mxu0 0.0
    %3681 = vmatprep.subr.mxu0 0.0
    %3682 = vmatpush2.msra.mxu0 0.0
    %3683 = vmatprep.subr.mxu0 0.0
    %3684 = vmatpush2.msra.mxu0 0.0
    %3685 = vmatprep.subr.mxu0 0.0
    %3686 = vmatpush2.msra.mxu0 0.0
    %3687 = vmatprep.subr.mxu0 0.0
    %3688 = vmatpush2.msra.mxu0 0.0
    %3689 = vmatprep.subr.mxu0 0.0
    %3690 = vmatpush2.msra.mxu0 0.0
    %3691 = vmatprep.subr.mxu0 0.0
    %3692 = vmatpush2.msra.mxu0 0.0
    %3693 = vmatprep.subr.mxu0 0.0
    %3694 = vmatpush2.msra.mxu0 0.0
    %3695 = vmatprep.subr.mxu0 0.0
    %3696 = vmatpush2.msra.mxu0 0.0
    %3697 = vmatprep.subr.mxu0 0.0
    %3698 = vmatpush2.msra.mxu0 0.0
    %3699 = vmatprep.mubr.f32.mxu0 0.0
    %3700 = vmatmul.mubr.f32.gmra.mxu0 %v3547
    %v3701 = vpop.f32.mrf.mxu0
    %v3702 = vadd.f32 %v3618, %v3701
    %v3703 = vpop.f32.mrf.mxu0
    %v3704 = vadd.f32 %v3622, %v3703
    %3705 = vmatprep.mubr.f32.mxu0 0.0
    %3706 = vmatmul.mubr.f32.gmra.mxu0 %v3548
    %v3707 = vpop.f32.mrf.mxu0
    %v3708 = vadd.f32 %v3618, %v3707
    %v3709 = vpop.f32.mrf.mxu0
    %v3710 = vadd.f32 %v3622, %v3709
    %3711 = vdwg.mxu0
    %3712 = vmatprep.subr.mxu0 %v3612
    %3713 = vmatpush1.msra.mxu0 %v3611
    %3714 = vmatprep.subr.mxu0 %v3608
    %3715 = vmatpush1.msra.mxu0 %v3607
    %3716 = vmatprep.subr.mxu0 %v3604
    %3717 = vmatpush1.msra.mxu0 %v3603
    %3718 = vmatprep.subr.mxu0 %v3600
    %3719 = vmatpush1.msra.mxu0 %v3599
    %3720 = vmatprep.subr.mxu0 %v3596
    %3721 = vmatpush1.msra.mxu0 %v3595
    %3722 = vmatprep.subr.mxu0 %v3592
    %3723 = vmatpush1.msra.mxu0 %v3591
    %3724 = vmatprep.subr.mxu0 %v3588
    %3725 = vmatpush1.msra.mxu0 %v3587
    %3726 = vmatprep.subr.mxu0 %v3584
    %3727 = vmatpush1.msra.mxu0 %v3583
    %3728 = vmatprep.subr.mxu0 %v3580
    %3729 = vmatpush1.msra.mxu0 %v3579
    %3730 = vmatprep.subr.mxu0 %v3576
    %3731 = vmatpush1.msra.mxu0 %v3575
    %3732 = vmatprep.subr.mxu0 %v3572
    %3733 = vmatpush1.msra.mxu0 %v3571
    %3734 = vmatprep.subr.mxu0 %v3568
    %3735 = vmatpush1.msra.mxu0 %v3567
    %3736 = vmatprep.subr.mxu0 %v3564
    %3737 = vmatpush1.msra.mxu0 %v3563
    %3738 = vmatprep.subr.mxu0 %v3560
    %3739 = vmatpush1.msra.mxu0 %v3559
    %3740 = vmatprep.subr.mxu0 %v3556
    %3741 = vmatpush1.msra.mxu0 %v3555
    %3742 = vmatprep.subr.mxu0 %v3552
    %3743 = vmatpush1.msra.mxu0 %v3551
    %3744 = vmatprep.subr.mxu0 0.0
    %3745 = vmatpush2.msra.mxu0 0.0
    %3746 = vmatprep.subr.mxu0 0.0
    %3747 = vmatpush2.msra.mxu0 0.0
    %3748 = vmatprep.subr.mxu0 0.0
    %3749 = vmatpush2.msra.mxu0 0.0
    %3750 = vmatprep.subr.mxu0 0.0
    %3751 = vmatpush2.msra.mxu0 0.0
    %3752 = vmatprep.subr.mxu0 0.0
    %3753 = vmatpush2.msra.mxu0 0.0
    %3754 = vmatprep.subr.mxu0 0.0
    %3755 = vmatpush2.msra.mxu0 0.0
    %3756 = vmatprep.subr.mxu0 0.0
    %3757 = vmatpush2.msra.mxu0 0.0
    %3758 = vmatprep.subr.mxu0 0.0
    %3759 = vmatpush2.msra.mxu0 0.0
    %3760 = vmatprep.subr.mxu0 0.0
    %3761 = vmatpush2.msra.mxu0 0.0
    %3762 = vmatprep.subr.mxu0 0.0
    %3763 = vmatpush2.msra.mxu0 0.0
    %3764 = vmatprep.subr.mxu0 0.0
    %3765 = vmatpush2.msra.mxu0 0.0
    %3766 = vmatprep.subr.mxu0 0.0
    %3767 = vmatpush2.msra.mxu0 0.0
    %3768 = vmatprep.subr.mxu0 0.0
    %3769 = vmatpush2.msra.mxu0 0.0
    %3770 = vmatprep.subr.mxu0 0.0
    %3771 = vmatpush2.msra.mxu0 0.0
    %3772 = vmatprep.subr.mxu0 0.0
    %3773 = vmatpush2.msra.mxu0 0.0
    %3774 = vmatprep.subr.mxu0 0.0
    %3775 = vmatpush2.msra.mxu0 0.0
    %3776 = vmatprep.mubr.f32.mxu0 0.0
    %3777 = vmatmul.mubr.f32.gmra.mxu0 %v3547
    %v3778 = vpop.f32.mrf.mxu0
    %v3779 = vadd.f32 %v3626, %v3778
    %v3780 = vpop.f32.mrf.mxu0
    %v3781 = vadd.f32 %v3630, %v3780
    %3782 = vmatprep.mubr.f32.mxu0 0.0
    %3783 = vmatmul.mubr.f32.gmra.mxu0 %v3548
    %v3784 = vpop.f32.mrf.mxu0
    %v3785 = vadd.f32 %v3626, %v3784
    %v3786 = vpop.f32.mrf.mxu0
    %v3787 = vadd.f32 %v3630, %v3786
    %3788 = vdwg.mxu0
    %3789 = vmatprep.subr.mxu0 %v269
    %3790 = vmatpush1.msra.mxu0 %v268
    %3791 = vmatprep.subr.mxu0 %v265
    %3792 = vmatpush1.msra.mxu0 %v264
    %3793 = vmatprep.subr.mxu0 %v261
    %3794 = vmatpush1.msra.mxu0 %v260
    %3795 = vmatprep.subr.mxu0 %v257
    %3796 = vmatpush1.msra.mxu0 %v256
    %3797 = vmatprep.subr.mxu0 %v253
    %3798 = vmatpush1.msra.mxu0 %v252
    %3799 = vmatprep.subr.mxu0 %v249
    %3800 = vmatpush1.msra.mxu0 %v248
    %3801 = vmatprep.subr.mxu0 %v245
    %3802 = vmatpush1.msra.mxu0 %v244
    %3803 = vmatprep.subr.mxu0 %v241
    %3804 = vmatpush1.msra.mxu0 %v240
    %3805 = vmatprep.subr.mxu0 %v237
    %3806 = vmatpush1.msra.mxu0 %v236
    %3807 = vmatprep.subr.mxu0 %v233
    %3808 = vmatpush1.msra.mxu0 %v232
    %3809 = vmatprep.subr.mxu0 %v229
    %3810 = vmatpush1.msra.mxu0 %v228
    %3811 = vmatprep.subr.mxu0 %v225
    %3812 = vmatpush1.msra.mxu0 %v224
    %3813 = vmatprep.subr.mxu0 %v221
    %3814 = vmatpush1.msra.mxu0 %v220
    %3815 = vmatprep.subr.mxu0 %v217
    %3816 = vmatpush1.msra.mxu0 %v216
    %3817 = vmatprep.subr.mxu0 %v213
    %3818 = vmatpush1.msra.mxu0 %v212
    %3819 = vmatprep.subr.mxu0 %v209
    %3820 = vmatpush1.msra.mxu0 %v208
    %3821 = vmatprep.subr.mxu0 0.0
    %3822 = vmatpush2.msra.mxu0 0.0
    %3823 = vmatprep.subr.mxu0 0.0
    %3824 = vmatpush2.msra.mxu0 0.0
    %3825 = vmatprep.subr.mxu0 0.0
    %3826 = vmatpush2.msra.mxu0 0.0
    %3827 = vmatprep.subr.mxu0 0.0
    %3828 = vmatpush2.msra.mxu0 0.0
    %3829 = vmatprep.subr.mxu0 0.0
    %3830 = vmatpush2.msra.mxu0 0.0
    %3831 = vmatprep.subr.mxu0 0.0
    %3832 = vmatpush2.msra.mxu0 0.0
    %3833 = vmatprep.subr.mxu0 0.0
    %3834 = vmatpush2.msra.mxu0 0.0
    %3835 = vmatprep.subr.mxu0 0.0
    %3836 = vmatpush2.msra.mxu0 0.0
    %3837 = vmatprep.subr.mxu0 0.0
    %3838 = vmatpush2.msra.mxu0 0.0
    %3839 = vmatprep.subr.mxu0 0.0
    %3840 = vmatpush2.msra.mxu0 0.0
    %3841 = vmatprep.subr.mxu0 0.0
    %3842 = vmatpush2.msra.mxu0 0.0
    %3843 = vmatprep.subr.mxu0 0.0
    %3844 = vmatpush2.msra.mxu0 0.0
    %3845 = vmatprep.subr.mxu0 0.0
    %3846 = vmatpush2.msra.mxu0 0.0
    %3847 = vmatprep.subr.mxu0 0.0
    %3848 = vmatpush2.msra.mxu0 0.0
    %3849 = vmatprep.subr.mxu0 0.0
    %3850 = vmatpush2.msra.mxu0 0.0
    %3851 = vmatprep.subr.mxu0 0.0
    %3852 = vmatpush2.msra.mxu0 0.0
    %3853 = vmatprep.mubr.f32.mxu0 0.0
    %3854 = vmatmul.mubr.f32.gmra.mxu0 0.0
    %v3855 = vpop.f32.mrf.mxu0
    %v3856 = vadd.f32 0.0, %v3855
    %v3857 = vpop.f32.mrf.mxu0
    %v3858 = vadd.f32 0.0, %v3857
    %3859 = vdwg.mxu0
    %3860 = vmatprep.subr.mxu0 %v271
    %3861 = vmatpush1.msra.mxu0 %v270
    %3862 = vmatprep.subr.mxu0 %v267
    %3863 = vmatpush1.msra.mxu0 %v266
    %3864 = vmatprep.subr.mxu0 %v263
    %3865 = vmatpush1.msra.mxu0 %v262
    %3866 = vmatprep.subr.mxu0 %v259
    %3867 = vmatpush1.msra.mxu0 %v258
    %3868 = vmatprep.subr.mxu0 %v255
    %3869 = vmatpush1.msra.mxu0 %v254
    %3870 = vmatprep.subr.mxu0 %v251
    %3871 = vmatpush1.msra.mxu0 %v250
    %3872 = vmatprep.subr.mxu0 %v247
    %3873 = vmatpush1.msra.mxu0 %v246
    %3874 = vmatprep.subr.mxu0 %v243
    %3875 = vmatpush1.msra.mxu0 %v242
    %3876 = vmatprep.subr.mxu0 %v239
    %3877 = vmatpush1.msra.mxu0 %v238
    %3878 = vmatprep.subr.mxu0 %v235
    %3879 = vmatpush1.msra.mxu0 %v234
    %3880 = vmatprep.subr.mxu0 %v231
    %3881 = vmatpush1.msra.mxu0 %v230
    %3882 = vmatprep.subr.mxu0 %v227
    %3883 = vmatpush1.msra.mxu0 %v226
    %3884 = vmatprep.subr.mxu0 %v223
    %3885 = vmatpush1.msra.mxu0 %v222
    %3886 = vmatprep.subr.mxu0 %v219
    %3887 = vmatpush1.msra.mxu0 %v218
    %3888 = vmatprep.subr.mxu0 %v215
    %3889 = vmatpush1.msra.mxu0 %v214
    %3890 = vmatprep.subr.mxu0 %v211
    %3891 = vmatpush1.msra.mxu0 %v210
    %3892 = vmatprep.subr.mxu0 0.0
    %3893 = vmatpush2.msra.mxu0 0.0
    %3894 = vmatprep.subr.mxu0 0.0
    %3895 = vmatpush2.msra.mxu0 0.0
    %3896 = vmatprep.subr.mxu0 0.0
    %3897 = vmatpush2.msra.mxu0 0.0
    %3898 = vmatprep.subr.mxu0 0.0
    %3899 = vmatpush2.msra.mxu0 0.0
    %3900 = vmatprep.subr.mxu0 0.0
    %3901 = vmatpush2.msra.mxu0 0.0
    %3902 = vmatprep.subr.mxu0 0.0
    %3903 = vmatpush2.msra.mxu0 0.0
    %3904 = vmatprep.subr.mxu0 0.0
    %3905 = vmatpush2.msra.mxu0 0.0
    %3906 = vmatprep.subr.mxu0 0.0
    %3907 = vmatpush2.msra.mxu0 0.0
    %3908 = vmatprep.subr.mxu0 0.0
    %3909 = vmatpush2.msra.mxu0 0.0
    %3910 = vmatprep.subr.mxu0 0.0
    %3911 = vmatpush2.msra.mxu0 0.0
    %3912 = vmatprep.subr.mxu0 0.0
    %3913 = vmatpush2.msra.mxu0 0.0
    %3914 = vmatprep.subr.mxu0 0.0
    %3915 = vmatpush2.msra.mxu0 0.0
    %3916 = vmatprep.subr.mxu0 0.0
    %3917 = vmatpush2.msra.mxu0 0.0
    %3918 = vmatprep.subr.mxu0 0.0
    %3919 = vmatpush2.msra.mxu0 0.0
    %3920 = vmatprep.subr.mxu0 0.0
    %3921 = vmatpush2.msra.mxu0 0.0
    %3922 = vmatprep.subr.mxu0 0.0
    %3923 = vmatpush2.msra.mxu0 0.0
    %3924 = vmatprep.mubr.f32.mxu0 0.0
    %3925 = vmatmul.mubr.f32.gmra.mxu0 0.0
    %v3926 = vpop.f32.mrf.mxu0
    %v3927 = vadd.f32 0.0, %v3926
    %v3928 = vpop.f32.mrf.mxu0
    %v3929 = vadd.f32 0.0, %v3928
    %3930 = vdwg.mxu0
    %v3931 = vadd.f32 %v3702, %v3856
    %v3932 = vadd.f32 %v3704, %v3858
    %v3933 = vadd.f32 %v3779, %v3927
    %v3934 = vadd.f32 %v3781, %v3929
    %v3935 = vxor.u32 %v3931, 2147483648
    %v3936 = vmul.f32 %v3935, 1.442695
    %v3937 = vpow.pop %v3936
    %v3938 = vadd.f32 %v3937, 1.0
    %v3939 = vrcp.pop %v3938
    %v3940 = vmul.f32 1.0, %v3939
    %v3941 = vxor.u32 %v3932, 2147483648
    %v3942 = vmul.f32 %v3941, 1.442695
    %v3943 = vpow.pop %v3942
    %v3944 = vadd.f32 %v3943, 1.0
    %v3945 = vrcp.pop %v3944
    %v3946 = vmul.f32 1.0, %v3945
    %v3947 = vtanh.pop %v3933
    %v3948 = vxor.u32 %v3934, 2147483648
    %v3949 = vmul.f32 %v3948, 1.442695
    %v3950 = vpow.pop %v3949
    %v3951 = vadd.f32 %v3950, 1.0
    %v3952 = vrcp.pop %v3951
    %v3953 = vmul.f32 1.0, %v3952
    %v3954 = vmul.f32 %v3946, 0.0
    %v3955 = vmul.f32 %v3940, %v3947
    %v3956 = vadd.f32 %v3954, %v3955
    %v3957 = vtanh.pop %v3956
    %v3958 = vmul.f32 %v3953, %v3957
    %v3959 = vtanh.pop %v3958
    %3960 = vst [vmem:[#allocation4] sm:$0x3] %v3959
    %3961 = vmatprep.subr.mxu0 %v269
    %3962 = vmatpush1.msra.mxu0 %v268
    %3963 = vmatprep.subr.mxu0 %v265
    %3964 = vmatpush1.msra.mxu0 %v264
    %3965 = vmatprep.subr.mxu0 %v261
    %3966 = vmatpush1.msra.mxu0 %v260
    %3967 = vmatprep.subr.mxu0 %v257
    %3968 = vmatpush1.msra.mxu0 %v256
    %3969 = vmatprep.subr.mxu0 %v253
    %3970 = vmatpush1.msra.mxu0 %v252
    %3971 = vmatprep.subr.mxu0 %v249
    %3972 = vmatpush1.msra.mxu0 %v248
    %3973 = vmatprep.subr.mxu0 %v245
    %3974 = vmatpush1.msra.mxu0 %v244
    %3975 = vmatprep.subr.mxu0 %v241
    %3976 = vmatpush1.msra.mxu0 %v240
    %3977 = vmatprep.subr.mxu0 %v237
    %3978 = vmatpush1.msra.mxu0 %v236
    %3979 = vmatprep.subr.mxu0 %v233
    %3980 = vmatpush1.msra.mxu0 %v232
    %3981 = vmatprep.subr.mxu0 %v229
    %3982 = vmatpush1.msra.mxu0 %v228
    %3983 = vmatprep.subr.mxu0 %v225
    %3984 = vmatpush1.msra.mxu0 %v224
    %3985 = vmatprep.subr.mxu0 %v221
    %3986 = vmatpush1.msra.mxu0 %v220
    %3987 = vmatprep.subr.mxu0 %v217
    %3988 = vmatpush1.msra.mxu0 %v216
    %3989 = vmatprep.subr.mxu0 %v213
    %3990 = vmatpush1.msra.mxu0 %v212
    %3991 = vmatprep.subr.mxu0 %v209
    %3992 = vmatpush1.msra.mxu0 %v208
    %3993 = vmatprep.subr.mxu0 0.0
    %3994 = vmatpush2.msra.mxu0 0.0
    %3995 = vmatprep.subr.mxu0 0.0
    %3996 = vmatpush2.msra.mxu0 0.0
    %3997 = vmatprep.subr.mxu0 0.0
    %3998 = vmatpush2.msra.mxu0 0.0
    %3999 = vmatprep.subr.mxu0 0.0
    %4000 = vmatpush2.msra.mxu0 0.0
    %4001 = vmatprep.subr.mxu0 0.0
    %4002 = vmatpush2.msra.mxu0 0.0
    %4003 = vmatprep.subr.mxu0 0.0
    %4004 = vmatpush2.msra.mxu0 0.0
    %4005 = vmatprep.subr.mxu0 0.0
    %4006 = vmatpush2.msra.mxu0 0.0
    %4007 = vmatprep.subr.mxu0 0.0
    %4008 = vmatpush2.msra.mxu0 0.0
    %4009 = vmatprep.subr.mxu0 0.0
    %4010 = vmatpush2.msra.mxu0 0.0
    %4011 = vmatprep.subr.mxu0 0.0
    %4012 = vmatpush2.msra.mxu0 0.0
    %4013 = vmatprep.subr.mxu0 0.0
    %4014 = vmatpush2.msra.mxu0 0.0
    %4015 = vmatprep.subr.mxu0 0.0
    %4016 = vmatpush2.msra.mxu0 0.0
    %4017 = vmatprep.subr.mxu0 0.0
    %4018 = vmatpush2.msra.mxu0 0.0
    %4019 = vmatprep.subr.mxu0 0.0
    %4020 = vmatpush2.msra.mxu0 0.0
    %4021 = vmatprep.subr.mxu0 0.0
    %4022 = vmatpush2.msra.mxu0 0.0
    %4023 = vmatprep.subr.mxu0 0.0
    %4024 = vmatpush2.msra.mxu0 0.0
    %4025 = vmatprep.mubr.f32.mxu0 0.0
    %4026 = vmatmul.mubr.f32.gmra.mxu0 %v3958
    %v4027 = vpop.f32.mrf.mxu0
    %v4028 = vadd.f32 0.0, %v4027
    %v4029 = vpop.f32.mrf.mxu0
    %v4030 = vadd.f32 0.0, %v4029
    %4031 = vdwg.mxu0
    %4032 = vmatprep.subr.mxu0 %v271
    %4033 = vmatpush1.msra.mxu0 %v270
    %4034 = vmatprep.subr.mxu0 %v267
    %4035 = vmatpush1.msra.mxu0 %v266
    %4036 = vmatprep.subr.mxu0 %v263
    %4037 = vmatpush1.msra.mxu0 %v262
    %4038 = vmatprep.subr.mxu0 %v259
    %4039 = vmatpush1.msra.mxu0 %v258
    %4040 = vmatprep.subr.mxu0 %v255
    %4041 = vmatpush1.msra.mxu0 %v254
    %4042 = vmatprep.subr.mxu0 %v251
    %4043 = vmatpush1.msra.mxu0 %v250
    %4044 = vmatprep.subr.mxu0 %v247
    %4045 = vmatpush1.msra.mxu0 %v246
    %4046 = vmatprep.subr.mxu0 %v243
    %4047 = vmatpush1.msra.mxu0 %v242
    %4048 = vmatprep.subr.mxu0 %v239
    %4049 = vmatpush1.msra.mxu0 %v238
    %4050 = vmatprep.subr.mxu0 %v235
    %4051 = vmatpush1.msra.mxu0 %v234
    %4052 = vmatprep.subr.mxu0 %v231
    %4053 = vmatpush1.msra.mxu0 %v230
    %4054 = vmatprep.subr.mxu0 %v227
    %4055 = vmatpush1.msra.mxu0 %v226
    %4056 = vmatprep.subr.mxu0 %v223
    %4057 = vmatpush1.msra.mxu0 %v222
    %4058 = vmatprep.subr.mxu0 %v219
    %4059 = vmatpush1.msra.mxu0 %v218
    %4060 = vmatprep.subr.mxu0 %v215
    %4061 = vmatpush1.msra.mxu0 %v214
    %4062 = vmatprep.subr.mxu0 %v211
    %4063 = vmatpush1.msra.mxu0 %v210
    %4064 = vmatprep.subr.mxu0 0.0
    %4065 = vmatpush2.msra.mxu0 0.0
    %4066 = vmatprep.subr.mxu0 0.0
    %4067 = vmatpush2.msra.mxu0 0.0
    %4068 = vmatprep.subr.mxu0 0.0
    %4069 = vmatpush2.msra.mxu0 0.0
    %4070 = vmatprep.subr.mxu0 0.0
    %4071 = vmatpush2.msra.mxu0 0.0
    %4072 = vmatprep.subr.mxu0 0.0
    %4073 = vmatpush2.msra.mxu0 0.0
    %4074 = vmatprep.subr.mxu0 0.0
    %4075 = vmatpush2.msra.mxu0 0.0
    %4076 = vmatprep.subr.mxu0 0.0
    %4077 = vmatpush2.msra.mxu0 0.0
    %4078 = vmatprep.subr.mxu0 0.0
    %4079 = vmatpush2.msra.mxu0 0.0
    %4080 = vmatprep.subr.mxu0 0.0
    %4081 = vmatpush2.msra.mxu0 0.0
    %4082 = vmatprep.subr.mxu0 0.0
    %4083 = vmatpush2.msra.mxu0 0.0
    %4084 = vmatprep.subr.mxu0 0.0
    %4085 = vmatpush2.msra.mxu0 0.0
    %4086 = vmatprep.subr.mxu0 0.0
    %4087 = vmatpush2.msra.mxu0 0.0
    %4088 = vmatprep.subr.mxu0 0.0
    %4089 = vmatpush2.msra.mxu0 0.0
    %4090 = vmatprep.subr.mxu0 0.0
    %4091 = vmatpush2.msra.mxu0 0.0
    %4092 = vmatprep.subr.mxu0 0.0
    %4093 = vmatpush2.msra.mxu0 0.0
    %4094 = vmatprep.subr.mxu0 0.0
    %4095 = vmatpush2.msra.mxu0 0.0
    %4096 = vmatprep.mubr.f32.mxu0 0.0
    %4097 = vmatmul.mubr.f32.gmra.mxu0 %v3958
    %v4098 = vpop.f32.mrf.mxu0
    %v4099 = vadd.f32 0.0, %v4098
    %v4100 = vpop.f32.mrf.mxu0
    %v4101 = vadd.f32 0.0, %v4100
    %4102 = vdwg.mxu0
    %v4107 = vrot.slane %v4028, 6
    %v4108 = vrot.slane %v4030, 6
    %v4109 = vrot.slane %v4099, 6
    %v4110 = vrot.slane %v4101, 6
    %v4115 = vadd.f32 %v3702, %v4107
    %v4116 = vadd.f32 %v3704, %v4108
    %v4117 = vadd.f32 %v3779, %v4109
    %v4118 = vadd.f32 %v3781, %v4110
    %v4119 = vxor.u32 %v4115, 2147483648
    %v4120 = vmul.f32 %v4119, 1.442695
    %v4121 = vpow.pop %v4120
    %v4122 = vadd.f32 %v4121, 1.0
    %v4123 = vrcp.pop %v4122
    %v4124 = vmul.f32 1.0, %v4123
    %v4125 = vxor.u32 %v4116, 2147483648
    %v4126 = vmul.f32 %v4125, 1.442695
    %v4127 = vpow.pop %v4126
    %v4128 = vadd.f32 %v4127, 1.0
    %v4129 = vrcp.pop %v4128
    %v4130 = vmul.f32 1.0, %v4129
    %v4131 = vtanh.pop %v4117
    %v4132 = vxor.u32 %v4118, 2147483648
    %v4133 = vmul.f32 %v4132, 1.442695
    %v4134 = vpow.pop %v4133
    %v4135 = vadd.f32 %v4134, 1.0
    %v4136 = vrcp.pop %v4135
    %v4137 = vmul.f32 1.0, %v4136
    %v4139 = vrot.slane %v3956, 6
    %v4141 = vmul.f32 %v4130, %v4139
    %v4142 = vmul.f32 %v4124, %v4131
    %v4143 = vadd.f32 %v4141, %v4142
    %v4144 = vtanh.pop %v4143
    %v4145 = vmul.f32 %v4137, %v4144
    %v4146 = vtanh.pop %v4145
    %v4149 = vunpack.c.l.s4 1983009808
    %v4150 = vunpack.c.0.s8 %v4149
    %v4151 = vlaneseq
    %v4152 = vshrl.u32 %v4151, 7
    %v4153 = vsub.s32 %v4150, %v4152
    %v4154 = vrot.slane %v4146, %v4153
    %v4155 = vcombine.high %v4154, %v4154
    %4157 = vst [vmem:[#allocation4 + $0x2] sm:$0x3] %v4155
    %v4159 = vrot.slane %v4145, 2
    %4161 = vmatprep.subr.mxu0 %v269
    %4162 = vmatpush1.msra.mxu0 %v268
    %4163 = vmatprep.subr.mxu0 %v265
    %4164 = vmatpush1.msra.mxu0 %v264
    %4165 = vmatprep.subr.mxu0 %v261
    %4166 = vmatpush1.msra.mxu0 %v260
    %4167 = vmatprep.subr.mxu0 %v257
    %4168 = vmatpush1.msra.mxu0 %v256
    %4169 = vmatprep.subr.mxu0 %v253
    %4170 = vmatpush1.msra.mxu0 %v252
    %4171 = vmatprep.subr.mxu0 %v249
    %4172 = vmatpush1.msra.mxu0 %v248
    %4173 = vmatprep.subr.mxu0 %v245
    %4174 = vmatpush1.msra.mxu0 %v244
    %4175 = vmatprep.subr.mxu0 %v241
    %4176 = vmatpush1.msra.mxu0 %v240
    %4177 = vmatprep.subr.mxu0 %v237
    %4178 = vmatpush1.msra.mxu0 %v236
    %4179 = vmatprep.subr.mxu0 %v233
    %4180 = vmatpush1.msra.mxu0 %v232
    %4181 = vmatprep.subr.mxu0 %v229
    %4182 = vmatpush1.msra.mxu0 %v228
    %4183 = vmatprep.subr.mxu0 %v225
    %4184 = vmatpush1.msra.mxu0 %v224
    %4185 = vmatprep.subr.mxu0 %v221
    %4186 = vmatpush1.msra.mxu0 %v220
    %4187 = vmatprep.subr.mxu0 %v217
    %4188 = vmatpush1.msra.mxu0 %v216
    %4189 = vmatprep.subr.mxu0 %v213
    %4190 = vmatpush1.msra.mxu0 %v212
    %4191 = vmatprep.subr.mxu0 %v209
    %4192 = vmatpush1.msra.mxu0 %v208
    %4193 = vmatprep.subr.mxu0 0.0
    %4194 = vmatpush2.msra.mxu0 0.0
    %4195 = vmatprep.subr.mxu0 0.0
    %4196 = vmatpush2.msra.mxu0 0.0
    %4197 = vmatprep.subr.mxu0 0.0
    %4198 = vmatpush2.msra.mxu0 0.0
    %4199 = vmatprep.subr.mxu0 0.0
    %4200 = vmatpush2.msra.mxu0 0.0
    %4201 = vmatprep.subr.mxu0 0.0
    %4202 = vmatpush2.msra.mxu0 0.0
    %4203 = vmatprep.subr.mxu0 0.0
    %4204 = vmatpush2.msra.mxu0 0.0
    %4205 = vmatprep.subr.mxu0 0.0
    %4206 = vmatpush2.msra.mxu0 0.0
    %4207 = vmatprep.subr.mxu0 0.0
    %4208 = vmatpush2.msra.mxu0 0.0
    %4209 = vmatprep.subr.mxu0 0.0
    %4210 = vmatpush2.msra.mxu0 0.0
    %4211 = vmatprep.subr.mxu0 0.0
    %4212 = vmatpush2.msra.mxu0 0.0
    %4213 = vmatprep.subr.mxu0 0.0
    %4214 = vmatpush2.msra.mxu0 0.0
    %4215 = vmatprep.subr.mxu0 0.0
    %4216 = vmatpush2.msra.mxu0 0.0
    %4217 = vmatprep.subr.mxu0 0.0
    %4218 = vmatpush2.msra.mxu0 0.0
    %4219 = vmatprep.subr.mxu0 0.0
    %4220 = vmatpush2.msra.mxu0 0.0
    %4221 = vmatprep.subr.mxu0 0.0
    %4222 = vmatpush2.msra.mxu0 0.0
    %4223 = vmatprep.subr.mxu0 0.0
    %4224 = vmatpush2.msra.mxu0 0.0
    %4225 = vmatprep.mubr.f32.mxu0 0.0
    %4226 = vmatmul.mubr.f32.gmra.mxu0 %v4159
    %v4227 = vpop.f32.mrf.mxu0
    %v4228 = vadd.f32 0.0, %v4227
    %v4229 = vpop.f32.mrf.mxu0
    %v4230 = vadd.f32 0.0, %v4229
    %4231 = vdwg.mxu0
    %4232 = vmatprep.subr.mxu0 %v271
    %4233 = vmatpush1.msra.mxu0 %v270
    %4234 = vmatprep.subr.mxu0 %v267
    %4235 = vmatpush1.msra.mxu0 %v266
    %4236 = vmatprep.subr.mxu0 %v263
    %4237 = vmatpush1.msra.mxu0 %v262
    %4238 = vmatprep.subr.mxu0 %v259
    %4239 = vmatpush1.msra.mxu0 %v258
    %4240 = vmatprep.subr.mxu0 %v255
    %4241 = vmatpush1.msra.mxu0 %v254
    %4242 = vmatprep.subr.mxu0 %v251
    %4243 = vmatpush1.msra.mxu0 %v250
    %4244 = vmatprep.subr.mxu0 %v247
    %4245 = vmatpush1.msra.mxu0 %v246
    %4246 = vmatprep.subr.mxu0 %v243
    %4247 = vmatpush1.msra.mxu0 %v242
    %4248 = vmatprep.subr.mxu0 %v239
    %4249 = vmatpush1.msra.mxu0 %v238
    %4250 = vmatprep.subr.mxu0 %v235
    %4251 = vmatpush1.msra.mxu0 %v234
    %4252 = vmatprep.subr.mxu0 %v231
    %4253 = vmatpush1.msra.mxu0 %v230
    %4254 = vmatprep.subr.mxu0 %v227
    %4255 = vmatpush1.msra.mxu0 %v226
    %4256 = vmatprep.subr.mxu0 %v223
    %4257 = vmatpush1.msra.mxu0 %v222
    %4258 = vmatprep.subr.mxu0 %v219
    %4259 = vmatpush1.msra.mxu0 %v218
    %4260 = vmatprep.subr.mxu0 %v215
    %4261 = vmatpush1.msra.mxu0 %v214
    %4262 = vmatprep.subr.mxu0 %v211
    %4263 = vmatpush1.msra.mxu0 %v210
    %4264 = vmatprep.subr.mxu0 0.0
    %4265 = vmatpush2.msra.mxu0 0.0
    %4266 = vmatprep.subr.mxu0 0.0
    %4267 = vmatpush2.msra.mxu0 0.0
    %4268 = vmatprep.subr.mxu0 0.0
    %4269 = vmatpush2.msra.mxu0 0.0
    %4270 = vmatprep.subr.mxu0 0.0
    %4271 = vmatpush2.msra.mxu0 0.0
    %4272 = vmatprep.subr.mxu0 0.0
    %4273 = vmatpush2.msra.mxu0 0.0
    %4274 = vmatprep.subr.mxu0 0.0
    %4275 = vmatpush2.msra.mxu0 0.0
    %4276 = vmatprep.subr.mxu0 0.0
    %4277 = vmatpush2.msra.mxu0 0.0
    %4278 = vmatprep.subr.mxu0 0.0
    %4279 = vmatpush2.msra.mxu0 0.0
    %4280 = vmatprep.subr.mxu0 0.0
    %4281 = vmatpush2.msra.mxu0 0.0
    %4282 = vmatprep.subr.mxu0 0.0
    %4283 = vmatpush2.msra.mxu0 0.0
    %4284 = vmatprep.subr.mxu0 0.0
    %4285 = vmatpush2.msra.mxu0 0.0
    %4286 = vmatprep.subr.mxu0 0.0
    %4287 = vmatpush2.msra.mxu0 0.0
    %4288 = vmatprep.subr.mxu0 0.0
    %4289 = vmatpush2.msra.mxu0 0.0
    %4290 = vmatprep.subr.mxu0 0.0
    %4291 = vmatpush2.msra.mxu0 0.0
    %4292 = vmatprep.subr.mxu0 0.0
    %4293 = vmatpush2.msra.mxu0 0.0
    %4294 = vmatprep.subr.mxu0 0.0
    %4295 = vmatpush2.msra.mxu0 0.0
    %4296 = vmatprep.mubr.f32.mxu0 0.0
    %4297 = vmatmul.mubr.f32.gmra.mxu0 %v4159
    %v4298 = vpop.f32.mrf.mxu0
    %v4299 = vadd.f32 0.0, %v4298
    %v4300 = vpop.f32.mrf.mxu0
    %v4301 = vadd.f32 0.0, %v4300
    %4302 = vdwg.mxu0
    %v4307 = vrot.slane %v4228, 4
    %v4308 = vrot.slane %v4230, 4
    %v4309 = vrot.slane %v4299, 4
    %v4310 = vrot.slane %v4301, 4
    %v4315 = vadd.f32 %v3702, %v4307
    %v4316 = vadd.f32 %v3704, %v4308
    %v4317 = vadd.f32 %v3779, %v4309
    %v4318 = vadd.f32 %v3781, %v4310
    %v4319 = vxor.u32 %v4315, 2147483648
    %v4320 = vmul.f32 %v4319, 1.442695
    %v4321 = vpow.pop %v4320
    %v4322 = vadd.f32 %v4321, 1.0
    %v4323 = vrcp.pop %v4322
    %v4324 = vmul.f32 1.0, %v4323
    %v4325 = vxor.u32 %v4316, 2147483648
    %v4326 = vmul.f32 %v4325, 1.442695
    %v4327 = vpow.pop %v4326
    %v4328 = vadd.f32 %v4327, 1.0
    %v4329 = vrcp.pop %v4328
    %v4330 = vmul.f32 1.0, %v4329
    %v4331 = vtanh.pop %v4317
    %v4332 = vxor.u32 %v4318, 2147483648
    %v4333 = vmul.f32 %v4332, 1.442695
    %v4334 = vpow.pop %v4333
    %v4335 = vadd.f32 %v4334, 1.0
    %v4336 = vrcp.pop %v4335
    %v4337 = vmul.f32 1.0, %v4336
    %v4339 = vrot.slane %v4143, 6
    %v4341 = vmul.f32 %v4330, %v4339
    %v4342 = vmul.f32 %v4324, %v4331
    %v4343 = vadd.f32 %v4341, %v4342
    %v4344 = vtanh.pop %v4343
    %v4345 = vmul.f32 %v4337, %v4344
    %v4346 = vtanh.pop %v4345
    %v4348 = vcombine.high %v4346, %v4346
    %v4350 = vunpack.c.l.s4 1983009808
    %v4351 = vunpack.c.0.s8 %v4350
    %v4352 = vlaneseq
    %v4353 = vshrl.u32 %v4352, 7
    %v4354 = vsub.s32 %v4351, %v4353
    %v4355 = vrot.slane %v4348, %v4354
    %4357 = vst [vmem:[#allocation4 + $0x4] sm:$0x3] %v4355
    %v4359 = vrot.slane %v4345, 4
    %4361 = vmatprep.subr.mxu0 %v269
    %4362 = vmatpush1.msra.mxu0 %v268
    %4363 = vmatprep.subr.mxu0 %v265
    %4364 = vmatpush1.msra.mxu0 %v264
    %4365 = vmatprep.subr.mxu0 %v261
    %4366 = vmatpush1.msra.mxu0 %v260
    %4367 = vmatprep.subr.mxu0 %v257
    %4368 = vmatpush1.msra.mxu0 %v256
    %4369 = vmatprep.subr.mxu0 %v253
    %4370 = vmatpush1.msra.mxu0 %v252
    %4371 = vmatprep.subr.mxu0 %v249
    %4372 = vmatpush1.msra.mxu0 %v248
    %4373 = vmatprep.subr.mxu0 %v245
    %4374 = vmatpush1.msra.mxu0 %v244
    %4375 = vmatprep.subr.mxu0 %v241
    %4376 = vmatpush1.msra.mxu0 %v240
    %4377 = vmatprep.subr.mxu0 %v237
    %4378 = vmatpush1.msra.mxu0 %v236
    %4379 = vmatprep.subr.mxu0 %v233
    %4380 = vmatpush1.msra.mxu0 %v232
    %4381 = vmatprep.subr.mxu0 %v229
    %4382 = vmatpush1.msra.mxu0 %v228
    %4383 = vmatprep.subr.mxu0 %v225
    %4384 = vmatpush1.msra.mxu0 %v224
    %4385 = vmatprep.subr.mxu0 %v221
    %4386 = vmatpush1.msra.mxu0 %v220
    %4387 = vmatprep.subr.mxu0 %v217
    %4388 = vmatpush1.msra.mxu0 %v216
    %4389 = vmatprep.subr.mxu0 %v213
    %4390 = vmatpush1.msra.mxu0 %v212
    %4391 = vmatprep.subr.mxu0 %v209
    %4392 = vmatpush1.msra.mxu0 %v208
    %4393 = vmatprep.subr.mxu0 0.0
    %4394 = vmatpush2.msra.mxu0 0.0
    %4395 = vmatprep.subr.mxu0 0.0
    %4396 = vmatpush2.msra.mxu0 0.0
    %4397 = vmatprep.subr.mxu0 0.0
    %4398 = vmatpush2.msra.mxu0 0.0
    %4399 = vmatprep.subr.mxu0 0.0
    %4400 = vmatpush2.msra.mxu0 0.0
    %4401 = vmatprep.subr.mxu0 0.0
    %4402 = vmatpush2.msra.mxu0 0.0
    %4403 = vmatprep.subr.mxu0 0.0
    %4404 = vmatpush2.msra.mxu0 0.0
    %4405 = vmatprep.subr.mxu0 0.0
    %4406 = vmatpush2.msra.mxu0 0.0
    %4407 = vmatprep.subr.mxu0 0.0
    %4408 = vmatpush2.msra.mxu0 0.0
    %4409 = vmatprep.subr.mxu0 0.0
    %4410 = vmatpush2.msra.mxu0 0.0
    %4411 = vmatprep.subr.mxu0 0.0
    %4412 = vmatpush2.msra.mxu0 0.0
    %4413 = vmatprep.subr.mxu0 0.0
    %4414 = vmatpush2.msra.mxu0 0.0
    %4415 = vmatprep.subr.mxu0 0.0
    %4416 = vmatpush2.msra.mxu0 0.0
    %4417 = vmatprep.subr.mxu0 0.0
    %4418 = vmatpush2.msra.mxu0 0.0
    %4419 = vmatprep.subr.mxu0 0.0
    %4420 = vmatpush2.msra.mxu0 0.0
    %4421 = vmatprep.subr.mxu0 0.0
    %4422 = vmatpush2.msra.mxu0 0.0
    %4423 = vmatprep.subr.mxu0 0.0
    %4424 = vmatpush2.msra.mxu0 0.0
    %4425 = vmatprep.mubr.f32.mxu0 0.0
    %4426 = vmatmul.mubr.f32.gmra.mxu0 %v4359
    %v4427 = vpop.f32.mrf.mxu0
    %v4428 = vadd.f32 0.0, %v4427
    %v4429 = vpop.f32.mrf.mxu0
    %v4430 = vadd.f32 0.0, %v4429
    %4431 = vdwg.mxu0
    %4432 = vmatprep.subr.mxu0 %v271
    %4433 = vmatpush1.msra.mxu0 %v270
    %4434 = vmatprep.subr.mxu0 %v267
    %4435 = vmatpush1.msra.mxu0 %v266
    %4436 = vmatprep.subr.mxu0 %v263
    %4437 = vmatpush1.msra.mxu0 %v262
    %4438 = vmatprep.subr.mxu0 %v259
    %4439 = vmatpush1.msra.mxu0 %v258
    %4440 = vmatprep.subr.mxu0 %v255
    %4441 = vmatpush1.msra.mxu0 %v254
    %4442 = vmatprep.subr.mxu0 %v251
    %4443 = vmatpush1.msra.mxu0 %v250
    %4444 = vmatprep.subr.mxu0 %v247
    %4445 = vmatpush1.msra.mxu0 %v246
    %4446 = vmatprep.subr.mxu0 %v243
    %4447 = vmatpush1.msra.mxu0 %v242
    %4448 = vmatprep.subr.mxu0 %v239
    %4449 = vmatpush1.msra.mxu0 %v238
    %4450 = vmatprep.subr.mxu0 %v235
    %4451 = vmatpush1.msra.mxu0 %v234
    %4452 = vmatprep.subr.mxu0 %v231
    %4453 = vmatpush1.msra.mxu0 %v230
    %4454 = vmatprep.subr.mxu0 %v227
    %4455 = vmatpush1.msra.mxu0 %v226
    %4456 = vmatprep.subr.mxu0 %v223
    %4457 = vmatpush1.msra.mxu0 %v222
    %4458 = vmatprep.subr.mxu0 %v219
    %4459 = vmatpush1.msra.mxu0 %v218
    %4460 = vmatprep.subr.mxu0 %v215
    %4461 = vmatpush1.msra.mxu0 %v214
    %4462 = vmatprep.subr.mxu0 %v211
    %4463 = vmatpush1.msra.mxu0 %v210
    %4464 = vmatprep.subr.mxu0 0.0
    %4465 = vmatpush2.msra.mxu0 0.0
    %4466 = vmatprep.subr.mxu0 0.0
    %4467 = vmatpush2.msra.mxu0 0.0
    %4468 = vmatprep.subr.mxu0 0.0
    %4469 = vmatpush2.msra.mxu0 0.0
    %4470 = vmatprep.subr.mxu0 0.0
    %4471 = vmatpush2.msra.mxu0 0.0
    %4472 = vmatprep.subr.mxu0 0.0
    %4473 = vmatpush2.msra.mxu0 0.0
    %4474 = vmatprep.subr.mxu0 0.0
    %4475 = vmatpush2.msra.mxu0 0.0
    %4476 = vmatprep.subr.mxu0 0.0
    %4477 = vmatpush2.msra.mxu0 0.0
    %4478 = vmatprep.subr.mxu0 0.0
    %4479 = vmatpush2.msra.mxu0 0.0
    %4480 = vmatprep.subr.mxu0 0.0
    %4481 = vmatpush2.msra.mxu0 0.0
    %4482 = vmatprep.subr.mxu0 0.0
    %4483 = vmatpush2.msra.mxu0 0.0
    %4484 = vmatprep.subr.mxu0 0.0
    %4485 = vmatpush2.msra.mxu0 0.0
    %4486 = vmatprep.subr.mxu0 0.0
    %4487 = vmatpush2.msra.mxu0 0.0
    %4488 = vmatprep.subr.mxu0 0.0
    %4489 = vmatpush2.msra.mxu0 0.0
    %4490 = vmatprep.subr.mxu0 0.0
    %4491 = vmatpush2.msra.mxu0 0.0
    %4492 = vmatprep.subr.mxu0 0.0
    %4493 = vmatpush2.msra.mxu0 0.0
    %4494 = vmatprep.subr.mxu0 0.0
    %4495 = vmatpush2.msra.mxu0 0.0
    %4496 = vmatprep.mubr.f32.mxu0 0.0
    %4497 = vmatmul.mubr.f32.gmra.mxu0 %v4359
    %v4498 = vpop.f32.mrf.mxu0
    %v4499 = vadd.f32 0.0, %v4498
    %v4500 = vpop.f32.mrf.mxu0
    %v4501 = vadd.f32 0.0, %v4500
    %4502 = vdwg.mxu0
    %v4507 = vrot.slane %v4428, 2
    %v4508 = vrot.slane %v4430, 2
    %v4509 = vrot.slane %v4499, 2
    %v4510 = vrot.slane %v4501, 2
    %v4515 = vadd.f32 %v3702, %v4507
    %v4516 = vadd.f32 %v3704, %v4508
    %v4517 = vadd.f32 %v3779, %v4509
    %v4518 = vadd.f32 %v3781, %v4510
    %v4519 = vxor.u32 %v4515, 2147483648
    %v4520 = vmul.f32 %v4519, 1.442695
    %v4521 = vpow.pop %v4520
    %v4522 = vadd.f32 %v4521, 1.0
    %v4523 = vrcp.pop %v4522
    %v4524 = vmul.f32 1.0, %v4523
    %v4525 = vxor.u32 %v4516, 2147483648
    %v4526 = vmul.f32 %v4525, 1.442695
    %v4527 = vpow.pop %v4526
    %v4528 = vadd.f32 %v4527, 1.0
    %v4529 = vrcp.pop %v4528
    %v4530 = vmul.f32 1.0, %v4529
    %v4531 = vtanh.pop %v4517
    %v4532 = vxor.u32 %v4518, 2147483648
    %v4533 = vmul.f32 %v4532, 1.442695
    %v4534 = vpow.pop %v4533
    %v4535 = vadd.f32 %v4534, 1.0
    %v4536 = vrcp.pop %v4535
    %v4537 = vmul.f32 1.0, %v4536
    %v4539 = vrot.slane %v4343, 6
    %v4541 = vmul.f32 %v4530, %v4539
    %v4542 = vmul.f32 %v4524, %v4531
    %v4543 = vadd.f32 %v4541, %v4542
    %v4544 = vtanh.pop %v4543
    %v4545 = vmul.f32 %v4537, %v4544
    %v4546 = vtanh.pop %v4545
    %v4548 = vcombine.high %v4546, %v4546
    %v4550 = vunpack.c.l.s4 1983009808
    %v4551 = vunpack.c.0.s8 %v4550
    %v4552 = vlaneseq
    %v4553 = vshrl.u32 %v4552, 7
    %v4554 = vsub.s32 %v4551, %v4553
    %v4555 = vrot.slane %v4548, %v4554
    %v4556 = vcombine.high %v4555, %v4555
    %4558 = vst [vmem:[#allocation4 + $0x6] sm:$0x3] %v4556
    %v4560 = vrot.slane %v4545, 6
    %4562 = vmatprep.subr.mxu0 %v269
    %4563 = vmatpush1.msra.mxu0 %v268
    %4564 = vmatprep.subr.mxu0 %v265
    %4565 = vmatpush1.msra.mxu0 %v264
    %4566 = vmatprep.subr.mxu0 %v261
    %4567 = vmatpush1.msra.mxu0 %v260
    %4568 = vmatprep.subr.mxu0 %v257
    %4569 = vmatpush1.msra.mxu0 %v256
    %4570 = vmatprep.subr.mxu0 %v253
    %4571 = vmatpush1.msra.mxu0 %v252
    %4572 = vmatprep.subr.mxu0 %v249
    %4573 = vmatpush1.msra.mxu0 %v248
    %4574 = vmatprep.subr.mxu0 %v245
    %4575 = vmatpush1.msra.mxu0 %v244
    %4576 = vmatprep.subr.mxu0 %v241
    %4577 = vmatpush1.msra.mxu0 %v240
    %4578 = vmatprep.subr.mxu0 %v237
    %4579 = vmatpush1.msra.mxu0 %v236
    %4580 = vmatprep.subr.mxu0 %v233
    %4581 = vmatpush1.msra.mxu0 %v232
    %4582 = vmatprep.subr.mxu0 %v229
    %4583 = vmatpush1.msra.mxu0 %v228
    %4584 = vmatprep.subr.mxu0 %v225
    %4585 = vmatpush1.msra.mxu0 %v224
    %4586 = vmatprep.subr.mxu0 %v221
    %4587 = vmatpush1.msra.mxu0 %v220
    %4588 = vmatprep.subr.mxu0 %v217
    %4589 = vmatpush1.msra.mxu0 %v216
    %4590 = vmatprep.subr.mxu0 %v213
    %4591 = vmatpush1.msra.mxu0 %v212
    %4592 = vmatprep.subr.mxu0 %v209
    %4593 = vmatpush1.msra.mxu0 %v208
    %4594 = vmatprep.subr.mxu0 0.0
    %4595 = vmatpush2.msra.mxu0 0.0
    %4596 = vmatprep.subr.mxu0 0.0
    %4597 = vmatpush2.msra.mxu0 0.0
    %4598 = vmatprep.subr.mxu0 0.0
    %4599 = vmatpush2.msra.mxu0 0.0
    %4600 = vmatprep.subr.mxu0 0.0
    %4601 = vmatpush2.msra.mxu0 0.0
    %4602 = vmatprep.subr.mxu0 0.0
    %4603 = vmatpush2.msra.mxu0 0.0
    %4604 = vmatprep.subr.mxu0 0.0
    %4605 = vmatpush2.msra.mxu0 0.0
    %4606 = vmatprep.subr.mxu0 0.0
    %4607 = vmatpush2.msra.mxu0 0.0
    %4608 = vmatprep.subr.mxu0 0.0
    %4609 = vmatpush2.msra.mxu0 0.0
    %4610 = vmatprep.subr.mxu0 0.0
    %4611 = vmatpush2.msra.mxu0 0.0
    %4612 = vmatprep.subr.mxu0 0.0
    %4613 = vmatpush2.msra.mxu0 0.0
    %4614 = vmatprep.subr.mxu0 0.0
    %4615 = vmatpush2.msra.mxu0 0.0
    %4616 = vmatprep.subr.mxu0 0.0
    %4617 = vmatpush2.msra.mxu0 0.0
    %4618 = vmatprep.subr.mxu0 0.0
    %4619 = vmatpush2.msra.mxu0 0.0
    %4620 = vmatprep.subr.mxu0 0.0
    %4621 = vmatpush2.msra.mxu0 0.0
    %4622 = vmatprep.subr.mxu0 0.0
    %4623 = vmatpush2.msra.mxu0 0.0
    %4624 = vmatprep.subr.mxu0 0.0
    %4625 = vmatpush2.msra.mxu0 0.0
    %4626 = vmatprep.mubr.f32.mxu0 0.0
    %4627 = vmatmul.mubr.f32.gmra.mxu0 %v4560
    %v4628 = vpop.f32.mrf.mxu0
    %v4629 = vadd.f32 0.0, %v4628
    %v4630 = vpop.f32.mrf.mxu0
    %v4631 = vadd.f32 0.0, %v4630
    %4632 = vdwg.mxu0
    %4633 = vmatprep.subr.mxu0 %v271
    %4634 = vmatpush1.msra.mxu0 %v270
    %4635 = vmatprep.subr.mxu0 %v267
    %4636 = vmatpush1.msra.mxu0 %v266
    %4637 = vmatprep.subr.mxu0 %v263
    %4638 = vmatpush1.msra.mxu0 %v262
    %4639 = vmatprep.subr.mxu0 %v259
    %4640 = vmatpush1.msra.mxu0 %v258
    %4641 = vmatprep.subr.mxu0 %v255
    %4642 = vmatpush1.msra.mxu0 %v254
    %4643 = vmatprep.subr.mxu0 %v251
    %4644 = vmatpush1.msra.mxu0 %v250
    %4645 = vmatprep.subr.mxu0 %v247
    %4646 = vmatpush1.msra.mxu0 %v246
    %4647 = vmatprep.subr.mxu0 %v243
    %4648 = vmatpush1.msra.mxu0 %v242
    %4649 = vmatprep.subr.mxu0 %v239
    %4650 = vmatpush1.msra.mxu0 %v238
    %4651 = vmatprep.subr.mxu0 %v235
    %4652 = vmatpush1.msra.mxu0 %v234
    %4653 = vmatprep.subr.mxu0 %v231
    %4654 = vmatpush1.msra.mxu0 %v230
    %4655 = vmatprep.subr.mxu0 %v227
    %4656 = vmatpush1.msra.mxu0 %v226
    %4657 = vmatprep.subr.mxu0 %v223
    %4658 = vmatpush1.msra.mxu0 %v222
    %4659 = vmatprep.subr.mxu0 %v219
    %4660 = vmatpush1.msra.mxu0 %v218
    %4661 = vmatprep.subr.mxu0 %v215
    %4662 = vmatpush1.msra.mxu0 %v214
    %4663 = vmatprep.subr.mxu0 %v211
    %4664 = vmatpush1.msra.mxu0 %v210
    %4665 = vmatprep.subr.mxu0 0.0
    %4666 = vmatpush2.msra.mxu0 0.0
    %4667 = vmatprep.subr.mxu0 0.0
    %4668 = vmatpush2.msra.mxu0 0.0
    %4669 = vmatprep.subr.mxu0 0.0
    %4670 = vmatpush2.msra.mxu0 0.0
    %4671 = vmatprep.subr.mxu0 0.0
    %4672 = vmatpush2.msra.mxu0 0.0
    %4673 = vmatprep.subr.mxu0 0.0
    %4674 = vmatpush2.msra.mxu0 0.0
    %4675 = vmatprep.subr.mxu0 0.0
    %4676 = vmatpush2.msra.mxu0 0.0
    %4677 = vmatprep.subr.mxu0 0.0
    %4678 = vmatpush2.msra.mxu0 0.0
    %4679 = vmatprep.subr.mxu0 0.0
    %4680 = vmatpush2.msra.mxu0 0.0
    %4681 = vmatprep.subr.mxu0 0.0
    %4682 = vmatpush2.msra.mxu0 0.0
    %4683 = vmatprep.subr.mxu0 0.0
    %4684 = vmatpush2.msra.mxu0 0.0
    %4685 = vmatprep.subr.mxu0 0.0
    %4686 = vmatpush2.msra.mxu0 0.0
    %4687 = vmatprep.subr.mxu0 0.0
    %4688 = vmatpush2.msra.mxu0 0.0
    %4689 = vmatprep.subr.mxu0 0.0
    %4690 = vmatpush2.msra.mxu0 0.0
    %4691 = vmatprep.subr.mxu0 0.0
    %4692 = vmatpush2.msra.mxu0 0.0
    %4693 = vmatprep.subr.mxu0 0.0
    %4694 = vmatpush2.msra.mxu0 0.0
    %4695 = vmatprep.subr.mxu0 0.0
    %4696 = vmatpush2.msra.mxu0 0.0
    %4697 = vmatprep.mubr.f32.mxu0 0.0
    %4698 = vmatmul.mubr.f32.gmra.mxu0 %v4560
    %v4699 = vpop.f32.mrf.mxu0
    %v4700 = vadd.f32 0.0, %v4699
    %v4701 = vpop.f32.mrf.mxu0
    %v4702 = vadd.f32 0.0, %v4701
    %4703 = vdwg.mxu0
    %v4704 = vadd.f32 %v3708, %v4629
    %v4705 = vadd.f32 %v3710, %v4631
    %v4706 = vadd.f32 %v3785, %v4700
    %v4707 = vadd.f32 %v3787, %v4702
    %v4708 = vxor.u32 %v4704, 2147483648
    %v4709 = vmul.f32 %v4708, 1.442695
    %v4710 = vpow.pop %v4709
    %v4711 = vadd.f32 %v4710, 1.0
    %v4712 = vrcp.pop %v4711
    %v4713 = vmul.f32 1.0, %v4712
    %v4714 = vxor.u32 %v4705, 2147483648
    %v4715 = vmul.f32 %v4714, 1.442695
    %v4716 = vpow.pop %v4715
    %v4717 = vadd.f32 %v4716, 1.0
    %v4718 = vrcp.pop %v4717
    %v4719 = vmul.f32 1.0, %v4718
    %v4720 = vtanh.pop %v4706
    %v4721 = vxor.u32 %v4707, 2147483648
    %v4722 = vmul.f32 %v4721, 1.442695
    %v4723 = vpow.pop %v4722
    %v4724 = vadd.f32 %v4723, 1.0
    %v4725 = vrcp.pop %v4724
    %v4726 = vmul.f32 1.0, %v4725
    %v4728 = vrot.slane %v4543, 6
    %v4730 = vmul.f32 %v4719, %v4728
    %v4731 = vmul.f32 %v4713, %v4720
    %v4732 = vadd.f32 %v4730, %v4731
    %v4733 = vtanh.pop %v4732
    %v4734 = vmul.f32 %v4726, %v4733
    %v4735 = vtanh.pop %v4734
    %4736 = vst [vmem:[#allocation4 + $0x8] sm:$0x3] %v4735
    %4737 = vmatprep.subr.mxu0 %v269
    %4738 = vmatpush1.msra.mxu0 %v268
    %4739 = vmatprep.subr.mxu0 %v265
    %4740 = vmatpush1.msra.mxu0 %v264
    %4741 = vmatprep.subr.mxu0 %v261
    %4742 = vmatpush1.msra.mxu0 %v260
    %4743 = vmatprep.subr.mxu0 %v257
    %4744 = vmatpush1.msra.mxu0 %v256
    %4745 = vmatprep.subr.mxu0 %v253
    %4746 = vmatpush1.msra.mxu0 %v252
    %4747 = vmatprep.subr.mxu0 %v249
    %4748 = vmatpush1.msra.mxu0 %v248
    %4749 = vmatprep.subr.mxu0 %v245
    %4750 = vmatpush1.msra.mxu0 %v244
    %4751 = vmatprep.subr.mxu0 %v241
    %4752 = vmatpush1.msra.mxu0 %v240
    %4753 = vmatprep.subr.mxu0 %v237
    %4754 = vmatpush1.msra.mxu0 %v236
    %4755 = vmatprep.subr.mxu0 %v233
    %4756 = vmatpush1.msra.mxu0 %v232
    %4757 = vmatprep.subr.mxu0 %v229
    %4758 = vmatpush1.msra.mxu0 %v228
    %4759 = vmatprep.subr.mxu0 %v225
    %4760 = vmatpush1.msra.mxu0 %v224
    %4761 = vmatprep.subr.mxu0 %v221
    %4762 = vmatpush1.msra.mxu0 %v220
    %4763 = vmatprep.subr.mxu0 %v217
    %4764 = vmatpush1.msra.mxu0 %v216
    %4765 = vmatprep.subr.mxu0 %v213
    %4766 = vmatpush1.msra.mxu0 %v212
    %4767 = vmatprep.subr.mxu0 %v209
    %4768 = vmatpush1.msra.mxu0 %v208
    %4769 = vmatprep.subr.mxu0 0.0
    %4770 = vmatpush2.msra.mxu0 0.0
    %4771 = vmatprep.subr.mxu0 0.0
    %4772 = vmatpush2.msra.mxu0 0.0
    %4773 = vmatprep.subr.mxu0 0.0
    %4774 = vmatpush2.msra.mxu0 0.0
    %4775 = vmatprep.subr.mxu0 0.0
    %4776 = vmatpush2.msra.mxu0 0.0
    %4777 = vmatprep.subr.mxu0 0.0
    %4778 = vmatpush2.msra.mxu0 0.0
    %4779 = vmatprep.subr.mxu0 0.0
    %4780 = vmatpush2.msra.mxu0 0.0
    %4781 = vmatprep.subr.mxu0 0.0
    %4782 = vmatpush2.msra.mxu0 0.0
    %4783 = vmatprep.subr.mxu0 0.0
    %4784 = vmatpush2.msra.mxu0 0.0
    %4785 = vmatprep.subr.mxu0 0.0
    %4786 = vmatpush2.msra.mxu0 0.0
    %4787 = vmatprep.subr.mxu0 0.0
    %4788 = vmatpush2.msra.mxu0 0.0
    %4789 = vmatprep.subr.mxu0 0.0
    %4790 = vmatpush2.msra.mxu0 0.0
    %4791 = vmatprep.subr.mxu0 0.0
    %4792 = vmatpush2.msra.mxu0 0.0
    %4793 = vmatprep.subr.mxu0 0.0
    %4794 = vmatpush2.msra.mxu0 0.0
    %4795 = vmatprep.subr.mxu0 0.0
    %4796 = vmatpush2.msra.mxu0 0.0
    %4797 = vmatprep.subr.mxu0 0.0
    %4798 = vmatpush2.msra.mxu0 0.0
    %4799 = vmatprep.subr.mxu0 0.0
    %4800 = vmatpush2.msra.mxu0 0.0
    %4801 = vmatprep.mubr.f32.mxu0 0.0
    %4802 = vmatmul.mubr.f32.gmra.mxu0 %v4734
    %v4803 = vpop.f32.mrf.mxu0
    %v4804 = vadd.f32 0.0, %v4803
    %v4805 = vpop.f32.mrf.mxu0
    %v4806 = vadd.f32 0.0, %v4805
    %4807 = vdwg.mxu0
    %4808 = vmatprep.subr.mxu0 %v271
    %4809 = vmatpush1.msra.mxu0 %v270
    %4810 = vmatprep.subr.mxu0 %v267
    %4811 = vmatpush1.msra.mxu0 %v266
    %4812 = vmatprep.subr.mxu0 %v263
    %4813 = vmatpush1.msra.mxu0 %v262
    %4814 = vmatprep.subr.mxu0 %v259
    %4815 = vmatpush1.msra.mxu0 %v258
    %4816 = vmatprep.subr.mxu0 %v255
    %4817 = vmatpush1.msra.mxu0 %v254
    %4818 = vmatprep.subr.mxu0 %v251
    %4819 = vmatpush1.msra.mxu0 %v250
    %4820 = vmatprep.subr.mxu0 %v247
    %4821 = vmatpush1.msra.mxu0 %v246
    %4822 = vmatprep.subr.mxu0 %v243
    %4823 = vmatpush1.msra.mxu0 %v242
    %4824 = vmatprep.subr.mxu0 %v239
    %4825 = vmatpush1.msra.mxu0 %v238
    %4826 = vmatprep.subr.mxu0 %v235
    %4827 = vmatpush1.msra.mxu0 %v234
    %4828 = vmatprep.subr.mxu0 %v231
    %4829 = vmatpush1.msra.mxu0 %v230
    %4830 = vmatprep.subr.mxu0 %v227
    %4831 = vmatpush1.msra.mxu0 %v226
    %4832 = vmatprep.subr.mxu0 %v223
    %4833 = vmatpush1.msra.mxu0 %v222
    %4834 = vmatprep.subr.mxu0 %v219
    %4835 = vmatpush1.msra.mxu0 %v218
    %4836 = vmatprep.subr.mxu0 %v215
    %4837 = vmatpush1.msra.mxu0 %v214
    %4838 = vmatprep.subr.mxu0 %v211
    %4839 = vmatpush1.msra.mxu0 %v210
    %4840 = vmatprep.subr.mxu0 0.0
    %4841 = vmatpush2.msra.mxu0 0.0
    %4842 = vmatprep.subr.mxu0 0.0
    %4843 = vmatpush2.msra.mxu0 0.0
    %4844 = vmatprep.subr.mxu0 0.0
    %4845 = vmatpush2.msra.mxu0 0.0
    %4846 = vmatprep.subr.mxu0 0.0
    %4847 = vmatpush2.msra.mxu0 0.0
    %4848 = vmatprep.subr.mxu0 0.0
    %4849 = vmatpush2.msra.mxu0 0.0
    %4850 = vmatprep.subr.mxu0 0.0
    %4851 = vmatpush2.msra.mxu0 0.0
    %4852 = vmatprep.subr.mxu0 0.0
    %4853 = vmatpush2.msra.mxu0 0.0
    %4854 = vmatprep.subr.mxu0 0.0
    %4855 = vmatpush2.msra.mxu0 0.0
    %4856 = vmatprep.subr.mxu0 0.0
    %4857 = vmatpush2.msra.mxu0 0.0
    %4858 = vmatprep.subr.mxu0 0.0
    %4859 = vmatpush2.msra.mxu0 0.0
    %4860 = vmatprep.subr.mxu0 0.0
    %4861 = vmatpush2.msra.mxu0 0.0
    %4862 = vmatprep.subr.mxu0 0.0
    %4863 = vmatpush2.msra.mxu0 0.0
    %4864 = vmatprep.subr.mxu0 0.0
    %4865 = vmatpush2.msra.mxu0 0.0
    %4866 = vmatprep.subr.mxu0 0.0
    %4867 = vmatpush2.msra.mxu0 0.0
    %4868 = vmatprep.subr.mxu0 0.0
    %4869 = vmatpush2.msra.mxu0 0.0
    %4870 = vmatprep.subr.mxu0 0.0
    %4871 = vmatpush2.msra.mxu0 0.0
    %4872 = vmatprep.mubr.f32.mxu0 0.0
    %4873 = vmatmul.mubr.f32.gmra.mxu0 %v4734
    %v4874 = vpop.f32.mrf.mxu0
    %v4875 = vadd.f32 0.0, %v4874
    %v4876 = vpop.f32.mrf.mxu0
    %v4877 = vadd.f32 0.0, %v4876
    %4878 = vdwg.mxu0
    %v4883 = vrot.slane %v4804, 6
    %v4884 = vrot.slane %v4806, 6
    %v4885 = vrot.slane %v4875, 6
    %v4886 = vrot.slane %v4877, 6
    %v4891 = vadd.f32 %v3708, %v4883
    %v4892 = vadd.f32 %v3710, %v4884
    %v4893 = vadd.f32 %v3785, %v4885
    %v4894 = vadd.f32 %v3787, %v4886
    %v4895 = vxor.u32 %v4891, 2147483648
    %v4896 = vmul.f32 %v4895, 1.442695
    %v4897 = vpow.pop %v4896
    %v4898 = vadd.f32 %v4897, 1.0
    %v4899 = vrcp.pop %v4898
    %v4900 = vmul.f32 1.0, %v4899
    %v4901 = vxor.u32 %v4892, 2147483648
    %v4902 = vmul.f32 %v4901, 1.442695
    %v4903 = vpow.pop %v4902
    %v4904 = vadd.f32 %v4903, 1.0
    %v4905 = vrcp.pop %v4904
    %v4906 = vmul.f32 1.0, %v4905
    %v4907 = vtanh.pop %v4893
    %v4908 = vxor.u32 %v4894, 2147483648
    %v4909 = vmul.f32 %v4908, 1.442695
    %v4910 = vpow.pop %v4909
    %v4911 = vadd.f32 %v4910, 1.0
    %v4912 = vrcp.pop %v4911
    %v4913 = vmul.f32 1.0, %v4912
    %v4915 = vrot.slane %v4732, 6
    %v4917 = vmul.f32 %v4906, %v4915
    %v4918 = vmul.f32 %v4900, %v4907
    %v4919 = vadd.f32 %v4917, %v4918
    %v4920 = vtanh.pop %v4919
    %v4921 = vmul.f32 %v4913, %v4920
    %v4922 = vtanh.pop %v4921
    %v4925 = vunpack.c.l.s4 1983009808
    %v4926 = vunpack.c.0.s8 %v4925
    %v4927 = vlaneseq
    %v4928 = vshrl.u32 %v4927, 7
    %v4929 = vsub.s32 %v4926, %v4928
    %v4930 = vrot.slane %v4922, %v4929
    %v4931 = vcombine.high %v4930, %v4930
    %4933 = vst [vmem:[#allocation4 + $0xa] sm:$0x3] %v4931
    %v4935 = vrot.slane %v4921, 2
    %4937 = vmatprep.subr.mxu0 %v269
    %4938 = vmatpush1.msra.mxu0 %v268
    %4939 = vmatprep.subr.mxu0 %v265
    %4940 = vmatpush1.msra.mxu0 %v264
    %4941 = vmatprep.subr.mxu0 %v261
    %4942 = vmatpush1.msra.mxu0 %v260
    %4943 = vmatprep.subr.mxu0 %v257
    %4944 = vmatpush1.msra.mxu0 %v256
    %4945 = vmatprep.subr.mxu0 %v253
    %4946 = vmatpush1.msra.mxu0 %v252
    %4947 = vmatprep.subr.mxu0 %v249
    %4948 = vmatpush1.msra.mxu0 %v248
    %4949 = vmatprep.subr.mxu0 %v245
    %4950 = vmatpush1.msra.mxu0 %v244
    %4951 = vmatprep.subr.mxu0 %v241
    %4952 = vmatpush1.msra.mxu0 %v240
    %4953 = vmatprep.subr.mxu0 %v237
    %4954 = vmatpush1.msra.mxu0 %v236
    %4955 = vmatprep.subr.mxu0 %v233
    %4956 = vmatpush1.msra.mxu0 %v232
    %4957 = vmatprep.subr.mxu0 %v229
    %4958 = vmatpush1.msra.mxu0 %v228
    %4959 = vmatprep.subr.mxu0 %v225
    %4960 = vmatpush1.msra.mxu0 %v224
    %4961 = vmatprep.subr.mxu0 %v221
    %4962 = vmatpush1.msra.mxu0 %v220
    %4963 = vmatprep.subr.mxu0 %v217
    %4964 = vmatpush1.msra.mxu0 %v216
    %4965 = vmatprep.subr.mxu0 %v213
    %4966 = vmatpush1.msra.mxu0 %v212
    %4967 = vmatprep.subr.mxu0 %v209
    %4968 = vmatpush1.msra.mxu0 %v208
    %4969 = vmatprep.subr.mxu0 0.0
    %4970 = vmatpush2.msra.mxu0 0.0
    %4971 = vmatprep.subr.mxu0 0.0
    %4972 = vmatpush2.msra.mxu0 0.0
    %4973 = vmatprep.subr.mxu0 0.0
    %4974 = vmatpush2.msra.mxu0 0.0
    %4975 = vmatprep.subr.mxu0 0.0
    %4976 = vmatpush2.msra.mxu0 0.0
    %4977 = vmatprep.subr.mxu0 0.0
    %4978 = vmatpush2.msra.mxu0 0.0
    %4979 = vmatprep.subr.mxu0 0.0
    %4980 = vmatpush2.msra.mxu0 0.0
    %4981 = vmatprep.subr.mxu0 0.0
    %4982 = vmatpush2.msra.mxu0 0.0
    %4983 = vmatprep.subr.mxu0 0.0
    %4984 = vmatpush2.msra.mxu0 0.0
    %4985 = vmatprep.subr.mxu0 0.0
    %4986 = vmatpush2.msra.mxu0 0.0
    %4987 = vmatprep.subr.mxu0 0.0
    %4988 = vmatpush2.msra.mxu0 0.0
    %4989 = vmatprep.subr.mxu0 0.0
    %4990 = vmatpush2.msra.mxu0 0.0
    %4991 = vmatprep.subr.mxu0 0.0
    %4992 = vmatpush2.msra.mxu0 0.0
    %4993 = vmatprep.subr.mxu0 0.0
    %4994 = vmatpush2.msra.mxu0 0.0
    %4995 = vmatprep.subr.mxu0 0.0
    %4996 = vmatpush2.msra.mxu0 0.0
    %4997 = vmatprep.subr.mxu0 0.0
    %4998 = vmatpush2.msra.mxu0 0.0
    %4999 = vmatprep.subr.mxu0 0.0
    %5000 = vmatpush2.msra.mxu0 0.0
    %5001 = vmatprep.mubr.f32.mxu0 0.0
    %5002 = vmatmul.mubr.f32.gmra.mxu0 %v4935
    %v5003 = vpop.f32.mrf.mxu0
    %v5004 = vadd.f32 0.0, %v5003
    %v5005 = vpop.f32.mrf.mxu0
    %v5006 = vadd.f32 0.0, %v5005
    %5007 = vdwg.mxu0
    %5008 = vmatprep.subr.mxu0 %v271
    %5009 = vmatpush1.msra.mxu0 %v270
    %5010 = vmatprep.subr.mxu0 %v267
    %5011 = vmatpush1.msra.mxu0 %v266
    %5012 = vmatprep.subr.mxu0 %v263
    %5013 = vmatpush1.msra.mxu0 %v262
    %5014 = vmatprep.subr.mxu0 %v259
    %5015 = vmatpush1.msra.mxu0 %v258
    %5016 = vmatprep.subr.mxu0 %v255
    %5017 = vmatpush1.msra.mxu0 %v254
    %5018 = vmatprep.subr.mxu0 %v251
    %5019 = vmatpush1.msra.mxu0 %v250
    %5020 = vmatprep.subr.mxu0 %v247
    %5021 = vmatpush1.msra.mxu0 %v246
    %5022 = vmatprep.subr.mxu0 %v243
    %5023 = vmatpush1.msra.mxu0 %v242
    %5024 = vmatprep.subr.mxu0 %v239
    %5025 = vmatpush1.msra.mxu0 %v238
    %5026 = vmatprep.subr.mxu0 %v235
    %5027 = vmatpush1.msra.mxu0 %v234
    %5028 = vmatprep.subr.mxu0 %v231
    %5029 = vmatpush1.msra.mxu0 %v230
    %5030 = vmatprep.subr.mxu0 %v227
    %5031 = vmatpush1.msra.mxu0 %v226
    %5032 = vmatprep.subr.mxu0 %v223
    %5033 = vmatpush1.msra.mxu0 %v222
    %5034 = vmatprep.subr.mxu0 %v219
    %5035 = vmatpush1.msra.mxu0 %v218
    %5036 = vmatprep.subr.mxu0 %v215
    %5037 = vmatpush1.msra.mxu0 %v214
    %5038 = vmatprep.subr.mxu0 %v211
    %5039 = vmatpush1.msra.mxu0 %v210
    %5040 = vmatprep.subr.mxu0 0.0
    %5041 = vmatpush2.msra.mxu0 0.0
    %5042 = vmatprep.subr.mxu0 0.0
    %5043 = vmatpush2.msra.mxu0 0.0
    %5044 = vmatprep.subr.mxu0 0.0
    %5045 = vmatpush2.msra.mxu0 0.0
    %5046 = vmatprep.subr.mxu0 0.0
    %5047 = vmatpush2.msra.mxu0 0.0
    %5048 = vmatprep.subr.mxu0 0.0
    %5049 = vmatpush2.msra.mxu0 0.0
    %5050 = vmatprep.subr.mxu0 0.0
    %5051 = vmatpush2.msra.mxu0 0.0
    %5052 = vmatprep.subr.mxu0 0.0
    %5053 = vmatpush2.msra.mxu0 0.0
    %5054 = vmatprep.subr.mxu0 0.0
    %5055 = vmatpush2.msra.mxu0 0.0
    %5056 = vmatprep.subr.mxu0 0.0
    %5057 = vmatpush2.msra.mxu0 0.0
    %5058 = vmatprep.subr.mxu0 0.0
    %5059 = vmatpush2.msra.mxu0 0.0
    %5060 = vmatprep.subr.mxu0 0.0
    %5061 = vmatpush2.msra.mxu0 0.0
    %5062 = vmatprep.subr.mxu0 0.0
    %5063 = vmatpush2.msra.mxu0 0.0
    %5064 = vmatprep.subr.mxu0 0.0
    %5065 = vmatpush2.msra.mxu0 0.0
    %5066 = vmatprep.subr.mxu0 0.0
    %5067 = vmatpush2.msra.mxu0 0.0
    %5068 = vmatprep.subr.mxu0 0.0
    %5069 = vmatpush2.msra.mxu0 0.0
    %5070 = vmatprep.subr.mxu0 0.0
    %5071 = vmatpush2.msra.mxu0 0.0
    %5072 = vmatprep.mubr.f32.mxu0 0.0
    %5073 = vmatmul.mubr.f32.gmra.mxu0 %v4935
    %v5074 = vpop.f32.mrf.mxu0
    %v5075 = vadd.f32 0.0, %v5074
    %v5076 = vpop.f32.mrf.mxu0
    %v5077 = vadd.f32 0.0, %v5076
    %5078 = vdwg.mxu0
    %v5083 = vrot.slane %v5004, 4
    %v5084 = vrot.slane %v5006, 4
    %v5085 = vrot.slane %v5075, 4
    %v5086 = vrot.slane %v5077, 4
    %v5091 = vadd.f32 %v3708, %v5083
    %v5092 = vadd.f32 %v3710, %v5084
    %v5093 = vadd.f32 %v3785, %v5085
    %v5094 = vadd.f32 %v3787, %v5086
    %v5095 = vxor.u32 %v5091, 2147483648
    %v5096 = vmul.f32 %v5095, 1.442695
    %v5097 = vpow.pop %v5096
    %v5098 = vadd.f32 %v5097, 1.0
    %v5099 = vrcp.pop %v5098
    %v5100 = vmul.f32 1.0, %v5099
    %v5101 = vxor.u32 %v5092, 2147483648
    %v5102 = vmul.f32 %v5101, 1.442695
    %v5103 = vpow.pop %v5102
    %v5104 = vadd.f32 %v5103, 1.0
    %v5105 = vrcp.pop %v5104
    %v5106 = vmul.f32 1.0, %v5105
    %v5107 = vtanh.pop %v5093
    %v5108 = vxor.u32 %v5094, 2147483648
    %v5109 = vmul.f32 %v5108, 1.442695
    %v5110 = vpow.pop %v5109
    %v5111 = vadd.f32 %v5110, 1.0
    %v5112 = vrcp.pop %v5111
    %v5113 = vmul.f32 1.0, %v5112
    %v5115 = vrot.slane %v4919, 6
    %v5117 = vmul.f32 %v5106, %v5115
    %v5118 = vmul.f32 %v5100, %v5107
    %v5119 = vadd.f32 %v5117, %v5118
    %v5120 = vtanh.pop %v5119
    %v5121 = vmul.f32 %v5113, %v5120
    %v5122 = vtanh.pop %v5121
    %v5124 = vcombine.high %v5122, %v5122
    %v5126 = vunpack.c.l.s4 1983009808
    %v5127 = vunpack.c.0.s8 %v5126
    %v5128 = vlaneseq
    %v5129 = vshrl.u32 %v5128, 7
    %v5130 = vsub.s32 %v5127, %v5129
    %v5131 = vrot.slane %v5124, %v5130
    %5133 = vst [vmem:[#allocation4 + $0xc] sm:$0x3] %v5131
    %v5135 = vrot.slane %v5121, 4
    %5137 = vmatprep.subr.mxu0 %v269
    %5138 = vmatpush1.msra.mxu0 %v268
    %5139 = vmatprep.subr.mxu0 %v265
    %5140 = vmatpush1.msra.mxu0 %v264
    %5141 = vmatprep.subr.mxu0 %v261
    %5142 = vmatpush1.msra.mxu0 %v260
    %5143 = vmatprep.subr.mxu0 %v257
    %5144 = vmatpush1.msra.mxu0 %v256
    %5145 = vmatprep.subr.mxu0 %v253
    %5146 = vmatpush1.msra.mxu0 %v252
    %5147 = vmatprep.subr.mxu0 %v249
    %5148 = vmatpush1.msra.mxu0 %v248
    %5149 = vmatprep.subr.mxu0 %v245
    %5150 = vmatpush1.msra.mxu0 %v244
    %5151 = vmatprep.subr.mxu0 %v241
    %5152 = vmatpush1.msra.mxu0 %v240
    %5153 = vmatprep.subr.mxu0 %v237
    %5154 = vmatpush1.msra.mxu0 %v236
    %5155 = vmatprep.subr.mxu0 %v233
    %5156 = vmatpush1.msra.mxu0 %v232
    %5157 = vmatprep.subr.mxu0 %v229
    %5158 = vmatpush1.msra.mxu0 %v228
    %5159 = vmatprep.subr.mxu0 %v225
    %5160 = vmatpush1.msra.mxu0 %v224
    %5161 = vmatprep.subr.mxu0 %v221
    %5162 = vmatpush1.msra.mxu0 %v220
    %5163 = vmatprep.subr.mxu0 %v217
    %5164 = vmatpush1.msra.mxu0 %v216
    %5165 = vmatprep.subr.mxu0 %v213
    %5166 = vmatpush1.msra.mxu0 %v212
    %5167 = vmatprep.subr.mxu0 %v209
    %5168 = vmatpush1.msra.mxu0 %v208
    %5169 = vmatprep.subr.mxu0 0.0
    %5170 = vmatpush2.msra.mxu0 0.0
    %5171 = vmatprep.subr.mxu0 0.0
    %5172 = vmatpush2.msra.mxu0 0.0
    %5173 = vmatprep.subr.mxu0 0.0
    %5174 = vmatpush2.msra.mxu0 0.0
    %5175 = vmatprep.subr.mxu0 0.0
    %5176 = vmatpush2.msra.mxu0 0.0
    %5177 = vmatprep.subr.mxu0 0.0
    %5178 = vmatpush2.msra.mxu0 0.0
    %5179 = vmatprep.subr.mxu0 0.0
    %5180 = vmatpush2.msra.mxu0 0.0
    %5181 = vmatprep.subr.mxu0 0.0
    %5182 = vmatpush2.msra.mxu0 0.0
    %5183 = vmatprep.subr.mxu0 0.0
    %5184 = vmatpush2.msra.mxu0 0.0
    %5185 = vmatprep.subr.mxu0 0.0
    %5186 = vmatpush2.msra.mxu0 0.0
    %5187 = vmatprep.subr.mxu0 0.0
    %5188 = vmatpush2.msra.mxu0 0.0
    %5189 = vmatprep.subr.mxu0 0.0
    %5190 = vmatpush2.msra.mxu0 0.0
    %5191 = vmatprep.subr.mxu0 0.0
    %5192 = vmatpush2.msra.mxu0 0.0
    %5193 = vmatprep.subr.mxu0 0.0
    %5194 = vmatpush2.msra.mxu0 0.0
    %5195 = vmatprep.subr.mxu0 0.0
    %5196 = vmatpush2.msra.mxu0 0.0
    %5197 = vmatprep.subr.mxu0 0.0
    %5198 = vmatpush2.msra.mxu0 0.0
    %5199 = vmatprep.subr.mxu0 0.0
    %5200 = vmatpush2.msra.mxu0 0.0
    %5201 = vmatprep.mubr.f32.mxu0 0.0
    %5202 = vmatmul.mubr.f32.gmra.mxu0 %v5135
    %v5203 = vpop.f32.mrf.mxu0
    %v5204 = vadd.f32 0.0, %v5203
    %v5205 = vpop.f32.mrf.mxu0
    %v5206 = vadd.f32 0.0, %v5205
    %5207 = vdwg.mxu0
    %5208 = vmatprep.subr.mxu0 %v271
    %5209 = vmatpush1.msra.mxu0 %v270
    %5210 = vmatprep.subr.mxu0 %v267
    %5211 = vmatpush1.msra.mxu0 %v266
    %5212 = vmatprep.subr.mxu0 %v263
    %5213 = vmatpush1.msra.mxu0 %v262
    %5214 = vmatprep.subr.mxu0 %v259
    %5215 = vmatpush1.msra.mxu0 %v258
    %5216 = vmatprep.subr.mxu0 %v255
    %5217 = vmatpush1.msra.mxu0 %v254
    %5218 = vmatprep.subr.mxu0 %v251
    %5219 = vmatpush1.msra.mxu0 %v250
    %5220 = vmatprep.subr.mxu0 %v247
    %5221 = vmatpush1.msra.mxu0 %v246
    %5222 = vmatprep.subr.mxu0 %v243
    %5223 = vmatpush1.msra.mxu0 %v242
    %5224 = vmatprep.subr.mxu0 %v239
    %5225 = vmatpush1.msra.mxu0 %v238
    %5226 = vmatprep.subr.mxu0 %v235
    %5227 = vmatpush1.msra.mxu0 %v234
    %5228 = vmatprep.subr.mxu0 %v231
    %5229 = vmatpush1.msra.mxu0 %v230
    %5230 = vmatprep.subr.mxu0 %v227
    %5231 = vmatpush1.msra.mxu0 %v226
    %5232 = vmatprep.subr.mxu0 %v223
    %5233 = vmatpush1.msra.mxu0 %v222
    %5234 = vmatprep.subr.mxu0 %v219
    %5235 = vmatpush1.msra.mxu0 %v218
    %5236 = vmatprep.subr.mxu0 %v215
    %5237 = vmatpush1.msra.mxu0 %v214
    %5238 = vmatprep.subr.mxu0 %v211
    %5239 = vmatpush1.msra.mxu0 %v210
    %5240 = vmatprep.subr.mxu0 0.0
    %5241 = vmatpush2.msra.mxu0 0.0
    %5242 = vmatprep.subr.mxu0 0.0
    %5243 = vmatpush2.msra.mxu0 0.0
    %5244 = vmatprep.subr.mxu0 0.0
    %5245 = vmatpush2.msra.mxu0 0.0
    %5246 = vmatprep.subr.mxu0 0.0
    %5247 = vmatpush2.msra.mxu0 0.0
    %5248 = vmatprep.subr.mxu0 0.0
    %5249 = vmatpush2.msra.mxu0 0.0
    %5250 = vmatprep.subr.mxu0 0.0
    %5251 = vmatpush2.msra.mxu0 0.0
    %5252 = vmatprep.subr.mxu0 0.0
    %5253 = vmatpush2.msra.mxu0 0.0
    %5254 = vmatprep.subr.mxu0 0.0
    %5255 = vmatpush2.msra.mxu0 0.0
    %5256 = vmatprep.subr.mxu0 0.0
    %5257 = vmatpush2.msra.mxu0 0.0
    %5258 = vmatprep.subr.mxu0 0.0
    %5259 = vmatpush2.msra.mxu0 0.0
    %5260 = vmatprep.subr.mxu0 0.0
    %5261 = vmatpush2.msra.mxu0 0.0
    %5262 = vmatprep.subr.mxu0 0.0
    %5263 = vmatpush2.msra.mxu0 0.0
    %5264 = vmatprep.subr.mxu0 0.0
    %5265 = vmatpush2.msra.mxu0 0.0
    %5266 = vmatprep.subr.mxu0 0.0
    %5267 = vmatpush2.msra.mxu0 0.0
    %5268 = vmatprep.subr.mxu0 0.0
    %5269 = vmatpush2.msra.mxu0 0.0
    %5270 = vmatprep.subr.mxu0 0.0
    %5271 = vmatpush2.msra.mxu0 0.0
    %5272 = vmatprep.mubr.f32.mxu0 0.0
    %5273 = vmatmul.mubr.f32.gmra.mxu0 %v5135
    %v5274 = vpop.f32.mrf.mxu0
    %v5275 = vadd.f32 0.0, %v5274
    %v5276 = vpop.f32.mrf.mxu0
    %v5277 = vadd.f32 0.0, %v5276
    %5278 = vdwg.mxu0
    %v5283 = vrot.slane %v5204, 2
    %v5284 = vrot.slane %v5206, 2
    %v5285 = vrot.slane %v5275, 2
    %v5286 = vrot.slane %v5277, 2
    %v5291 = vadd.f32 %v3708, %v5283
    %v5292 = vadd.f32 %v3710, %v5284
    %v5293 = vadd.f32 %v3785, %v5285
    %v5294 = vadd.f32 %v3787, %v5286
    %v5295 = vxor.u32 %v5291, 2147483648
    %v5296 = vmul.f32 %v5295, 1.442695
    %v5297 = vpow.pop %v5296
    %v5298 = vadd.f32 %v5297, 1.0
    %v5299 = vrcp.pop %v5298
    %v5300 = vmul.f32 1.0, %v5299
    %v5301 = vxor.u32 %v5292, 2147483648
    %v5302 = vmul.f32 %v5301, 1.442695
    %v5303 = vpow.pop %v5302
    %v5304 = vadd.f32 %v5303, 1.0
    %v5305 = vrcp.pop %v5304
    %v5306 = vmul.f32 1.0, %v5305
    %v5307 = vtanh.pop %v5293
    %v5308 = vxor.u32 %v5294, 2147483648
    %v5309 = vmul.f32 %v5308, 1.442695
    %v5310 = vpow.pop %v5309
    %v5311 = vadd.f32 %v5310, 1.0
    %v5312 = vrcp.pop %v5311
    %v5313 = vmul.f32 1.0, %v5312
    %v5315 = vrot.slane %v5119, 6
    %v5317 = vmul.f32 %v5306, %v5315
    %v5318 = vmul.f32 %v5300, %v5307
    %v5319 = vadd.f32 %v5317, %v5318
    %v5320 = vtanh.pop %v5319
    %v5321 = vmul.f32 %v5313, %v5320
    %v5322 = vtanh.pop %v5321
    %v5324 = vcombine.high %v5322, %v5322
    %v5326 = vunpack.c.l.s4 1983009808
    %v5327 = vunpack.c.0.s8 %v5326
    %v5328 = vlaneseq
    %v5329 = vshrl.u32 %v5328, 7
    %v5330 = vsub.s32 %v5327, %v5329
    %v5331 = vrot.slane %v5324, %v5330
    %v5332 = vcombine.high %v5331, %v5331
    %5334 = vst [vmem:[#allocation4 + $0xe] sm:$0x3] %v5332
    %v5335 = vld [vmem:[#allocation4] sm:$0xff]
    %v5336 = vld [vmem:[#allocation4 + $0x8] sm:$0xff]
    %v5337 = vld [vmem:[%s10] sm:$0xff]
    %v5338 = vld [vmem:[%s10 + $0x8] sm:$0xff]
    %v5339 = vld [vmem:[%s10 + $0x10] sm:$0xff]
    %v5340 = vld [vmem:[%s10 + $0x18] sm:$0xff]
    %v5341 = vld [vmem:[%s10 + $0x20] sm:$0xff]
    %v5342 = vld [vmem:[%s10 + $0x28] sm:$0xff]
    %v5343 = vld [vmem:[%s10 + $0x30] sm:$0xff]
    %v5344 = vld [vmem:[%s10 + $0x38] sm:$0xff]
    %v5345 = vld [vmem:[%s10 + $0x40] sm:$0xff]
    %v5346 = vld [vmem:[%s10 + $0x48] sm:$0xff]
    %v5347 = vld [vmem:[%s10 + $0x50] sm:$0xff]
    %v5348 = vld [vmem:[%s10 + $0x58] sm:$0xff]
    %v5349 = vld [vmem:[%s10 + $0x60] sm:$0xff]
    %v5350 = vld [vmem:[%s10 + $0x68] sm:$0xff]
    %v5351 = vld [vmem:[%s10 + $0x70] sm:$0xff]
    %v5352 = vld [vmem:[%s10 + $0x78] sm:$0xff]
    %v5353 = vld [vmem:[%s10 + $0x80] sm:$0xff]
    %v5354 = vld [vmem:[%s10 + $0x88] sm:$0xff]
    %v5355 = vld [vmem:[%s10 + $0x90] sm:$0xff]
    %v5356 = vld [vmem:[%s10 + $0x98] sm:$0xff]
    %v5357 = vld [vmem:[%s10 + $0xa0] sm:$0xff]
    %v5358 = vld [vmem:[%s10 + $0xa8] sm:$0xff]
    %v5359 = vld [vmem:[%s10 + $0xb0] sm:$0xff]
    %v5360 = vld [vmem:[%s10 + $0xb8] sm:$0xff]
    %v5361 = vld [vmem:[%s10 + $0xc0] sm:$0xff]
    %v5362 = vld [vmem:[%s10 + $0xc8] sm:$0xff]
    %v5363 = vld [vmem:[%s10 + $0xd0] sm:$0xff]
    %v5364 = vld [vmem:[%s10 + $0xd8] sm:$0xff]
    %v5365 = vld [vmem:[%s10 + $0xe0] sm:$0xff]
    %v5366 = vld [vmem:[%s10 + $0xe8] sm:$0xff]
    %v5367 = vld [vmem:[%s10 + $0xf0] sm:$0xff]
    %v5368 = vld [vmem:[%s10 + $0xf8] sm:$0xff]
    %v5369 = vld [vmem:[%s10 + $0x100] sm:$0xff]
    %v5370 = vld [vmem:[%s10 + $0x108] sm:$0xff]
    %v5371 = vld [vmem:[%s10 + $0x110] sm:$0xff]
    %v5372 = vld [vmem:[%s10 + $0x118] sm:$0xff]
    %v5373 = vld [vmem:[%s10 + $0x120] sm:$0xff]
    %v5374 = vld [vmem:[%s10 + $0x128] sm:$0xff]
    %v5375 = vld [vmem:[%s10 + $0x130] sm:$0xff]
    %v5376 = vld [vmem:[%s10 + $0x138] sm:$0xff]
    %v5377 = vld [vmem:[%s10 + $0x140] sm:$0xff]
    %v5378 = vld [vmem:[%s10 + $0x148] sm:$0xff]
    %v5379 = vld [vmem:[%s10 + $0x150] sm:$0xff]
    %v5380 = vld [vmem:[%s10 + $0x158] sm:$0xff]
    %v5381 = vld [vmem:[%s10 + $0x160] sm:$0xff]
    %v5382 = vld [vmem:[%s10 + $0x168] sm:$0xff]
    %v5383 = vld [vmem:[%s10 + $0x170] sm:$0xff]
    %v5384 = vld [vmem:[%s10 + $0x178] sm:$0xff]
    %v5385 = vld [vmem:[%s10 + $0x180] sm:$0xff]
    %v5386 = vld [vmem:[%s10 + $0x188] sm:$0xff]
    %v5387 = vld [vmem:[%s10 + $0x190] sm:$0xff]
    %v5388 = vld [vmem:[%s10 + $0x198] sm:$0xff]
    %v5389 = vld [vmem:[%s10 + $0x1a0] sm:$0xff]
    %v5390 = vld [vmem:[%s10 + $0x1a8] sm:$0xff]
    %v5391 = vld [vmem:[%s10 + $0x1b0] sm:$0xff]
    %v5392 = vld [vmem:[%s10 + $0x1b8] sm:$0xff]
    %v5393 = vld [vmem:[%s10 + $0x1c0] sm:$0xff]
    %v5394 = vld [vmem:[%s10 + $0x1c8] sm:$0xff]
    %v5395 = vld [vmem:[%s10 + $0x1d0] sm:$0xff]
    %v5396 = vld [vmem:[%s10 + $0x1d8] sm:$0xff]
    %v5397 = vld [vmem:[%s10 + $0x1e0] sm:$0xff]
    %v5398 = vld [vmem:[%s10 + $0x1e8] sm:$0xff]
    %v5399 = vld [vmem:[%s10 + $0x1f0] sm:$0xff]
    %v5400 = vld [vmem:[%s10 + $0x1f8] sm:$0xff]
    %v5401 = vld [vmem:[%s10 + $0x200] sm:$0xff]
    %v5402 = vld [vmem:[%s10 + $0x208] sm:$0xff]
    %v5403 = vld [vmem:[%s10 + $0x210] sm:$0xff]
    %v5404 = vld [vmem:[%s10 + $0x218] sm:$0xff]
    %v5405 = vld [vmem:[%s10 + $0x220] sm:$0xff]
    %v5406 = vld [vmem:[%s10 + $0x228] sm:$0xff]
    %v5407 = vld [vmem:[%s10 + $0x230] sm:$0xff]
    %v5408 = vld [vmem:[%s10 + $0x238] sm:$0xff]
    %v5409 = vld [vmem:[%s10 + $0x240] sm:$0xff]
    %v5410 = vld [vmem:[%s10 + $0x248] sm:$0xff]
    %v5411 = vld [vmem:[%s10 + $0x250] sm:$0xff]
    %v5412 = vld [vmem:[%s10 + $0x258] sm:$0xff]
    %v5413 = vld [vmem:[%s10 + $0x260] sm:$0xff]
    %v5414 = vld [vmem:[%s10 + $0x268] sm:$0xff]
    %v5415 = vld [vmem:[%s10 + $0x270] sm:$0xff]
    %v5416 = vld [vmem:[%s10 + $0x278] sm:$0xff]
    %v5417 = vld [vmem:[%s10 + $0x280] sm:$0xff]
    %v5418 = vld [vmem:[%s10 + $0x288] sm:$0xff]
    %v5419 = vld [vmem:[%s10 + $0x290] sm:$0xff]
    %v5420 = vld [vmem:[%s10 + $0x298] sm:$0xff]
    %v5421 = vld [vmem:[%s10 + $0x2a0] sm:$0xff]
    %v5422 = vld [vmem:[%s10 + $0x2a8] sm:$0xff]
    %v5423 = vld [vmem:[%s10 + $0x2b0] sm:$0xff]
    %v5424 = vld [vmem:[%s10 + $0x2b8] sm:$0xff]
    %v5425 = vld [vmem:[%s10 + $0x2c0] sm:$0xff]
    %v5426 = vld [vmem:[%s10 + $0x2c8] sm:$0xff]
    %v5427 = vld [vmem:[%s10 + $0x2d0] sm:$0xff]
    %v5428 = vld [vmem:[%s10 + $0x2d8] sm:$0xff]
    %v5429 = vld [vmem:[%s10 + $0x2e0] sm:$0xff]
    %v5430 = vld [vmem:[%s10 + $0x2e8] sm:$0xff]
    %v5431 = vld [vmem:[%s10 + $0x2f0] sm:$0xff]
    %v5432 = vld [vmem:[%s10 + $0x2f8] sm:$0xff]
    %v5433 = vld [vmem:[%s10 + $0x300] sm:$0xff]
    %v5434 = vld [vmem:[%s10 + $0x308] sm:$0xff]
    %v5435 = vld [vmem:[%s10 + $0x310] sm:$0xff]
    %v5436 = vld [vmem:[%s10 + $0x318] sm:$0xff]
    %v5437 = vld [vmem:[%s10 + $0x320] sm:$0xff]
    %v5438 = vld [vmem:[%s10 + $0x328] sm:$0xff]
    %v5439 = vld [vmem:[%s10 + $0x330] sm:$0xff]
    %v5440 = vld [vmem:[%s10 + $0x338] sm:$0xff]
    %v5441 = vld [vmem:[%s10 + $0x340] sm:$0xff]
    %v5442 = vld [vmem:[%s10 + $0x348] sm:$0xff]
    %v5443 = vld [vmem:[%s10 + $0x350] sm:$0xff]
    %v5444 = vld [vmem:[%s10 + $0x358] sm:$0xff]
    %v5445 = vld [vmem:[%s10 + $0x360] sm:$0xff]
    %v5446 = vld [vmem:[%s10 + $0x368] sm:$0xff]
    %v5447 = vld [vmem:[%s10 + $0x370] sm:$0xff]
    %v5448 = vld [vmem:[%s10 + $0x378] sm:$0xff]
    %v5449 = vld [vmem:[%s10 + $0x380] sm:$0xff]
    %v5450 = vld [vmem:[%s10 + $0x388] sm:$0xff]
    %v5451 = vld [vmem:[%s10 + $0x390] sm:$0xff]
    %v5452 = vld [vmem:[%s10 + $0x398] sm:$0xff]
    %v5453 = vld [vmem:[%s10 + $0x3a0] sm:$0xff]
    %v5454 = vld [vmem:[%s10 + $0x3a8] sm:$0xff]
    %v5455 = vld [vmem:[%s10 + $0x3b0] sm:$0xff]
    %v5456 = vld [vmem:[%s10 + $0x3b8] sm:$0xff]
    %v5457 = vld [vmem:[%s10 + $0x3c0] sm:$0xff]
    %v5458 = vld [vmem:[%s10 + $0x3c8] sm:$0xff]
    %v5459 = vld [vmem:[%s10 + $0x3d0] sm:$0xff]
    %v5460 = vld [vmem:[%s10 + $0x3d8] sm:$0xff]
    %v5461 = vld [vmem:[%s10 + $0x3e0] sm:$0xff]
    %v5462 = vld [vmem:[%s10 + $0x3e8] sm:$0xff]
    %v5463 = vld [vmem:[%s10 + $0x3f0] sm:$0xff]
    %v5464 = vld [vmem:[%s10 + $0x3f8] sm:$0xff]
    %v5467 = vcombine.high %v5335, %v5335
    %v5469 = vunpack.c.l.s4 1983009808
    %v5470 = vunpack.c.0.s8 %v5469
    %v5471 = vlaneseq
    %v5472 = vshrl.u32 %v5471, 7
    %v5473 = vsub.s32 %v5470, %v5472
    %v5474 = vrot.slane %v5335, %v5473
    %v5476 = vunpack.c.l.s4 1983009808
    %v5477 = vunpack.c.0.s8 %v5476
    %v5478 = vlaneseq
    %v5479 = vshrl.u32 %v5478, 7
    %v5480 = vsub.s32 %v5477, %v5479
    %v5481 = vrot.slane %v5467, %v5480
    %v5482 = vcombine.high %v5474, %v5474
    %v5483 = vcombine.high %v5481, %v5481
    %v5484 = vcombine.high %v5336, %v5336
    %v5486 = vunpack.c.l.s4 1983009808
    %v5487 = vunpack.c.0.s8 %v5486
    %v5488 = vlaneseq
    %v5489 = vshrl.u32 %v5488, 7
    %v5490 = vsub.s32 %v5487, %v5489
    %v5491 = vrot.slane %v5336, %v5490
    %v5493 = vunpack.c.l.s4 1983009808
    %v5494 = vunpack.c.0.s8 %v5493
    %v5495 = vlaneseq
    %v5496 = vshrl.u32 %v5495, 7
    %v5497 = vsub.s32 %v5494, %v5496
    %v5498 = vrot.slane %v5484, %v5497
    %v5499 = vcombine.high %v5491, %v5491
    %v5500 = vcombine.high %v5498, %v5498
    %5509 = vmatprep.subr.mxu0 0.0
    %5510 = vmatpush1.msra.mxu0 %v5352
    %5511 = vmatprep.subr.mxu0 0.0
    %5512 = vmatpush1.msra.mxu0 %v5351
    %5513 = vmatprep.subr.mxu0 0.0
    %5514 = vmatpush1.msra.mxu0 %v5350
    %5515 = vmatprep.subr.mxu0 0.0
    %5516 = vmatpush1.msra.mxu0 %v5349
    %5517 = vmatprep.subr.mxu0 0.0
    %5518 = vmatpush1.msra.mxu0 %v5348
    %5519 = vmatprep.subr.mxu0 0.0
    %5520 = vmatpush1.msra.mxu0 %v5347
    %5521 = vmatprep.subr.mxu0 0.0
    %5522 = vmatpush1.msra.mxu0 %v5346
    %5523 = vmatprep.subr.mxu0 0.0
    %5524 = vmatpush1.msra.mxu0 %v5345
    %5525 = vmatprep.subr.mxu0 0.0
    %5526 = vmatpush1.msra.mxu0 %v5344
    %5527 = vmatprep.subr.mxu0 0.0
    %5528 = vmatpush1.msra.mxu0 %v5343
    %5529 = vmatprep.subr.mxu0 0.0
    %5530 = vmatpush1.msra.mxu0 %v5342
    %5531 = vmatprep.subr.mxu0 0.0
    %5532 = vmatpush1.msra.mxu0 %v5341
    %5533 = vmatprep.subr.mxu0 0.0
    %5534 = vmatpush1.msra.mxu0 %v5340
    %5535 = vmatprep.subr.mxu0 0.0
    %5536 = vmatpush1.msra.mxu0 %v5339
    %5537 = vmatprep.subr.mxu0 0.0
    %5538 = vmatpush1.msra.mxu0 %v5338
    %5539 = vmatprep.subr.mxu0 0.0
    %5540 = vmatpush1.msra.mxu0 %v5337
    %5541 = vmatprep.subr.mxu0 0.0
    %5542 = vmatpush2.msra.mxu0 %v5368
    %5543 = vmatprep.subr.mxu0 0.0
    %5544 = vmatpush2.msra.mxu0 %v5367
    %5545 = vmatprep.subr.mxu0 0.0
    %5546 = vmatpush2.msra.mxu0 %v5366
    %5547 = vmatprep.subr.mxu0 0.0
    %5548 = vmatpush2.msra.mxu0 %v5365
    %5549 = vmatprep.subr.mxu0 0.0
    %5550 = vmatpush2.msra.mxu0 %v5364
    %5551 = vmatprep.subr.mxu0 0.0
    %5552 = vmatpush2.msra.mxu0 %v5363
    %5553 = vmatprep.subr.mxu0 0.0
    %5554 = vmatpush2.msra.mxu0 %v5362
    %5555 = vmatprep.subr.mxu0 0.0
    %5556 = vmatpush2.msra.mxu0 %v5361
    %5557 = vmatprep.subr.mxu0 0.0
    %5558 = vmatpush2.msra.mxu0 %v5360
    %5559 = vmatprep.subr.mxu0 0.0
    %5560 = vmatpush2.msra.mxu0 %v5359
    %5561 = vmatprep.subr.mxu0 0.0
    %5562 = vmatpush2.msra.mxu0 %v5358
    %5563 = vmatprep.subr.mxu0 0.0
    %5564 = vmatpush2.msra.mxu0 %v5357
    %5565 = vmatprep.subr.mxu0 0.0
    %5566 = vmatpush2.msra.mxu0 %v5356
    %5567 = vmatprep.subr.mxu0 0.0
    %5568 = vmatpush2.msra.mxu0 %v5355
    %5569 = vmatprep.subr.mxu0 0.0
    %5570 = vmatpush2.msra.mxu0 %v5354
    %5571 = vmatprep.subr.mxu0 0.0
    %5572 = vmatpush2.msra.mxu0 %v5353
    %5573 = vmatprep.mubr.f32.mxu0 %v5482
    %5574 = vmatmul.mubr.f32.gmra.mxu0 %v5474
    %v5575 = vpop.f32.mrf.mxu0
    %v5576 = vadd.f32 0.0, %v5575
    %v5577 = vpop.f32.mrf.mxu0
    %5578 = vdwg.mxu0
    %5579 = vmatprep.subr.mxu0 0.0
    %5580 = vmatpush1.msra.mxu0 %v5384
    %5581 = vmatprep.subr.mxu0 0.0
    %5582 = vmatpush1.msra.mxu0 %v5383
    %5583 = vmatprep.subr.mxu0 0.0
    %5584 = vmatpush1.msra.mxu0 %v5382
    %5585 = vmatprep.subr.mxu0 0.0
    %5586 = vmatpush1.msra.mxu0 %v5381
    %5587 = vmatprep.subr.mxu0 0.0
    %5588 = vmatpush1.msra.mxu0 %v5380
    %5589 = vmatprep.subr.mxu0 0.0
    %5590 = vmatpush1.msra.mxu0 %v5379
    %5591 = vmatprep.subr.mxu0 0.0
    %5592 = vmatpush1.msra.mxu0 %v5378
    %5593 = vmatprep.subr.mxu0 0.0
    %5594 = vmatpush1.msra.mxu0 %v5377
    %5595 = vmatprep.subr.mxu0 0.0
    %5596 = vmatpush1.msra.mxu0 %v5376
    %5597 = vmatprep.subr.mxu0 0.0
    %5598 = vmatpush1.msra.mxu0 %v5375
    %5599 = vmatprep.subr.mxu0 0.0
    %5600 = vmatpush1.msra.mxu0 %v5374
    %5601 = vmatprep.subr.mxu0 0.0
    %5602 = vmatpush1.msra.mxu0 %v5373
    %5603 = vmatprep.subr.mxu0 0.0
    %5604 = vmatpush1.msra.mxu0 %v5372
    %5605 = vmatprep.subr.mxu0 0.0
    %5606 = vmatpush1.msra.mxu0 %v5371
    %5607 = vmatprep.subr.mxu0 0.0
    %5608 = vmatpush1.msra.mxu0 %v5370
    %5609 = vmatprep.subr.mxu0 0.0
    %5610 = vmatpush1.msra.mxu0 %v5369
    %5611 = vmatprep.subr.mxu0 0.0
    %5612 = vmatpush2.msra.mxu0 %v5400
    %5613 = vmatprep.subr.mxu0 0.0
    %5614 = vmatpush2.msra.mxu0 %v5399
    %5615 = vmatprep.subr.mxu0 0.0
    %5616 = vmatpush2.msra.mxu0 %v5398
    %5617 = vmatprep.subr.mxu0 0.0
    %5618 = vmatpush2.msra.mxu0 %v5397
    %5619 = vmatprep.subr.mxu0 0.0
    %5620 = vmatpush2.msra.mxu0 %v5396
    %5621 = vmatprep.subr.mxu0 0.0
    %5622 = vmatpush2.msra.mxu0 %v5395
    %5623 = vmatprep.subr.mxu0 0.0
    %5624 = vmatpush2.msra.mxu0 %v5394
    %5625 = vmatprep.subr.mxu0 0.0
    %5626 = vmatpush2.msra.mxu0 %v5393
    %5627 = vmatprep.subr.mxu0 0.0
    %5628 = vmatpush2.msra.mxu0 %v5392
    %5629 = vmatprep.subr.mxu0 0.0
    %5630 = vmatpush2.msra.mxu0 %v5391
    %5631 = vmatprep.subr.mxu0 0.0
    %5632 = vmatpush2.msra.mxu0 %v5390
    %5633 = vmatprep.subr.mxu0 0.0
    %5634 = vmatpush2.msra.mxu0 %v5389
    %5635 = vmatprep.subr.mxu0 0.0
    %5636 = vmatpush2.msra.mxu0 %v5388
    %5637 = vmatprep.subr.mxu0 0.0
    %5638 = vmatpush2.msra.mxu0 %v5387
    %5639 = vmatprep.subr.mxu0 0.0
    %5640 = vmatpush2.msra.mxu0 %v5386
    %5641 = vmatprep.subr.mxu0 0.0
    %5642 = vmatpush2.msra.mxu0 %v5385
    %5643 = vmatprep.mubr.f32.mxu0 %v5483
    %5644 = vmatmul.mubr.f32.gmra.mxu0 %v5481
    %v5645 = vpop.f32.mrf.mxu0
    %v5646 = vadd.f32 %v5576, %v5645
    %v5647 = vpop.f32.mrf.mxu0
    %5648 = vdwg.mxu0
    %5649 = vmatprep.subr.mxu0 0.0
    %5650 = vmatpush1.msra.mxu0 %v5416
    %5651 = vmatprep.subr.mxu0 0.0
    %5652 = vmatpush1.msra.mxu0 %v5415
    %5653 = vmatprep.subr.mxu0 0.0
    %5654 = vmatpush1.msra.mxu0 %v5414
    %5655 = vmatprep.subr.mxu0 0.0
    %5656 = vmatpush1.msra.mxu0 %v5413
    %5657 = vmatprep.subr.mxu0 0.0
    %5658 = vmatpush1.msra.mxu0 %v5412
    %5659 = vmatprep.subr.mxu0 0.0
    %5660 = vmatpush1.msra.mxu0 %v5411
    %5661 = vmatprep.subr.mxu0 0.0
    %5662 = vmatpush1.msra.mxu0 %v5410
    %5663 = vmatprep.subr.mxu0 0.0
    %5664 = vmatpush1.msra.mxu0 %v5409
    %5665 = vmatprep.subr.mxu0 0.0
    %5666 = vmatpush1.msra.mxu0 %v5408
    %5667 = vmatprep.subr.mxu0 0.0
    %5668 = vmatpush1.msra.mxu0 %v5407
    %5669 = vmatprep.subr.mxu0 0.0
    %5670 = vmatpush1.msra.mxu0 %v5406
    %5671 = vmatprep.subr.mxu0 0.0
    %5672 = vmatpush1.msra.mxu0 %v5405
    %5673 = vmatprep.subr.mxu0 0.0
    %5674 = vmatpush1.msra.mxu0 %v5404
    %5675 = vmatprep.subr.mxu0 0.0
    %5676 = vmatpush1.msra.mxu0 %v5403
    %5677 = vmatprep.subr.mxu0 0.0
    %5678 = vmatpush1.msra.mxu0 %v5402
    %5679 = vmatprep.subr.mxu0 0.0
    %5680 = vmatpush1.msra.mxu0 %v5401
    %5681 = vmatprep.subr.mxu0 0.0
    %5682 = vmatpush2.msra.mxu0 %v5432
    %5683 = vmatprep.subr.mxu0 0.0
    %5684 = vmatpush2.msra.mxu0 %v5431
    %5685 = vmatprep.subr.mxu0 0.0
    %5686 = vmatpush2.msra.mxu0 %v5430
    %5687 = vmatprep.subr.mxu0 0.0
    %5688 = vmatpush2.msra.mxu0 %v5429
    %5689 = vmatprep.subr.mxu0 0.0
    %5690 = vmatpush2.msra.mxu0 %v5428
    %5691 = vmatprep.subr.mxu0 0.0
    %5692 = vmatpush2.msra.mxu0 %v5427
    %5693 = vmatprep.subr.mxu0 0.0
    %5694 = vmatpush2.msra.mxu0 %v5426
    %5695 = vmatprep.subr.mxu0 0.0
    %5696 = vmatpush2.msra.mxu0 %v5425
    %5697 = vmatprep.subr.mxu0 0.0
    %5698 = vmatpush2.msra.mxu0 %v5424
    %5699 = vmatprep.subr.mxu0 0.0
    %5700 = vmatpush2.msra.mxu0 %v5423
    %5701 = vmatprep.subr.mxu0 0.0
    %5702 = vmatpush2.msra.mxu0 %v5422
    %5703 = vmatprep.subr.mxu0 0.0
    %5704 = vmatpush2.msra.mxu0 %v5421
    %5705 = vmatprep.subr.mxu0 0.0
    %5706 = vmatpush2.msra.mxu0 %v5420
    %5707 = vmatprep.subr.mxu0 0.0
    %5708 = vmatpush2.msra.mxu0 %v5419
    %5709 = vmatprep.subr.mxu0 0.0
    %5710 = vmatpush2.msra.mxu0 %v5418
    %5711 = vmatprep.subr.mxu0 0.0
    %5712 = vmatpush2.msra.mxu0 %v5417
    %5713 = vmatprep.mubr.f32.mxu0 %v5499
    %5714 = vmatmul.mubr.f32.gmra.mxu0 %v5491
    %v5715 = vpop.f32.mrf.mxu0
    %v5716 = vadd.f32 %v5646, %v5715
    %v5717 = vpop.f32.mrf.mxu0
    %5718 = vdwg.mxu0
    %5719 = vmatprep.subr.mxu0 0.0
    %5720 = vmatpush1.msra.mxu0 %v5448
    %5721 = vmatprep.subr.mxu0 0.0
    %5722 = vmatpush1.msra.mxu0 %v5447
    %5723 = vmatprep.subr.mxu0 0.0
    %5724 = vmatpush1.msra.mxu0 %v5446
    %5725 = vmatprep.subr.mxu0 0.0
    %5726 = vmatpush1.msra.mxu0 %v5445
    %5727 = vmatprep.subr.mxu0 0.0
    %5728 = vmatpush1.msra.mxu0 %v5444
    %5729 = vmatprep.subr.mxu0 0.0
    %5730 = vmatpush1.msra.mxu0 %v5443
    %5731 = vmatprep.subr.mxu0 0.0
    %5732 = vmatpush1.msra.mxu0 %v5442
    %5733 = vmatprep.subr.mxu0 0.0
    %5734 = vmatpush1.msra.mxu0 %v5441
    %5735 = vmatprep.subr.mxu0 0.0
    %5736 = vmatpush1.msra.mxu0 %v5440
    %5737 = vmatprep.subr.mxu0 0.0
    %5738 = vmatpush1.msra.mxu0 %v5439
    %5739 = vmatprep.subr.mxu0 0.0
    %5740 = vmatpush1.msra.mxu0 %v5438
    %5741 = vmatprep.subr.mxu0 0.0
    %5742 = vmatpush1.msra.mxu0 %v5437
    %5743 = vmatprep.subr.mxu0 0.0
    %5744 = vmatpush1.msra.mxu0 %v5436
    %5745 = vmatprep.subr.mxu0 0.0
    %5746 = vmatpush1.msra.mxu0 %v5435
    %5747 = vmatprep.subr.mxu0 0.0
    %5748 = vmatpush1.msra.mxu0 %v5434
    %5749 = vmatprep.subr.mxu0 0.0
    %5750 = vmatpush1.msra.mxu0 %v5433
    %5751 = vmatprep.subr.mxu0 0.0
    %5752 = vmatpush2.msra.mxu0 %v5464
    %5753 = vmatprep.subr.mxu0 0.0
    %5754 = vmatpush2.msra.mxu0 %v5463
    %5755 = vmatprep.subr.mxu0 0.0
    %5756 = vmatpush2.msra.mxu0 %v5462
    %5757 = vmatprep.subr.mxu0 0.0
    %5758 = vmatpush2.msra.mxu0 %v5461
    %5759 = vmatprep.subr.mxu0 0.0
    %5760 = vmatpush2.msra.mxu0 %v5460
    %5761 = vmatprep.subr.mxu0 0.0
    %5762 = vmatpush2.msra.mxu0 %v5459
    %5763 = vmatprep.subr.mxu0 0.0
    %5764 = vmatpush2.msra.mxu0 %v5458
    %5765 = vmatprep.subr.mxu0 0.0
    %5766 = vmatpush2.msra.mxu0 %v5457
    %5767 = vmatprep.subr.mxu0 0.0
    %5768 = vmatpush2.msra.mxu0 %v5456
    %5769 = vmatprep.subr.mxu0 0.0
    %5770 = vmatpush2.msra.mxu0 %v5455
    %5771 = vmatprep.subr.mxu0 0.0
    %5772 = vmatpush2.msra.mxu0 %v5454
    %5773 = vmatprep.subr.mxu0 0.0
    %5774 = vmatpush2.msra.mxu0 %v5453
    %5775 = vmatprep.subr.mxu0 0.0
    %5776 = vmatpush2.msra.mxu0 %v5452
    %5777 = vmatprep.subr.mxu0 0.0
    %5778 = vmatpush2.msra.mxu0 %v5451
    %5779 = vmatprep.subr.mxu0 0.0
    %5780 = vmatpush2.msra.mxu0 %v5450
    %5781 = vmatprep.subr.mxu0 0.0
    %5782 = vmatpush2.msra.mxu0 %v5449
    %5783 = vmatprep.mubr.f32.mxu0 %v5500
    %5784 = vmatmul.mubr.f32.gmra.mxu0 %v5498
    %v5785 = vpop.f32.mrf.mxu0
    %v5786 = vadd.f32 %v5716, %v5785
    %v5787 = vpop.f32.mrf.mxu0
    %5788 = vdwg.mxu0
    %vm5789 = vcmask 58368
    %5790 = vst.msk [vmem:[#allocation11] sm:$0x3] %vm5789, %v5786
    // Predicated region
    $region58: #{tpu_custom_call.1} parent=1 // pred_check
      _
    $region59: #{tpu_custom_call.1} parent=1 // pred_check_branch
      %5792 = sbr.rel (0) target = $region61
    $region60: #{tpu_custom_call.1} parent=1 // pred_region
      %s5794 = ssub.s32 32, 32
      %5795 = vsyncadd [#allocation7], %s5794
      %s5797 = sshll.u32 [#allocation11], 4
      %s5798 = int_to_ptr.vmem [resolvable:$true] %s5797
      %5800 = dma.vmem_to_hbm [thread:$0]  %s5798, 32, %s11, [#allocation7]
    $region61: #{tpu_custom_call.1} parent=1 // pred_fallthru
      _
    // Predicated region
    $region62: #{tpu_custom_call.1} parent=1 // pred_check
      _
    $region63: #{tpu_custom_call.1} parent=1 // pred_check_branch
      %5802 = sbr.rel (0) target = $region65
    $region64: #{tpu_custom_call.1} parent=1 // pred_region
      %5803 = dma.done [#allocation7], 32
    $region65: #{tpu_custom_call.1} parent=1 // pred_fallthru
      _
    %5804 = vsyncpa [#allocation6], 1
    %5805 = vsyncpa [#allocation9], 1
    %5806 = vsyncpa [#allocation7], 1

</llo_original>
